<compile_context>
chip_gen: v6e
topology: v6e:2x2x1
jax: 0.10.0
libtpu: 0.0.40
codegen_flags: <defaults>
</compile_context>

<pallas_src>
import functools

import jax
import jax.numpy as jnp
from jax.experimental import pallas as pl
from jax.experimental.pallas import tpu as pltpu

EPS = 1e-6  # LayerNormalization eps (10**-6 in the reference module)


# --------------------------------------------------------------------------
# Hardware-aware budgets
# --------------------------------------------------------------------------
_VMEM_CAP = -1  # sentinel: not queried yet


def _vmem_bytes():
    """Physical VMEM capacity, or None if it cannot be queried."""
    global _VMEM_CAP
    if _VMEM_CAP == -1:
        try:
            _VMEM_CAP = int(pltpu.get_tpu_info().vmem_capacity_bytes)
        except Exception:  # noqa: BLE001 - fall back conservatively
            _VMEM_CAP = None
    return _VMEM_CAP


def _act_budget():
    """Per-step activation working-set budget used for tile picking."""
    cap = _vmem_bytes()
    if cap is None:
        cap = 64 << 20
    return max(4 << 20, cap // 4)


def _vmem_limit_bytes():
    """Explicit scoped-VMEM limit (None -> compiler default)."""
    cap = _vmem_bytes()
    if cap is None:
        return None
    return int(min((cap * 3) // 4, 100 << 20))


def _compiler_params(semantics):
    return pltpu.CompilerParams(dimension_semantics=semantics,
                                vmem_limit_bytes=_vmem_limit_bytes())


# --------------------------------------------------------------------------
# Tiling helpers
# --------------------------------------------------------------------------
def _pick_seq_tile(s, max_rows=512):
    """Largest multiple-of-8 divisor of s that is <= max_rows (or full s)."""
    if s <= max_rows or s % 8:
        return s
    for t in range(max_rows - max_rows % 8, 7, -8):
        if s % t == 0:
            return t
    return s


def _pick_batch_tile(b, bytes_per_item, budget, max_tile=None):
    """Largest divisor of b whose per-step working set stays under budget."""
    cap = b if max_tile is None else max(1, min(b, max_tile))
    bt = max(1, min(cap, budget // max(1, bytes_per_item)))
    while b % bt:
        bt -= 1
    return bt


def _cap_for_two_steps(b, n_other_steps):
    """Cap the batch tile so the grid has >= 2 steps (v7x has 2 TensorCores)."""
    if n_other_steps >= 2 or b < 2:
        return None
    return b // 2


# --------------------------------------------------------------------------
# In-kernel helpers
# --------------------------------------------------------------------------
def _layer_norm(x, alpha, beta, d_model):
    """Tutorial LayerNorm: alpha*(x-mean)/(std+eps)+bias with unbiased std."""
    mean = jnp.mean(x, axis=-1, keepdims=True)
    var = jnp.sum((x - mean) ** 2, axis=-1, keepdims=True) * (1.0 / (d_model - 1))
    return alpha * (x - mean) / (jnp.sqrt(var) + EPS) + beta


def _attention_heads(q, k, v, bias, num_heads, d_k):
    """Per-head scaled-dot-product attention; q is pre-scaled by 1/sqrt(d_k).

    q:   (bt, sq, D) bf16
    k,v: (bt, sk, D) bf16
    bias: (1|bt, sq, sk) f32 additive mask bias (-1e9 on masked positions)
    Returns the concatenated head outputs (bt, sq, D) in bf16 (ready for the
    single K=D output-projection dot).
    """
    bt, sq, _ = q.shape
    sk = k.shape[1]
    bias_b = jnp.broadcast_to(bias, (bt, sq, sk))        # hoisted out of the loop
    heads = []
    for h in range(num_heads):                           # static unroll over heads
        sl = slice(h * d_k, (h + 1) * d_k)
        s = jnp.einsum("bqc,bkc->bqk", q[:, :, sl], k[:, :, sl],
                       preferred_element_type=jnp.float32) + bias_b
        s = s - jnp.max(s, axis=-1, keepdims=True)
        p = jnp.exp(s)
        p = p * pl.reciprocal(jnp.sum(p, axis=-1, keepdims=True), approx=True)
        oh = jnp.einsum("bqk,bkc->bqc", p.astype(jnp.bfloat16), v[:, :, sl],
                        preferred_element_type=jnp.float32)
        heads.append(oh.astype(jnp.bfloat16))
    return jnp.concatenate(heads, axis=-1)               # (bt, sq, D) bf16


# --------------------------------------------------------------------------
# Fused kernels (pre-norm LayerNorm + sublayer + residual in one kernel)
# --------------------------------------------------------------------------
def _self_attn_kernel(x_ref, bias_ref, ga_ref, gb_ref,
                      wqkv_ref, bqkv_ref, wo_ref, bo_ref, o_ref,
                      *, num_heads, d_k, d_model):
    bf16 = jnp.bfloat16
    x = x_ref[...].astype(jnp.float32)                    # (bt, S, D)
    bt, s, d = x.shape
    xn = _layer_norm(x, ga_ref[...], gb_ref[...], d_model)
    # fused q/k/v projection (one (D,3D) dot); wq/bq already carry 1/sqrt(d_k)
    qkv = jnp.dot(xn.reshape(bt * s, d).astype(bf16), wqkv_ref[...],
                  preferred_element_type=jnp.float32) + bqkv_ref[...]
    qkv = qkv.astype(bf16).reshape(bt, s, 3 * d)
    q, k, v = qkv[:, :, :d], qkv[:, :, d:2 * d], qkv[:, :, 2 * d:]
    o = _attention_heads(q, k, v, bias_ref[...], num_heads, d_k)
    y = jnp.dot(o.reshape(bt * s, d), wo_ref[...],
                preferred_element_type=jnp.float32) + bo_ref[...]
    o_ref[...] = (x + y.reshape(bt, s, d)).astype(o_ref.dtype)


def _cross_attn_kernel(x_ref, k_ref, v_ref, bias_ref, ga_ref, gb_ref,
                       wq_ref, bq_ref, wo_ref, bo_ref, o_ref,
                       *, num_heads, d_k, d_model):
    bf16 = jnp.bfloat16
    x = x_ref[...].astype(jnp.float32)                    # (bt, sq_t, D)
    bt, sq, d = x.shape
    xn = _layer_norm(x, ga_ref[...], gb_ref[...], d_model)
    q = jnp.dot(xn.reshape(bt * sq, d).astype(bf16), wq_ref[...],
                preferred_element_type=jnp.float32) + bq_ref[...]
    q = q.astype(bf16).reshape(bt, sq, d)
    # k_ref / v_ref already hold the projected, biased, bf16 encoder K/V
    o = _attention_heads(q, k_ref[...], v_ref[...], bias_ref[...], num_heads, d_k)
    y = jnp.dot(o.reshape(bt * sq, d), wo_ref[...],
                preferred_element_type=jnp.float32) + bo_ref[...]
    o_ref[...] = (x + y.reshape(bt, sq, d)).astype(o_ref.dtype)


def _kv_proj_kernel(ks_ref, vs_ref, wk_ref, bk_ref, wv_ref, bv_ref,
                    k_ref, v_ref):
    """Per-layer encoder K/V projection (done once, not per query tile)."""
    bf16 = jnp.bfloat16
    bt, st, d = ks_ref.shape
    ks = ks_ref[...].reshape(bt * st, d).astype(bf16)
    vs = vs_ref[...].reshape(bt * st, d).astype(bf16)
    k = jnp.dot(ks, wk_ref[...], preferred_element_type=jnp.float32) + bk_ref[...]
    v = jnp.dot(vs, wv_ref[...], preferred_element_type=jnp.float32) + bv_ref[...]
    k_ref[...] = k.astype(bf16).reshape(bt, st, d)
    v_ref[...] = v.astype(bf16).reshape(bt, st, d)


def _ffn_kernel(*refs, d_model, apply_final_ln):
    if apply_final_ln:
        (x_ref, ga_ref, gb_ref, w1_ref, b1_ref, w2_ref, b2_ref,
         fa_ref, fb_ref, o_ref) = refs
    else:
        (x_ref, ga_ref, gb_ref, w1_ref, b1_ref, w2_ref, b2_ref, o_ref) = refs
        fa_ref = fb_ref = None
    bf16 = jnp.bfloat16
    x = x_ref[...].astype(jnp.float32)                    # (bt, st, D)
    bt, st, d = x.shape
    xn = _layer_norm(x, ga_ref[...], gb_ref[...], d_model)
    h = jnp.dot(xn.reshape(bt * st, d).astype(bf16), w1_ref[...],
                preferred_element_type=jnp.float32) + b1_ref[...]
    h = jnp.maximum(h, 0.0)
    y = jnp.dot(h.astype(bf16), w2_ref[...],
                preferred_element_type=jnp.float32) + b2_ref[...]
    out = x + y.reshape(bt, st, d)
    if apply_final_ln:                                    # fused final LayerNorm
        out = _layer_norm(out, fa_ref[...], fb_ref[...], d_model)
    o_ref[...] = out.astype(o_ref.dtype)


def _final_ln_kernel(x_ref, ga_ref, gb_ref, o_ref, *, d_model):
    x = x_ref[...].astype(jnp.float32)
    o_ref[...] = _layer_norm(x, ga_ref[...], gb_ref[...], d_model).astype(o_ref.dtype)


# --------------------------------------------------------------------------
# pallas_call wrappers
# --------------------------------------------------------------------------
def self_attn_residual(x, bias, ln_a, ln_b, p, num_heads):
    """out = x + MHA(LN(x), LN(x), LN(x)); bias is additive (-1e9 masked).
    Self-attn needs the full sequence per step, so only the batch is tiled."""
    B, S, D = x.shape
    assert bias.shape[0] in (1, B)
    d_k = D // num_heads
    bytes_per_item = S * D * 48 + S * S * 12
    bt = _pick_batch_tile(B, bytes_per_item, _act_budget(),
                          max_tile=_cap_for_two_steps(B, 1))
    nb = B // bt
    kern = functools.partial(_self_attn_kernel, num_heads=num_heads, d_k=d_k,
                             d_model=D)
    act = pl.BlockSpec((bt, S, D), lambda b: (b, 0, 0))
    if bias.shape[0] == 1:
        bsp = pl.BlockSpec((1, S, S), lambda b: (0, 0, 0))
    else:
        bsp = pl.BlockSpec((bt, S, S), lambda b: (b, 0, 0))
    vsp = pl.BlockSpec((1, D), lambda b: (0, 0))
    return pl.pallas_call(
        kern,
        out_shape=jax.ShapeDtypeStruct((B, S, D), x.dtype),
        grid=(nb,),
        in_specs=[act, bsp, vsp, vsp,
                  pl.BlockSpec((D, 3 * D), lambda b: (0, 0)),
                  pl.BlockSpec((1, 3 * D), lambda b: (0, 0)),
                  pl.BlockSpec((D, D), lambda b: (0, 0)),
                  vsp],
        out_specs=act,
        compiler_params=_compiler_params(("parallel",)),
    )(x, bias, ln_a, ln_b, p["wqkv"], p["bqkv"], p["wo"], p["bo"])


def project_kv(k_src, v_src, p, seq_tile=None):
    """Projected bf16 encoder K/V for one layer (computed once per layer)."""
    B, Sk, D = k_src.shape
    sk_t = seq_tile if seq_tile is not None else _pick_seq_tile(Sk)
    nq = Sk // sk_t
    bt = _pick_batch_tile(B, sk_t * D * 24, _act_budget(),
                          max_tile=_cap_for_two_steps(B, nq))
    nb = B // bt
    act = pl.BlockSpec((bt, sk_t, D), lambda b, q: (b, q, 0))
    vsp = pl.BlockSpec((1, D), lambda b, q: (0, 0))
    wsp = pl.BlockSpec((D, D), lambda b, q: (0, 0))
    out16 = jax.ShapeDtypeStruct((B, Sk, D), jnp.bfloat16)
    return pl.pallas_call(
        _kv_proj_kernel,
        out_shape=(out16, out16),
        grid=(nb, nq),
        in_specs=[act, act, wsp, vsp, wsp, vsp],
        out_specs=[act, act],
        compiler_params=_compiler_params(("parallel", "parallel")),
    )(k_src, v_src, p["wk"], p["bk"], p["wv"], p["bv"])


def cross_attn_residual(x, k_proj, v_proj, bias, ln_a, ln_b, p, num_heads,
                        seq_tile=None):
    """out = x + MHA(LN(x), K, V); K/V are pre-projected bf16; query-tiled."""
    B, Sq, D = x.shape
    Sk = k_proj.shape[1]
    assert bias.shape[0] in (1, B)
    d_k = D // num_heads
    sq_t = seq_tile if seq_tile is not None else _pick_seq_tile(Sq)
    nq = Sq // sq_t
    bytes_per_item = sq_t * D * 40 + sq_t * Sk * 12 + Sk * D * 8
    bt = _pick_batch_tile(B, bytes_per_item, _act_budget(),
                          max_tile=_cap_for_two_steps(B, nq))
    nb = B // bt
    kern = functools.partial(_cross_attn_kernel, num_heads=num_heads, d_k=d_k,
                             d_model=D)
    act = pl.BlockSpec((bt, sq_t, D), lambda b, q: (b, q, 0))
    kvs = pl.BlockSpec((bt, Sk, D), lambda b, q: (b, 0, 0))
    if bias.shape[0] == 1:
        bsp = pl.BlockSpec((1, sq_t, Sk), lambda b, q: (0, q, 0))
    else:
        bsp = pl.BlockSpec((bt, sq_t, Sk), lambda b, q: (b, q, 0))
    vsp = pl.BlockSpec((1, D), lambda b, q: (0, 0))
    wsp = pl.BlockSpec((D, D), lambda b, q: (0, 0))
    return pl.pallas_call(
        kern,
        out_shape=jax.ShapeDtypeStruct((B, Sq, D), x.dtype),
        grid=(nb, nq),
        in_specs=[act, kvs, kvs, bsp, vsp, vsp, wsp, vsp, wsp, vsp],
        out_specs=act,
        compiler_params=_compiler_params(("parallel", "parallel")),
    )(x, k_proj, v_proj, bias, ln_a, ln_b, p["wq"], p["bq"], p["wo"], p["bo"])


def ffn_residual(x, ln_a, ln_b, p, final_ln=None, seq_tile=None):
    """out = x + FFN(LN(x)); optionally fuses the decoder's final LayerNorm."""
    B, S, D = x.shape
    Dff = p["w1"].shape[1]
    sq_t = seq_tile if seq_tile is not None else _pick_seq_tile(S)
    nq = S // sq_t
    bt = _pick_batch_tile(B, sq_t * (24 * D + 8 * Dff), _act_budget(),
                          max_tile=_cap_for_two_steps(B, nq))
    nb = B // bt
    apply_final = final_ln is not None
    kern = functools.partial(_ffn_kernel, d_model=D, apply_final_ln=apply_final)
    act = pl.BlockSpec((bt, sq_t, D), lambda b, q: (b, q, 0))
    vsp = pl.BlockSpec((1, D), lambda b, q: (0, 0))
    in_specs = [act, vsp, vsp,
                pl.BlockSpec((D, Dff), lambda b, q: (0, 0)),
                pl.BlockSpec((1, Dff), lambda b, q: (0, 0)),
                pl.BlockSpec((Dff, D), lambda b, q: (0, 0)),
                vsp]
    args = [x, ln_a, ln_b, p["w1"], p["b1"], p["w2"], p["b2"]]
    if apply_final:
        in_specs += [vsp, vsp]
        args += [final_ln[0], final_ln[1]]
    return pl.pallas_call(
        kern,
        out_shape=jax.ShapeDtypeStruct((B, S, D), x.dtype),
        grid=(nb, nq),
        in_specs=in_specs,
        out_specs=act,
        compiler_params=_compiler_params(("parallel", "parallel")),
    )(*args)


def final_layernorm(x, ln_a, ln_b, seq_tile=None):
    """Standalone final LN (only used when there are zero decoder blocks)."""
    B, S, D = x.shape
    sq_t = seq_tile if seq_tile is not None else _pick_seq_tile(S)
    nq = S // sq_t
    bt = _pick_batch_tile(B, sq_t * D * 12, _act_budget(),
                          max_tile=_cap_for_two_steps(B, nq))
    nb = B // bt
    kern = functools.partial(_final_ln_kernel, d_model=D)
    act = pl.BlockSpec((bt, sq_t, D), lambda b, q: (b, q, 0))
    vsp = pl.BlockSpec((1, D), lambda b, q: (0, 0))
    return pl.pallas_call(
        kern,
        out_shape=jax.ShapeDtypeStruct((B, S, D), x.dtype),
        grid=(nb, nq),
        in_specs=[act, vsp, vsp],
        out_specs=act,
        compiler_params=_compiler_params(("parallel", "parallel")),
    )(x, ln_a, ln_b)


# --------------------------------------------------------------------------
# Parameter preparation (done ONCE, outside the jitted forward)
# --------------------------------------------------------------------------
def prepare_params(params, num_heads):
    """Cast weights to bf16, fuse wq/wk/wv, fold 1/sqrt(d_k) into wq/bq,
    reshape biases / LN params to (1, D)."""
    bf16 = jnp.bfloat16
    d_model = params["norm_a"].shape[-1]
    d_k = d_model // num_heads
    scale = 1.0 / (d_k ** 0.5)

    def vec(b):
        return jnp.asarray(b, jnp.float32).reshape(1, -1)

    blocks = []
    for blk in params["blocks"]:
        sa, ca, ff = blk["self_attn"], blk["cross_attn"], blk["ffn"]
        wqkv = jnp.concatenate([sa["wq"] * scale, sa["wk"], sa["wv"]],
                               axis=1).astype(bf16)
        bqkv = jnp.concatenate([sa["bq"] * scale, sa["bk"], sa["bv"]]
                               ).reshape(1, -1).astype(jnp.float32)
        blocks.append(dict(
            ln1_a=vec(blk["ln1_a"]), ln1_b=vec(blk["ln1_b"]),
            ln2_a=vec(blk["ln2_a"]), ln2_b=vec(blk["ln2_b"]),
            ln3_a=vec(blk["ln3_a"]), ln3_b=vec(blk["ln3_b"]),
            self_attn=dict(wqkv=wqkv, bqkv=bqkv,
                           wo=sa["wo"].astype(bf16), bo=vec(sa["bo"])),
            cross_attn=dict(wq=(ca["wq"] * scale).astype(bf16),
                            bq=vec(ca["bq"] * scale),
                            wk=ca["wk"].astype(bf16), bk=vec(ca["bk"]),
                            wv=ca["wv"].astype(bf16), bv=vec(ca["bv"]),
                            wo=ca["wo"].astype(bf16), bo=vec(ca["bo"])),
            ffn=dict(w1=ff["w1"].astype(bf16), b1=vec(ff["b1"]),
                     w2=ff["w2"].astype(bf16), b2=vec(ff["b2"])),
        ))
    return dict(blocks=blocks,
                norm_a=vec(params["norm_a"]), norm_b=vec(params["norm_b"]))


# --------------------------------------------------------------------------
# Full Decoder forward
# --------------------------------------------------------------------------
def decoder_forward(prepared, x, k, v, trg_mask, src_mask, num_heads):
    # Additive mask biases computed once per forward (shared across layers).
    trg_bias = jnp.where(trg_mask == 0, jnp.float32(-1e9), jnp.float32(0.0))
    src_bias = jnp.where(src_mask == 0, jnp.float32(-1e9), jnp.float32(0.0))
    k16 = k.astype(jnp.bfloat16)
    v16 = v.astype(jnp.bfloat16)
    blocks = prepared["blocks"]
    if not blocks:
        return final_layernorm(x, prepared["norm_a"], prepared["norm_b"])
    last = len(blocks) - 1
    for i, blk in enumerate(blocks):
        x = self_attn_residual(x, trg_bias, blk["ln1_a"], blk["ln1_b"],
                               blk["self_attn"], num_heads)
        kp, vp = project_kv(k16, v16, blk["cross_attn"])
        x = cross_attn_residual(x, kp, vp, src_bias, blk["ln2_a"], blk["ln2_b"],
                                blk["cross_attn"], num_heads)
        final_ln = ((prepared["norm_a"], prepared["norm_b"])
                    if i == last else None)
        x = ffn_residual(x, blk["ln3_a"], blk["ln3_b"], blk["ffn"],
                         final_ln=final_ln)
    return x


# --------------------------------------------------------------------------
# Pure-JAX f32 reference (for correctness check)
# --------------------------------------------------------------------------
def ref_layernorm(x, a, b):
    mean = x.mean(-1, keepdims=True)
    var = ((x - mean) ** 2).sum(-1, keepdims=True) / (x.shape[-1] - 1)
    return a * (x - mean) / (jnp.sqrt(var) + EPS) + b


def ref_mha(q_in, k_in, v_in, mask, p, h):
    B, Sq, D = q_in.shape
    d_k = D // h
    q = q_in @ p["wq"] + p["bq"]
    k = k_in @ p["wk"] + p["bk"]
    v = v_in @ p["wv"] + p["bv"]
    q = q.reshape(B, Sq, h, d_k).transpose(0, 2, 1, 3)
    k = k.reshape(B, -1, h, d_k).transpose(0, 2, 1, 3)
    v = v.reshape(B, -1, h, d_k).transpose(0, 2, 1, 3)
    s = jnp.einsum("bhqd,bhkd->bhqk", q, k) / jnp.sqrt(jnp.float32(d_k))
    s = jnp.where(mask[:, None, :, :] == 0, -1e9, s)
    p_attn = jax.nn.softmax(s, axis=-1)
    o = jnp.einsum("bhqk,bhkd->bhqd", p_attn, v)
    o = o.transpose(0, 2, 1, 3).reshape(B, Sq, D)
    return o @ p["wo"] + p["bo"]


def ref_decoder(params, x, k, v, trg_mask, src_mask, h):
    for blk in params["blocks"]:
        xn = ref_layernorm(x, blk["ln1_a"], blk["ln1_b"])
        x = x + ref_mha(xn, xn, xn, trg_mask, blk["self_attn"], h)
        xn = ref_layernorm(x, blk["ln2_a"], blk["ln2_b"])
        x = x + ref_mha(xn, k, v, src_mask, blk["cross_attn"], h)
        xn = ref_layernorm(x, blk["ln3_a"], blk["ln3_b"])
        p = blk["ffn"]
        x = x + (jnp.maximum(xn @ p["w1"] + p["b1"], 0.0) @ p["w2"] + p["b2"])
    return ref_layernorm(x, params["norm_a"], params["norm_b"])


# --------------------------------------------------------------------------
# Deterministic parameter init (matches shapes implied by __init__)
# --------------------------------------------------------------------------
def init_params(key, n_layers, d_model, d_ff):
    def linear(key, fan_in, fan_out):
        k1, k2 = jax.random.split(key)
        bound = 1.0 / (fan_in ** 0.5)
        w = jax.random.uniform(k1, (fan_in, fan_out), jnp.float32, -bound, bound)
        b = jax.random.uniform(k2, (fan_out,), jnp.float32, -bound, bound)
        return w, b

    def attn_params(key):
        ks = jax.random.split(key, 4)
        wq, bq = linear(ks[0], d_model, d_model)
        wk, bk = linear(ks[1], d_model, d_model)
        wv, bv = linear(ks[2], d_model, d_model)
        wo, bo = linear(ks[3], d_model, d_model)
        return dict(wq=wq, bq=bq, wk=wk, bk=bk, wv=wv, bv=bv, wo=wo, bo=bo)

    blocks = []
    for _ in range(n_layers):
        key, k_self, k_cross, k_ff1, k_ff2 = jax.random.split(key, 5)
        w1, b1 = linear(k_ff1, d_model, d_ff)
        w2, b2 = linear(k_ff2, d_ff, d_model)
        blocks.append(dict(
            self_attn=attn_params(k_self),
            cross_attn=attn_params(k_cross),
            ffn=dict(w1=w1, b1=b1, w2=w2, b2=b2),
            ln1_a=jnp.ones((d_model,), jnp.float32),
            ln1_b=jnp.zeros((d_model,), jnp.float32),
            ln2_a=jnp.ones((d_model,), jnp.float32),
            ln2_b=jnp.zeros((d_model,), jnp.float32),
            ln3_a=jnp.ones((d_model,), jnp.float32),
            ln3_b=jnp.zeros((d_model,), jnp.float32),
        ))
    return dict(
        blocks=blocks,
        norm_a=jnp.ones((d_model,), jnp.float32),
        norm_b=jnp.zeros((d_model,), jnp.float32),
    )


if __name__ == "__main__":
    # Small shapes consistent with the module; d_model a multiple of 128 so
    # the lane dimension exercises real (8,128) tiling.
    N_LAYERS, D_MODEL, D_FF, H = 2, 128, 256, 4
    B, S_TRG, S_SRC = 2, 8, 16

    key = jax.random.PRNGKey(0)
    key, kx, kk, kv, kp = jax.random.split(key, 5)

    x = jax.random.normal(kx, (B, S_TRG, D_MODEL), jnp.float32)
    k_enc = jax.random.normal(kk, (B, S_SRC, D_MODEL), jnp.float32)
    v_enc = jax.random.normal(kv, (B, S_SRC, D_MODEL), jnp.float32)

    # causal target mask and a source mask hiding the last 3 source positions;
    # leading dim 1 (broadcast over batch) -> no per-batch mask DMA.
    trg_mask = jnp.tril(jnp.ones((S_TRG, S_TRG), jnp.float32))[None]
    src_valid = (jnp.arange(S_SRC) < (S_SRC - 3)).astype(jnp.float32)
    src_mask = src_valid[None, None, :] * jnp.ones((1, S_TRG, S_SRC), jnp.float32)

    params = init_params(kp, N_LAYERS, D_MODEL, D_FF)
    prepared = prepare_params(params, H)          # one-time bf16 conversion

    fwd = jax.jit(decoder_forward, static_argnums=(6,))
    out = fwd(prepared, x, k_enc, v_enc, trg_mask, src_mask, H)
    out = jax.block_until_ready(out)

    ref = ref_decoder(params, x, k_enc, v_enc, trg_mask, src_mask, H)
    assert out.shape == (B, S_TRG, D_MODEL)
    # bf16 MXU operands (f32 accumulation) -> compare vs. the f32 reference
    # with a relaxed tolerance.
    assert jnp.allclose(out, ref, atol=5e-2, rtol=5e-2), float(
        jnp.max(jnp.abs(out - ref)))

    print("KERNEL_OK")
</pallas_src>

<mosaic_0001>
module attributes {stable_mosaic.version = 11 : i64} {
  func.func @_kv_proj_kernel(%arg0: i32, %arg1: i32, %arg2: memref<1x16x128xbf16, #tpu.memory_space<vmem>>, %arg3: memref<1x16x128xbf16, #tpu.memory_space<vmem>>, %arg4: memref<128x128xbf16, #tpu.memory_space<vmem>>, %arg5: memref<1x128xf32, #tpu.memory_space<vmem>>, %arg6: memref<128x128xbf16, #tpu.memory_space<vmem>>, %arg7: memref<1x128xf32, #tpu.memory_space<vmem>>, %arg8: memref<1x16x128xbf16, #tpu.memory_space<vmem>>, %arg9: memref<1x16x128xbf16, #tpu.memory_space<vmem>>) attributes {dimension_semantics = [#tpu.dimension_semantics<parallel>, #tpu.dimension_semantics<parallel>], iteration_bounds = array<i64: 2, 1>, scalar_prefetch = 0 : i64, scratch_operands = 0 : i64, tpu.core_type = #tpu.core_type<tc>, window_params = [{transform_indices = @transform_0, window_bounds = array<i64: 1, 16, 128>}, {transform_indices = @transform_1, window_bounds = array<i64: 1, 16, 128>}, {pipeline_mode = #tpu.pipeline_mode<synchronous>, transform_indices = @transform_2, window_bounds = array<i64: 128, 128>}, {pipeline_mode = #tpu.pipeline_mode<synchronous>, transform_indices = @transform_3, window_bounds = array<i64: 1, 128>}, {pipeline_mode = #tpu.pipeline_mode<synchronous>, transform_indices = @transform_4, window_bounds = array<i64: 128, 128>}, {pipeline_mode = #tpu.pipeline_mode<synchronous>, transform_indices = @transform_5, window_bounds = array<i64: 1, 128>}, {transform_indices = @transform_6, window_bounds = array<i64: 1, 16, 128>}, {transform_indices = @transform_7, window_bounds = array<i64: 1, 16, 128>}]} {
    %c0 = arith.constant 0 : index
    %c0_0 = arith.constant 0 : index
    %c0_1 = arith.constant 0 : index
    %0 = vector.load %arg2[%c0, %c0_0, %c0_1] : memref<1x16x128xbf16, #tpu.memory_space<vmem>>, vector<1x16x128xbf16>
    %1 = vector.shape_cast %0 : vector<1x16x128xbf16> to vector<16x128xbf16>
    %c0_2 = arith.constant 0 : index
    %c0_3 = arith.constant 0 : index
    %c0_4 = arith.constant 0 : index
    %2 = vector.load %arg3[%c0_2, %c0_3, %c0_4] : memref<1x16x128xbf16, #tpu.memory_space<vmem>>, vector<1x16x128xbf16>
    %3 = vector.shape_cast %2 : vector<1x16x128xbf16> to vector<16x128xbf16>
    %c0_5 = arith.constant 0 : index
    %c0_6 = arith.constant 0 : index
    %4 = vector.load %arg4[%c0_5, %c0_6] : memref<128x128xbf16, #tpu.memory_space<vmem>>, vector<128x128xbf16>
    %cst = arith.constant dense<0.000000e+00> : vector<16x128xf32>
    %5 = tpu.matmul %1, %4, %cst {dimension_numbers = #tpu.dot_dimension_numbers<[1], [0], [0], [1], [0, 0, 1, 1], [], []>} : vector<16x128xbf16>, vector<128x128xbf16>, vector<16x128xf32> -> vector<16x128xf32>
    %c0_7 = arith.constant 0 : index
    %c0_8 = arith.constant 0 : index
    %6 = vector.load %arg5[%c0_7, %c0_8] : memref<1x128xf32, #tpu.memory_space<vmem>>, vector<1x128xf32>
    %7 = vector.broadcast %6 : vector<1x128xf32> to vector<16x128xf32>
    %8 = arith.addf %5, %7 : vector<16x128xf32>
    %c0_9 = arith.constant 0 : index
    %c0_10 = arith.constant 0 : index
    %9 = vector.load %arg6[%c0_9, %c0_10] : memref<128x128xbf16, #tpu.memory_space<vmem>>, vector<128x128xbf16>
    %cst_11 = arith.constant dense<0.000000e+00> : vector<16x128xf32>
    %10 = tpu.matmul %3, %9, %cst_11 {dimension_numbers = #tpu.dot_dimension_numbers<[1], [0], [0], [1], [0, 0, 1, 1], [], []>} : vector<16x128xbf16>, vector<128x128xbf16>, vector<16x128xf32> -> vector<16x128xf32>
    %c0_12 = arith.constant 0 : index
    %c0_13 = arith.constant 0 : index
    %11 = vector.load %arg7[%c0_12, %c0_13] : memref<1x128xf32, #tpu.memory_space<vmem>>, vector<1x128xf32>
    %12 = vector.broadcast %11 : vector<1x128xf32> to vector<16x128xf32>
    %13 = arith.addf %10, %12 : vector<16x128xf32>
    %14 = arith.truncf %8 : vector<16x128xf32> to vector<16x128xbf16>
    %15 = vector.shape_cast %14 : vector<16x128xbf16> to vector<1x16x128xbf16>
    %c0_14 = arith.constant 0 : index
    %c0_15 = arith.constant 0 : index
    %c0_16 = arith.constant 0 : index
    %16 = vector.load %arg8[%c0_14, %c0_15, %c0_16] : memref<1x16x128xbf16, #tpu.memory_space<vmem>>, vector<1x16x128xbf16>
    tpu.vector_store %arg8[%c0_14, %c0_15, %c0_16], %15 {strides = array<i32>} : memref<1x16x128xbf16, #tpu.memory_space<vmem>>, vector<1x16x128xbf16>,
    %17 = arith.truncf %13 : vector<16x128xf32> to vector<16x128xbf16>
    %18 = vector.shape_cast %17 : vector<16x128xbf16> to vector<1x16x128xbf16>
    %c0_17 = arith.constant 0 : index
    %c0_18 = arith.constant 0 : index
    %c0_19 = arith.constant 0 : index
    %19 = vector.load %arg9[%c0_17, %c0_18, %c0_19] : memref<1x16x128xbf16, #tpu.memory_space<vmem>>, vector<1x16x128xbf16>
    tpu.vector_store %arg9[%c0_17, %c0_18, %c0_19], %18 {strides = array<i32>} : memref<1x16x128xbf16, #tpu.memory_space<vmem>>, vector<1x16x128xbf16>,
    return
  }
  func.func @transform_0(%arg0: i32, %arg1: i32) -> (i32, i32, i32) {
    %c0_i32 = arith.constant 0 : i32
    %c0_i32_0 = arith.constant 0 : i32
    return %arg0, %arg1, %c0_i32 : i32, i32, i32
  }
  func.func @transform_1(%arg0: i32, %arg1: i32) -> (i32, i32, i32) {
    %c0_i32 = arith.constant 0 : i32
    %c0_i32_0 = arith.constant 0 : i32
    return %arg0, %arg1, %c0_i32 : i32, i32, i32
  }
  func.func @transform_2(%arg0: i32, %arg1: i32) -> (i32, i32) {
    %c0_i32 = arith.constant 0 : i32
    %c0_i32_0 = arith.constant 0 : i32
    %c0_i32_1 = arith.constant 0 : i32
    return %c0_i32, %c0_i32_0 : i32, i32
  }
  func.func @transform_3(%arg0: i32, %arg1: i32) -> (i32, i32) {
    %c0_i32 = arith.constant 0 : i32
    %c0_i32_0 = arith.constant 0 : i32
    %c0_i32_1 = arith.constant 0 : i32
    return %c0_i32, %c0_i32_0 : i32, i32
  }
  func.func @transform_4(%arg0: i32, %arg1: i32) -> (i32, i32) {
    %c0_i32 = arith.constant 0 : i32
    %c0_i32_0 = arith.constant 0 : i32
    %c0_i32_1 = arith.constant 0 : i32
    return %c0_i32, %c0_i32_0 : i32, i32
  }
  func.func @transform_5(%arg0: i32, %arg1: i32) -> (i32, i32) {
    %c0_i32 = arith.constant 0 : i32
    %c0_i32_0 = arith.constant 0 : i32
    %c0_i32_1 = arith.constant 0 : i32
    return %c0_i32, %c0_i32_0 : i32, i32
  }
  func.func @transform_6(%arg0: i32, %arg1: i32) -> (i32, i32, i32) {
    %c0_i32 = arith.constant 0 : i32
    %c0_i32_0 = arith.constant 0 : i32
    return %arg0, %arg1, %c0_i32 : i32, i32, i32
  }
  func.func @transform_7(%arg0: i32, %arg1: i32) -> (i32, i32, i32) {
    %c0_i32 = arith.constant 0 : i32
    %c0_i32_0 = arith.constant 0 : i32
    return %arg0, %arg1, %c0_i32 : i32, i32, i32
  }
}

module attributes {stable_mosaic.version = 11 : i64} {
  func.func @_cross_attn_kernel(%arg0: i32, %arg1: i32, %arg2: memref<1x8x128xf32, #tpu.memory_space<vmem>>, %arg3: memref<1x16x128xbf16, #tpu.memory_space<vmem>>, %arg4: memref<1x16x128xbf16, #tpu.memory_space<vmem>>, %arg5: memref<1x8x16xf32, #tpu.memory_space<vmem>>, %arg6: memref<1x128xf32, #tpu.memory_space<vmem>>, %arg7: memref<1x128xf32, #tpu.memory_space<vmem>>, %arg8: memref<128x128xbf16, #tpu.memory_space<vmem>>, %arg9: memref<1x128xf32, #tpu.memory_space<vmem>>, %arg10: memref<128x128xbf16, #tpu.memory_space<vmem>>, %arg11: memref<1x128xf32, #tpu.memory_space<vmem>>, %arg12: memref<1x8x128xf32, #tpu.memory_space<vmem>>) attributes {dimension_semantics = [#tpu.dimension_semantics<parallel>, #tpu.dimension_semantics<parallel>], iteration_bounds = array<i64: 2, 1>, scalar_prefetch = 0 : i64, scratch_operands = 0 : i64, tpu.core_type = #tpu.core_type<tc>, window_params = [{transform_indices = @transform_0, window_bounds = array<i64: 1, 8, 128>}, {transform_indices = @transform_1, window_bounds = array<i64: 1, 16, 128>}, {transform_indices = @transform_2, window_bounds = array<i64: 1, 16, 128>}, {transform_indices = @transform_3, window_bounds = array<i64: 1, 8, 16>}, {pipeline_mode = #tpu.pipeline_mode<synchronous>, transform_indices = @transform_4, window_bounds = array<i64: 1, 128>}, {pipeline_mode = #tpu.pipeline_mode<synchronous>, transform_indices = @transform_5, window_bounds = array<i64: 1, 128>}, {pipeline_mode = #tpu.pipeline_mode<synchronous>, transform_indices = @transform_6, window_bounds = array<i64: 128, 128>}, {pipeline_mode = #tpu.pipeline_mode<synchronous>, transform_indices = @transform_7, window_bounds = array<i64: 1, 128>}, {pipeline_mode = #tpu.pipeline_mode<synchronous>, transform_indices = @transform_8, window_bounds = array<i64: 128, 128>}, {pipeline_mode = #tpu.pipeline_mode<synchronous>, transform_indices = @transform_9, window_bounds = array<i64: 1, 128>}, {transform_indices = @transform_10, window_bounds = array<i64: 1, 8, 128>}]} {
    %c0 = arith.constant 0 : index
    %c0_0 = arith.constant 0 : index
    %c0_1 = arith.constant 0 : index
    %0 = vector.load %arg2[%c0, %c0_0, %c0_1] : memref<1x8x128xf32, #tpu.memory_space<vmem>>, vector<1x8x128xf32>
    %c0_2 = arith.constant 0 : index
    %c0_3 = arith.constant 0 : index
    %1 = vector.load %arg6[%c0_2, %c0_3] : memref<1x128xf32, #tpu.memory_space<vmem>>, vector<1x128xf32>
    %c0_4 = arith.constant 0 : index
    %c0_5 = arith.constant 0 : index
    %2 = vector.load %arg7[%c0_4, %c0_5] : memref<1x128xf32, #tpu.memory_space<vmem>>, vector<1x128xf32>
    %cst = arith.constant dense<0.000000e+00> : vector<1x8xf32>
    %3 = vector.multi_reduction <add>, %0, %cst [2] : vector<1x8x128xf32> to vector<1x8xf32>
    %4 = vector.shape_cast %3 : vector<1x8xf32> to vector<1x8x1xf32>
    %cst_6 = arith.constant 1.280000e+02 : f32
    %5 = vector.broadcast %cst_6 : f32 to vector<1x8x1xf32>
    %6 = arith.divf %4, %5 : vector<1x8x1xf32>
    %7 = vector.broadcast %6 : vector<1x8x1xf32> to vector<1x8x128xf32>
    %8 = arith.subf %0, %7 : vector<1x8x128xf32>
    %9 = arith.mulf %8, %8 : vector<1x8x128xf32>
    %cst_7 = arith.constant dense<0.000000e+00> : vector<1x8xf32>
    %10 = vector.multi_reduction <add>, %9, %cst_7 [2] : vector<1x8x128xf32> to vector<1x8xf32>
    %11 = vector.shape_cast %10 : vector<1x8xf32> to vector<1x8x1xf32>
    %cst_8 = arith.constant 0.00787401571 : f32
    %12 = vector.broadcast %cst_8 : f32 to vector<1x8x1xf32>
    %13 = arith.mulf %11, %12 : vector<1x8x1xf32>
    %14 = vector.broadcast %6 : vector<1x8x1xf32> to vector<1x8x128xf32>
    %15 = arith.subf %0, %14 : vector<1x8x128xf32>
    %16 = vector.shape_cast %1 : vector<1x128xf32> to vector<1x1x128xf32>
    %17 = vector.broadcast %16 : vector<1x1x128xf32> to vector<1x8x128xf32>
    %18 = arith.mulf %17, %15 : vector<1x8x128xf32>
    %19 = math.sqrt %13 : vector<1x8x1xf32>
    %cst_9 = arith.constant 9.99999997E-7 : f32
    %20 = vector.broadcast %cst_9 : f32 to vector<1x8x1xf32>
    %21 = arith.addf %19, %20 : vector<1x8x1xf32>
    %22 = vector.broadcast %21 : vector<1x8x1xf32> to vector<1x8x128xf32>
    %23 = arith.divf %18, %22 : vector<1x8x128xf32>
    %24 = vector.shape_cast %2 : vector<1x128xf32> to vector<1x1x128xf32>
    %25 = vector.broadcast %24 : vector<1x1x128xf32> to vector<1x8x128xf32>
    %26 = arith.addf %23, %25 : vector<1x8x128xf32>
    %27 = vector.shape_cast %26 : vector<1x8x128xf32> to vector<8x128xf32>
    %28 = arith.truncf %27 : vector<8x128xf32> to vector<8x128xbf16>
    %c0_10 = arith.constant 0 : index
    %c0_11 = arith.constant 0 : index
    %29 = vector.load %arg8[%c0_10, %c0_11] : memref<128x128xbf16, #tpu.memory_space<vmem>>, vector<128x128xbf16>
    %cst_12 = arith.constant dense<0.000000e+00> : vector<8x128xf32>
    %30 = tpu.matmul %28, %29, %cst_12 {dimension_numbers = #tpu.dot_dimension_numbers<[1], [0], [0], [1], [0, 0, 1, 1], [], []>} : vector<8x128xbf16>, vector<128x128xbf16>, vector<8x128xf32> -> vector<8x128xf32>
    %c0_13 = arith.constant 0 : index
    %c0_14 = arith.constant 0 : index
    %31 = vector.load %arg9[%c0_13, %c0_14] : memref<1x128xf32, #tpu.memory_space<vmem>>, vector<1x128xf32>
    %32 = vector.broadcast %31 : vector<1x128xf32> to vector<8x128xf32>
    %33 = arith.addf %30, %32 : vector<8x128xf32>
    %34 = arith.truncf %33 : vector<8x128xf32> to vector<8x128xbf16>
    %35 = vector.shape_cast %34 : vector<8x128xbf16> to vector<1x8x128xbf16>
    %c0_15 = arith.constant 0 : index
    %c0_16 = arith.constant 0 : index
    %c0_17 = arith.constant 0 : index
    %36 = vector.load %arg3[%c0_15, %c0_16, %c0_17] : memref<1x16x128xbf16, #tpu.memory_space<vmem>>, vector<1x16x128xbf16>
    %c0_18 = arith.constant 0 : index
    %c0_19 = arith.constant 0 : index
    %c0_20 = arith.constant 0 : index
    %37 = vector.load %arg4[%c0_18, %c0_19, %c0_20] : memref<1x16x128xbf16, #tpu.memory_space<vmem>>, vector<1x16x128xbf16>
    %c0_21 = arith.constant 0 : index
    %c0_22 = arith.constant 0 : index
    %c0_23 = arith.constant 0 : index
    %38 = vector.load %arg5[%c0_21, %c0_22, %c0_23] : memref<1x8x16xf32, #tpu.memory_space<vmem>>, vector<1x8x16xf32>
    %39 = vector.extract_strided_slice %35 {offsets = [0, 0, 0], sizes = [1, 8, 32], strides = [1, 1, 1]} : vector<1x8x128xbf16> to vector<1x8x32xbf16>
    %40 = vector.extract_strided_slice %36 {offsets = [0, 0, 0], sizes = [1, 16, 32], strides = [1, 1, 1]} : vector<1x16x128xbf16> to vector<1x16x32xbf16>
    "tpu.trace_start"() <{level = 10 : i32, message = "bqc,bkc->bqk"}> : () -> ()
    %cst_24 = arith.constant dense<0.000000e+00> : vector<1x8x16xf32>
    %41 = tpu.matmul %39, %40, %cst_24 {dimension_numbers = #tpu.dot_dimension_numbers<[2], [2], [1], [1], [0, 0, 0, 1, 1, 1], [0], [0]>} : vector<1x8x32xbf16>, vector<1x16x32xbf16>, vector<1x8x16xf32> -> vector<1x8x16xf32>
    "tpu.trace_stop"() : () -> ()
    %42 = arith.addf %41, %38 : vector<1x8x16xf32>
    %cst_25 = arith.constant dense<0xFF800000> : vector<1x8xf32>
    %43 = vector.multi_reduction <maximumf>, %42, %cst_25 [2] : vector<1x8x16xf32> to vector<1x8xf32>
    %44 = vector.shape_cast %43 : vector<1x8xf32> to vector<1x8x1xf32>
    %45 = vector.broadcast %44 : vector<1x8x1xf32> to vector<1x8x16xf32>
    %46 = arith.subf %42, %45 : vector<1x8x16xf32>
    %47 = math.exp %46 : vector<1x8x16xf32>
    %cst_26 = arith.constant dense<0.000000e+00> : vector<1x8xf32>
    %48 = vector.multi_reduction <add>, %47, %cst_26 [2] : vector<1x8x16xf32> to vector<1x8xf32>
    %49 = vector.shape_cast %48 : vector<1x8xf32> to vector<1x8x1xf32>
    %50 = tpu.reciprocal %49 {approx = true} : vector<1x8x1xf32> -> vector<1x8x1xf32>
    %51 = vector.broadcast %50 : vector<1x8x1xf32> to vector<1x8x16xf32>
    %52 = arith.mulf %47, %51 : vector<1x8x16xf32>
    %53 = arith.truncf %52 : vector<1x8x16xf32> to vector<1x8x16xbf16>
    %54 = vector.extract_strided_slice %37 {offsets = [0, 0, 0], sizes = [1, 16, 32], strides = [1, 1, 1]} : vector<1x16x128xbf16> to vector<1x16x32xbf16>
    "tpu.trace_start"() <{level = 10 : i32, message = "bqk,bkc->bqc"}> : () -> ()
    %cst_27 = arith.constant dense<0.000000e+00> : vector<1x8x32xf32>
    %55 = tpu.matmul %53, %54, %cst_27 {dimension_numbers = #tpu.dot_dimension_numbers<[2], [1], [1], [2], [0, 0, 0, 1, 1, 2], [0], [0]>} : vector<1x8x16xbf16>, vector<1x16x32xbf16>, vector<1x8x32xf32> -> vector<1x8x32xf32>
    "tpu.trace_stop"() : () -> ()
    %56 = arith.truncf %55 : vector<1x8x32xf32> to vector<1x8x32xbf16>
    %57 = vector.extract_strided_slice %35 {offsets = [0, 0, 32], sizes = [1, 8, 32], strides = [1, 1, 1]} : vector<1x8x128xbf16> to vector<1x8x32xbf16>
    %58 = vector.extract_strided_slice %36 {offsets = [0, 0, 32], sizes = [1, 16, 32], strides = [1, 1, 1]} : vector<1x16x128xbf16> to vector<1x16x32xbf16>
    "tpu.trace_start"() <{level = 10 : i32, message = "bqc,bkc->bqk"}> : () -> ()
    %cst_28 = arith.constant dense<0.000000e+00> : vector<1x8x16xf32>
    %59 = tpu.matmul %57, %58, %cst_28 {dimension_numbers = #tpu.dot_dimension_numbers<[2], [2], [1], [1], [0, 0, 0, 1, 1, 1], [0], [0]>} : vector<1x8x32xbf16>, vector<1x16x32xbf16>, vector<1x8x16xf32> -> vector<1x8x16xf32>
    "tpu.trace_stop"() : () -> ()
    %60 = arith.addf %59, %38 : vector<1x8x16xf32>
    %cst_29 = arith.constant dense<0xFF800000> : vector<1x8xf32>
    %61 = vector.multi_reduction <maximumf>, %60, %cst_29 [2] : vector<1x8x16xf32> to vector<1x8xf32>
    %62 = vector.shape_cast %61 : vector<1x8xf32> to vector<1x8x1xf32>
    %63 = vector.broadcast %62 : vector<1x8x1xf32> to vector<1x8x16xf32>
    %64 = arith.subf %60, %63 : vector<1x8x16xf32>
    %65 = math.exp %64 : vector<1x8x16xf32>
    %cst_30 = arith.constant dense<0.000000e+00> : vector<1x8xf32>
    %66 = vector.multi_reduction <add>, %65, %cst_30 [2] : vector<1x8x16xf32> to vector<1x8xf32>
    %67 = vector.shape_cast %66 : vector<1x8xf32> to vector<1x8x1xf32>
    %68 = tpu.reciprocal %67 {approx = true} : vector<1x8x1xf32> -> vector<1x8x1xf32>
    %69 = vector.broadcast %68 : vector<1x8x1xf32> to vector<1x8x16xf32>
    %70 = arith.mulf %65, %69 : vector<1x8x16xf32>
    %71 = arith.truncf %70 : vector<1x8x16xf32> to vector<1x8x16xbf16>
    %72 = vector.extract_strided_slice %37 {offsets = [0, 0, 32], sizes = [1, 16, 32], strides = [1, 1, 1]} : vector<1x16x128xbf16> to vector<1x16x32xbf16>
    "tpu.trace_start"() <{level = 10 : i32, message = "bqk,bkc->bqc"}> : () -> ()
    %cst_31 = arith.constant dense<0.000000e+00> : vector<1x8x32xf32>
    %73 = tpu.matmul %71, %72, %cst_31 {dimension_numbers = #tpu.dot_dimension_numbers<[2], [1], [1], [2], [0, 0, 0, 1, 1, 2], [0], [0]>} : vector<1x8x16xbf16>, vector<1x16x32xbf16>, vector<1x8x32xf32> -> vector<1x8x32xf32>
    "tpu.trace_stop"() : () -> ()
    %74 = arith.truncf %73 : vector<1x8x32xf32> to vector<1x8x32xbf16>
    %75 = vector.extract_strided_slice %35 {offsets = [0, 0, 64], sizes = [1, 8, 32], strides = [1, 1, 1]} : vector<1x8x128xbf16> to vector<1x8x32xbf16>
    %76 = vector.extract_strided_slice %36 {offsets = [0, 0, 64], sizes = [1, 16, 32], strides = [1, 1, 1]} : vector<1x16x128xbf16> to vector<1x16x32xbf16>
    "tpu.trace_start"() <{level = 10 : i32, message = "bqc,bkc->bqk"}> : () -> ()
    %cst_32 = arith.constant dense<0.000000e+00> : vector<1x8x16xf32>
    %77 = tpu.matmul %75, %76, %cst_32 {dimension_numbers = #tpu.dot_dimension_numbers<[2], [2], [1], [1], [0, 0, 0, 1, 1, 1], [0], [0]>} : vector<1x8x32xbf16>, vector<1x16x32xbf16>, vector<1x8x16xf32> -> vector<1x8x16xf32>
    "tpu.trace_stop"() : () -> ()
    %78 = arith.addf %77, %38 : vector<1x8x16xf32>
    %cst_33 = arith.constant dense<0xFF800000> : vector<1x8xf32>
    %79 = vector.multi_reduction <maximumf>, %78, %cst_33 [2] : vector<1x8x16xf32> to vector<1x8xf32>
    %80 = vector.shape_cast %79 : vector<1x8xf32> to vector<1x8x1xf32>
    %81 = vector.broadcast %80 : vector<1x8x1xf32> to vector<1x8x16xf32>
    %82 = arith.subf %78, %81 : vector<1x8x16xf32>
    %83 = math.exp %82 : vector<1x8x16xf32>
    %cst_34 = arith.constant dense<0.000000e+00> : vector<1x8xf32>
    %84 = vector.multi_reduction <add>, %83, %cst_34 [2] : vector<1x8x16xf32> to vector<1x8xf32>
    %85 = vector.shape_cast %84 : vector<1x8xf32> to vector<1x8x1xf32>
    %86 = tpu.reciprocal %85 {approx = true} : vector<1x8x1xf32> -> vector<1x8x1xf32>
    %87 = vector.broadcast %86 : vector<1x8x1xf32> to vector<1x8x16xf32>
    %88 = arith.mulf %83, %87 : vector<1x8x16xf32>
    %89 = arith.truncf %88 : vector<1x8x16xf32> to vector<1x8x16xbf16>
    %90 = vector.extract_strided_slice %37 {offsets = [0, 0, 64], sizes = [1, 16, 32], strides = [1, 1, 1]} : vector<1x16x128xbf16> to vector<1x16x32xbf16>
    "tpu.trace_start"() <{level = 10 : i32, message = "bqk,bkc->bqc"}> : () -> ()
    %cst_35 = arith.constant dense<0.000000e+00> : vector<1x8x32xf32>
    %91 = tpu.matmul %89, %90, %cst_35 {dimension_numbers = #tpu.dot_dimension_numbers<[2], [1], [1], [2], [0, 0, 0, 1, 1, 2], [0], [0]>} : vector<1x8x16xbf16>, vector<1x16x32xbf16>, vector<1x8x32xf32> -> vector<1x8x32xf32>
    "tpu.trace_stop"() : () -> ()
    %92 = arith.truncf %91 : vector<1x8x32xf32> to vector<1x8x32xbf16>
    %93 = vector.extract_strided_slice %35 {offsets = [0, 0, 96], sizes = [1, 8, 32], strides = [1, 1, 1]} : vector<1x8x128xbf16> to vector<1x8x32xbf16>
    %94 = vector.extract_strided_slice %36 {offsets = [0, 0, 96], sizes = [1, 16, 32], strides = [1, 1, 1]} : vector<1x16x128xbf16> to vector<1x16x32xbf16>
    "tpu.trace_start"() <{level = 10 : i32, message = "bqc,bkc->bqk"}> : () -> ()
    %cst_36 = arith.constant dense<0.000000e+00> : vector<1x8x16xf32>
    %95 = tpu.matmul %93, %94, %cst_36 {dimension_numbers = #tpu.dot_dimension_numbers<[2], [2], [1], [1], [0, 0, 0, 1, 1, 1], [0], [0]>} : vector<1x8x32xbf16>, vector<1x16x32xbf16>, vector<1x8x16xf32> -> vector<1x8x16xf32>
    "tpu.trace_stop"() : () -> ()
    %96 = arith.addf %95, %38 : vector<1x8x16xf32>
    %cst_37 = arith.constant dense<0xFF800000> : vector<1x8xf32>
    %97 = vector.multi_reduction <maximumf>, %96, %cst_37 [2] : vector<1x8x16xf32> to vector<1x8xf32>
    %98 = vector.shape_cast %97 : vector<1x8xf32> to vector<1x8x1xf32>
    %99 = vector.broadcast %98 : vector<1x8x1xf32> to vector<1x8x16xf32>
    %100 = arith.subf %96, %99 : vector<1x8x16xf32>
    %101 = math.exp %100 : vector<1x8x16xf32>
    %cst_38 = arith.constant dense<0.000000e+00> : vector<1x8xf32>
    %102 = vector.multi_reduction <add>, %101, %cst_38 [2] : vector<1x8x16xf32> to vector<1x8xf32>
    %103 = vector.shape_cast %102 : vector<1x8xf32> to vector<1x8x1xf32>
    %104 = tpu.reciprocal %103 {approx = true} : vector<1x8x1xf32> -> vector<1x8x1xf32>
    %105 = vector.broadcast %104 : vector<1x8x1xf32> to vector<1x8x16xf32>
    %106 = arith.mulf %101, %105 : vector<1x8x16xf32>
    %107 = arith.truncf %106 : vector<1x8x16xf32> to vector<1x8x16xbf16>
    %108 = vector.extract_strided_slice %37 {offsets = [0, 0, 96], sizes = [1, 16, 32], strides = [1, 1, 1]} : vector<1x16x128xbf16> to vector<1x16x32xbf16>
    "tpu.trace_start"() <{level = 10 : i32, message = "bqk,bkc->bqc"}> : () -> ()
    %cst_39 = arith.constant dense<0.000000e+00> : vector<1x8x32xf32>
    %109 = tpu.matmul %107, %108, %cst_39 {dimension_numbers = #tpu.dot_dimension_numbers<[2], [1], [1], [2], [0, 0, 0, 1, 1, 2], [0], [0]>} : vector<1x8x16xbf16>, vector<1x16x32xbf16>, vector<1x8x32xf32> -> vector<1x8x32xf32>
    "tpu.trace_stop"() : () -> ()
    %110 = arith.truncf %109 : vector<1x8x32xf32> to vector<1x8x32xbf16>
    %111 = tpu.concatenate %56, %74, %92, %110 in 2 : vector<1x8x32xbf16>, vector<1x8x32xbf16>, vector<1x8x32xbf16>, vector<1x8x32xbf16> -> vector<1x8x128xbf16>
    %112 = vector.shape_cast %111 : vector<1x8x128xbf16> to vector<8x128xbf16>
    %c0_40 = arith.constant 0 : index
    %c0_41 = arith.constant 0 : index
    %113 = vector.load %arg10[%c0_40, %c0_41] : memref<128x128xbf16, #tpu.memory_space<vmem>>, vector<128x128xbf16>
    %cst_42 = arith.constant dense<0.000000e+00> : vector<8x128xf32>
    %114 = tpu.matmul %112, %113, %cst_42 {dimension_numbers = #tpu.dot_dimension_numbers<[1], [0], [0], [1], [0, 0, 1, 1], [], []>} : vector<8x128xbf16>, vector<128x128xbf16>, vector<8x128xf32> -> vector<8x128xf32>
    %c0_43 = arith.constant 0 : index
    %c0_44 = arith.constant 0 : index
    %115 = vector.load %arg11[%c0_43, %c0_44] : memref<1x128xf32, #tpu.memory_space<vmem>>, vector<1x128xf32>
    %116 = vector.broadcast %115 : vector<1x128xf32> to vector<8x128xf32>
    %117 = arith.addf %114, %116 : vector<8x128xf32>
    %118 = vector.shape_cast %117 : vector<8x128xf32> to vector<1x8x128xf32>
    %119 = arith.addf %0, %118 : vector<1x8x128xf32>
    %c0_45 = arith.constant 0 : index
    %c0_46 = arith.constant 0 : index
    %c0_47 = arith.constant 0 : index
    %120 = vector.load %arg12[%c0_45, %c0_46, %c0_47] : memref<1x8x128xf32, #tpu.memory_space<vmem>>, vector<1x8x128xf32>
    tpu.vector_store %arg12[%c0_45, %c0_46, %c0_47], %119 {strides = array<i32>} : memref<1x8x128xf32, #tpu.memory_space<vmem>>, vector<1x8x128xf32>,
    return
  }
  func.func @transform_0(%arg0: i32, %arg1: i32) -> (i32, i32, i32) {
    %c0_i32 = arith.constant 0 : i32
    %c0_i32_0 = arith.constant 0 : i32
    return %arg0, %arg1, %c0_i32 : i32, i32, i32
  }
  func.func @transform_1(%arg0: i32, %arg1: i32) -> (i32, i32, i32) {
    %c0_i32 = arith.constant 0 : i32
    %c0_i32_0 = arith.constant 0 : i32
    %c0_i32_1 = arith.constant 0 : i32
    return %arg0, %c0_i32, %c0_i32_0 : i32, i32, i32
  }
  func.func @transform_2(%arg0: i32, %arg1: i32) -> (i32, i32, i32) {
    %c0_i32 = arith.constant 0 : i32
    %c0_i32_0 = arith.constant 0 : i32
    %c0_i32_1 = arith.constant 0 : i32
    return %arg0, %c0_i32, %c0_i32_0 : i32, i32, i32
  }
  func.func @transform_3(%arg0: i32, %arg1: i32) -> (i32, i32, i32) {
    %c0_i32 = arith.constant 0 : i32
    %c0_i32_0 = arith.constant 0 : i32
    %c0_i32_1 = arith.constant 0 : i32
    return %c0_i32, %arg1, %c0_i32_0 : i32, i32, i32
  }
  func.func @transform_4(%arg0: i32, %arg1: i32) -> (i32, i32) {
    %c0_i32 = arith.constant 0 : i32
    %c0_i32_0 = arith.constant 0 : i32
    %c0_i32_1 = arith.constant 0 : i32
    return %c0_i32, %c0_i32_0 : i32, i32
  }
  func.func @transform_5(%arg0: i32, %arg1: i32) -> (i32, i32) {
    %c0_i32 = arith.constant 0 : i32
    %c0_i32_0 = arith.constant 0 : i32
    %c0_i32_1 = arith.constant 0 : i32
    return %c0_i32, %c0_i32_0 : i32, i32
  }
  func.func @transform_6(%arg0: i32, %arg1: i32) -> (i32, i32) {
    %c0_i32 = arith.constant 0 : i32
    %c0_i32_0 = arith.constant 0 : i32
    %c0_i32_1 = arith.constant 0 : i32
    return %c0_i32, %c0_i32_0 : i32, i32
  }
  func.func @transform_7(%arg0: i32, %arg1: i32) -> (i32, i32) {
    %c0_i32 = arith.constant 0 : i32
    %c0_i32_0 = arith.constant 0 : i32
    %c0_i32_1 = arith.constant 0 : i32
    return %c0_i32, %c0_i32_0 : i32, i32
  }
  func.func @transform_8(%arg0: i32, %arg1: i32) -> (i32, i32) {
    %c0_i32 = arith.constant 0 : i32
    %c0_i32_0 = arith.constant 0 : i32
    %c0_i32_1 = arith.constant 0 : i32
    return %c0_i32, %c0_i32_0 : i32, i32
  }
  func.func @transform_9(%arg0: i32, %arg1: i32) -> (i32, i32) {
    %c0_i32 = arith.constant 0 : i32
    %c0_i32_0 = arith.constant 0 : i32
    %c0_i32_1 = arith.constant 0 : i32
    return %c0_i32, %c0_i32_0 : i32, i32
  }
  func.func @transform_10(%arg0: i32, %arg1: i32) -> (i32, i32, i32) {
    %c0_i32 = arith.constant 0 : i32
    %c0_i32_0 = arith.constant 0 : i32
    return %arg0, %arg1, %c0_i32 : i32, i32, i32
  }
}

module attributes {stable_mosaic.version = 11 : i64} {
  func.func @_ffn_kernel(%arg0: i32, %arg1: i32, %arg2: memref<1x8x128xf32, #tpu.memory_space<vmem>>, %arg3: memref<1x128xf32, #tpu.memory_space<vmem>>, %arg4: memref<1x128xf32, #tpu.memory_space<vmem>>, %arg5: memref<128x256xbf16, #tpu.memory_space<vmem>>, %arg6: memref<1x256xf32, #tpu.memory_space<vmem>>, %arg7: memref<256x128xbf16, #tpu.memory_space<vmem>>, %arg8: memref<1x128xf32, #tpu.memory_space<vmem>>, %arg9: memref<1x8x128xf32, #tpu.memory_space<vmem>>) attributes {dimension_semantics = [#tpu.dimension_semantics<parallel>, #tpu.dimension_semantics<parallel>], iteration_bounds = array<i64: 2, 1>, scalar_prefetch = 0 : i64, scratch_operands = 0 : i64, tpu.core_type = #tpu.core_type<tc>, window_params = [{transform_indices = @transform_0, window_bounds = array<i64: 1, 8, 128>}, {pipeline_mode = #tpu.pipeline_mode<synchronous>, transform_indices = @transform_1, window_bounds = array<i64: 1, 128>}, {pipeline_mode = #tpu.pipeline_mode<synchronous>, transform_indices = @transform_2, window_bounds = array<i64: 1, 128>}, {pipeline_mode = #tpu.pipeline_mode<synchronous>, transform_indices = @transform_3, window_bounds = array<i64: 128, 256>}, {pipeline_mode = #tpu.pipeline_mode<synchronous>, transform_indices = @transform_4, window_bounds = array<i64: 1, 256>}, {pipeline_mode = #tpu.pipeline_mode<synchronous>, transform_indices = @transform_5, window_bounds = array<i64: 256, 128>}, {pipeline_mode = #tpu.pipeline_mode<synchronous>, transform_indices = @transform_6, window_bounds = array<i64: 1, 128>}, {transform_indices = @transform_7, window_bounds = array<i64: 1, 8, 128>}]} {
    %c0 = arith.constant 0 : index
    %c0_0 = arith.constant 0 : index
    %c0_1 = arith.constant 0 : index
    %0 = vector.load %arg2[%c0, %c0_0, %c0_1] : memref<1x8x128xf32, #tpu.memory_space<vmem>>, vector<1x8x128xf32>
    %c0_2 = arith.constant 0 : index
    %c0_3 = arith.constant 0 : index
    %1 = vector.load %arg3[%c0_2, %c0_3] : memref<1x128xf32, #tpu.memory_space<vmem>>, vector<1x128xf32>
    %c0_4 = arith.constant 0 : index
    %c0_5 = arith.constant 0 : index
    %2 = vector.load %arg4[%c0_4, %c0_5] : memref<1x128xf32, #tpu.memory_space<vmem>>, vector<1x128xf32>
    %cst = arith.constant dense<0.000000e+00> : vector<1x8xf32>
    %3 = vector.multi_reduction <add>, %0, %cst [2] : vector<1x8x128xf32> to vector<1x8xf32>
    %4 = vector.shape_cast %3 : vector<1x8xf32> to vector<1x8x1xf32>
    %cst_6 = arith.constant 1.280000e+02 : f32
    %5 = vector.broadcast %cst_6 : f32 to vector<1x8x1xf32>
    %6 = arith.divf %4, %5 : vector<1x8x1xf32>
    %7 = vector.broadcast %6 : vector<1x8x1xf32> to vector<1x8x128xf32>
    %8 = arith.subf %0, %7 : vector<1x8x128xf32>
    %9 = arith.mulf %8, %8 : vector<1x8x128xf32>
    %cst_7 = arith.constant dense<0.000000e+00> : vector<1x8xf32>
    %10 = vector.multi_reduction <add>, %9, %cst_7 [2] : vector<1x8x128xf32> to vector<1x8xf32>
    %11 = vector.shape_cast %10 : vector<1x8xf32> to vector<1x8x1xf32>
    %cst_8 = arith.constant 0.00787401571 : f32
    %12 = vector.broadcast %cst_8 : f32 to vector<1x8x1xf32>
    %13 = arith.mulf %11, %12 : vector<1x8x1xf32>
    %14 = vector.broadcast %6 : vector<1x8x1xf32> to vector<1x8x128xf32>
    %15 = arith.subf %0, %14 : vector<1x8x128xf32>
    %16 = vector.shape_cast %1 : vector<1x128xf32> to vector<1x1x128xf32>
    %17 = vector.broadcast %16 : vector<1x1x128xf32> to vector<1x8x128xf32>
    %18 = arith.mulf %17, %15 : vector<1x8x128xf32>
    %19 = math.sqrt %13 : vector<1x8x1xf32>
    %cst_9 = arith.constant 9.99999997E-7 : f32
    %20 = vector.broadcast %cst_9 : f32 to vector<1x8x1xf32>
    %21 = arith.addf %19, %20 : vector<1x8x1xf32>
    %22 = vector.broadcast %21 : vector<1x8x1xf32> to vector<1x8x128xf32>
    %23 = arith.divf %18, %22 : vector<1x8x128xf32>
    %24 = vector.shape_cast %2 : vector<1x128xf32> to vector<1x1x128xf32>
    %25 = vector.broadcast %24 : vector<1x1x128xf32> to vector<1x8x128xf32>
    %26 = arith.addf %23, %25 : vector<1x8x128xf32>
    %27 = vector.shape_cast %26 : vector<1x8x128xf32> to vector<8x128xf32>
    %28 = arith.truncf %27 : vector<8x128xf32> to vector<8x128xbf16>
    %c0_10 = arith.constant 0 : index
    %c0_11 = arith.constant 0 : index
    %29 = vector.load %arg5[%c0_10, %c0_11] : memref<128x256xbf16, #tpu.memory_space<vmem>>, vector<128x256xbf16>
    %cst_12 = arith.constant dense<0.000000e+00> : vector<8x256xf32>
    %30 = tpu.matmul %28, %29, %cst_12 {dimension_numbers = #tpu.dot_dimension_numbers<[1], [0], [0], [1], [0, 0, 1, 1], [], []>} : vector<8x128xbf16>, vector<128x256xbf16>, vector<8x256xf32> -> vector<8x256xf32>
    %c0_13 = arith.constant 0 : index
    %c0_14 = arith.constant 0 : index
    %31 = vector.load %arg6[%c0_13, %c0_14] : memref<1x256xf32, #tpu.memory_space<vmem>>, vector<1x256xf32>
    %32 = vector.broadcast %31 : vector<1x256xf32> to vector<8x256xf32>
    %33 = arith.addf %30, %32 : vector<8x256xf32>
    %cst_15 = arith.constant 0.000000e+00 : f32
    %34 = vector.broadcast %cst_15 : f32 to vector<8x256xf32>
    %35 = arith.maximumf %33, %34 : vector<8x256xf32>
    %36 = arith.truncf %35 : vector<8x256xf32> to vector<8x256xbf16>
    %c0_16 = arith.constant 0 : index
    %c0_17 = arith.constant 0 : index
    %37 = vector.load %arg7[%c0_16, %c0_17] : memref<256x128xbf16, #tpu.memory_space<vmem>>, vector<256x128xbf16>
    %cst_18 = arith.constant dense<0.000000e+00> : vector<8x128xf32>
    %38 = tpu.matmul %36, %37, %cst_18 {dimension_numbers = #tpu.dot_dimension_numbers<[1], [0], [0], [1], [0, 0, 1, 1], [], []>} : vector<8x256xbf16>, vector<256x128xbf16>, vector<8x128xf32> -> vector<8x128xf32>
    %c0_19 = arith.constant 0 : index
    %c0_20 = arith.constant 0 : index
    %39 = vector.load %arg8[%c0_19, %c0_20] : memref<1x128xf32, #tpu.memory_space<vmem>>, vector<1x128xf32>
    %40 = vector.broadcast %39 : vector<1x128xf32> to vector<8x128xf32>
    %41 = arith.addf %38, %40 : vector<8x128xf32>
    %42 = vector.shape_cast %41 : vector<8x128xf32> to vector<1x8x128xf32>
    %43 = arith.addf %0, %42 : vector<1x8x128xf32>
    %c0_21 = arith.constant 0 : index
    %c0_22 = arith.constant 0 : index
    %c0_23 = arith.constant 0 : index
    %44 = vector.load %arg9[%c0_21, %c0_22, %c0_23] : memref<1x8x128xf32, #tpu.memory_space<vmem>>, vector<1x8x128xf32>
    tpu.vector_store %arg9[%c0_21, %c0_22, %c0_23], %43 {strides = array<i32>} : memref<1x8x128xf32, #tpu.memory_space<vmem>>, vector<1x8x128xf32>,
    return
  }
  func.func @transform_0(%arg0: i32, %arg1: i32) -> (i32, i32, i32) {
    %c0_i32 = arith.constant 0 : i32
    %c0_i32_0 = arith.constant 0 : i32
    return %arg0, %arg1, %c0_i32 : i32, i32, i32
  }
  func.func @transform_1(%arg0: i32, %arg1: i32) -> (i32, i32) {
    %c0_i32 = arith.constant 0 : i32
    %c0_i32_0 = arith.constant 0 : i32
    %c0_i32_1 = arith.constant 0 : i32
    return %c0_i32, %c0_i32_0 : i32, i32
  }
  func.func @transform_2(%arg0: i32, %arg1: i32) -> (i32, i32) {
    %c0_i32 = arith.constant 0 : i32
    %c0_i32_0 = arith.constant 0 : i32
    %c0_i32_1 = arith.constant 0 : i32
    return %c0_i32, %c0_i32_0 : i32, i32
  }
  func.func @transform_3(%arg0: i32, %arg1: i32) -> (i32, i32) {
    %c0_i32 = arith.constant 0 : i32
    %c0_i32_0 = arith.constant 0 : i32
    %c0_i32_1 = arith.constant 0 : i32
    return %c0_i32, %c0_i32_0 : i32, i32
  }
  func.func @transform_4(%arg0: i32, %arg1: i32) -> (i32, i32) {
    %c0_i32 = arith.constant 0 : i32
    %c0_i32_0 = arith.constant 0 : i32
    %c0_i32_1 = arith.constant 0 : i32
    return %c0_i32, %c0_i32_0 : i32, i32
  }
  func.func @transform_5(%arg0: i32, %arg1: i32) -> (i32, i32) {
    %c0_i32 = arith.constant 0 : i32
    %c0_i32_0 = arith.constant 0 : i32
    %c0_i32_1 = arith.constant 0 : i32
    return %c0_i32, %c0_i32_0 : i32, i32
  }
  func.func @transform_6(%arg0: i32, %arg1: i32) -> (i32, i32) {
    %c0_i32 = arith.constant 0 : i32
    %c0_i32_0 = arith.constant 0 : i32
    %c0_i32_1 = arith.constant 0 : i32
    return %c0_i32, %c0_i32_0 : i32, i32
  }
  func.func @transform_7(%arg0: i32, %arg1: i32) -> (i32, i32, i32) {
    %c0_i32 = arith.constant 0 : i32
    %c0_i32_0 = arith.constant 0 : i32
    return %arg0, %arg1, %c0_i32 : i32, i32, i32
  }
}

module attributes {stable_mosaic.version = 11 : i64} {
  func.func @_self_attn_kernel(%arg0: i32, %arg1: memref<1x8x128xf32, #tpu.memory_space<vmem>>, %arg2: memref<1x8x8xf32, #tpu.memory_space<vmem>>, %arg3: memref<1x128xf32, #tpu.memory_space<vmem>>, %arg4: memref<1x128xf32, #tpu.memory_space<vmem>>, %arg5: memref<128x384xbf16, #tpu.memory_space<vmem>>, %arg6: memref<1x384xf32, #tpu.memory_space<vmem>>, %arg7: memref<128x128xbf16, #tpu.memory_space<vmem>>, %arg8: memref<1x128xf32, #tpu.memory_space<vmem>>, %arg9: memref<1x8x128xf32, #tpu.memory_space<vmem>>) attributes {dimension_semantics = [#tpu.dimension_semantics<parallel>], iteration_bounds = array<i64: 2>, scalar_prefetch = 0 : i64, scratch_operands = 0 : i64, tpu.core_type = #tpu.core_type<tc>, window_params = [{transform_indices = @transform_0, window_bounds = array<i64: 1, 8, 128>}, {pipeline_mode = #tpu.pipeline_mode<synchronous>, transform_indices = @transform_1, window_bounds = array<i64: 1, 8, 8>}, {pipeline_mode = #tpu.pipeline_mode<synchronous>, transform_indices = @transform_2, window_bounds = array<i64: 1, 128>}, {pipeline_mode = #tpu.pipeline_mode<synchronous>, transform_indices = @transform_3, window_bounds = array<i64: 1, 128>}, {pipeline_mode = #tpu.pipeline_mode<synchronous>, transform_indices = @transform_4, window_bounds = array<i64: 128, 384>}, {pipeline_mode = #tpu.pipeline_mode<synchronous>, transform_indices = @transform_5, window_bounds = array<i64: 1, 384>}, {pipeline_mode = #tpu.pipeline_mode<synchronous>, transform_indices = @transform_6, window_bounds = array<i64: 128, 128>}, {pipeline_mode = #tpu.pipeline_mode<synchronous>, transform_indices = @transform_7, window_bounds = array<i64: 1, 128>}, {transform_indices = @transform_8, window_bounds = array<i64: 1, 8, 128>}]} {
    %c0 = arith.constant 0 : index
    %c0_0 = arith.constant 0 : index
    %c0_1 = arith.constant 0 : index
    %0 = vector.load %arg1[%c0, %c0_0, %c0_1] : memref<1x8x128xf32, #tpu.memory_space<vmem>>, vector<1x8x128xf32>
    %c0_2 = arith.constant 0 : index
    %c0_3 = arith.constant 0 : index
    %1 = vector.load %arg3[%c0_2, %c0_3] : memref<1x128xf32, #tpu.memory_space<vmem>>, vector<1x128xf32>
    %c0_4 = arith.constant 0 : index
    %c0_5 = arith.constant 0 : index
    %2 = vector.load %arg4[%c0_4, %c0_5] : memref<1x128xf32, #tpu.memory_space<vmem>>, vector<1x128xf32>
    %cst = arith.constant dense<0.000000e+00> : vector<1x8xf32>
    %3 = vector.multi_reduction <add>, %0, %cst [2] : vector<1x8x128xf32> to vector<1x8xf32>
    %4 = vector.shape_cast %3 : vector<1x8xf32> to vector<1x8x1xf32>
    %cst_6 = arith.constant 1.280000e+02 : f32
    %5 = vector.broadcast %cst_6 : f32 to vector<1x8x1xf32>
    %6 = arith.divf %4, %5 : vector<1x8x1xf32>
    %7 = vector.broadcast %6 : vector<1x8x1xf32> to vector<1x8x128xf32>
    %8 = arith.subf %0, %7 : vector<1x8x128xf32>
    %9 = arith.mulf %8, %8 : vector<1x8x128xf32>
    %cst_7 = arith.constant dense<0.000000e+00> : vector<1x8xf32>
    %10 = vector.multi_reduction <add>, %9, %cst_7 [2] : vector<1x8x128xf32> to vector<1x8xf32>
    %11 = vector.shape_cast %10 : vector<1x8xf32> to vector<1x8x1xf32>
    %cst_8 = arith.constant 0.00787401571 : f32
    %12 = vector.broadcast %cst_8 : f32 to vector<1x8x1xf32>
    %13 = arith.mulf %11, %12 : vector<1x8x1xf32>
    %14 = vector.broadcast %6 : vector<1x8x1xf32> to vector<1x8x128xf32>
    %15 = arith.subf %0, %14 : vector<1x8x128xf32>
    %16 = vector.shape_cast %1 : vector<1x128xf32> to vector<1x1x128xf32>
    %17 = vector.broadcast %16 : vector<1x1x128xf32> to vector<1x8x128xf32>
    %18 = arith.mulf %17, %15 : vector<1x8x128xf32>
    %19 = math.sqrt %13 : vector<1x8x1xf32>
    %cst_9 = arith.constant 9.99999997E-7 : f32
    %20 = vector.broadcast %cst_9 : f32 to vector<1x8x1xf32>
    %21 = arith.addf %19, %20 : vector<1x8x1xf32>
    %22 = vector.broadcast %21 : vector<1x8x1xf32> to vector<1x8x128xf32>
    %23 = arith.divf %18, %22 : vector<1x8x128xf32>
    %24 = vector.shape_cast %2 : vector<1x128xf32> to vector<1x1x128xf32>
    %25 = vector.broadcast %24 : vector<1x1x128xf32> to vector<1x8x128xf32>
    %26 = arith.addf %23, %25 : vector<1x8x128xf32>
    %27 = vector.shape_cast %26 : vector<1x8x128xf32> to vector<8x128xf32>
    %28 = arith.truncf %27 : vector<8x128xf32> to vector<8x128xbf16>
    %c0_10 = arith.constant 0 : index
    %c0_11 = arith.constant 0 : index
    %29 = vector.load %arg5[%c0_10, %c0_11] : memref<128x384xbf16, #tpu.memory_space<vmem>>, vector<128x384xbf16>
    %cst_12 = arith.constant dense<0.000000e+00> : vector<8x384xf32>
    %30 = tpu.matmul %28, %29, %cst_12 {dimension_numbers = #tpu.dot_dimension_numbers<[1], [0], [0], [1], [0, 0, 1, 1], [], []>} : vector<8x128xbf16>, vector<128x384xbf16>, vector<8x384xf32> -> vector<8x384xf32>
    %c0_13 = arith.constant 0 : index
    %c0_14 = arith.constant 0 : index
    %31 = vector.load %arg6[%c0_13, %c0_14] : memref<1x384xf32, #tpu.memory_space<vmem>>, vector<1x384xf32>
    %32 = vector.broadcast %31 : vector<1x384xf32> to vector<8x384xf32>
    %33 = arith.addf %30, %32 : vector<8x384xf32>
    %34 = arith.truncf %33 : vector<8x384xf32> to vector<8x384xbf16>
    %35 = vector.shape_cast %34 : vector<8x384xbf16> to vector<1x8x384xbf16>
    %36 = vector.extract_strided_slice %35 {offsets = [0, 0, 0], sizes = [1, 8, 128], strides = [1, 1, 1]} : vector<1x8x384xbf16> to vector<1x8x128xbf16>
    %37 = vector.extract_strided_slice %35 {offsets = [0, 0, 128], sizes = [1, 8, 128], strides = [1, 1, 1]} : vector<1x8x384xbf16> to vector<1x8x128xbf16>
    %38 = vector.extract_strided_slice %35 {offsets = [0, 0, 256], sizes = [1, 8, 128], strides = [1, 1, 1]} : vector<1x8x384xbf16> to vector<1x8x128xbf16>
    %c0_15 = arith.constant 0 : index
    %c0_16 = arith.constant 0 : index
    %c0_17 = arith.constant 0 : index
    %39 = vector.load %arg2[%c0_15, %c0_16, %c0_17] : memref<1x8x8xf32, #tpu.memory_space<vmem>>, vector<1x8x8xf32>
    %40 = vector.extract_strided_slice %36 {offsets = [0, 0, 0], sizes = [1, 8, 32], strides = [1, 1, 1]} : vector<1x8x128xbf16> to vector<1x8x32xbf16>
    %41 = vector.extract_strided_slice %37 {offsets = [0, 0, 0], sizes = [1, 8, 32], strides = [1, 1, 1]} : vector<1x8x128xbf16> to vector<1x8x32xbf16>
    "tpu.trace_start"() <{level = 10 : i32, message = "bqc,bkc->bqk"}> : () -> ()
    %cst_18 = arith.constant dense<0.000000e+00> : vector<1x8x8xf32>
    %42 = tpu.matmul %40, %41, %cst_18 {dimension_numbers = #tpu.dot_dimension_numbers<[2], [2], [1], [1], [0, 0, 0, 1, 1, 1], [0], [0]>} : vector<1x8x32xbf16>, vector<1x8x32xbf16>, vector<1x8x8xf32> -> vector<1x8x8xf32>
    "tpu.trace_stop"() : () -> ()
    %43 = arith.addf %42, %39 : vector<1x8x8xf32>
    %cst_19 = arith.constant dense<0xFF800000> : vector<1x8xf32>
    %44 = vector.multi_reduction <maximumf>, %43, %cst_19 [2] : vector<1x8x8xf32> to vector<1x8xf32>
    %45 = vector.shape_cast %44 : vector<1x8xf32> to vector<1x8x1xf32>
    %46 = vector.broadcast %45 : vector<1x8x1xf32> to vector<1x8x8xf32>
    %47 = arith.subf %43, %46 : vector<1x8x8xf32>
    %48 = math.exp %47 : vector<1x8x8xf32>
    %cst_20 = arith.constant dense<0.000000e+00> : vector<1x8xf32>
    %49 = vector.multi_reduction <add>, %48, %cst_20 [2] : vector<1x8x8xf32> to vector<1x8xf32>
    %50 = vector.shape_cast %49 : vector<1x8xf32> to vector<1x8x1xf32>
    %51 = tpu.reciprocal %50 {approx = true} : vector<1x8x1xf32> -> vector<1x8x1xf32>
    %52 = vector.broadcast %51 : vector<1x8x1xf32> to vector<1x8x8xf32>
    %53 = arith.mulf %48, %52 : vector<1x8x8xf32>
    %54 = arith.truncf %53 : vector<1x8x8xf32> to vector<1x8x8xbf16>
    %55 = vector.extract_strided_slice %38 {offsets = [0, 0, 0], sizes = [1, 8, 32], strides = [1, 1, 1]} : vector<1x8x128xbf16> to vector<1x8x32xbf16>
    "tpu.trace_start"() <{level = 10 : i32, message = "bqk,bkc->bqc"}> : () -> ()
    %cst_21 = arith.constant dense<0.000000e+00> : vector<1x8x32xf32>
    %56 = tpu.matmul %54, %55, %cst_21 {dimension_numbers = #tpu.dot_dimension_numbers<[2], [1], [1], [2], [0, 0, 0, 1, 1, 2], [0], [0]>} : vector<1x8x8xbf16>, vector<1x8x32xbf16>, vector<1x8x32xf32> -> vector<1x8x32xf32>
    "tpu.trace_stop"() : () -> ()
    %57 = arith.truncf %56 : vector<1x8x32xf32> to vector<1x8x32xbf16>
    %58 = vector.extract_strided_slice %36 {offsets = [0, 0, 32], sizes = [1, 8, 32], strides = [1, 1, 1]} : vector<1x8x128xbf16> to vector<1x8x32xbf16>
    %59 = vector.extract_strided_slice %37 {offsets = [0, 0, 32], sizes = [1, 8, 32], strides = [1, 1, 1]} : vector<1x8x128xbf16> to vector<1x8x32xbf16>
    "tpu.trace_start"() <{level = 10 : i32, message = "bqc,bkc->bqk"}> : () -> ()
    %cst_22 = arith.constant dense<0.000000e+00> : vector<1x8x8xf32>
    %60 = tpu.matmul %58, %59, %cst_22 {dimension_numbers = #tpu.dot_dimension_numbers<[2], [2], [1], [1], [0, 0, 0, 1, 1, 1], [0], [0]>} : vector<1x8x32xbf16>, vector<1x8x32xbf16>, vector<1x8x8xf32> -> vector<1x8x8xf32>
    "tpu.trace_stop"() : () -> ()
    %61 = arith.addf %60, %39 : vector<1x8x8xf32>
    %cst_23 = arith.constant dense<0xFF800000> : vector<1x8xf32>
    %62 = vector.multi_reduction <maximumf>, %61, %cst_23 [2] : vector<1x8x8xf32> to vector<1x8xf32>
    %63 = vector.shape_cast %62 : vector<1x8xf32> to vector<1x8x1xf32>
    %64 = vector.broadcast %63 : vector<1x8x1xf32> to vector<1x8x8xf32>
    %65 = arith.subf %61, %64 : vector<1x8x8xf32>
    %66 = math.exp %65 : vector<1x8x8xf32>
    %cst_24 = arith.constant dense<0.000000e+00> : vector<1x8xf32>
    %67 = vector.multi_reduction <add>, %66, %cst_24 [2] : vector<1x8x8xf32> to vector<1x8xf32>
    %68 = vector.shape_cast %67 : vector<1x8xf32> to vector<1x8x1xf32>
    %69 = tpu.reciprocal %68 {approx = true} : vector<1x8x1xf32> -> vector<1x8x1xf32>
    %70 = vector.broadcast %69 : vector<1x8x1xf32> to vector<1x8x8xf32>
    %71 = arith.mulf %66, %70 : vector<1x8x8xf32>
    %72 = arith.truncf %71 : vector<1x8x8xf32> to vector<1x8x8xbf16>
    %73 = vector.extract_strided_slice %38 {offsets = [0, 0, 32], sizes = [1, 8, 32], strides = [1, 1, 1]} : vector<1x8x128xbf16> to vector<1x8x32xbf16>
    "tpu.trace_start"() <{level = 10 : i32, message = "bqk,bkc->bqc"}> : () -> ()
    %cst_25 = arith.constant dense<0.000000e+00> : vector<1x8x32xf32>
    %74 = tpu.matmul %72, %73, %cst_25 {dimension_numbers = #tpu.dot_dimension_numbers<[2], [1], [1], [2], [0, 0, 0, 1, 1, 2], [0], [0]>} : vector<1x8x8xbf16>, vector<1x8x32xbf16>, vector<1x8x32xf32> -> vector<1x8x32xf32>
    "tpu.trace_stop"() : () -> ()
    %75 = arith.truncf %74 : vector<1x8x32xf32> to vector<1x8x32xbf16>
    %76 = vector.extract_strided_slice %36 {offsets = [0, 0, 64], sizes = [1, 8, 32], strides = [1, 1, 1]} : vector<1x8x128xbf16> to vector<1x8x32xbf16>
    %77 = vector.extract_strided_slice %37 {offsets = [0, 0, 64], sizes = [1, 8, 32], strides = [1, 1, 1]} : vector<1x8x128xbf16> to vector<1x8x32xbf16>
    "tpu.trace_start"() <{level = 10 : i32, message = "bqc,bkc->bqk"}> : () -> ()
    %cst_26 = arith.constant dense<0.000000e+00> : vector<1x8x8xf32>
    %78 = tpu.matmul %76, %77, %cst_26 {dimension_numbers = #tpu.dot_dimension_numbers<[2], [2], [1], [1], [0, 0, 0, 1, 1, 1], [0], [0]>} : vector<1x8x32xbf16>, vector<1x8x32xbf16>, vector<1x8x8xf32> -> vector<1x8x8xf32>
    "tpu.trace_stop"() : () -> ()
    %79 = arith.addf %78, %39 : vector<1x8x8xf32>
    %cst_27 = arith.constant dense<0xFF800000> : vector<1x8xf32>
    %80 = vector.multi_reduction <maximumf>, %79, %cst_27 [2] : vector<1x8x8xf32> to vector<1x8xf32>
    %81 = vector.shape_cast %80 : vector<1x8xf32> to vector<1x8x1xf32>
    %82 = vector.broadcast %81 : vector<1x8x1xf32> to vector<1x8x8xf32>
    %83 = arith.subf %79, %82 : vector<1x8x8xf32>
    %84 = math.exp %83 : vector<1x8x8xf32>
    %cst_28 = arith.constant dense<0.000000e+00> : vector<1x8xf32>
    %85 = vector.multi_reduction <add>, %84, %cst_28 [2] : vector<1x8x8xf32> to vector<1x8xf32>
    %86 = vector.shape_cast %85 : vector<1x8xf32> to vector<1x8x1xf32>
    %87 = tpu.reciprocal %86 {approx = true} : vector<1x8x1xf32> -> vector<1x8x1xf32>
    %88 = vector.broadcast %87 : vector<1x8x1xf32> to vector<1x8x8xf32>
    %89 = arith.mulf %84, %88 : vector<1x8x8xf32>
    %90 = arith.truncf %89 : vector<1x8x8xf32> to vector<1x8x8xbf16>
    %91 = vector.extract_strided_slice %38 {offsets = [0, 0, 64], sizes = [1, 8, 32], strides = [1, 1, 1]} : vector<1x8x128xbf16> to vector<1x8x32xbf16>
    "tpu.trace_start"() <{level = 10 : i32, message = "bqk,bkc->bqc"}> : () -> ()
    %cst_29 = arith.constant dense<0.000000e+00> : vector<1x8x32xf32>
    %92 = tpu.matmul %90, %91, %cst_29 {dimension_numbers = #tpu.dot_dimension_numbers<[2], [1], [1], [2], [0, 0, 0, 1, 1, 2], [0], [0]>} : vector<1x8x8xbf16>, vector<1x8x32xbf16>, vector<1x8x32xf32> -> vector<1x8x32xf32>
    "tpu.trace_stop"() : () -> ()
    %93 = arith.truncf %92 : vector<1x8x32xf32> to vector<1x8x32xbf16>
    %94 = vector.extract_strided_slice %36 {offsets = [0, 0, 96], sizes = [1, 8, 32], strides = [1, 1, 1]} : vector<1x8x128xbf16> to vector<1x8x32xbf16>
    %95 = vector.extract_strided_slice %37 {offsets = [0, 0, 96], sizes = [1, 8, 32], strides = [1, 1, 1]} : vector<1x8x128xbf16> to vector<1x8x32xbf16>
    "tpu.trace_start"() <{level = 10 : i32, message = "bqc,bkc->bqk"}> : () -> ()
    %cst_30 = arith.constant dense<0.000000e+00> : vector<1x8x8xf32>
    %96 = tpu.matmul %94, %95, %cst_30 {dimension_numbers = #tpu.dot_dimension_numbers<[2], [2], [1], [1], [0, 0, 0, 1, 1, 1], [0], [0]>} : vector<1x8x32xbf16>, vector<1x8x32xbf16>, vector<1x8x8xf32> -> vector<1x8x8xf32>
    "tpu.trace_stop"() : () -> ()
    %97 = arith.addf %96, %39 : vector<1x8x8xf32>
    %cst_31 = arith.constant dense<0xFF800000> : vector<1x8xf32>
    %98 = vector.multi_reduction <maximumf>, %97, %cst_31 [2] : vector<1x8x8xf32> to vector<1x8xf32>
    %99 = vector.shape_cast %98 : vector<1x8xf32> to vector<1x8x1xf32>
    %100 = vector.broadcast %99 : vector<1x8x1xf32> to vector<1x8x8xf32>
    %101 = arith.subf %97, %100 : vector<1x8x8xf32>
    %102 = math.exp %101 : vector<1x8x8xf32>
    %cst_32 = arith.constant dense<0.000000e+00> : vector<1x8xf32>
    %103 = vector.multi_reduction <add>, %102, %cst_32 [2] : vector<1x8x8xf32> to vector<1x8xf32>
    %104 = vector.shape_cast %103 : vector<1x8xf32> to vector<1x8x1xf32>
    %105 = tpu.reciprocal %104 {approx = true} : vector<1x8x1xf32> -> vector<1x8x1xf32>
    %106 = vector.broadcast %105 : vector<1x8x1xf32> to vector<1x8x8xf32>
    %107 = arith.mulf %102, %106 : vector<1x8x8xf32>
    %108 = arith.truncf %107 : vector<1x8x8xf32> to vector<1x8x8xbf16>
    %109 = vector.extract_strided_slice %38 {offsets = [0, 0, 96], sizes = [1, 8, 32], strides = [1, 1, 1]} : vector<1x8x128xbf16> to vector<1x8x32xbf16>
    "tpu.trace_start"() <{level = 10 : i32, message = "bqk,bkc->bqc"}> : () -> ()
    %cst_33 = arith.constant dense<0.000000e+00> : vector<1x8x32xf32>
    %110 = tpu.matmul %108, %109, %cst_33 {dimension_numbers = #tpu.dot_dimension_numbers<[2], [1], [1], [2], [0, 0, 0, 1, 1, 2], [0], [0]>} : vector<1x8x8xbf16>, vector<1x8x32xbf16>, vector<1x8x32xf32> -> vector<1x8x32xf32>
    "tpu.trace_stop"() : () -> ()
    %111 = arith.truncf %110 : vector<1x8x32xf32> to vector<1x8x32xbf16>
    %112 = tpu.concatenate %57, %75, %93, %111 in 2 : vector<1x8x32xbf16>, vector<1x8x32xbf16>, vector<1x8x32xbf16>, vector<1x8x32xbf16> -> vector<1x8x128xbf16>
    %113 = vector.shape_cast %112 : vector<1x8x128xbf16> to vector<8x128xbf16>
    %c0_34 = arith.constant 0 : index
    %c0_35 = arith.constant 0 : index
    %114 = vector.load %arg7[%c0_34, %c0_35] : memref<128x128xbf16, #tpu.memory_space<vmem>>, vector<128x128xbf16>
    %cst_36 = arith.constant dense<0.000000e+00> : vector<8x128xf32>
    %115 = tpu.matmul %113, %114, %cst_36 {dimension_numbers = #tpu.dot_dimension_numbers<[1], [0], [0], [1], [0, 0, 1, 1], [], []>} : vector<8x128xbf16>, vector<128x128xbf16>, vector<8x128xf32> -> vector<8x128xf32>
    %c0_37 = arith.constant 0 : index
    %c0_38 = arith.constant 0 : index
    %116 = vector.load %arg8[%c0_37, %c0_38] : memref<1x128xf32, #tpu.memory_space<vmem>>, vector<1x128xf32>
    %117 = vector.broadcast %116 : vector<1x128xf32> to vector<8x128xf32>
    %118 = arith.addf %115, %117 : vector<8x128xf32>
    %119 = vector.shape_cast %118 : vector<8x128xf32> to vector<1x8x128xf32>
    %120 = arith.addf %0, %119 : vector<1x8x128xf32>
    %c0_39 = arith.constant 0 : index
    %c0_40 = arith.constant 0 : index
    %c0_41 = arith.constant 0 : index
    %121 = vector.load %arg9[%c0_39, %c0_40, %c0_41] : memref<1x8x128xf32, #tpu.memory_space<vmem>>, vector<1x8x128xf32>
    tpu.vector_store %arg9[%c0_39, %c0_40, %c0_41], %120 {strides = array<i32>} : memref<1x8x128xf32, #tpu.memory_space<vmem>>, vector<1x8x128xf32>,
    return
  }
  func.func @transform_0(%arg0: i32) -> (i32, i32, i32) {
    %c0_i32 = arith.constant 0 : i32
    %c0_i32_0 = arith.constant 0 : i32
    %c0_i32_1 = arith.constant 0 : i32
    return %arg0, %c0_i32, %c0_i32_0 : i32, i32, i32
  }
  func.func @transform_1(%arg0: i32) -> (i32, i32, i32) {
    %c0_i32 = arith.constant 0 : i32
    %c0_i32_0 = arith.constant 0 : i32
    %c0_i32_1 = arith.constant 0 : i32
    %c0_i32_2 = arith.constant 0 : i32
    return %c0_i32, %c0_i32_0, %c0_i32_1 : i32, i32, i32
  }
  func.func @transform_2(%arg0: i32) -> (i32, i32) {
    %c0_i32 = arith.constant 0 : i32
    %c0_i32_0 = arith.constant 0 : i32
    %c0_i32_1 = arith.constant 0 : i32
    return %c0_i32, %c0_i32_0 : i32, i32
  }
  func.func @transform_3(%arg0: i32) -> (i32, i32) {
    %c0_i32 = arith.constant 0 : i32
    %c0_i32_0 = arith.constant 0 : i32
    %c0_i32_1 = arith.constant 0 : i32
    return %c0_i32, %c0_i32_0 : i32, i32
  }
  func.func @transform_4(%arg0: i32) -> (i32, i32) {
    %c0_i32 = arith.constant 0 : i32
    %c0_i32_0 = arith.constant 0 : i32
    %c0_i32_1 = arith.constant 0 : i32
    return %c0_i32, %c0_i32_0 : i32, i32
  }
  func.func @transform_5(%arg0: i32) -> (i32, i32) {
    %c0_i32 = arith.constant 0 : i32
    %c0_i32_0 = arith.constant 0 : i32
    %c0_i32_1 = arith.constant 0 : i32
    return %c0_i32, %c0_i32_0 : i32, i32
  }
  func.func @transform_6(%arg0: i32) -> (i32, i32) {
    %c0_i32 = arith.constant 0 : i32
    %c0_i32_0 = arith.constant 0 : i32
    %c0_i32_1 = arith.constant 0 : i32
    return %c0_i32, %c0_i32_0 : i32, i32
  }
  func.func @transform_7(%arg0: i32) -> (i32, i32) {
    %c0_i32 = arith.constant 0 : i32
    %c0_i32_0 = arith.constant 0 : i32
    %c0_i32_1 = arith.constant 0 : i32
    return %c0_i32, %c0_i32_0 : i32, i32
  }
  func.func @transform_8(%arg0: i32) -> (i32, i32, i32) {
    %c0_i32 = arith.constant 0 : i32
    %c0_i32_0 = arith.constant 0 : i32
    %c0_i32_1 = arith.constant 0 : i32
    return %arg0, %c0_i32, %c0_i32_0 : i32, i32, i32
  }
}

module attributes {stable_mosaic.version = 11 : i64} {
  func.func @_self_attn_kernel(%arg0: i32, %arg1: memref<1x8x128xf32, #tpu.memory_space<vmem>>, %arg2: memref<1x8x8xf32, #tpu.memory_space<vmem>>, %arg3: memref<1x128xf32, #tpu.memory_space<vmem>>, %arg4: memref<1x128xf32, #tpu.memory_space<vmem>>, %arg5: memref<128x384xbf16, #tpu.memory_space<vmem>>, %arg6: memref<1x384xf32, #tpu.memory_space<vmem>>, %arg7: memref<128x128xbf16, #tpu.memory_space<vmem>>, %arg8: memref<1x128xf32, #tpu.memory_space<vmem>>, %arg9: memref<1x8x128xf32, #tpu.memory_space<vmem>>) attributes {dimension_semantics = [#tpu.dimension_semantics<parallel>], iteration_bounds = array<i64: 2>, scalar_prefetch = 0 : i64, scratch_operands = 0 : i64, tpu.core_type = #tpu.core_type<tc>, window_params = [{transform_indices = @transform_0, window_bounds = array<i64: 1, 8, 128>}, {pipeline_mode = #tpu.pipeline_mode<synchronous>, transform_indices = @transform_1, window_bounds = array<i64: 1, 8, 8>}, {pipeline_mode = #tpu.pipeline_mode<synchronous>, transform_indices = @transform_2, window_bounds = array<i64: 1, 128>}, {pipeline_mode = #tpu.pipeline_mode<synchronous>, transform_indices = @transform_3, window_bounds = array<i64: 1, 128>}, {pipeline_mode = #tpu.pipeline_mode<synchronous>, transform_indices = @transform_4, window_bounds = array<i64: 128, 384>}, {pipeline_mode = #tpu.pipeline_mode<synchronous>, transform_indices = @transform_5, window_bounds = array<i64: 1, 384>}, {pipeline_mode = #tpu.pipeline_mode<synchronous>, transform_indices = @transform_6, window_bounds = array<i64: 128, 128>}, {pipeline_mode = #tpu.pipeline_mode<synchronous>, transform_indices = @transform_7, window_bounds = array<i64: 1, 128>}, {transform_indices = @transform_8, window_bounds = array<i64: 1, 8, 128>}]} {
    %c0 = arith.constant 0 : index
    %c0_0 = arith.constant 0 : index
    %c0_1 = arith.constant 0 : index
    %0 = vector.load %arg1[%c0, %c0_0, %c0_1] : memref<1x8x128xf32, #tpu.memory_space<vmem>>, vector<1x8x128xf32>
    %c0_2 = arith.constant 0 : index
    %c0_3 = arith.constant 0 : index
    %1 = vector.load %arg3[%c0_2, %c0_3] : memref<1x128xf32, #tpu.memory_space<vmem>>, vector<1x128xf32>
    %c0_4 = arith.constant 0 : index
    %c0_5 = arith.constant 0 : index
    %2 = vector.load %arg4[%c0_4, %c0_5] : memref<1x128xf32, #tpu.memory_space<vmem>>, vector<1x128xf32>
    %cst = arith.constant dense<0.000000e+00> : vector<1x8xf32>
    %3 = vector.multi_reduction <add>, %0, %cst [2] : vector<1x8x128xf32> to vector<1x8xf32>
    %4 = vector.shape_cast %3 : vector<1x8xf32> to vector<1x8x1xf32>
    %cst_6 = arith.constant 1.280000e+02 : f32
    %5 = vector.broadcast %cst_6 : f32 to vector<1x8x1xf32>
    %6 = arith.divf %4, %5 : vector<1x8x1xf32>
    %7 = vector.broadcast %6 : vector<1x8x1xf32> to vector<1x8x128xf32>
    %8 = arith.subf %0, %7 : vector<1x8x128xf32>
    %9 = arith.mulf %8, %8 : vector<1x8x128xf32>
    %cst_7 = arith.constant dense<0.000000e+00> : vector<1x8xf32>
    %10 = vector.multi_reduction <add>, %9, %cst_7 [2] : vector<1x8x128xf32> to vector<1x8xf32>
    %11 = vector.shape_cast %10 : vector<1x8xf32> to vector<1x8x1xf32>
    %cst_8 = arith.constant 0.00787401571 : f32
    %12 = vector.broadcast %cst_8 : f32 to vector<1x8x1xf32>
    %13 = arith.mulf %11, %12 : vector<1x8x1xf32>
    %14 = vector.broadcast %6 : vector<1x8x1xf32> to vector<1x8x128xf32>
    %15 = arith.subf %0, %14 : vector<1x8x128xf32>
    %16 = vector.shape_cast %1 : vector<1x128xf32> to vector<1x1x128xf32>
    %17 = vector.broadcast %16 : vector<1x1x128xf32> to vector<1x8x128xf32>
    %18 = arith.mulf %17, %15 : vector<1x8x128xf32>
    %19 = math.sqrt %13 : vector<1x8x1xf32>
    %cst_9 = arith.constant 9.99999997E-7 : f32
    %20 = vector.broadcast %cst_9 : f32 to vector<1x8x1xf32>
    %21 = arith.addf %19, %20 : vector<1x8x1xf32>
    %22 = vector.broadcast %21 : vector<1x8x1xf32> to vector<1x8x128xf32>
    %23 = arith.divf %18, %22 : vector<1x8x128xf32>
    %24 = vector.shape_cast %2 : vector<1x128xf32> to vector<1x1x128xf32>
    %25 = vector.broadcast %24 : vector<1x1x128xf32> to vector<1x8x128xf32>
    %26 = arith.addf %23, %25 : vector<1x8x128xf32>
    %27 = vector.shape_cast %26 : vector<1x8x128xf32> to vector<8x128xf32>
    %28 = arith.truncf %27 : vector<8x128xf32> to vector<8x128xbf16>
    %c0_10 = arith.constant 0 : index
    %c0_11 = arith.constant 0 : index
    %29 = vector.load %arg5[%c0_10, %c0_11] : memref<128x384xbf16, #tpu.memory_space<vmem>>, vector<128x384xbf16>
    %cst_12 = arith.constant dense<0.000000e+00> : vector<8x384xf32>
    %30 = tpu.matmul %28, %29, %cst_12 {dimension_numbers = #tpu.dot_dimension_numbers<[1], [0], [0], [1], [0, 0, 1, 1], [], []>} : vector<8x128xbf16>, vector<128x384xbf16>, vector<8x384xf32> -> vector<8x384xf32>
    %c0_13 = arith.constant 0 : index
    %c0_14 = arith.constant 0 : index
    %31 = vector.load %arg6[%c0_13, %c0_14] : memref<1x384xf32, #tpu.memory_space<vmem>>, vector<1x384xf32>
    %32 = vector.broadcast %31 : vector<1x384xf32> to vector<8x384xf32>
    %33 = arith.addf %30, %32 : vector<8x384xf32>
    %34 = arith.truncf %33 : vector<8x384xf32> to vector<8x384xbf16>
    %35 = vector.shape_cast %34 : vector<8x384xbf16> to vector<1x8x384xbf16>
    %36 = vector.extract_strided_slice %35 {offsets = [0, 0, 0], sizes = [1, 8, 128], strides = [1, 1, 1]} : vector<1x8x384xbf16> to vector<1x8x128xbf16>
    %37 = vector.extract_strided_slice %35 {offsets = [0, 0, 128], sizes = [1, 8, 128], strides = [1, 1, 1]} : vector<1x8x384xbf16> to vector<1x8x128xbf16>
    %38 = vector.extract_strided_slice %35 {offsets = [0, 0, 256], sizes = [1, 8, 128], strides = [1, 1, 1]} : vector<1x8x384xbf16> to vector<1x8x128xbf16>
    %c0_15 = arith.constant 0 : index
    %c0_16 = arith.constant 0 : index
    %c0_17 = arith.constant 0 : index
    %39 = vector.load %arg2[%c0_15, %c0_16, %c0_17] : memref<1x8x8xf32, #tpu.memory_space<vmem>>, vector<1x8x8xf32>
    %40 = vector.extract_strided_slice %36 {offsets = [0, 0, 0], sizes = [1, 8, 32], strides = [1, 1, 1]} : vector<1x8x128xbf16> to vector<1x8x32xbf16>
    %41 = vector.extract_strided_slice %37 {offsets = [0, 0, 0], sizes = [1, 8, 32], strides = [1, 1, 1]} : vector<1x8x128xbf16> to vector<1x8x32xbf16>
    "tpu.trace_start"() <{level = 10 : i32, message = "bqc,bkc->bqk"}> : () -> ()
    %cst_18 = arith.constant dense<0.000000e+00> : vector<1x8x8xf32>
    %42 = tpu.matmul %40, %41, %cst_18 {dimension_numbers = #tpu.dot_dimension_numbers<[2], [2], [1], [1], [0, 0, 0, 1, 1, 1], [0], [0]>} : vector<1x8x32xbf16>, vector<1x8x32xbf16>, vector<1x8x8xf32> -> vector<1x8x8xf32>
    "tpu.trace_stop"() : () -> ()
    %43 = arith.addf %42, %39 : vector<1x8x8xf32>
    %cst_19 = arith.constant dense<0xFF800000> : vector<1x8xf32>
    %44 = vector.multi_reduction <maximumf>, %43, %cst_19 [2] : vector<1x8x8xf32> to vector<1x8xf32>
    %45 = vector.shape_cast %44 : vector<1x8xf32> to vector<1x8x1xf32>
    %46 = vector.broadcast %45 : vector<1x8x1xf32> to vector<1x8x8xf32>
    %47 = arith.subf %43, %46 : vector<1x8x8xf32>
    %48 = math.exp %47 : vector<1x8x8xf32>
    %cst_20 = arith.constant dense<0.000000e+00> : vector<1x8xf32>
    %49 = vector.multi_reduction <add>, %48, %cst_20 [2] : vector<1x8x8xf32> to vector<1x8xf32>
    %50 = vector.shape_cast %49 : vector<1x8xf32> to vector<1x8x1xf32>
    %51 = tpu.reciprocal %50 {approx = true} : vector<1x8x1xf32> -> vector<1x8x1xf32>
    %52 = vector.broadcast %51 : vector<1x8x1xf32> to vector<1x8x8xf32>
    %53 = arith.mulf %48, %52 : vector<1x8x8xf32>
    %54 = arith.truncf %53 : vector<1x8x8xf32> to vector<1x8x8xbf16>
    %55 = vector.extract_strided_slice %38 {offsets = [0, 0, 0], sizes = [1, 8, 32], strides = [1, 1, 1]} : vector<1x8x128xbf16> to vector<1x8x32xbf16>
    "tpu.trace_start"() <{level = 10 : i32, message = "bqk,bkc->bqc"}> : () -> ()
    %cst_21 = arith.constant dense<0.000000e+00> : vector<1x8x32xf32>
    %56 = tpu.matmul %54, %55, %cst_21 {dimension_numbers = #tpu.dot_dimension_numbers<[2], [1], [1], [2], [0, 0, 0, 1, 1, 2], [0], [0]>} : vector<1x8x8xbf16>, vector<1x8x32xbf16>, vector<1x8x32xf32> -> vector<1x8x32xf32>
    "tpu.trace_stop"() : () -> ()
    %57 = arith.truncf %56 : vector<1x8x32xf32> to vector<1x8x32xbf16>
    %58 = vector.extract_strided_slice %36 {offsets = [0, 0, 32], sizes = [1, 8, 32], strides = [1, 1, 1]} : vector<1x8x128xbf16> to vector<1x8x32xbf16>
    %59 = vector.extract_strided_slice %37 {offsets = [0, 0, 32], sizes = [1, 8, 32], strides = [1, 1, 1]} : vector<1x8x128xbf16> to vector<1x8x32xbf16>
    "tpu.trace_start"() <{level = 10 : i32, message = "bqc,bkc->bqk"}> : () -> ()
    %cst_22 = arith.constant dense<0.000000e+00> : vector<1x8x8xf32>
    %60 = tpu.matmul %58, %59, %cst_22 {dimension_numbers = #tpu.dot_dimension_numbers<[2], [2], [1], [1], [0, 0, 0, 1, 1, 1], [0], [0]>} : vector<1x8x32xbf16>, vector<1x8x32xbf16>, vector<1x8x8xf32> -> vector<1x8x8xf32>
    "tpu.trace_stop"() : () -> ()
    %61 = arith.addf %60, %39 : vector<1x8x8xf32>
    %cst_23 = arith.constant dense<0xFF800000> : vector<1x8xf32>
    %62 = vector.multi_reduction <maximumf>, %61, %cst_23 [2] : vector<1x8x8xf32> to vector<1x8xf32>
    %63 = vector.shape_cast %62 : vector<1x8xf32> to vector<1x8x1xf32>
    %64 = vector.broadcast %63 : vector<1x8x1xf32> to vector<1x8x8xf32>
    %65 = arith.subf %61, %64 : vector<1x8x8xf32>
    %66 = math.exp %65 : vector<1x8x8xf32>
    %cst_24 = arith.constant dense<0.000000e+00> : vector<1x8xf32>
    %67 = vector.multi_reduction <add>, %66, %cst_24 [2] : vector<1x8x8xf32> to vector<1x8xf32>
    %68 = vector.shape_cast %67 : vector<1x8xf32> to vector<1x8x1xf32>
    %69 = tpu.reciprocal %68 {approx = true} : vector<1x8x1xf32> -> vector<1x8x1xf32>
    %70 = vector.broadcast %69 : vector<1x8x1xf32> to vector<1x8x8xf32>
    %71 = arith.mulf %66, %70 : vector<1x8x8xf32>
    %72 = arith.truncf %71 : vector<1x8x8xf32> to vector<1x8x8xbf16>
    %73 = vector.extract_strided_slice %38 {offsets = [0, 0, 32], sizes = [1, 8, 32], strides = [1, 1, 1]} : vector<1x8x128xbf16> to vector<1x8x32xbf16>
    "tpu.trace_start"() <{level = 10 : i32, message = "bqk,bkc->bqc"}> : () -> ()
    %cst_25 = arith.constant dense<0.000000e+00> : vector<1x8x32xf32>
    %74 = tpu.matmul %72, %73, %cst_25 {dimension_numbers = #tpu.dot_dimension_numbers<[2], [1], [1], [2], [0, 0, 0, 1, 1, 2], [0], [0]>} : vector<1x8x8xbf16>, vector<1x8x32xbf16>, vector<1x8x32xf32> -> vector<1x8x32xf32>
    "tpu.trace_stop"() : () -> ()
    %75 = arith.truncf %74 : vector<1x8x32xf32> to vector<1x8x32xbf16>
    %76 = vector.extract_strided_slice %36 {offsets = [0, 0, 64], sizes = [1, 8, 32], strides = [1, 1, 1]} : vector<1x8x128xbf16> to vector<1x8x32xbf16>
    %77 = vector.extract_strided_slice %37 {offsets = [0, 0, 64], sizes = [1, 8, 32], strides = [1, 1, 1]} : vector<1x8x128xbf16> to vector<1x8x32xbf16>
    "tpu.trace_start"() <{level = 10 : i32, message = "bqc,bkc->bqk"}> : () -> ()
    %cst_26 = arith.constant dense<0.000000e+00> : vector<1x8x8xf32>
    %78 = tpu.matmul %76, %77, %cst_26 {dimension_numbers = #tpu.dot_dimension_numbers<[2], [2], [1], [1], [0, 0, 0, 1, 1, 1], [0], [0]>} : vector<1x8x32xbf16>, vector<1x8x32xbf16>, vector<1x8x8xf32> -> vector<1x8x8xf32>
    "tpu.trace_stop"() : () -> ()
    %79 = arith.addf %78, %39 : vector<1x8x8xf32>
    %cst_27 = arith.constant dense<0xFF800000> : vector<1x8xf32>
    %80 = vector.multi_reduction <maximumf>, %79, %cst_27 [2] : vector<1x8x8xf32> to vector<1x8xf32>
    %81 = vector.shape_cast %80 : vector<1x8xf32> to vector<1x8x1xf32>
    %82 = vector.broadcast %81 : vector<1x8x1xf32> to vector<1x8x8xf32>
    %83 = arith.subf %79, %82 : vector<1x8x8xf32>
    %84 = math.exp %83 : vector<1x8x8xf32>
    %cst_28 = arith.constant dense<0.000000e+00> : vector<1x8xf32>
    %85 = vector.multi_reduction <add>, %84, %cst_28 [2] : vector<1x8x8xf32> to vector<1x8xf32>
    %86 = vector.shape_cast %85 : vector<1x8xf32> to vector<1x8x1xf32>
    %87 = tpu.reciprocal %86 {approx = true} : vector<1x8x1xf32> -> vector<1x8x1xf32>
    %88 = vector.broadcast %87 : vector<1x8x1xf32> to vector<1x8x8xf32>
    %89 = arith.mulf %84, %88 : vector<1x8x8xf32>
    %90 = arith.truncf %89 : vector<1x8x8xf32> to vector<1x8x8xbf16>
    %91 = vector.extract_strided_slice %38 {offsets = [0, 0, 64], sizes = [1, 8, 32], strides = [1, 1, 1]} : vector<1x8x128xbf16> to vector<1x8x32xbf16>
    "tpu.trace_start"() <{level = 10 : i32, message = "bqk,bkc->bqc"}> : () -> ()
    %cst_29 = arith.constant dense<0.000000e+00> : vector<1x8x32xf32>
    %92 = tpu.matmul %90, %91, %cst_29 {dimension_numbers = #tpu.dot_dimension_numbers<[2], [1], [1], [2], [0, 0, 0, 1, 1, 2], [0], [0]>} : vector<1x8x8xbf16>, vector<1x8x32xbf16>, vector<1x8x32xf32> -> vector<1x8x32xf32>
    "tpu.trace_stop"() : () -> ()
    %93 = arith.truncf %92 : vector<1x8x32xf32> to vector<1x8x32xbf16>
    %94 = vector.extract_strided_slice %36 {offsets = [0, 0, 96], sizes = [1, 8, 32], strides = [1, 1, 1]} : vector<1x8x128xbf16> to vector<1x8x32xbf16>
    %95 = vector.extract_strided_slice %37 {offsets = [0, 0, 96], sizes = [1, 8, 32], strides = [1, 1, 1]} : vector<1x8x128xbf16> to vector<1x8x32xbf16>
    "tpu.trace_start"() <{level = 10 : i32, message = "bqc,bkc->bqk"}> : () -> ()
    %cst_30 = arith.constant dense<0.000000e+00> : vector<1x8x8xf32>
    %96 = tpu.matmul %94, %95, %cst_30 {dimension_numbers = #tpu.dot_dimension_numbers<[2], [2], [1], [1], [0, 0, 0, 1, 1, 1], [0], [0]>} : vector<1x8x32xbf16>, vector<1x8x32xbf16>, vector<1x8x8xf32> -> vector<1x8x8xf32>
    "tpu.trace_stop"() : () -> ()
    %97 = arith.addf %96, %39 : vector<1x8x8xf32>
    %cst_31 = arith.constant dense<0xFF800000> : vector<1x8xf32>
    %98 = vector.multi_reduction <maximumf>, %97, %cst_31 [2] : vector<1x8x8xf32> to vector<1x8xf32>
    %99 = vector.shape_cast %98 : vector<1x8xf32> to vector<1x8x1xf32>
    %100 = vector.broadcast %99 : vector<1x8x1xf32> to vector<1x8x8xf32>
    %101 = arith.subf %97, %100 : vector<1x8x8xf32>
    %102 = math.exp %101 : vector<1x8x8xf32>
    %cst_32 = arith.constant dense<0.000000e+00> : vector<1x8xf32>
    %103 = vector.multi_reduction <add>, %102, %cst_32 [2] : vector<1x8x8xf32> to vector<1x8xf32>
    %104 = vector.shape_cast %103 : vector<1x8xf32> to vector<1x8x1xf32>
    %105 = tpu.reciprocal %104 {approx = true} : vector<1x8x1xf32> -> vector<1x8x1xf32>
    %106 = vector.broadcast %105 : vector<1x8x1xf32> to vector<1x8x8xf32>
    %107 = arith.mulf %102, %106 : vector<1x8x8xf32>
    %108 = arith.truncf %107 : vector<1x8x8xf32> to vector<1x8x8xbf16>
    %109 = vector.extract_strided_slice %38 {offsets = [0, 0, 96], sizes = [1, 8, 32], strides = [1, 1, 1]} : vector<1x8x128xbf16> to vector<1x8x32xbf16>
    "tpu.trace_start"() <{level = 10 : i32, message = "bqk,bkc->bqc"}> : () -> ()
    %cst_33 = arith.constant dense<0.000000e+00> : vector<1x8x32xf32>
    %110 = tpu.matmul %108, %109, %cst_33 {dimension_numbers = #tpu.dot_dimension_numbers<[2], [1], [1], [2], [0, 0, 0, 1, 1, 2], [0], [0]>} : vector<1x8x8xbf16>, vector<1x8x32xbf16>, vector<1x8x32xf32> -> vector<1x8x32xf32>
    "tpu.trace_stop"() : () -> ()
    %111 = arith.truncf %110 : vector<1x8x32xf32> to vector<1x8x32xbf16>
    %112 = tpu.concatenate %57, %75, %93, %111 in 2 : vector<1x8x32xbf16>, vector<1x8x32xbf16>, vector<1x8x32xbf16>, vector<1x8x32xbf16> -> vector<1x8x128xbf16>
    %113 = vector.shape_cast %112 : vector<1x8x128xbf16> to vector<8x128xbf16>
    %c0_34 = arith.constant 0 : index
    %c0_35 = arith.constant 0 : index
    %114 = vector.load %arg7[%c0_34, %c0_35] : memref<128x128xbf16, #tpu.memory_space<vmem>>, vector<128x128xbf16>
    %cst_36 = arith.constant dense<0.000000e+00> : vector<8x128xf32>
    %115 = tpu.matmul %113, %114, %cst_36 {dimension_numbers = #tpu.dot_dimension_numbers<[1], [0], [0], [1], [0, 0, 1, 1], [], []>} : vector<8x128xbf16>, vector<128x128xbf16>, vector<8x128xf32> -> vector<8x128xf32>
    %c0_37 = arith.constant 0 : index
    %c0_38 = arith.constant 0 : index
    %116 = vector.load %arg8[%c0_37, %c0_38] : memref<1x128xf32, #tpu.memory_space<vmem>>, vector<1x128xf32>
    %117 = vector.broadcast %116 : vector<1x128xf32> to vector<8x128xf32>
    %118 = arith.addf %115, %117 : vector<8x128xf32>
    %119 = vector.shape_cast %118 : vector<8x128xf32> to vector<1x8x128xf32>
    %120 = arith.addf %0, %119 : vector<1x8x128xf32>
    %c0_39 = arith.constant 0 : index
    %c0_40 = arith.constant 0 : index
    %c0_41 = arith.constant 0 : index
    %121 = vector.load %arg9[%c0_39, %c0_40, %c0_41] : memref<1x8x128xf32, #tpu.memory_space<vmem>>, vector<1x8x128xf32>
    tpu.vector_store %arg9[%c0_39, %c0_40, %c0_41], %120 {strides = array<i32>} : memref<1x8x128xf32, #tpu.memory_space<vmem>>, vector<1x8x128xf32>,
    return
  }
  func.func @transform_0(%arg0: i32) -> (i32, i32, i32) {
    %c0_i32 = arith.constant 0 : i32
    %c0_i32_0 = arith.constant 0 : i32
    %c0_i32_1 = arith.constant 0 : i32
    return %arg0, %c0_i32, %c0_i32_0 : i32, i32, i32
  }
  func.func @transform_1(%arg0: i32) -> (i32, i32, i32) {
    %c0_i32 = arith.constant 0 : i32
    %c0_i32_0 = arith.constant 0 : i32
    %c0_i32_1 = arith.constant 0 : i32
    %c0_i32_2 = arith.constant 0 : i32
    return %c0_i32, %c0_i32_0, %c0_i32_1 : i32, i32, i32
  }
  func.func @transform_2(%arg0: i32) -> (i32, i32) {
    %c0_i32 = arith.constant 0 : i32
    %c0_i32_0 = arith.constant 0 : i32
    %c0_i32_1 = arith.constant 0 : i32
    return %c0_i32, %c0_i32_0 : i32, i32
  }
  func.func @transform_3(%arg0: i32) -> (i32, i32) {
    %c0_i32 = arith.constant 0 : i32
    %c0_i32_0 = arith.constant 0 : i32
    %c0_i32_1 = arith.constant 0 : i32
    return %c0_i32, %c0_i32_0 : i32, i32
  }
  func.func @transform_4(%arg0: i32) -> (i32, i32) {
    %c0_i32 = arith.constant 0 : i32
    %c0_i32_0 = arith.constant 0 : i32
    %c0_i32_1 = arith.constant 0 : i32
    return %c0_i32, %c0_i32_0 : i32, i32
  }
  func.func @transform_5(%arg0: i32) -> (i32, i32) {
    %c0_i32 = arith.constant 0 : i32
    %c0_i32_0 = arith.constant 0 : i32
    %c0_i32_1 = arith.constant 0 : i32
    return %c0_i32, %c0_i32_0 : i32, i32
  }
  func.func @transform_6(%arg0: i32) -> (i32, i32) {
    %c0_i32 = arith.constant 0 : i32
    %c0_i32_0 = arith.constant 0 : i32
    %c0_i32_1 = arith.constant 0 : i32
    return %c0_i32, %c0_i32_0 : i32, i32
  }
  func.func @transform_7(%arg0: i32) -> (i32, i32) {
    %c0_i32 = arith.constant 0 : i32
    %c0_i32_0 = arith.constant 0 : i32
    %c0_i32_1 = arith.constant 0 : i32
    return %c0_i32, %c0_i32_0 : i32, i32
  }
  func.func @transform_8(%arg0: i32) -> (i32, i32, i32) {
    %c0_i32 = arith.constant 0 : i32
    %c0_i32_0 = arith.constant 0 : i32
    %c0_i32_1 = arith.constant 0 : i32
    return %arg0, %c0_i32, %c0_i32_0 : i32, i32, i32
  }
}

module attributes {stable_mosaic.version = 11 : i64} {
  func.func @_ffn_kernel(%arg0: i32, %arg1: i32, %arg2: memref<1x8x128xf32, #tpu.memory_space<vmem>>, %arg3: memref<1x128xf32, #tpu.memory_space<vmem>>, %arg4: memref<1x128xf32, #tpu.memory_space<vmem>>, %arg5: memref<128x256xbf16, #tpu.memory_space<vmem>>, %arg6: memref<1x256xf32, #tpu.memory_space<vmem>>, %arg7: memref<256x128xbf16, #tpu.memory_space<vmem>>, %arg8: memref<1x128xf32, #tpu.memory_space<vmem>>, %arg9: memref<1x128xf32, #tpu.memory_space<vmem>>, %arg10: memref<1x128xf32, #tpu.memory_space<vmem>>, %arg11: memref<1x8x128xf32, #tpu.memory_space<vmem>>) attributes {dimension_semantics = [#tpu.dimension_semantics<parallel>, #tpu.dimension_semantics<parallel>], iteration_bounds = array<i64: 2, 1>, scalar_prefetch = 0 : i64, scratch_operands = 0 : i64, tpu.core_type = #tpu.core_type<tc>, window_params = [{transform_indices = @transform_0, window_bounds = array<i64: 1, 8, 128>}, {pipeline_mode = #tpu.pipeline_mode<synchronous>, transform_indices = @transform_1, window_bounds = array<i64: 1, 128>}, {pipeline_mode = #tpu.pipeline_mode<synchronous>, transform_indices = @transform_2, window_bounds = array<i64: 1, 128>}, {pipeline_mode = #tpu.pipeline_mode<synchronous>, transform_indices = @transform_3, window_bounds = array<i64: 128, 256>}, {pipeline_mode = #tpu.pipeline_mode<synchronous>, transform_indices = @transform_4, window_bounds = array<i64: 1, 256>}, {pipeline_mode = #tpu.pipeline_mode<synchronous>, transform_indices = @transform_5, window_bounds = array<i64: 256, 128>}, {pipeline_mode = #tpu.pipeline_mode<synchronous>, transform_indices = @transform_6, window_bounds = array<i64: 1, 128>}, {pipeline_mode = #tpu.pipeline_mode<synchronous>, transform_indices = @transform_7, window_bounds = array<i64: 1, 128>}, {pipeline_mode = #tpu.pipeline_mode<synchronous>, transform_indices = @transform_8, window_bounds = array<i64: 1, 128>}, {transform_indices = @transform_9, window_bounds = array<i64: 1, 8, 128>}]} {
    %c0 = arith.constant 0 : index
    %c0_0 = arith.constant 0 : index
    %c0_1 = arith.constant 0 : index
    %0 = vector.load %arg2[%c0, %c0_0, %c0_1] : memref<1x8x128xf32, #tpu.memory_space<vmem>>, vector<1x8x128xf32>
    %c0_2 = arith.constant 0 : index
    %c0_3 = arith.constant 0 : index
    %1 = vector.load %arg3[%c0_2, %c0_3] : memref<1x128xf32, #tpu.memory_space<vmem>>, vector<1x128xf32>
    %c0_4 = arith.constant 0 : index
    %c0_5 = arith.constant 0 : index
    %2 = vector.load %arg4[%c0_4, %c0_5] : memref<1x128xf32, #tpu.memory_space<vmem>>, vector<1x128xf32>
    %cst = arith.constant dense<0.000000e+00> : vector<1x8xf32>
    %3 = vector.multi_reduction <add>, %0, %cst [2] : vector<1x8x128xf32> to vector<1x8xf32>
    %4 = vector.shape_cast %3 : vector<1x8xf32> to vector<1x8x1xf32>
    %cst_6 = arith.constant 1.280000e+02 : f32
    %5 = vector.broadcast %cst_6 : f32 to vector<1x8x1xf32>
    %6 = arith.divf %4, %5 : vector<1x8x1xf32>
    %7 = vector.broadcast %6 : vector<1x8x1xf32> to vector<1x8x128xf32>
    %8 = arith.subf %0, %7 : vector<1x8x128xf32>
    %9 = arith.mulf %8, %8 : vector<1x8x128xf32>
    %cst_7 = arith.constant dense<0.000000e+00> : vector<1x8xf32>
    %10 = vector.multi_reduction <add>, %9, %cst_7 [2] : vector<1x8x128xf32> to vector<1x8xf32>
    %11 = vector.shape_cast %10 : vector<1x8xf32> to vector<1x8x1xf32>
    %cst_8 = arith.constant 0.00787401571 : f32
    %12 = vector.broadcast %cst_8 : f32 to vector<1x8x1xf32>
    %13 = arith.mulf %11, %12 : vector<1x8x1xf32>
    %14 = vector.broadcast %6 : vector<1x8x1xf32> to vector<1x8x128xf32>
    %15 = arith.subf %0, %14 : vector<1x8x128xf32>
    %16 = vector.shape_cast %1 : vector<1x128xf32> to vector<1x1x128xf32>
    %17 = vector.broadcast %16 : vector<1x1x128xf32> to vector<1x8x128xf32>
    %18 = arith.mulf %17, %15 : vector<1x8x128xf32>
    %19 = math.sqrt %13 : vector<1x8x1xf32>
    %cst_9 = arith.constant 9.99999997E-7 : f32
    %20 = vector.broadcast %cst_9 : f32 to vector<1x8x1xf32>
    %21 = arith.addf %19, %20 : vector<1x8x1xf32>
    %22 = vector.broadcast %21 : vector<1x8x1xf32> to vector<1x8x128xf32>
    %23 = arith.divf %18, %22 : vector<1x8x128xf32>
    %24 = vector.shape_cast %2 : vector<1x128xf32> to vector<1x1x128xf32>
    %25 = vector.broadcast %24 : vector<1x1x128xf32> to vector<1x8x128xf32>
    %26 = arith.addf %23, %25 : vector<1x8x128xf32>
    %27 = vector.shape_cast %26 : vector<1x8x128xf32> to vector<8x128xf32>
    %28 = arith.truncf %27 : vector<8x128xf32> to vector<8x128xbf16>
    %c0_10 = arith.constant 0 : index
    %c0_11 = arith.constant 0 : index
    %29 = vector.load %arg5[%c0_10, %c0_11] : memref<128x256xbf16, #tpu.memory_space<vmem>>, vector<128x256xbf16>
    %cst_12 = arith.constant dense<0.000000e+00> : vector<8x256xf32>
    %30 = tpu.matmul %28, %29, %cst_12 {dimension_numbers = #tpu.dot_dimension_numbers<[1], [0], [0], [1], [0, 0, 1, 1], [], []>} : vector<8x128xbf16>, vector<128x256xbf16>, vector<8x256xf32> -> vector<8x256xf32>
    %c0_13 = arith.constant 0 : index
    %c0_14 = arith.constant 0 : index
    %31 = vector.load %arg6[%c0_13, %c0_14] : memref<1x256xf32, #tpu.memory_space<vmem>>, vector<1x256xf32>
    %32 = vector.broadcast %31 : vector<1x256xf32> to vector<8x256xf32>
    %33 = arith.addf %30, %32 : vector<8x256xf32>
    %cst_15 = arith.constant 0.000000e+00 : f32
    %34 = vector.broadcast %cst_15 : f32 to vector<8x256xf32>
    %35 = arith.maximumf %33, %34 : vector<8x256xf32>
    %36 = arith.truncf %35 : vector<8x256xf32> to vector<8x256xbf16>
    %c0_16 = arith.constant 0 : index
    %c0_17 = arith.constant 0 : index
    %37 = vector.load %arg7[%c0_16, %c0_17] : memref<256x128xbf16, #tpu.memory_space<vmem>>, vector<256x128xbf16>
    %cst_18 = arith.constant dense<0.000000e+00> : vector<8x128xf32>
    %38 = tpu.matmul %36, %37, %cst_18 {dimension_numbers = #tpu.dot_dimension_numbers<[1], [0], [0], [1], [0, 0, 1, 1], [], []>} : vector<8x256xbf16>, vector<256x128xbf16>, vector<8x128xf32> -> vector<8x128xf32>
    %c0_19 = arith.constant 0 : index
    %c0_20 = arith.constant 0 : index
    %39 = vector.load %arg8[%c0_19, %c0_20] : memref<1x128xf32, #tpu.memory_space<vmem>>, vector<1x128xf32>
    %40 = vector.broadcast %39 : vector<1x128xf32> to vector<8x128xf32>
    %41 = arith.addf %38, %40 : vector<8x128xf32>
    %42 = vector.shape_cast %41 : vector<8x128xf32> to vector<1x8x128xf32>
    %43 = arith.addf %0, %42 : vector<1x8x128xf32>
    %c0_21 = arith.constant 0 : index
    %c0_22 = arith.constant 0 : index
    %44 = vector.load %arg9[%c0_21, %c0_22] : memref<1x128xf32, #tpu.memory_space<vmem>>, vector<1x128xf32>
    %c0_23 = arith.constant 0 : index
    %c0_24 = arith.constant 0 : index
    %45 = vector.load %arg10[%c0_23, %c0_24] : memref<1x128xf32, #tpu.memory_space<vmem>>, vector<1x128xf32>
    %cst_25 = arith.constant dense<0.000000e+00> : vector<1x8xf32>
    %46 = vector.multi_reduction <add>, %43, %cst_25 [2] : vector<1x8x128xf32> to vector<1x8xf32>
    %47 = vector.shape_cast %46 : vector<1x8xf32> to vector<1x8x1xf32>
    %cst_26 = arith.constant 1.280000e+02 : f32
    %48 = vector.broadcast %cst_26 : f32 to vector<1x8x1xf32>
    %49 = arith.divf %47, %48 : vector<1x8x1xf32>
    %50 = vector.broadcast %49 : vector<1x8x1xf32> to vector<1x8x128xf32>
    %51 = arith.subf %43, %50 : vector<1x8x128xf32>
    %52 = arith.mulf %51, %51 : vector<1x8x128xf32>
    %cst_27 = arith.constant dense<0.000000e+00> : vector<1x8xf32>
    %53 = vector.multi_reduction <add>, %52, %cst_27 [2] : vector<1x8x128xf32> to vector<1x8xf32>
    %54 = vector.shape_cast %53 : vector<1x8xf32> to vector<1x8x1xf32>
    %cst_28 = arith.constant 0.00787401571 : f32
    %55 = vector.broadcast %cst_28 : f32 to vector<1x8x1xf32>
    %56 = arith.mulf %54, %55 : vector<1x8x1xf32>
    %57 = vector.broadcast %49 : vector<1x8x1xf32> to vector<1x8x128xf32>
    %58 = arith.subf %43, %57 : vector<1x8x128xf32>
    %59 = vector.shape_cast %44 : vector<1x128xf32> to vector<1x1x128xf32>
    %60 = vector.broadcast %59 : vector<1x1x128xf32> to vector<1x8x128xf32>
    %61 = arith.mulf %60, %58 : vector<1x8x128xf32>
    %62 = math.sqrt %56 : vector<1x8x1xf32>
    %cst_29 = arith.constant 9.99999997E-7 : f32
    %63 = vector.broadcast %cst_29 : f32 to vector<1x8x1xf32>
    %64 = arith.addf %62, %63 : vector<1x8x1xf32>
    %65 = vector.broadcast %64 : vector<1x8x1xf32> to vector<1x8x128xf32>
    %66 = arith.divf %61, %65 : vector<1x8x128xf32>
    %67 = vector.shape_cast %45 : vector<1x128xf32> to vector<1x1x128xf32>
    %68 = vector.broadcast %67 : vector<1x1x128xf32> to vector<1x8x128xf32>
    %69 = arith.addf %66, %68 : vector<1x8x128xf32>
    %c0_30 = arith.constant 0 : index
    %c0_31 = arith.constant 0 : index
    %c0_32 = arith.constant 0 : index
    %70 = vector.load %arg11[%c0_30, %c0_31, %c0_32] : memref<1x8x128xf32, #tpu.memory_space<vmem>>, vector<1x8x128xf32>
    tpu.vector_store %arg11[%c0_30, %c0_31, %c0_32], %69 {strides = array<i32>} : memref<1x8x128xf32, #tpu.memory_space<vmem>>, vector<1x8x128xf32>,
    return
  }
  func.func @transform_0(%arg0: i32, %arg1: i32) -> (i32, i32, i32) {
    %c0_i32 = arith.constant 0 : i32
    %c0_i32_0 = arith.constant 0 : i32
    return %arg0, %arg1, %c0_i32 : i32, i32, i32
  }
  func.func @transform_1(%arg0: i32, %arg1: i32) -> (i32, i32) {
    %c0_i32 = arith.constant 0 : i32
    %c0_i32_0 = arith.constant 0 : i32
    %c0_i32_1 = arith.constant 0 : i32
    return %c0_i32, %c0_i32_0 : i32, i32
  }
  func.func @transform_2(%arg0: i32, %arg1: i32) -> (i32, i32) {
    %c0_i32 = arith.constant 0 : i32
    %c0_i32_0 = arith.constant 0 : i32
    %c0_i32_1 = arith.constant 0 : i32
    return %c0_i32, %c0_i32_0 : i32, i32
  }
  func.func @transform_3(%arg0: i32, %arg1: i32) -> (i32, i32) {
    %c0_i32 = arith.constant 0 : i32
    %c0_i32_0 = arith.constant 0 : i32
    %c0_i32_1 = arith.constant 0 : i32
    return %c0_i32, %c0_i32_0 : i32, i32
  }
  func.func @transform_4(%arg0: i32, %arg1: i32) -> (i32, i32) {
    %c0_i32 = arith.constant 0 : i32
    %c0_i32_0 = arith.constant 0 : i32
    %c0_i32_1 = arith.constant 0 : i32
    return %c0_i32, %c0_i32_0 : i32, i32
  }
  func.func @transform_5(%arg0: i32, %arg1: i32) -> (i32, i32) {
    %c0_i32 = arith.constant 0 : i32
    %c0_i32_0 = arith.constant 0 : i32
    %c0_i32_1 = arith.constant 0 : i32
    return %c0_i32, %c0_i32_0 : i32, i32
  }
  func.func @transform_6(%arg0: i32, %arg1: i32) -> (i32, i32) {
    %c0_i32 = arith.constant 0 : i32
    %c0_i32_0 = arith.constant 0 : i32
    %c0_i32_1 = arith.constant 0 : i32
    return %c0_i32, %c0_i32_0 : i32, i32
  }
  func.func @transform_7(%arg0: i32, %arg1: i32) -> (i32, i32) {
    %c0_i32 = arith.constant 0 : i32
    %c0_i32_0 = arith.constant 0 : i32
    %c0_i32_1 = arith.constant 0 : i32
    return %c0_i32, %c0_i32_0 : i32, i32
  }
  func.func @transform_8(%arg0: i32, %arg1: i32) -> (i32, i32) {
    %c0_i32 = arith.constant 0 : i32
    %c0_i32_0 = arith.constant 0 : i32
    %c0_i32_1 = arith.constant 0 : i32
    return %c0_i32, %c0_i32_0 : i32, i32
  }
  func.func @transform_9(%arg0: i32, %arg1: i32) -> (i32, i32, i32) {
    %c0_i32 = arith.constant 0 : i32
    %c0_i32_0 = arith.constant 0 : i32
    return %arg0, %arg1, %c0_i32 : i32, i32, i32
  }
}

</mosaic_0001>

<llo_original>
// kernel: decoder_forward.9
$region0: #{decoder_forward.9}
  #allocation0 [shape = 'u32[]', space=smem, size = 0x4, offset = 0x4, fixed_abs, tag = 'smem constant byte address 0x4 - core index']
  #allocation1 [shape = 'u32[144,128]{1,0:T(1,128)}', space=vmem, size = 0x12000, scoped, tag = 'internal scratch']
  %s0 = inlined_call_operand.vmem [shape: bf16[2,16,128], index: 0, kind: input, shape index: {}]
  %s1 = inlined_call_operand.vmem [shape: bf16[2,16,128], index: 1, kind: input, shape index: {}]
  %s2 = inlined_call_operand.vmem [shape: bf16[128,128], index: 2, kind: input, shape index: {}]
  %s3 = inlined_call_operand.vmem [shape: f32[1,128], index: 3, kind: input, shape index: {}]
  %s4 = inlined_call_operand.vmem [shape: bf16[128,128], index: 4, kind: input, shape index: {}]
  %s5 = inlined_call_operand.vmem [shape: f32[1,128], index: 5, kind: input, shape index: {}]
  %s6 = inlined_call_operand.vmem [shape: bf16[2,16,128], index: 6, kind: output, shape index: {0}]
  %s7 = inlined_call_operand.vmem [shape: bf16[2,16,128], index: 7, kind: output, shape index: {1}]
  %8 = xla_tuple %s6, %s7
  %s9 = sld [smem:[#allocation0]]
  $region65: #{decoder_forward.9} parent=0
    _
  %s11 = ssub.s32 1, %s9
  %s12 = scalar_select 0, %s11, %s9
  loop: start=0, step=1, limit=4
  $region2: #{decoder_forward.9} parent=0 // loop_pre_header
    _
  $region3: #{decoder_forward.9} parent=0 // loop_header
    %s14 = sphi 0, %s18
    %p15 = scmp.ge.s32.totalorder %s14, 4
    %s21 = sphi 0, %s33
    %s22 = sphi 0, %s29
    %s23 = sphi 0, %s21
    %s24 = sphi 0, %s22
    %s25 = sphi 0, %s23
    %s26 = sphi 0, %s24
    %s38 = sphi 0, %s40
    %s41 = sphi 0, %s38
    %s42 = sphi 0, %s41
    %s58 = sphi 0, %s42
    %s66 = sphi 0, %s68
    %s69 = sphi 0, %s66
    %s70 = sphi 0, %s69
    %s86 = sphi 0, %s70
    %s90 = sphi 0, %s90
    %s92 = sphi 0, %s90
    %s93 = sphi 0, %s92
    %s107 = sphi 0, %s93
    %s111 = sphi 0, %s111
    %s113 = sphi 0, %s111
    %s114 = sphi 0, %s113
    %s128 = sphi 0, %s114
    %s132 = sphi 0, %s132
    %s134 = sphi 0, %s132
    %s135 = sphi 0, %s134
    %s149 = sphi 0, %s135
    %s153 = sphi 0, %s153
    %s155 = sphi 0, %s153
    %s156 = sphi 0, %s155
    %s170 = sphi 0, %s156
    %s178 = sphi 0, %s180
    %s181 = sphi 0, %s178
    %s182 = sphi 0, %s181
    %s198 = sphi 0, %s182
    %s206 = sphi 0, %s208
    %s209 = sphi 0, %s206
    %s210 = sphi 0, %s209
    %s226 = sphi 0, %s210
  $region4: #{decoder_forward.9} parent=0 // loop_header_branch
    %17 = sbr.rel (%p15) target = $region8
  $region5: #{decoder_forward.9} parent=0 // loop_body
    %s19 = ssub.s32 %s14, 1
    %s20 = ssub.s32 %s14, 2
    %s27 = sadd.s32 1, %s22
    %p28 = scmp.ge.s32.totalorder %s27, 1
    %s29 = scalar_select %p28, 0, %s27
    %s30 = sadd.s32 1, %s21
    %s31 = scalar_select %p28, %s30, %s21
    %p32 = scmp.ge.s32.totalorder %s31, 2
    %s33 = scalar_select %p32, 0, %s31
    %s34 = ssub.s32 %s21, %s33
    %s35 = ssub.s32 %s22, %s29
    %s36 = sor.u32 %s34, %s35
    %p37 = scmp.eq.s32.totalorder %s36, 0
    %s39 = sadd.s32 %s38, 1
    %s40 = scalar_select %p37, %s38, %s39
    %p43 = pneg %p37
    %p44 = scmp.eq.s32.totalorder %s14, 1
    %p45 = por %p43, %p44
    %p46 = scmp.ne.s32.totalorder %s38, %s41
    %p47 = scmp.eq.s32.totalorder %s14, 0
    %p48 = por %p46, %p47
    %p49 = scmp.ne.s32.totalorder %s38, %s41
    %p50 = scmp.eq.s32.totalorder %s19, 1
    %p51 = por %p49, %p50
    %p52 = scmp.ne.s32.totalorder %s41, %s42
    %p53 = scmp.eq.s32.totalorder %s19, 0
    %p54 = por %p52, %p53
    %p55 = scmp.ne.s32.totalorder %s41, %s42
    %p56 = scmp.eq.s32.totalorder %s20, 1
    %p57 = por %p55, %p56
    %p59 = scmp.ne.s32.totalorder %s42, %s58
    %p60 = scmp.eq.s32.totalorder %s20, 0
    %p61 = por %p59, %p60
    %s62 = ssub.s32 %s21, %s33
    %s63 = ssub.s32 %s22, %s29
    %s64 = sor.u32 %s62, %s63
    %p65 = scmp.eq.s32.totalorder %s64, 0
    %s67 = sadd.s32 %s66, 1
    %s68 = scalar_select %p65, %s66, %s67
    %p71 = pneg %p65
    %p72 = scmp.eq.s32.totalorder %s14, 1
    %p73 = por %p71, %p72
    %p74 = scmp.ne.s32.totalorder %s66, %s69
    %p75 = scmp.eq.s32.totalorder %s14, 0
    %p76 = por %p74, %p75
    %p77 = scmp.ne.s32.totalorder %s66, %s69
    %p78 = scmp.eq.s32.totalorder %s19, 1
    %p79 = por %p77, %p78
    %p80 = scmp.ne.s32.totalorder %s69, %s70
    %p81 = scmp.eq.s32.totalorder %s19, 0
    %p82 = por %p80, %p81
    %p83 = scmp.ne.s32.totalorder %s69, %s70
    %p84 = scmp.eq.s32.totalorder %s20, 1
    %p85 = por %p83, %p84
    %p87 = scmp.ne.s32.totalorder %s70, %s86
    %p88 = scmp.eq.s32.totalorder %s20, 0
    %p89 = por %p87, %p88
    %s91 = sadd.s32 %s90, 1
    %p94 = scmp.eq.s32.totalorder %s14, 1
    %p95 = scmp.ne.s32.totalorder %s90, %s92
    %p96 = scmp.eq.s32.totalorder %s14, 0
    %p97 = por %p95, %p96
    %p98 = scmp.ne.s32.totalorder %s90, %s92
    %p99 = scmp.eq.s32.totalorder %s19, 1
    %p100 = por %p98, %p99
    %p101 = scmp.ne.s32.totalorder %s92, %s93
    %p102 = scmp.eq.s32.totalorder %s19, 0
    %p103 = por %p101, %p102
    %p104 = scmp.ne.s32.totalorder %s92, %s93
    %p105 = scmp.eq.s32.totalorder %s20, 1
    %p106 = por %p104, %p105
    %p108 = scmp.ne.s32.totalorder %s93, %s107
    %p109 = scmp.eq.s32.totalorder %s20, 0
    %p110 = por %p108, %p109
    %s112 = sadd.s32 %s111, 1
    %p115 = scmp.eq.s32.totalorder %s14, 1
    %p116 = scmp.ne.s32.totalorder %s111, %s113
    %p117 = scmp.eq.s32.totalorder %s14, 0
    %p118 = por %p116, %p117
    %p119 = scmp.ne.s32.totalorder %s111, %s113
    %p120 = scmp.eq.s32.totalorder %s19, 1
    %p121 = por %p119, %p120
    %p122 = scmp.ne.s32.totalorder %s113, %s114
    %p123 = scmp.eq.s32.totalorder %s19, 0
    %p124 = por %p122, %p123
    %p125 = scmp.ne.s32.totalorder %s113, %s114
    %p126 = scmp.eq.s32.totalorder %s20, 1
    %p127 = por %p125, %p126
    %p129 = scmp.ne.s32.totalorder %s114, %s128
    %p130 = scmp.eq.s32.totalorder %s20, 0
    %p131 = por %p129, %p130
    %s133 = sadd.s32 %s132, 1
    %p136 = scmp.eq.s32.totalorder %s14, 1
    %p137 = scmp.ne.s32.totalorder %s132, %s134
    %p138 = scmp.eq.s32.totalorder %s14, 0
    %p139 = por %p137, %p138
    %p140 = scmp.ne.s32.totalorder %s132, %s134
    %p141 = scmp.eq.s32.totalorder %s19, 1
    %p142 = por %p140, %p141
    %p143 = scmp.ne.s32.totalorder %s134, %s135
    %p144 = scmp.eq.s32.totalorder %s19, 0
    %p145 = por %p143, %p144
    %p146 = scmp.ne.s32.totalorder %s134, %s135
    %p147 = scmp.eq.s32.totalorder %s20, 1
    %p148 = por %p146, %p147
    %p150 = scmp.ne.s32.totalorder %s135, %s149
    %p151 = scmp.eq.s32.totalorder %s20, 0
    %p152 = por %p150, %p151
    %s154 = sadd.s32 %s153, 1
    %p157 = scmp.eq.s32.totalorder %s14, 1
    %p158 = scmp.ne.s32.totalorder %s153, %s155
    %p159 = scmp.eq.s32.totalorder %s14, 0
    %p160 = por %p158, %p159
    %p161 = scmp.ne.s32.totalorder %s153, %s155
    %p162 = scmp.eq.s32.totalorder %s19, 1
    %p163 = por %p161, %p162
    %p164 = scmp.ne.s32.totalorder %s155, %s156
    %p165 = scmp.eq.s32.totalorder %s19, 0
    %p166 = por %p164, %p165
    %p167 = scmp.ne.s32.totalorder %s155, %s156
    %p168 = scmp.eq.s32.totalorder %s20, 1
    %p169 = por %p167, %p168
    %p171 = scmp.ne.s32.totalorder %s156, %s170
    %p172 = scmp.eq.s32.totalorder %s20, 0
    %p173 = por %p171, %p172
    %s174 = ssub.s32 %s21, %s33
    %s175 = ssub.s32 %s22, %s29
    %s176 = sor.u32 %s174, %s175
    %p177 = scmp.eq.s32.totalorder %s176, 0
    %s179 = sadd.s32 %s178, 1
    %s180 = scalar_select %p177, %s178, %s179
    %p183 = pneg %p177
    %p184 = scmp.eq.s32.totalorder %s14, 1
    %p185 = por %p183, %p184
    %p186 = scmp.ne.s32.totalorder %s178, %s181
    %p187 = scmp.eq.s32.totalorder %s14, 0
    %p188 = por %p186, %p187
    %p189 = scmp.ne.s32.totalorder %s178, %s181
    %p190 = scmp.eq.s32.totalorder %s19, 1
    %p191 = por %p189, %p190
    %p192 = scmp.ne.s32.totalorder %s181, %s182
    %p193 = scmp.eq.s32.totalorder %s19, 0
    %p194 = por %p192, %p193
    %p195 = scmp.ne.s32.totalorder %s181, %s182
    %p196 = scmp.eq.s32.totalorder %s20, 1
    %p197 = por %p195, %p196
    %p199 = scmp.ne.s32.totalorder %s182, %s198
    %p200 = scmp.eq.s32.totalorder %s20, 0
    %p201 = por %p199, %p200
    %s202 = ssub.s32 %s21, %s33
    %s203 = ssub.s32 %s22, %s29
    %s204 = sor.u32 %s202, %s203
    %p205 = scmp.eq.s32.totalorder %s204, 0
    %s207 = sadd.s32 %s206, 1
    %s208 = scalar_select %p205, %s206, %s207
    %p211 = pneg %p205
    %p212 = scmp.eq.s32.totalorder %s14, 1
    %p213 = por %p211, %p212
    %p214 = scmp.ne.s32.totalorder %s206, %s209
    %p215 = scmp.eq.s32.totalorder %s14, 0
    %p216 = por %p214, %p215
    %p217 = scmp.ne.s32.totalorder %s206, %s209
    %p218 = scmp.eq.s32.totalorder %s19, 1
    %p219 = por %p217, %p218
    %p220 = scmp.ne.s32.totalorder %s209, %s210
    %p221 = scmp.eq.s32.totalorder %s19, 0
    %p222 = por %p220, %p221
    %p223 = scmp.ne.s32.totalorder %s209, %s210
    %p224 = scmp.eq.s32.totalorder %s20, 1
    %p225 = por %p223, %p224
    %p227 = scmp.ne.s32.totalorder %s210, %s226
    %p228 = scmp.eq.s32.totalorder %s20, 0
    %p229 = por %p227, %p228
    %p230 = scmp.le.s32.totalorder 1, %s14
    %p231 = scmp.lt.s32.totalorder %s14, 3
    %p232 = pnand %p230, %p231
    %p233 = pneg %p232
    // Predicated region
    $region9: #{decoder_forward.9} parent=5 // pred_check
      _
    $region10: #{decoder_forward.9} parent=5 // pred_check_branch
      %235 = sbr.rel (%p232) target = $region12
    $region11: #{decoder_forward.9} parent=5 // pred_region
      %s236 = ssub.s32 %s14, 1
      // Predicated region
      $region13: #{decoder_forward.9} parent=11 // pred_check
        %p237 = pneg %p103
      $region14: #{decoder_forward.9} parent=11 // pred_check_branch
        %239 = sbr.rel (%p237) target = $region16
      $region15: #{decoder_forward.9} parent=11 // pred_region
        _
      $region16: #{decoder_forward.9} parent=11 // pred_fallthru
        _
      // Predicated region
      $region17: #{decoder_forward.9} parent=11 // pred_check
        %p240 = pneg %p124
      $region18: #{decoder_forward.9} parent=11 // pred_check_branch
        %242 = sbr.rel (%p240) target = $region20
      $region19: #{decoder_forward.9} parent=11 // pred_region
        _
      $region20: #{decoder_forward.9} parent=11 // pred_fallthru
        _
      // Predicated region
      $region21: #{decoder_forward.9} parent=11 // pred_check
        %p243 = pneg %p145
      $region22: #{decoder_forward.9} parent=11 // pred_check_branch
        %245 = sbr.rel (%p243) target = $region24
      $region23: #{decoder_forward.9} parent=11 // pred_region
        _
      $region24: #{decoder_forward.9} parent=11 // pred_fallthru
        _
      // Predicated region
      $region25: #{decoder_forward.9} parent=11 // pred_check
        %p246 = pneg %p166
      $region26: #{decoder_forward.9} parent=11 // pred_check_branch
        %248 = sbr.rel (%p246) target = $region28
      $region27: #{decoder_forward.9} parent=11 // pred_region
        _
      $region28: #{decoder_forward.9} parent=11 // pred_fallthru
        _
    $region12: #{decoder_forward.9} parent=5 // pred_fallthru
      _
    %p249 = scmp.lt.s32.totalorder %s14, 2
    // Predicated region
    $region29: #{decoder_forward.9} parent=5 // pred_check
      %p250 = pneg %p249
    $region30: #{decoder_forward.9} parent=5 // pred_check_branch
      %252 = sbr.rel (%p250) target = $region32
    $region31: #{decoder_forward.9} parent=5 // pred_region
      // Predicated region
      $region33: #{decoder_forward.9} parent=31 // pred_check
        %p253 = pneg %p48
      $region34: #{decoder_forward.9} parent=31 // pred_check_branch
        %255 = sbr.rel (%p253) target = $region36
      $region35: #{decoder_forward.9} parent=31 // pred_region
        %s256 = smul.u32 2, %s22
        %p257 = scmp.lt.s32.totalorder %s21, 1
        %s258 = scalar_select %p257, %s21, 1
        %p259 = scmp.lt.s32.totalorder %s256, 1
        %s260 = scalar_select %p259, %s256, 1
        %s261 = smul.addr %s258, 2
        %s262 = sadd.s32 %s260, %s261
        %s263 = smul.addr %s262, 4
        %s264 = scalar_lea.vmem %s0, %s263
        %s265 = smul.u32 2, %s22
      $region36: #{decoder_forward.9} parent=31 // pred_fallthru
        _
      // Predicated region
      $region37: #{decoder_forward.9} parent=31 // pred_check
        %p266 = pneg %p76
      $region38: #{decoder_forward.9} parent=31 // pred_check_branch
        %268 = sbr.rel (%p266) target = $region40
      $region39: #{decoder_forward.9} parent=31 // pred_region
        %s269 = smul.u32 2, %s22
        %p270 = scmp.lt.s32.totalorder %s21, 1
        %s271 = scalar_select %p270, %s21, 1
        %p272 = scmp.lt.s32.totalorder %s269, 1
        %s273 = scalar_select %p272, %s269, 1
        %s274 = smul.addr %s271, 2
        %s275 = sadd.s32 %s273, %s274
        %s276 = smul.addr %s275, 4
        %s277 = scalar_lea.vmem %s1, %s276
        %s278 = smul.u32 2, %s22
      $region40: #{decoder_forward.9} parent=31 // pred_fallthru
        _
    $region32: #{decoder_forward.9} parent=5 // pred_fallthru
      _
    %p279 = scmp.le.s32.totalorder 1, %s14
    %p280 = scmp.lt.s32.totalorder %s14, 3
    %p281 = pnand %p279, %p280
    %p282 = pneg %p281
    // Predicated region
    $region41: #{decoder_forward.9} parent=5 // pred_check
      _
    $region42: #{decoder_forward.9} parent=5 // pred_check_branch
      %284 = sbr.rel (%p281) target = $region44
    $region43: #{decoder_forward.9} parent=5 // pred_region
      %s285 = ssub.s32 %s14, 1
      %s286 = smul.u32 2, %s24
      %p287 = scmp.lt.s32.totalorder %s23, 1
      %s288 = scalar_select %p287, %s23, 1
      %p289 = scmp.lt.s32.totalorder %s286, 1
      %s290 = scalar_select %p289, %s286, 1
      %s291 = smul.addr %s288, 2
      %s292 = sadd.s32 %s290, %s291
      %s293 = smul.addr %s292, 4
      %s294 = scalar_lea.vmem %s0, %s293
      %p295 = pneg %p54
      %p296 = pneg %p51
      %s297 = smul.u32 2, %s24
      %p298 = scmp.lt.s32.totalorder %s23, 1
      %s299 = scalar_select %p298, %s23, 1
      %p300 = scmp.lt.s32.totalorder %s297, 1
      %s301 = scalar_select %p300, %s297, 1
      %s302 = smul.addr %s299, 2
      %s303 = sadd.s32 %s301, %s302
      %s304 = smul.addr %s303, 4
      %s305 = scalar_lea.vmem %s1, %s304
      %p306 = pneg %p82
      %p307 = pneg %p79
      %p308 = pneg %p103
      %p309 = pneg %p100
      %p310 = pneg %p124
      %p311 = pneg %p121
      %p312 = pneg %p145
      %p313 = pneg %p142
      %p314 = pneg %p166
      %p315 = pneg %p163
      %p316 = pneg %p194
      %p317 = pneg %p191
      %s318 = smul.u32 2, %s24
      %p319 = scmp.lt.s32.totalorder %s23, 1
      %s320 = scalar_select %p319, %s23, 1
      %p321 = scmp.lt.s32.totalorder %s318, 1
      %s322 = scalar_select %p321, %s318, 1
      %s323 = smul.addr %s320, 2
      %s324 = sadd.s32 %s322, %s323
      %s325 = smul.addr %s324, 4
      %s326 = scalar_lea.vmem %s6, %s325
      %p327 = pneg %p222
      %p328 = pneg %p219
      %s329 = smul.u32 2, %s24
      %p330 = scmp.lt.s32.totalorder %s23, 1
      %s331 = scalar_select %p330, %s23, 1
      %p332 = scmp.lt.s32.totalorder %s329, 1
      %s333 = scalar_select %p332, %s329, 1
      %s334 = smul.addr %s331, 2
      %s335 = sadd.s32 %s333, %s334
      %s336 = smul.addr %s335, 4
      %s337 = scalar_lea.vmem %s7, %s336
      %s338 = smul.u32 2, %s24
      %p339 = scmp.lt.s32.totalorder %s23, 1
      %s340 = scalar_select %p339, %s23, 1
      %p341 = scmp.lt.s32.totalorder %s338, 1
      %s342 = scalar_select %p341, %s338, 1
      %s343 = smul.addr %s340, 2
      %s344 = sadd.s32 %s342, %s343
      %s345 = smul.addr %s344, 4
      %s346 = scalar_lea.vmem %s0, %s345
      %s347 = smul.u32 2, %s24
      %s348 = smul.u32 2, %s24
      %p349 = scmp.lt.s32.totalorder %s23, 1
      %s350 = scalar_select %p349, %s23, 1
      %p351 = scmp.lt.s32.totalorder %s348, 1
      %s352 = scalar_select %p351, %s348, 1
      %s353 = smul.addr %s350, 2
      %s354 = sadd.s32 %s352, %s353
      %s355 = smul.addr %s354, 4
      %s356 = scalar_lea.vmem %s1, %s355
      %s357 = smul.u32 2, %s24
      %s358 = smul.u32 2, %s24
      %p359 = scmp.lt.s32.totalorder %s23, 1
      %s360 = scalar_select %p359, %s23, 1
      %p361 = scmp.lt.s32.totalorder %s358, 1
      %s362 = scalar_select %p361, %s358, 1
      %s363 = smul.addr %s360, 2
      %s364 = sadd.s32 %s362, %s363
      %s365 = smul.addr %s364, 4
      %s366 = scalar_lea.vmem %s6, %s365
      %s367 = smul.u32 2, %s24
      %s368 = smul.u32 2, %s24
      %p369 = scmp.lt.s32.totalorder %s23, 1
      %s370 = scalar_select %p369, %s23, 1
      %p371 = scmp.lt.s32.totalorder %s368, 1
      %s372 = scalar_select %p371, %s368, 1
      %s373 = smul.addr %s370, 2
      %s374 = sadd.s32 %s372, %s373
      %s375 = smul.addr %s374, 4
      %s376 = scalar_lea.vmem %s7, %s375
      %s377 = smul.u32 2, %s24
      %v379 = vld [vmem:[%s346] sm:$0xf]
      %v380 = vld [vmem:[%s346 + $0x4] sm:$0xf]
      %v381 = vld [vmem:[%s356] sm:$0xf]
      %v382 = vld [vmem:[%s356 + $0x4] sm:$0xf]
      %v383 = vld [vmem:[%s2] sm:$0xf]
      %v384 = vld [vmem:[%s2 + $0x4] sm:$0xf]
      %v385 = vld [vmem:[%s2 + $0x8] sm:$0xf]
      %v386 = vld [vmem:[%s2 + $0xc] sm:$0xf]
      %v387 = vld [vmem:[%s2 + $0x10] sm:$0xf]
      %v388 = vld [vmem:[%s2 + $0x14] sm:$0xf]
      %v389 = vld [vmem:[%s2 + $0x18] sm:$0xf]
      %v390 = vld [vmem:[%s2 + $0x1c] sm:$0xf]
      %v391 = vld [vmem:[%s2 + $0x20] sm:$0xf]
      %v392 = vld [vmem:[%s2 + $0x24] sm:$0xf]
      %v393 = vld [vmem:[%s2 + $0x28] sm:$0xf]
      %v394 = vld [vmem:[%s2 + $0x2c] sm:$0xf]
      %v395 = vld [vmem:[%s2 + $0x30] sm:$0xf]
      %v396 = vld [vmem:[%s2 + $0x34] sm:$0xf]
      %v397 = vld [vmem:[%s2 + $0x38] sm:$0xf]
      %v398 = vld [vmem:[%s2 + $0x3c] sm:$0xf]
      %v399 = vld [vmem:[%s3] sm:$0x1]
      %v401 = vlaneseq
      %v402 = vshrl.u32 %v401, 7
      %v403 = vsub.s32 0, %v402
      %v404 = vrot.slane %v399, %v403
      %v408 = vunpack.c.l.b16 %v379
      %v409 = vunpack.c.l.b16 %v380
      %v410 = vpack.c.b16 %v409, %v408
      %v428 = vunpack.c.l.b16 %v383
      %v429 = vunpack.c.l.b16 %v384
      %v430 = vunpack.c.l.b16 %v385
      %v431 = vunpack.c.l.b16 %v386
      %v432 = vunpack.c.l.b16 %v387
      %v433 = vunpack.c.l.b16 %v388
      %v434 = vunpack.c.l.b16 %v389
      %v435 = vunpack.c.l.b16 %v390
      %v436 = vunpack.c.l.b16 %v391
      %v437 = vunpack.c.l.b16 %v392
      %v438 = vunpack.c.l.b16 %v393
      %v439 = vunpack.c.l.b16 %v394
      %v440 = vunpack.c.l.b16 %v395
      %v441 = vunpack.c.l.b16 %v396
      %v442 = vunpack.c.l.b16 %v397
      %v443 = vunpack.c.l.b16 %v398
      %v444 = vpack.c.b16 %v429, %v428
      %v445 = vpack.c.b16 %v431, %v430
      %v446 = vpack.c.b16 %v433, %v432
      %v447 = vpack.c.b16 %v435, %v434
      %v448 = vpack.c.b16 %v437, %v436
      %v449 = vpack.c.b16 %v439, %v438
      %v450 = vpack.c.b16 %v441, %v440
      %v451 = vpack.c.b16 %v443, %v442
      %460 = vmatprep.subr.bf16.mxu0 0
      %461 = vmatpush1.bf16.msra.mxu0 %v451
      %462 = vmatprep.subr.bf16.mxu0 0
      %463 = vmatpush1.bf16.msra.mxu0 %v450
      %464 = vmatprep.subr.bf16.mxu0 0
      %465 = vmatpush1.bf16.msra.mxu0 %v449
      %466 = vmatprep.subr.bf16.mxu0 0
      %467 = vmatpush1.bf16.msra.mxu0 %v448
      %468 = vmatprep.subr.bf16.mxu0 0
      %469 = vmatpush1.bf16.msra.mxu0 %v447
      %470 = vmatprep.subr.bf16.mxu0 0
      %471 = vmatpush1.bf16.msra.mxu0 %v446
      %472 = vmatprep.subr.bf16.mxu0 0
      %473 = vmatpush1.bf16.msra.mxu0 %v445
      %474 = vmatprep.subr.bf16.mxu0 0
      %475 = vmatpush1.bf16.msra.mxu0 %v444
      %476 = vmatprep.subr.bf16.mxu0 0
      %477 = vmatpush2.bf16.msra.mxu0 0
      %478 = vmatprep.subr.bf16.mxu0 0
      %479 = vmatpush2.bf16.msra.mxu0 0
      %480 = vmatprep.subr.bf16.mxu0 0
      %481 = vmatpush2.bf16.msra.mxu0 0
      %482 = vmatprep.subr.bf16.mxu0 0
      %483 = vmatpush2.bf16.msra.mxu0 0
      %484 = vmatprep.subr.bf16.mxu0 0
      %485 = vmatpush2.bf16.msra.mxu0 0
      %486 = vmatprep.subr.bf16.mxu0 0
      %487 = vmatpush2.bf16.msra.mxu0 0
      %488 = vmatprep.subr.bf16.mxu0 0
      %489 = vmatpush2.bf16.msra.mxu0 0
      %490 = vmatprep.subr.bf16.mxu0 0
      %491 = vmatpush2.bf16.msra.mxu0 0
      %492 = vmatprep.mubr.bf16.mxu0 0
      %493 = vmatmul.mubr.bf16.gmra.mxu0 %v410
      %v494 = vpop.f32.mrf.mxu0
      %v495 = vadd.f32 %v404, %v494
      %v496 = vpop.f32.mrf.mxu0
      %v497 = vpop.f32.mrf.mxu0
      %v498 = vadd.f32 %v404, %v497
      %v499 = vpop.f32.mrf.mxu0
      %500 = vdwg.mxu0
      %v501 = vld [vmem:[%s4] sm:$0xf]
      %v502 = vld [vmem:[%s4 + $0x4] sm:$0xf]
      %v503 = vld [vmem:[%s4 + $0x8] sm:$0xf]
      %v504 = vld [vmem:[%s4 + $0xc] sm:$0xf]
      %v505 = vld [vmem:[%s4 + $0x10] sm:$0xf]
      %v506 = vld [vmem:[%s4 + $0x14] sm:$0xf]
      %v507 = vld [vmem:[%s4 + $0x18] sm:$0xf]
      %v508 = vld [vmem:[%s4 + $0x1c] sm:$0xf]
      %v509 = vld [vmem:[%s4 + $0x20] sm:$0xf]
      %v510 = vld [vmem:[%s4 + $0x24] sm:$0xf]
      %v511 = vld [vmem:[%s4 + $0x28] sm:$0xf]
      %v512 = vld [vmem:[%s4 + $0x2c] sm:$0xf]
      %v513 = vld [vmem:[%s4 + $0x30] sm:$0xf]
      %v514 = vld [vmem:[%s4 + $0x34] sm:$0xf]
      %v515 = vld [vmem:[%s4 + $0x38] sm:$0xf]
      %v516 = vld [vmem:[%s4 + $0x3c] sm:$0xf]
      %v517 = vld [vmem:[%s5] sm:$0x1]
      %v519 = vlaneseq
      %v520 = vshrl.u32 %v519, 7
      %v521 = vsub.s32 0, %v520
      %v522 = vrot.slane %v517, %v521
      %v526 = vunpack.c.l.b16 %v381
      %v527 = vunpack.c.l.b16 %v382
      %v528 = vpack.c.b16 %v527, %v526
      %v546 = vunpack.c.l.b16 %v501
      %v547 = vunpack.c.l.b16 %v502
      %v548 = vunpack.c.l.b16 %v503
      %v549 = vunpack.c.l.b16 %v504
      %v550 = vunpack.c.l.b16 %v505
      %v551 = vunpack.c.l.b16 %v506
      %v552 = vunpack.c.l.b16 %v507
      %v553 = vunpack.c.l.b16 %v508
      %v554 = vunpack.c.l.b16 %v509
      %v555 = vunpack.c.l.b16 %v510
      %v556 = vunpack.c.l.b16 %v511
      %v557 = vunpack.c.l.b16 %v512
      %v558 = vunpack.c.l.b16 %v513
      %v559 = vunpack.c.l.b16 %v514
      %v560 = vunpack.c.l.b16 %v515
      %v561 = vunpack.c.l.b16 %v516
      %v562 = vpack.c.b16 %v547, %v546
      %v563 = vpack.c.b16 %v549, %v548
      %v564 = vpack.c.b16 %v551, %v550
      %v565 = vpack.c.b16 %v553, %v552
      %v566 = vpack.c.b16 %v555, %v554
      %v567 = vpack.c.b16 %v557, %v556
      %v568 = vpack.c.b16 %v559, %v558
      %v569 = vpack.c.b16 %v561, %v560
      %578 = vmatprep.subr.bf16.mxu0 0
      %579 = vmatpush1.bf16.msra.mxu0 %v569
      %580 = vmatprep.subr.bf16.mxu0 0
      %581 = vmatpush1.bf16.msra.mxu0 %v568
      %582 = vmatprep.subr.bf16.mxu0 0
      %583 = vmatpush1.bf16.msra.mxu0 %v567
      %584 = vmatprep.subr.bf16.mxu0 0
      %585 = vmatpush1.bf16.msra.mxu0 %v566
      %586 = vmatprep.subr.bf16.mxu0 0
      %587 = vmatpush1.bf16.msra.mxu0 %v565
      %588 = vmatprep.subr.bf16.mxu0 0
      %589 = vmatpush1.bf16.msra.mxu0 %v564
      %590 = vmatprep.subr.bf16.mxu0 0
      %591 = vmatpush1.bf16.msra.mxu0 %v563
      %592 = vmatprep.subr.bf16.mxu0 0
      %593 = vmatpush1.bf16.msra.mxu0 %v562
      %594 = vmatprep.subr.bf16.mxu0 0
      %595 = vmatpush2.bf16.msra.mxu0 0
      %596 = vmatprep.subr.bf16.mxu0 0
      %597 = vmatpush2.bf16.msra.mxu0 0
      %598 = vmatprep.subr.bf16.mxu0 0
      %599 = vmatpush2.bf16.msra.mxu0 0
      %600 = vmatprep.subr.bf16.mxu0 0
      %601 = vmatpush2.bf16.msra.mxu0 0
      %602 = vmatprep.subr.bf16.mxu0 0
      %603 = vmatpush2.bf16.msra.mxu0 0
      %604 = vmatprep.subr.bf16.mxu0 0
      %605 = vmatpush2.bf16.msra.mxu0 0
      %606 = vmatprep.subr.bf16.mxu0 0
      %607 = vmatpush2.bf16.msra.mxu0 0
      %608 = vmatprep.subr.bf16.mxu0 0
      %609 = vmatpush2.bf16.msra.mxu0 0
      %610 = vmatprep.mubr.bf16.mxu0 0
      %611 = vmatmul.mubr.bf16.gmra.mxu0 %v528
      %v612 = vpop.f32.mrf.mxu0
      %v613 = vadd.f32 %v522, %v612
      %v614 = vpop.f32.mrf.mxu0
      %v615 = vpop.f32.mrf.mxu0
      %v616 = vadd.f32 %v522, %v615
      %v617 = vpop.f32.mrf.mxu0
      %618 = vdwg.mxu0
      %v619 = vpack.c.bf16 %v498, %v495
      %v621 = vunpack.c.l.b16 %v619
      %v622 = vunpack.c.h.b16 %v619
      %v623 = vpack.c.b16 %v621, %v621
      %v624 = vpack.c.b16 %v622, %v622
      %627 = vst [vmem:[%s366] sm:$0xf] %v623
      %628 = vst [vmem:[%s366 + $0x4] sm:$0xf] %v624
      %v629 = vpack.c.bf16 %v616, %v613
      %v631 = vunpack.c.l.b16 %v629
      %v632 = vunpack.c.h.b16 %v629
      %v633 = vpack.c.b16 %v631, %v631
      %v634 = vpack.c.b16 %v632, %v632
      %637 = vst [vmem:[%s376] sm:$0xf] %v633
      %638 = vst [vmem:[%s376 + $0x4] sm:$0xf] %v634
      %s639 = smul.u32 2, %s24
      %p640 = scmp.lt.s32.totalorder %s23, 1
      %s641 = scalar_select %p640, %s23, 1
      %p642 = scmp.lt.s32.totalorder %s639, 1
      %s643 = scalar_select %p642, %s639, 1
      %s644 = smul.addr %s641, 2
      %s645 = sadd.s32 %s643, %s644
      %s646 = smul.addr %s645, 4
      %s647 = scalar_lea.vmem %s6, %s646
      %s648 = smul.u32 2, %s24
      %p649 = scmp.lt.s32.totalorder %s23, 1
      %s650 = scalar_select %p649, %s23, 1
      %p651 = scmp.lt.s32.totalorder %s648, 1
      %s652 = scalar_select %p651, %s648, 1
      %s653 = smul.addr %s650, 2
      %s654 = sadd.s32 %s652, %s653
      %s655 = smul.addr %s654, 4
      %s656 = scalar_lea.vmem %s7, %s655
      // Predicated region
      $region45: #{decoder_forward.9} parent=43 // pred_check
        %p657 = pneg %p191
      $region46: #{decoder_forward.9} parent=43 // pred_check_branch
        %659 = sbr.rel (%p657) target = $region48
      $region47: #{decoder_forward.9} parent=43 // pred_region
        %s660 = smul.u32 2, %s24
      $region48: #{decoder_forward.9} parent=43 // pred_fallthru
        _
      // Predicated region
      $region49: #{decoder_forward.9} parent=43 // pred_check
        %p661 = pneg %p219
      $region50: #{decoder_forward.9} parent=43 // pred_check_branch
        %663 = sbr.rel (%p661) target = $region52
      $region51: #{decoder_forward.9} parent=43 // pred_region
        %s664 = smul.u32 2, %s24
      $region52: #{decoder_forward.9} parent=43 // pred_fallthru
        _
    $region44: #{decoder_forward.9} parent=5 // pred_fallthru
      _
    %p665 = scmp.le.s32.totalorder 2, %s14
    // Predicated region
    $region53: #{decoder_forward.9} parent=5 // pred_check
      %p666 = pneg %p665
    $region54: #{decoder_forward.9} parent=5 // pred_check_branch
      %668 = sbr.rel (%p666) target = $region56
    $region55: #{decoder_forward.9} parent=5 // pred_region
      %s669 = ssub.s32 %s14, 2
      // Predicated region
      $region57: #{decoder_forward.9} parent=55 // pred_check
        %p670 = pneg %p197
      $region58: #{decoder_forward.9} parent=55 // pred_check_branch
        %672 = sbr.rel (%p670) target = $region60
      $region59: #{decoder_forward.9} parent=55 // pred_region
        %s673 = smul.u32 2, %s26
        %p674 = scmp.lt.s32.totalorder %s25, 1
        %s675 = scalar_select %p674, %s25, 1
        %p676 = scmp.lt.s32.totalorder %s673, 1
        %s677 = scalar_select %p676, %s673, 1
        %s678 = smul.addr %s675, 2
        %s679 = sadd.s32 %s677, %s678
        %s680 = smul.addr %s679, 4
        %s681 = scalar_lea.vmem %s6, %s680
      $region60: #{decoder_forward.9} parent=55 // pred_fallthru
        _
      // Predicated region
      $region61: #{decoder_forward.9} parent=55 // pred_check
        %p682 = pneg %p225
      $region62: #{decoder_forward.9} parent=55 // pred_check_branch
        %684 = sbr.rel (%p682) target = $region64
      $region63: #{decoder_forward.9} parent=55 // pred_region
        %s685 = smul.u32 2, %s26
        %p686 = scmp.lt.s32.totalorder %s25, 1
        %s687 = scalar_select %p686, %s25, 1
        %p688 = scmp.lt.s32.totalorder %s685, 1
        %s689 = scalar_select %p688, %s685, 1
        %s690 = smul.addr %s687, 2
        %s691 = sadd.s32 %s689, %s690
        %s692 = smul.addr %s691, 4
        %s693 = scalar_lea.vmem %s7, %s692
      $region64: #{decoder_forward.9} parent=55 // pred_fallthru
        _
    $region56: #{decoder_forward.9} parent=5 // pred_fallthru
      _
  $region6: #{decoder_forward.9} parent=0 // loop_footer
    %s18 = sadd.s32 1, %s14
  $region7: #{decoder_forward.9} parent=0 // loop_footer_branch
    %13 = sbr.rel target = $region3
  $region8: #{decoder_forward.9} parent=0 // loop_exit
    _

// kernel: decoder_forward.11
$region0: #{decoder_forward.11}
  #allocation0 [shape = 'u32[]', space=smem, size = 0x4, offset = 0x4, fixed_abs, tag = 'smem constant byte address 0x4 - core index']
  #allocation1 [shape = 'u32[144,128]{1,0:T(1,128)}', space=vmem, size = 0x12000, scoped, tag = 'internal scratch']
  %s0 = inlined_call_operand.vmem [shape: f32[2,8,128], index: 0, kind: input, shape index: {}]
  %s1 = inlined_call_operand.vmem [shape: f32[1,128], index: 1, kind: input, shape index: {}]
  %s2 = inlined_call_operand.vmem [shape: f32[1,128], index: 2, kind: input, shape index: {}]
  %s3 = inlined_call_operand.vmem [shape: bf16[128,256], index: 3, kind: input, shape index: {}]
  %s4 = inlined_call_operand.vmem [shape: f32[1,256], index: 4, kind: input, shape index: {}]
  %s5 = inlined_call_operand.vmem [shape: bf16[256,128], index: 5, kind: input, shape index: {}]
  %s6 = inlined_call_operand.vmem [shape: f32[1,128], index: 6, kind: input, shape index: {}]
  %s7 = inlined_call_operand.vmem [shape: f32[2,8,128], index: 7, kind: output, shape index: {}]
  %s8 = sld [smem:[#allocation0]]
  $region61: #{decoder_forward.11} parent=0
    _
  %s10 = ssub.s32 1, %s8
  %s11 = scalar_select 0, %s10, %s8
  loop: start=0, step=1, limit=4
  $region2: #{decoder_forward.11} parent=0 // loop_pre_header
    _
  $region3: #{decoder_forward.11} parent=0 // loop_header
    %s13 = sphi 0, %s17
    %p14 = scmp.ge.s32.totalorder %s13, 4
    %s20 = sphi 0, %s32
    %s21 = sphi 0, %s28
    %s22 = sphi 0, %s20
    %s23 = sphi 0, %s21
    %s24 = sphi 0, %s22
    %s25 = sphi 0, %s23
    %s37 = sphi 0, %s39
    %s40 = sphi 0, %s37
    %s41 = sphi 0, %s40
    %s57 = sphi 0, %s41
    %s61 = sphi 0, %s61
    %s63 = sphi 0, %s61
    %s64 = sphi 0, %s63
    %s78 = sphi 0, %s64
    %s82 = sphi 0, %s82
    %s84 = sphi 0, %s82
    %s85 = sphi 0, %s84
    %s99 = sphi 0, %s85
    %s103 = sphi 0, %s103
    %s105 = sphi 0, %s103
    %s106 = sphi 0, %s105
    %s120 = sphi 0, %s106
    %s124 = sphi 0, %s124
    %s126 = sphi 0, %s124
    %s127 = sphi 0, %s126
    %s141 = sphi 0, %s127
    %s145 = sphi 0, %s145
    %s147 = sphi 0, %s145
    %s148 = sphi 0, %s147
    %s162 = sphi 0, %s148
    %s166 = sphi 0, %s166
    %s168 = sphi 0, %s166
    %s169 = sphi 0, %s168
    %s183 = sphi 0, %s169
    %s191 = sphi 0, %s193
    %s194 = sphi 0, %s191
    %s195 = sphi 0, %s194
    %s211 = sphi 0, %s195
  $region4: #{decoder_forward.11} parent=0 // loop_header_branch
    %16 = sbr.rel (%p14) target = $region8
  $region5: #{decoder_forward.11} parent=0 // loop_body
    %s18 = ssub.s32 %s13, 1
    %s19 = ssub.s32 %s13, 2
    %s26 = sadd.s32 1, %s21
    %p27 = scmp.ge.s32.totalorder %s26, 1
    %s28 = scalar_select %p27, 0, %s26
    %s29 = sadd.s32 1, %s20
    %s30 = scalar_select %p27, %s29, %s20
    %p31 = scmp.ge.s32.totalorder %s30, 2
    %s32 = scalar_select %p31, 0, %s30
    %s33 = ssub.s32 %s20, %s32
    %s34 = ssub.s32 %s21, %s28
    %s35 = sor.u32 %s33, %s34
    %p36 = scmp.eq.s32.totalorder %s35, 0
    %s38 = sadd.s32 %s37, 1
    %s39 = scalar_select %p36, %s37, %s38
    %p42 = pneg %p36
    %p43 = scmp.eq.s32.totalorder %s13, 1
    %p44 = por %p42, %p43
    %p45 = scmp.ne.s32.totalorder %s37, %s40
    %p46 = scmp.eq.s32.totalorder %s13, 0
    %p47 = por %p45, %p46
    %p48 = scmp.ne.s32.totalorder %s37, %s40
    %p49 = scmp.eq.s32.totalorder %s18, 1
    %p50 = por %p48, %p49
    %p51 = scmp.ne.s32.totalorder %s40, %s41
    %p52 = scmp.eq.s32.totalorder %s18, 0
    %p53 = por %p51, %p52
    %p54 = scmp.ne.s32.totalorder %s40, %s41
    %p55 = scmp.eq.s32.totalorder %s19, 1
    %p56 = por %p54, %p55
    %p58 = scmp.ne.s32.totalorder %s41, %s57
    %p59 = scmp.eq.s32.totalorder %s19, 0
    %p60 = por %p58, %p59
    %s62 = sadd.s32 %s61, 1
    %p65 = scmp.eq.s32.totalorder %s13, 1
    %p66 = scmp.ne.s32.totalorder %s61, %s63
    %p67 = scmp.eq.s32.totalorder %s13, 0
    %p68 = por %p66, %p67
    %p69 = scmp.ne.s32.totalorder %s61, %s63
    %p70 = scmp.eq.s32.totalorder %s18, 1
    %p71 = por %p69, %p70
    %p72 = scmp.ne.s32.totalorder %s63, %s64
    %p73 = scmp.eq.s32.totalorder %s18, 0
    %p74 = por %p72, %p73
    %p75 = scmp.ne.s32.totalorder %s63, %s64
    %p76 = scmp.eq.s32.totalorder %s19, 1
    %p77 = por %p75, %p76
    %p79 = scmp.ne.s32.totalorder %s64, %s78
    %p80 = scmp.eq.s32.totalorder %s19, 0
    %p81 = por %p79, %p80
    %s83 = sadd.s32 %s82, 1
    %p86 = scmp.eq.s32.totalorder %s13, 1
    %p87 = scmp.ne.s32.totalorder %s82, %s84
    %p88 = scmp.eq.s32.totalorder %s13, 0
    %p89 = por %p87, %p88
    %p90 = scmp.ne.s32.totalorder %s82, %s84
    %p91 = scmp.eq.s32.totalorder %s18, 1
    %p92 = por %p90, %p91
    %p93 = scmp.ne.s32.totalorder %s84, %s85
    %p94 = scmp.eq.s32.totalorder %s18, 0
    %p95 = por %p93, %p94
    %p96 = scmp.ne.s32.totalorder %s84, %s85
    %p97 = scmp.eq.s32.totalorder %s19, 1
    %p98 = por %p96, %p97
    %p100 = scmp.ne.s32.totalorder %s85, %s99
    %p101 = scmp.eq.s32.totalorder %s19, 0
    %p102 = por %p100, %p101
    %s104 = sadd.s32 %s103, 1
    %p107 = scmp.eq.s32.totalorder %s13, 1
    %p108 = scmp.ne.s32.totalorder %s103, %s105
    %p109 = scmp.eq.s32.totalorder %s13, 0
    %p110 = por %p108, %p109
    %p111 = scmp.ne.s32.totalorder %s103, %s105
    %p112 = scmp.eq.s32.totalorder %s18, 1
    %p113 = por %p111, %p112
    %p114 = scmp.ne.s32.totalorder %s105, %s106
    %p115 = scmp.eq.s32.totalorder %s18, 0
    %p116 = por %p114, %p115
    %p117 = scmp.ne.s32.totalorder %s105, %s106
    %p118 = scmp.eq.s32.totalorder %s19, 1
    %p119 = por %p117, %p118
    %p121 = scmp.ne.s32.totalorder %s106, %s120
    %p122 = scmp.eq.s32.totalorder %s19, 0
    %p123 = por %p121, %p122
    %s125 = sadd.s32 %s124, 1
    %p128 = scmp.eq.s32.totalorder %s13, 1
    %p129 = scmp.ne.s32.totalorder %s124, %s126
    %p130 = scmp.eq.s32.totalorder %s13, 0
    %p131 = por %p129, %p130
    %p132 = scmp.ne.s32.totalorder %s124, %s126
    %p133 = scmp.eq.s32.totalorder %s18, 1
    %p134 = por %p132, %p133
    %p135 = scmp.ne.s32.totalorder %s126, %s127
    %p136 = scmp.eq.s32.totalorder %s18, 0
    %p137 = por %p135, %p136
    %p138 = scmp.ne.s32.totalorder %s126, %s127
    %p139 = scmp.eq.s32.totalorder %s19, 1
    %p140 = por %p138, %p139
    %p142 = scmp.ne.s32.totalorder %s127, %s141
    %p143 = scmp.eq.s32.totalorder %s19, 0
    %p144 = por %p142, %p143
    %s146 = sadd.s32 %s145, 1
    %p149 = scmp.eq.s32.totalorder %s13, 1
    %p150 = scmp.ne.s32.totalorder %s145, %s147
    %p151 = scmp.eq.s32.totalorder %s13, 0
    %p152 = por %p150, %p151
    %p153 = scmp.ne.s32.totalorder %s145, %s147
    %p154 = scmp.eq.s32.totalorder %s18, 1
    %p155 = por %p153, %p154
    %p156 = scmp.ne.s32.totalorder %s147, %s148
    %p157 = scmp.eq.s32.totalorder %s18, 0
    %p158 = por %p156, %p157
    %p159 = scmp.ne.s32.totalorder %s147, %s148
    %p160 = scmp.eq.s32.totalorder %s19, 1
    %p161 = por %p159, %p160
    %p163 = scmp.ne.s32.totalorder %s148, %s162
    %p164 = scmp.eq.s32.totalorder %s19, 0
    %p165 = por %p163, %p164
    %s167 = sadd.s32 %s166, 1
    %p170 = scmp.eq.s32.totalorder %s13, 1
    %p171 = scmp.ne.s32.totalorder %s166, %s168
    %p172 = scmp.eq.s32.totalorder %s13, 0
    %p173 = por %p171, %p172
    %p174 = scmp.ne.s32.totalorder %s166, %s168
    %p175 = scmp.eq.s32.totalorder %s18, 1
    %p176 = por %p174, %p175
    %p177 = scmp.ne.s32.totalorder %s168, %s169
    %p178 = scmp.eq.s32.totalorder %s18, 0
    %p179 = por %p177, %p178
    %p180 = scmp.ne.s32.totalorder %s168, %s169
    %p181 = scmp.eq.s32.totalorder %s19, 1
    %p182 = por %p180, %p181
    %p184 = scmp.ne.s32.totalorder %s169, %s183
    %p185 = scmp.eq.s32.totalorder %s19, 0
    %p186 = por %p184, %p185
    %s187 = ssub.s32 %s20, %s32
    %s188 = ssub.s32 %s21, %s28
    %s189 = sor.u32 %s187, %s188
    %p190 = scmp.eq.s32.totalorder %s189, 0
    %s192 = sadd.s32 %s191, 1
    %s193 = scalar_select %p190, %s191, %s192
    %p196 = pneg %p190
    %p197 = scmp.eq.s32.totalorder %s13, 1
    %p198 = por %p196, %p197
    %p199 = scmp.ne.s32.totalorder %s191, %s194
    %p200 = scmp.eq.s32.totalorder %s13, 0
    %p201 = por %p199, %p200
    %p202 = scmp.ne.s32.totalorder %s191, %s194
    %p203 = scmp.eq.s32.totalorder %s18, 1
    %p204 = por %p202, %p203
    %p205 = scmp.ne.s32.totalorder %s194, %s195
    %p206 = scmp.eq.s32.totalorder %s18, 0
    %p207 = por %p205, %p206
    %p208 = scmp.ne.s32.totalorder %s194, %s195
    %p209 = scmp.eq.s32.totalorder %s19, 1
    %p210 = por %p208, %p209
    %p212 = scmp.ne.s32.totalorder %s195, %s211
    %p213 = scmp.eq.s32.totalorder %s19, 0
    %p214 = por %p212, %p213
    %p215 = scmp.le.s32.totalorder 1, %s13
    %p216 = scmp.lt.s32.totalorder %s13, 3
    %p217 = pnand %p215, %p216
    %p218 = pneg %p217
    // Predicated region
    $region9: #{decoder_forward.11} parent=5 // pred_check
      _
    $region10: #{decoder_forward.11} parent=5 // pred_check_branch
      %220 = sbr.rel (%p217) target = $region12
    $region11: #{decoder_forward.11} parent=5 // pred_region
      %s221 = ssub.s32 %s13, 1
      // Predicated region
      $region13: #{decoder_forward.11} parent=11 // pred_check
        %p222 = pneg %p74
      $region14: #{decoder_forward.11} parent=11 // pred_check_branch
        %224 = sbr.rel (%p222) target = $region16
      $region15: #{decoder_forward.11} parent=11 // pred_region
        _
      $region16: #{decoder_forward.11} parent=11 // pred_fallthru
        _
      // Predicated region
      $region17: #{decoder_forward.11} parent=11 // pred_check
        %p225 = pneg %p95
      $region18: #{decoder_forward.11} parent=11 // pred_check_branch
        %227 = sbr.rel (%p225) target = $region20
      $region19: #{decoder_forward.11} parent=11 // pred_region
        _
      $region20: #{decoder_forward.11} parent=11 // pred_fallthru
        _
      // Predicated region
      $region21: #{decoder_forward.11} parent=11 // pred_check
        %p228 = pneg %p116
      $region22: #{decoder_forward.11} parent=11 // pred_check_branch
        %230 = sbr.rel (%p228) target = $region24
      $region23: #{decoder_forward.11} parent=11 // pred_region
        _
      $region24: #{decoder_forward.11} parent=11 // pred_fallthru
        _
      // Predicated region
      $region25: #{decoder_forward.11} parent=11 // pred_check
        %p231 = pneg %p137
      $region26: #{decoder_forward.11} parent=11 // pred_check_branch
        %233 = sbr.rel (%p231) target = $region28
      $region27: #{decoder_forward.11} parent=11 // pred_region
        _
      $region28: #{decoder_forward.11} parent=11 // pred_fallthru
        _
      // Predicated region
      $region29: #{decoder_forward.11} parent=11 // pred_check
        %p234 = pneg %p158
      $region30: #{decoder_forward.11} parent=11 // pred_check_branch
        %236 = sbr.rel (%p234) target = $region32
      $region31: #{decoder_forward.11} parent=11 // pred_region
        _
      $region32: #{decoder_forward.11} parent=11 // pred_fallthru
        _
      // Predicated region
      $region33: #{decoder_forward.11} parent=11 // pred_check
        %p237 = pneg %p179
      $region34: #{decoder_forward.11} parent=11 // pred_check_branch
        %239 = sbr.rel (%p237) target = $region36
      $region35: #{decoder_forward.11} parent=11 // pred_region
        _
      $region36: #{decoder_forward.11} parent=11 // pred_fallthru
        _
    $region12: #{decoder_forward.11} parent=5 // pred_fallthru
      _
    %p240 = scmp.lt.s32.totalorder %s13, 2
    // Predicated region
    $region37: #{decoder_forward.11} parent=5 // pred_check
      %p241 = pneg %p240
    $region38: #{decoder_forward.11} parent=5 // pred_check_branch
      %243 = sbr.rel (%p241) target = $region40
    $region39: #{decoder_forward.11} parent=5 // pred_region
      // Predicated region
      $region41: #{decoder_forward.11} parent=39 // pred_check
        %p244 = pneg %p47
      $region42: #{decoder_forward.11} parent=39 // pred_check_branch
        %246 = sbr.rel (%p244) target = $region44
      $region43: #{decoder_forward.11} parent=39 // pred_region
        %p247 = scmp.lt.s32.totalorder %s20, 1
        %s248 = scalar_select %p247, %s20, 1
        %p249 = scmp.lt.s32.totalorder %s21, 0
        %s250 = scalar_select %p249, %s21, 0
        %s251 = sadd.s32 %s250, %s248
        %s252 = smul.addr %s251, 8
        %s253 = scalar_lea.vmem %s0, %s252
      $region44: #{decoder_forward.11} parent=39 // pred_fallthru
        _
    $region40: #{decoder_forward.11} parent=5 // pred_fallthru
      _
    %p254 = scmp.le.s32.totalorder 1, %s13
    %p255 = scmp.lt.s32.totalorder %s13, 3
    %p256 = pnand %p254, %p255
    %p257 = pneg %p256
    // Predicated region
    $region45: #{decoder_forward.11} parent=5 // pred_check
      _
    $region46: #{decoder_forward.11} parent=5 // pred_check_branch
      %259 = sbr.rel (%p256) target = $region48
    $region47: #{decoder_forward.11} parent=5 // pred_region
      %s260 = ssub.s32 %s13, 1
      %p261 = scmp.lt.s32.totalorder %s22, 1
      %s262 = scalar_select %p261, %s22, 1
      %p263 = scmp.lt.s32.totalorder %s23, 0
      %s264 = scalar_select %p263, %s23, 0
      %s265 = sadd.s32 %s264, %s262
      %s266 = smul.addr %s265, 8
      %s267 = scalar_lea.vmem %s0, %s266
      %p268 = pneg %p53
      %p269 = pneg %p50
      %p270 = pneg %p74
      %p271 = pneg %p71
      %p272 = pneg %p95
      %p273 = pneg %p92
      %p274 = pneg %p116
      %p275 = pneg %p113
      %p276 = pneg %p137
      %p277 = pneg %p134
      %p278 = pneg %p158
      %p279 = pneg %p155
      %p280 = pneg %p179
      %p281 = pneg %p176
      %p282 = pneg %p207
      %p283 = pneg %p204
      %p284 = scmp.lt.s32.totalorder %s22, 1
      %s285 = scalar_select %p284, %s22, 1
      %p286 = scmp.lt.s32.totalorder %s23, 0
      %s287 = scalar_select %p286, %s23, 0
      %s288 = sadd.s32 %s287, %s285
      %s289 = smul.addr %s288, 8
      %s290 = scalar_lea.vmem %s7, %s289
      %p291 = scmp.lt.s32.totalorder %s22, 1
      %s292 = scalar_select %p291, %s22, 1
      %p293 = scmp.lt.s32.totalorder %s23, 0
      %s294 = scalar_select %p293, %s23, 0
      %s295 = sadd.s32 %s294, %s292
      %s296 = smul.addr %s295, 8
      %s297 = scalar_lea.vmem %s0, %s296
      %p298 = scmp.lt.s32.totalorder %s22, 1
      %s299 = scalar_select %p298, %s22, 1
      %p300 = scmp.lt.s32.totalorder %s23, 0
      %s301 = scalar_select %p300, %s23, 0
      %s302 = sadd.s32 %s301, %s299
      %s303 = smul.addr %s302, 8
      %s304 = scalar_lea.vmem %s7, %s303
      %v306 = vld [vmem:[%s297] sm:$0xff]
      %v307 = vld [vmem:[%s1] sm:$0x1]
      %v308 = vld [vmem:[%s2] sm:$0x1]
      %309 = vadd.xlane.f32.xlu0 %v306
      %v310 = vpop.xlane.xlu0 %309
      %v311 = vrcp.pop 128.0
      %v312 = vmul.f32 %v310, %v311
      %v313 = vsub.f32 %v306, %v312
      %v314 = vmul.f32 %v313, %v313
      %315 = vadd.xlane.f32.xlu0 %v314
      %v316 = vpop.xlane.xlu0 %315
      %v317 = vmul.f32 %v316, 0.007874016
      %v319 = vlaneseq
      %v320 = vshrl.u32 %v319, 7
      %v321 = vsub.s32 0, %v320
      %v322 = vrot.slane %v307, %v321
      %v324 = vmul.f32 %v322, %v313
      %v325 = vrsqrt.pop %v317
      %v326 = vmul.f32 %v317, %v325
      %vm327 = vcmp.eq.f32.partialorder %v317, inf
      %v328 = vsel %vm327, %v317, %v326
      %vm329 = vcmp.eq.f32.partialorder %v317, 0.0
      %v330 = vand.u32 %v317, 2147483648
      %v331 = vsel %vm329, %v330, %v328
      %v332 = vadd.f32 %v331, 1e-06
      %v333 = vrcp.pop %v332
      %v334 = vmul.f32 %v324, %v333
      %v336 = vlaneseq
      %v337 = vshrl.u32 %v336, 7
      %v338 = vsub.s32 0, %v337
      %v339 = vrot.slane %v308, %v338
      %v341 = vadd.f32 %v334, %v339
      %v342 = vpack.c.bf16 %v341, %v341
      %v343 = vld [vmem:[%s3] sm:$0xff]
      %v344 = vld [vmem:[%s3 + $0x8] sm:$0xff]
      %v345 = vld [vmem:[%s3 + $0x10] sm:$0xff]
      %v346 = vld [vmem:[%s3 + $0x18] sm:$0xff]
      %v347 = vld [vmem:[%s3 + $0x20] sm:$0xff]
      %v348 = vld [vmem:[%s3 + $0x28] sm:$0xff]
      %v349 = vld [vmem:[%s3 + $0x30] sm:$0xff]
      %v350 = vld [vmem:[%s3 + $0x38] sm:$0xff]
      %v351 = vld [vmem:[%s3 + $0x40] sm:$0xff]
      %v352 = vld [vmem:[%s3 + $0x48] sm:$0xff]
      %v353 = vld [vmem:[%s3 + $0x50] sm:$0xff]
      %v354 = vld [vmem:[%s3 + $0x58] sm:$0xff]
      %v355 = vld [vmem:[%s3 + $0x60] sm:$0xff]
      %v356 = vld [vmem:[%s3 + $0x68] sm:$0xff]
      %v357 = vld [vmem:[%s3 + $0x70] sm:$0xff]
      %v358 = vld [vmem:[%s3 + $0x78] sm:$0xff]
      %v359 = vld [vmem:[%s4] sm:$0x3]
      %v361 = vlaneseq
      %v362 = vshrl.u32 %v361, 7
      %v363 = vsub.s32 0, %v362
      %v364 = vrot.slane %v359, %v363
      %v365 = vlaneseq
      %v366 = vshrl.u32 %v365, 7
      %v367 = vsub.s32 1, %v366
      %v368 = vrot.slane %v359, %v367
      %v387 = vunpack.c.l.b16 %v343
      %v388 = vunpack.c.h.b16 %v343
      %v389 = vunpack.c.l.b16 %v344
      %v390 = vunpack.c.h.b16 %v344
      %v391 = vunpack.c.l.b16 %v345
      %v392 = vunpack.c.h.b16 %v345
      %v393 = vunpack.c.l.b16 %v346
      %v394 = vunpack.c.h.b16 %v346
      %v395 = vunpack.c.l.b16 %v347
      %v396 = vunpack.c.h.b16 %v347
      %v397 = vunpack.c.l.b16 %v348
      %v398 = vunpack.c.h.b16 %v348
      %v399 = vunpack.c.l.b16 %v349
      %v400 = vunpack.c.h.b16 %v349
      %v401 = vunpack.c.l.b16 %v350
      %v402 = vunpack.c.h.b16 %v350
      %v403 = vunpack.c.l.b16 %v351
      %v404 = vunpack.c.h.b16 %v351
      %v405 = vunpack.c.l.b16 %v352
      %v406 = vunpack.c.h.b16 %v352
      %v407 = vunpack.c.l.b16 %v353
      %v408 = vunpack.c.h.b16 %v353
      %v409 = vunpack.c.l.b16 %v354
      %v410 = vunpack.c.h.b16 %v354
      %v411 = vunpack.c.l.b16 %v355
      %v412 = vunpack.c.h.b16 %v355
      %v413 = vunpack.c.l.b16 %v356
      %v414 = vunpack.c.h.b16 %v356
      %v415 = vunpack.c.l.b16 %v357
      %v416 = vunpack.c.h.b16 %v357
      %v417 = vunpack.c.l.b16 %v358
      %v418 = vunpack.c.h.b16 %v358
      %v419 = vpack.c.b16 %v389, %v387
      %v420 = vpack.c.b16 %v390, %v388
      %v421 = vpack.c.b16 %v393, %v391
      %v422 = vpack.c.b16 %v394, %v392
      %v423 = vpack.c.b16 %v397, %v395
      %v424 = vpack.c.b16 %v398, %v396
      %v425 = vpack.c.b16 %v401, %v399
      %v426 = vpack.c.b16 %v402, %v400
      %v427 = vpack.c.b16 %v405, %v403
      %v428 = vpack.c.b16 %v406, %v404
      %v429 = vpack.c.b16 %v409, %v407
      %v430 = vpack.c.b16 %v410, %v408
      %v431 = vpack.c.b16 %v413, %v411
      %v432 = vpack.c.b16 %v414, %v412
      %v433 = vpack.c.b16 %v417, %v415
      %v434 = vpack.c.b16 %v418, %v416
      %451 = vmatprep.subr.bf16.mxu0 %v434
      %452 = vmatpush1.bf16.msra.mxu0 %v433
      %453 = vmatprep.subr.bf16.mxu0 %v432
      %454 = vmatpush1.bf16.msra.mxu0 %v431
      %455 = vmatprep.subr.bf16.mxu0 %v430
      %456 = vmatpush1.bf16.msra.mxu0 %v429
      %457 = vmatprep.subr.bf16.mxu0 %v428
      %458 = vmatpush1.bf16.msra.mxu0 %v427
      %459 = vmatprep.subr.bf16.mxu0 %v426
      %460 = vmatpush1.bf16.msra.mxu0 %v425
      %461 = vmatprep.subr.bf16.mxu0 %v424
      %462 = vmatpush1.bf16.msra.mxu0 %v423
      %463 = vmatprep.subr.bf16.mxu0 %v422
      %464 = vmatpush1.bf16.msra.mxu0 %v421
      %465 = vmatprep.subr.bf16.mxu0 %v420
      %466 = vmatpush1.bf16.msra.mxu0 %v419
      %467 = vmatprep.subr.bf16.mxu0 0
      %468 = vmatpush2.bf16.msra.mxu0 0
      %469 = vmatprep.subr.bf16.mxu0 0
      %470 = vmatpush2.bf16.msra.mxu0 0
      %471 = vmatprep.subr.bf16.mxu0 0
      %472 = vmatpush2.bf16.msra.mxu0 0
      %473 = vmatprep.subr.bf16.mxu0 0
      %474 = vmatpush2.bf16.msra.mxu0 0
      %475 = vmatprep.subr.bf16.mxu0 0
      %476 = vmatpush2.bf16.msra.mxu0 0
      %477 = vmatprep.subr.bf16.mxu0 0
      %478 = vmatpush2.bf16.msra.mxu0 0
      %479 = vmatprep.subr.bf16.mxu0 0
      %480 = vmatpush2.bf16.msra.mxu0 0
      %481 = vmatprep.subr.bf16.mxu0 0
      %482 = vmatpush2.bf16.msra.mxu0 0
      %483 = vmatprep.mubr.bf16.mxu0 0
      %484 = vmatmul.mubr.bf16.gmra.mxu0 %v342
      %v485 = vpop.f32.mrf.mxu0
      %v486 = vadd.f32 %v364, %v485
      %v487 = vpop.f32.mrf.mxu0
      %v488 = vadd.f32 %v368, %v487
      %v489 = vpop.f32.mrf.mxu0
      %v490 = vpop.f32.mrf.mxu0
      %491 = vdwg.mxu0
      %v492 = vmax.f32 %v486, 0.0
      %v493 = vmax.f32 %v488, 0.0
      %v494 = vpack.c.bf16 %v492, %v492
      %v495 = vpack.c.bf16 %v493, %v493
      %v496 = vld [vmem:[%s5] sm:$0xf]
      %v497 = vld [vmem:[%s5 + $0x4] sm:$0xf]
      %v498 = vld [vmem:[%s5 + $0x8] sm:$0xf]
      %v499 = vld [vmem:[%s5 + $0xc] sm:$0xf]
      %v500 = vld [vmem:[%s5 + $0x10] sm:$0xf]
      %v501 = vld [vmem:[%s5 + $0x14] sm:$0xf]
      %v502 = vld [vmem:[%s5 + $0x18] sm:$0xf]
      %v503 = vld [vmem:[%s5 + $0x1c] sm:$0xf]
      %v504 = vld [vmem:[%s5 + $0x20] sm:$0xf]
      %v505 = vld [vmem:[%s5 + $0x24] sm:$0xf]
      %v506 = vld [vmem:[%s5 + $0x28] sm:$0xf]
      %v507 = vld [vmem:[%s5 + $0x2c] sm:$0xf]
      %v508 = vld [vmem:[%s5 + $0x30] sm:$0xf]
      %v509 = vld [vmem:[%s5 + $0x34] sm:$0xf]
      %v510 = vld [vmem:[%s5 + $0x38] sm:$0xf]
      %v511 = vld [vmem:[%s5 + $0x3c] sm:$0xf]
      %v512 = vld [vmem:[%s5 + $0x40] sm:$0xf]
      %v513 = vld [vmem:[%s5 + $0x44] sm:$0xf]
      %v514 = vld [vmem:[%s5 + $0x48] sm:$0xf]
      %v515 = vld [vmem:[%s5 + $0x4c] sm:$0xf]
      %v516 = vld [vmem:[%s5 + $0x50] sm:$0xf]
      %v517 = vld [vmem:[%s5 + $0x54] sm:$0xf]
      %v518 = vld [vmem:[%s5 + $0x58] sm:$0xf]
      %v519 = vld [vmem:[%s5 + $0x5c] sm:$0xf]
      %v520 = vld [vmem:[%s5 + $0x60] sm:$0xf]
      %v521 = vld [vmem:[%s5 + $0x64] sm:$0xf]
      %v522 = vld [vmem:[%s5 + $0x68] sm:$0xf]
      %v523 = vld [vmem:[%s5 + $0x6c] sm:$0xf]
      %v524 = vld [vmem:[%s5 + $0x70] sm:$0xf]
      %v525 = vld [vmem:[%s5 + $0x74] sm:$0xf]
      %v526 = vld [vmem:[%s5 + $0x78] sm:$0xf]
      %v527 = vld [vmem:[%s5 + $0x7c] sm:$0xf]
      %v528 = vld [vmem:[%s6] sm:$0x1]
      %v530 = vlaneseq
      %v531 = vshrl.u32 %v530, 7
      %v532 = vsub.s32 0, %v531
      %v533 = vrot.slane %v528, %v532
      %v567 = vunpack.c.l.b16 %v496
      %v568 = vunpack.c.l.b16 %v497
      %v569 = vunpack.c.l.b16 %v498
      %v570 = vunpack.c.l.b16 %v499
      %v571 = vunpack.c.l.b16 %v500
      %v572 = vunpack.c.l.b16 %v501
      %v573 = vunpack.c.l.b16 %v502
      %v574 = vunpack.c.l.b16 %v503
      %v575 = vunpack.c.l.b16 %v504
      %v576 = vunpack.c.l.b16 %v505
      %v577 = vunpack.c.l.b16 %v506
      %v578 = vunpack.c.l.b16 %v507
      %v579 = vunpack.c.l.b16 %v508
      %v580 = vunpack.c.l.b16 %v509
      %v581 = vunpack.c.l.b16 %v510
      %v582 = vunpack.c.l.b16 %v511
      %v583 = vunpack.c.l.b16 %v512
      %v584 = vunpack.c.l.b16 %v513
      %v585 = vunpack.c.l.b16 %v514
      %v586 = vunpack.c.l.b16 %v515
      %v587 = vunpack.c.l.b16 %v516
      %v588 = vunpack.c.l.b16 %v517
      %v589 = vunpack.c.l.b16 %v518
      %v590 = vunpack.c.l.b16 %v519
      %v591 = vunpack.c.l.b16 %v520
      %v592 = vunpack.c.l.b16 %v521
      %v593 = vunpack.c.l.b16 %v522
      %v594 = vunpack.c.l.b16 %v523
      %v595 = vunpack.c.l.b16 %v524
      %v596 = vunpack.c.l.b16 %v525
      %v597 = vunpack.c.l.b16 %v526
      %v598 = vunpack.c.l.b16 %v527
      %v599 = vpack.c.b16 %v568, %v567
      %v600 = vpack.c.b16 %v570, %v569
      %v601 = vpack.c.b16 %v572, %v571
      %v602 = vpack.c.b16 %v574, %v573
      %v603 = vpack.c.b16 %v576, %v575
      %v604 = vpack.c.b16 %v578, %v577
      %v605 = vpack.c.b16 %v580, %v579
      %v606 = vpack.c.b16 %v582, %v581
      %v607 = vpack.c.b16 %v584, %v583
      %v608 = vpack.c.b16 %v586, %v585
      %v609 = vpack.c.b16 %v588, %v587
      %v610 = vpack.c.b16 %v590, %v589
      %v611 = vpack.c.b16 %v592, %v591
      %v612 = vpack.c.b16 %v594, %v593
      %v613 = vpack.c.b16 %v596, %v595
      %v614 = vpack.c.b16 %v598, %v597
      %631 = vmatprep.subr.bf16.mxu0 0
      %632 = vmatpush1.bf16.msra.mxu0 %v606
      %633 = vmatprep.subr.bf16.mxu0 0
      %634 = vmatpush1.bf16.msra.mxu0 %v605
      %635 = vmatprep.subr.bf16.mxu0 0
      %636 = vmatpush1.bf16.msra.mxu0 %v604
      %637 = vmatprep.subr.bf16.mxu0 0
      %638 = vmatpush1.bf16.msra.mxu0 %v603
      %639 = vmatprep.subr.bf16.mxu0 0
      %640 = vmatpush1.bf16.msra.mxu0 %v602
      %641 = vmatprep.subr.bf16.mxu0 0
      %642 = vmatpush1.bf16.msra.mxu0 %v601
      %643 = vmatprep.subr.bf16.mxu0 0
      %644 = vmatpush1.bf16.msra.mxu0 %v600
      %645 = vmatprep.subr.bf16.mxu0 0
      %646 = vmatpush1.bf16.msra.mxu0 %v599
      %647 = vmatprep.subr.bf16.mxu0 0
      %648 = vmatpush2.bf16.msra.mxu0 %v614
      %649 = vmatprep.subr.bf16.mxu0 0
      %650 = vmatpush2.bf16.msra.mxu0 %v613
      %651 = vmatprep.subr.bf16.mxu0 0
      %652 = vmatpush2.bf16.msra.mxu0 %v612
      %653 = vmatprep.subr.bf16.mxu0 0
      %654 = vmatpush2.bf16.msra.mxu0 %v611
      %655 = vmatprep.subr.bf16.mxu0 0
      %656 = vmatpush2.bf16.msra.mxu0 %v610
      %657 = vmatprep.subr.bf16.mxu0 0
      %658 = vmatpush2.bf16.msra.mxu0 %v609
      %659 = vmatprep.subr.bf16.mxu0 0
      %660 = vmatpush2.bf16.msra.mxu0 %v608
      %661 = vmatprep.subr.bf16.mxu0 0
      %662 = vmatpush2.bf16.msra.mxu0 %v607
      %663 = vmatprep.mubr.bf16.mxu0 %v495
      %664 = vmatmul.mubr.bf16.gmra.mxu0 %v494
      %v665 = vpop.f32.mrf.mxu0
      %v666 = vadd.f32 %v533, %v665
      %v667 = vpop.f32.mrf.mxu0
      %v668 = vpop.f32.mrf.mxu0
      %v669 = vpop.f32.mrf.mxu0
      %670 = vdwg.mxu0
      %v671 = vadd.f32 %v306, %v666
      %672 = vst [vmem:[%s304] sm:$0xff] %v671
      %p673 = scmp.lt.s32.totalorder %s22, 1
      %s674 = scalar_select %p673, %s22, 1
      %p675 = scmp.lt.s32.totalorder %s23, 0
      %s676 = scalar_select %p675, %s23, 0
      %s677 = sadd.s32 %s676, %s674
      %s678 = smul.addr %s677, 8
      %s679 = scalar_lea.vmem %s7, %s678
      // Predicated region
      $region49: #{decoder_forward.11} parent=47 // pred_check
        %p680 = pneg %p204
      $region50: #{decoder_forward.11} parent=47 // pred_check_branch
        %682 = sbr.rel (%p680) target = $region52
      $region51: #{decoder_forward.11} parent=47 // pred_region
        _
      $region52: #{decoder_forward.11} parent=47 // pred_fallthru
        _
    $region48: #{decoder_forward.11} parent=5 // pred_fallthru
      _
    %p683 = scmp.le.s32.totalorder 2, %s13
    // Predicated region
    $region53: #{decoder_forward.11} parent=5 // pred_check
      %p684 = pneg %p683
    $region54: #{decoder_forward.11} parent=5 // pred_check_branch
      %686 = sbr.rel (%p684) target = $region56
    $region55: #{decoder_forward.11} parent=5 // pred_region
      %s687 = ssub.s32 %s13, 2
      // Predicated region
      $region57: #{decoder_forward.11} parent=55 // pred_check
        %p688 = pneg %p210
      $region58: #{decoder_forward.11} parent=55 // pred_check_branch
        %690 = sbr.rel (%p688) target = $region60
      $region59: #{decoder_forward.11} parent=55 // pred_region
        %p691 = scmp.lt.s32.totalorder %s24, 1
        %s692 = scalar_select %p691, %s24, 1
        %p693 = scmp.lt.s32.totalorder %s25, 0
        %s694 = scalar_select %p693, %s25, 0
        %s695 = sadd.s32 %s694, %s692
        %s696 = smul.addr %s695, 8
        %s697 = scalar_lea.vmem %s7, %s696
      $region60: #{decoder_forward.11} parent=55 // pred_fallthru
        _
    $region56: #{decoder_forward.11} parent=5 // pred_fallthru
      _
  $region6: #{decoder_forward.11} parent=0 // loop_footer
    %s17 = sadd.s32 1, %s13
  $region7: #{decoder_forward.11} parent=0 // loop_footer_branch
    %12 = sbr.rel target = $region3
  $region8: #{decoder_forward.11} parent=0 // loop_exit
    _

// kernel: decoder_forward.10
$region0: #{decoder_forward.10}
  #allocation0 [shape = 'u32[]', space=smem, size = 0x4, offset = 0x4, fixed_abs, tag = 'smem constant byte address 0x4 - core index']
  #allocation1 [shape = 'u32[144,128]{1,0:T(1,128)}', space=vmem, size = 0x12000, scoped, tag = 'internal scratch']
  %s0 = inlined_call_operand.vmem [shape: f32[2,8,128], index: 0, kind: input, shape index: {}]
  %s1 = inlined_call_operand.vmem [shape: bf16[2,16,128], index: 1, kind: input, shape index: {}]
  %s2 = inlined_call_operand.vmem [shape: bf16[2,16,128], index: 2, kind: input, shape index: {}]
  %s3 = inlined_call_operand.vmem [shape: f32[1,8,16], index: 3, kind: input, shape index: {}]
  %s4 = inlined_call_operand.vmem [shape: f32[1,128], index: 4, kind: input, shape index: {}]
  %s5 = inlined_call_operand.vmem [shape: f32[1,128], index: 5, kind: input, shape index: {}]
  %s6 = inlined_call_operand.vmem [shape: bf16[128,128], index: 6, kind: input, shape index: {}]
  %s7 = inlined_call_operand.vmem [shape: f32[1,128], index: 7, kind: input, shape index: {}]
  %s8 = inlined_call_operand.vmem [shape: bf16[128,128], index: 8, kind: input, shape index: {}]
  %s9 = inlined_call_operand.vmem [shape: f32[1,128], index: 9, kind: input, shape index: {}]
  %s10 = inlined_call_operand.vmem [shape: f32[2,8,128], index: 10, kind: output, shape index: {}]
  %s11 = sld [smem:[#allocation0]]
  $region73: #{decoder_forward.10} parent=0
    _
  %s13 = ssub.s32 1, %s11
  %s14 = scalar_select 0, %s13, %s11
  loop: start=0, step=1, limit=4
  $region2: #{decoder_forward.10} parent=0 // loop_pre_header
    _
  $region3: #{decoder_forward.10} parent=0 // loop_header
    %s16 = sphi 0, %s20
    %p17 = scmp.ge.s32.totalorder %s16, 4
    %s23 = sphi 0, %s35
    %s24 = sphi 0, %s31
    %s25 = sphi 0, %s23
    %s26 = sphi 0, %s24
    %s27 = sphi 0, %s25
    %s28 = sphi 0, %s26
    %s40 = sphi 0, %s42
    %s43 = sphi 0, %s40
    %s44 = sphi 0, %s43
    %s60 = sphi 0, %s44
    %s66 = sphi 0, %s68
    %s69 = sphi 0, %s66
    %s70 = sphi 0, %s69
    %s86 = sphi 0, %s70
    %s92 = sphi 0, %s94
    %s95 = sphi 0, %s92
    %s96 = sphi 0, %s95
    %s112 = sphi 0, %s96
    %s118 = sphi 0, %s120
    %s121 = sphi 0, %s118
    %s122 = sphi 0, %s121
    %s138 = sphi 0, %s122
    %s142 = sphi 0, %s142
    %s144 = sphi 0, %s142
    %s145 = sphi 0, %s144
    %s159 = sphi 0, %s145
    %s163 = sphi 0, %s163
    %s165 = sphi 0, %s163
    %s166 = sphi 0, %s165
    %s180 = sphi 0, %s166
    %s184 = sphi 0, %s184
    %s186 = sphi 0, %s184
    %s187 = sphi 0, %s186
    %s201 = sphi 0, %s187
    %s205 = sphi 0, %s205
    %s207 = sphi 0, %s205
    %s208 = sphi 0, %s207
    %s222 = sphi 0, %s208
    %s226 = sphi 0, %s226
    %s228 = sphi 0, %s226
    %s229 = sphi 0, %s228
    %s243 = sphi 0, %s229
    %s247 = sphi 0, %s247
    %s249 = sphi 0, %s247
    %s250 = sphi 0, %s249
    %s264 = sphi 0, %s250
    %s272 = sphi 0, %s274
    %s275 = sphi 0, %s272
    %s276 = sphi 0, %s275
    %s292 = sphi 0, %s276
  $region4: #{decoder_forward.10} parent=0 // loop_header_branch
    %19 = sbr.rel (%p17) target = $region8
  $region5: #{decoder_forward.10} parent=0 // loop_body
    %s21 = ssub.s32 %s16, 1
    %s22 = ssub.s32 %s16, 2
    %s29 = sadd.s32 1, %s24
    %p30 = scmp.ge.s32.totalorder %s29, 1
    %s31 = scalar_select %p30, 0, %s29
    %s32 = sadd.s32 1, %s23
    %s33 = scalar_select %p30, %s32, %s23
    %p34 = scmp.ge.s32.totalorder %s33, 2
    %s35 = scalar_select %p34, 0, %s33
    %s36 = ssub.s32 %s23, %s35
    %s37 = ssub.s32 %s24, %s31
    %s38 = sor.u32 %s36, %s37
    %p39 = scmp.eq.s32.totalorder %s38, 0
    %s41 = sadd.s32 %s40, 1
    %s42 = scalar_select %p39, %s40, %s41
    %p45 = pneg %p39
    %p46 = scmp.eq.s32.totalorder %s16, 1
    %p47 = por %p45, %p46
    %p48 = scmp.ne.s32.totalorder %s40, %s43
    %p49 = scmp.eq.s32.totalorder %s16, 0
    %p50 = por %p48, %p49
    %p51 = scmp.ne.s32.totalorder %s40, %s43
    %p52 = scmp.eq.s32.totalorder %s21, 1
    %p53 = por %p51, %p52
    %p54 = scmp.ne.s32.totalorder %s43, %s44
    %p55 = scmp.eq.s32.totalorder %s21, 0
    %p56 = por %p54, %p55
    %p57 = scmp.ne.s32.totalorder %s43, %s44
    %p58 = scmp.eq.s32.totalorder %s22, 1
    %p59 = por %p57, %p58
    %p61 = scmp.ne.s32.totalorder %s44, %s60
    %p62 = scmp.eq.s32.totalorder %s22, 0
    %p63 = por %p61, %p62
    %s64 = ssub.s32 %s23, %s35
    %p65 = scmp.eq.s32.totalorder %s64, 0
    %s67 = sadd.s32 %s66, 1
    %s68 = scalar_select %p65, %s66, %s67
    %p71 = pneg %p65
    %p72 = scmp.eq.s32.totalorder %s16, 1
    %p73 = por %p71, %p72
    %p74 = scmp.ne.s32.totalorder %s66, %s69
    %p75 = scmp.eq.s32.totalorder %s16, 0
    %p76 = por %p74, %p75
    %p77 = scmp.ne.s32.totalorder %s66, %s69
    %p78 = scmp.eq.s32.totalorder %s21, 1
    %p79 = por %p77, %p78
    %p80 = scmp.ne.s32.totalorder %s69, %s70
    %p81 = scmp.eq.s32.totalorder %s21, 0
    %p82 = por %p80, %p81
    %p83 = scmp.ne.s32.totalorder %s69, %s70
    %p84 = scmp.eq.s32.totalorder %s22, 1
    %p85 = por %p83, %p84
    %p87 = scmp.ne.s32.totalorder %s70, %s86
    %p88 = scmp.eq.s32.totalorder %s22, 0
    %p89 = por %p87, %p88
    %s90 = ssub.s32 %s23, %s35
    %p91 = scmp.eq.s32.totalorder %s90, 0
    %s93 = sadd.s32 %s92, 1
    %s94 = scalar_select %p91, %s92, %s93
    %p97 = pneg %p91
    %p98 = scmp.eq.s32.totalorder %s16, 1
    %p99 = por %p97, %p98
    %p100 = scmp.ne.s32.totalorder %s92, %s95
    %p101 = scmp.eq.s32.totalorder %s16, 0
    %p102 = por %p100, %p101
    %p103 = scmp.ne.s32.totalorder %s92, %s95
    %p104 = scmp.eq.s32.totalorder %s21, 1
    %p105 = por %p103, %p104
    %p106 = scmp.ne.s32.totalorder %s95, %s96
    %p107 = scmp.eq.s32.totalorder %s21, 0
    %p108 = por %p106, %p107
    %p109 = scmp.ne.s32.totalorder %s95, %s96
    %p110 = scmp.eq.s32.totalorder %s22, 1
    %p111 = por %p109, %p110
    %p113 = scmp.ne.s32.totalorder %s96, %s112
    %p114 = scmp.eq.s32.totalorder %s22, 0
    %p115 = por %p113, %p114
    %s116 = ssub.s32 %s24, %s31
    %p117 = scmp.eq.s32.totalorder %s116, 0
    %s119 = sadd.s32 %s118, 1
    %s120 = scalar_select %p117, %s118, %s119
    %p123 = pneg %p117
    %p124 = scmp.eq.s32.totalorder %s16, 1
    %p125 = por %p123, %p124
    %p126 = scmp.ne.s32.totalorder %s118, %s121
    %p127 = scmp.eq.s32.totalorder %s16, 0
    %p128 = por %p126, %p127
    %p129 = scmp.ne.s32.totalorder %s118, %s121
    %p130 = scmp.eq.s32.totalorder %s21, 1
    %p131 = por %p129, %p130
    %p132 = scmp.ne.s32.totalorder %s121, %s122
    %p133 = scmp.eq.s32.totalorder %s21, 0
    %p134 = por %p132, %p133
    %p135 = scmp.ne.s32.totalorder %s121, %s122
    %p136 = scmp.eq.s32.totalorder %s22, 1
    %p137 = por %p135, %p136
    %p139 = scmp.ne.s32.totalorder %s122, %s138
    %p140 = scmp.eq.s32.totalorder %s22, 0
    %p141 = por %p139, %p140
    %s143 = sadd.s32 %s142, 1
    %p146 = scmp.eq.s32.totalorder %s16, 1
    %p147 = scmp.ne.s32.totalorder %s142, %s144
    %p148 = scmp.eq.s32.totalorder %s16, 0
    %p149 = por %p147, %p148
    %p150 = scmp.ne.s32.totalorder %s142, %s144
    %p151 = scmp.eq.s32.totalorder %s21, 1
    %p152 = por %p150, %p151
    %p153 = scmp.ne.s32.totalorder %s144, %s145
    %p154 = scmp.eq.s32.totalorder %s21, 0
    %p155 = por %p153, %p154
    %p156 = scmp.ne.s32.totalorder %s144, %s145
    %p157 = scmp.eq.s32.totalorder %s22, 1
    %p158 = por %p156, %p157
    %p160 = scmp.ne.s32.totalorder %s145, %s159
    %p161 = scmp.eq.s32.totalorder %s22, 0
    %p162 = por %p160, %p161
    %s164 = sadd.s32 %s163, 1
    %p167 = scmp.eq.s32.totalorder %s16, 1
    %p168 = scmp.ne.s32.totalorder %s163, %s165
    %p169 = scmp.eq.s32.totalorder %s16, 0
    %p170 = por %p168, %p169
    %p171 = scmp.ne.s32.totalorder %s163, %s165
    %p172 = scmp.eq.s32.totalorder %s21, 1
    %p173 = por %p171, %p172
    %p174 = scmp.ne.s32.totalorder %s165, %s166
    %p175 = scmp.eq.s32.totalorder %s21, 0
    %p176 = por %p174, %p175
    %p177 = scmp.ne.s32.totalorder %s165, %s166
    %p178 = scmp.eq.s32.totalorder %s22, 1
    %p179 = por %p177, %p178
    %p181 = scmp.ne.s32.totalorder %s166, %s180
    %p182 = scmp.eq.s32.totalorder %s22, 0
    %p183 = por %p181, %p182
    %s185 = sadd.s32 %s184, 1
    %p188 = scmp.eq.s32.totalorder %s16, 1
    %p189 = scmp.ne.s32.totalorder %s184, %s186
    %p190 = scmp.eq.s32.totalorder %s16, 0
    %p191 = por %p189, %p190
    %p192 = scmp.ne.s32.totalorder %s184, %s186
    %p193 = scmp.eq.s32.totalorder %s21, 1
    %p194 = por %p192, %p193
    %p195 = scmp.ne.s32.totalorder %s186, %s187
    %p196 = scmp.eq.s32.totalorder %s21, 0
    %p197 = por %p195, %p196
    %p198 = scmp.ne.s32.totalorder %s186, %s187
    %p199 = scmp.eq.s32.totalorder %s22, 1
    %p200 = por %p198, %p199
    %p202 = scmp.ne.s32.totalorder %s187, %s201
    %p203 = scmp.eq.s32.totalorder %s22, 0
    %p204 = por %p202, %p203
    %s206 = sadd.s32 %s205, 1
    %p209 = scmp.eq.s32.totalorder %s16, 1
    %p210 = scmp.ne.s32.totalorder %s205, %s207
    %p211 = scmp.eq.s32.totalorder %s16, 0
    %p212 = por %p210, %p211
    %p213 = scmp.ne.s32.totalorder %s205, %s207
    %p214 = scmp.eq.s32.totalorder %s21, 1
    %p215 = por %p213, %p214
    %p216 = scmp.ne.s32.totalorder %s207, %s208
    %p217 = scmp.eq.s32.totalorder %s21, 0
    %p218 = por %p216, %p217
    %p219 = scmp.ne.s32.totalorder %s207, %s208
    %p220 = scmp.eq.s32.totalorder %s22, 1
    %p221 = por %p219, %p220
    %p223 = scmp.ne.s32.totalorder %s208, %s222
    %p224 = scmp.eq.s32.totalorder %s22, 0
    %p225 = por %p223, %p224
    %s227 = sadd.s32 %s226, 1
    %p230 = scmp.eq.s32.totalorder %s16, 1
    %p231 = scmp.ne.s32.totalorder %s226, %s228
    %p232 = scmp.eq.s32.totalorder %s16, 0
    %p233 = por %p231, %p232
    %p234 = scmp.ne.s32.totalorder %s226, %s228
    %p235 = scmp.eq.s32.totalorder %s21, 1
    %p236 = por %p234, %p235
    %p237 = scmp.ne.s32.totalorder %s228, %s229
    %p238 = scmp.eq.s32.totalorder %s21, 0
    %p239 = por %p237, %p238
    %p240 = scmp.ne.s32.totalorder %s228, %s229
    %p241 = scmp.eq.s32.totalorder %s22, 1
    %p242 = por %p240, %p241
    %p244 = scmp.ne.s32.totalorder %s229, %s243
    %p245 = scmp.eq.s32.totalorder %s22, 0
    %p246 = por %p244, %p245
    %s248 = sadd.s32 %s247, 1
    %p251 = scmp.eq.s32.totalorder %s16, 1
    %p252 = scmp.ne.s32.totalorder %s247, %s249
    %p253 = scmp.eq.s32.totalorder %s16, 0
    %p254 = por %p252, %p253
    %p255 = scmp.ne.s32.totalorder %s247, %s249
    %p256 = scmp.eq.s32.totalorder %s21, 1
    %p257 = por %p255, %p256
    %p258 = scmp.ne.s32.totalorder %s249, %s250
    %p259 = scmp.eq.s32.totalorder %s21, 0
    %p260 = por %p258, %p259
    %p261 = scmp.ne.s32.totalorder %s249, %s250
    %p262 = scmp.eq.s32.totalorder %s22, 1
    %p263 = por %p261, %p262
    %p265 = scmp.ne.s32.totalorder %s250, %s264
    %p266 = scmp.eq.s32.totalorder %s22, 0
    %p267 = por %p265, %p266
    %s268 = ssub.s32 %s23, %s35
    %s269 = ssub.s32 %s24, %s31
    %s270 = sor.u32 %s268, %s269
    %p271 = scmp.eq.s32.totalorder %s270, 0
    %s273 = sadd.s32 %s272, 1
    %s274 = scalar_select %p271, %s272, %s273
    %p277 = pneg %p271
    %p278 = scmp.eq.s32.totalorder %s16, 1
    %p279 = por %p277, %p278
    %p280 = scmp.ne.s32.totalorder %s272, %s275
    %p281 = scmp.eq.s32.totalorder %s16, 0
    %p282 = por %p280, %p281
    %p283 = scmp.ne.s32.totalorder %s272, %s275
    %p284 = scmp.eq.s32.totalorder %s21, 1
    %p285 = por %p283, %p284
    %p286 = scmp.ne.s32.totalorder %s275, %s276
    %p287 = scmp.eq.s32.totalorder %s21, 0
    %p288 = por %p286, %p287
    %p289 = scmp.ne.s32.totalorder %s275, %s276
    %p290 = scmp.eq.s32.totalorder %s22, 1
    %p291 = por %p289, %p290
    %p293 = scmp.ne.s32.totalorder %s276, %s292
    %p294 = scmp.eq.s32.totalorder %s22, 0
    %p295 = por %p293, %p294
    %p296 = scmp.le.s32.totalorder 1, %s16
    %p297 = scmp.lt.s32.totalorder %s16, 3
    %p298 = pnand %p296, %p297
    %p299 = pneg %p298
    // Predicated region
    $region9: #{decoder_forward.10} parent=5 // pred_check
      _
    $region10: #{decoder_forward.10} parent=5 // pred_check_branch
      %301 = sbr.rel (%p298) target = $region12
    $region11: #{decoder_forward.10} parent=5 // pred_region
      %s302 = ssub.s32 %s16, 1
      // Predicated region
      $region13: #{decoder_forward.10} parent=11 // pred_check
        %p303 = pneg %p134
      $region14: #{decoder_forward.10} parent=11 // pred_check_branch
        %305 = sbr.rel (%p303) target = $region16
      $region15: #{decoder_forward.10} parent=11 // pred_region
        %p306 = scmp.lt.s32.totalorder %s26, 0
        %s307 = scalar_select %p306, %s26, 0
        %s308 = smul.addr %s307, 8
        %s309 = scalar_lea.vmem %s3, %s308
      $region16: #{decoder_forward.10} parent=11 // pred_fallthru
        _
      // Predicated region
      $region17: #{decoder_forward.10} parent=11 // pred_check
        %p310 = pneg %p155
      $region18: #{decoder_forward.10} parent=11 // pred_check_branch
        %312 = sbr.rel (%p310) target = $region20
      $region19: #{decoder_forward.10} parent=11 // pred_region
        _
      $region20: #{decoder_forward.10} parent=11 // pred_fallthru
        _
      // Predicated region
      $region21: #{decoder_forward.10} parent=11 // pred_check
        %p313 = pneg %p176
      $region22: #{decoder_forward.10} parent=11 // pred_check_branch
        %315 = sbr.rel (%p313) target = $region24
      $region23: #{decoder_forward.10} parent=11 // pred_region
        _
      $region24: #{decoder_forward.10} parent=11 // pred_fallthru
        _
      // Predicated region
      $region25: #{decoder_forward.10} parent=11 // pred_check
        %p316 = pneg %p197
      $region26: #{decoder_forward.10} parent=11 // pred_check_branch
        %318 = sbr.rel (%p316) target = $region28
      $region27: #{decoder_forward.10} parent=11 // pred_region
        _
      $region28: #{decoder_forward.10} parent=11 // pred_fallthru
        _
      // Predicated region
      $region29: #{decoder_forward.10} parent=11 // pred_check
        %p319 = pneg %p218
      $region30: #{decoder_forward.10} parent=11 // pred_check_branch
        %321 = sbr.rel (%p319) target = $region32
      $region31: #{decoder_forward.10} parent=11 // pred_region
        _
      $region32: #{decoder_forward.10} parent=11 // pred_fallthru
        _
      // Predicated region
      $region33: #{decoder_forward.10} parent=11 // pred_check
        %p322 = pneg %p239
      $region34: #{decoder_forward.10} parent=11 // pred_check_branch
        %324 = sbr.rel (%p322) target = $region36
      $region35: #{decoder_forward.10} parent=11 // pred_region
        _
      $region36: #{decoder_forward.10} parent=11 // pred_fallthru
        _
      // Predicated region
      $region37: #{decoder_forward.10} parent=11 // pred_check
        %p325 = pneg %p260
      $region38: #{decoder_forward.10} parent=11 // pred_check_branch
        %327 = sbr.rel (%p325) target = $region40
      $region39: #{decoder_forward.10} parent=11 // pred_region
        _
      $region40: #{decoder_forward.10} parent=11 // pred_fallthru
        _
    $region12: #{decoder_forward.10} parent=5 // pred_fallthru
      _
    %p328 = scmp.lt.s32.totalorder %s16, 2
    // Predicated region
    $region41: #{decoder_forward.10} parent=5 // pred_check
      %p329 = pneg %p328
    $region42: #{decoder_forward.10} parent=5 // pred_check_branch
      %331 = sbr.rel (%p329) target = $region44
    $region43: #{decoder_forward.10} parent=5 // pred_region
      // Predicated region
      $region45: #{decoder_forward.10} parent=43 // pred_check
        %p332 = pneg %p50
      $region46: #{decoder_forward.10} parent=43 // pred_check_branch
        %334 = sbr.rel (%p332) target = $region48
      $region47: #{decoder_forward.10} parent=43 // pred_region
        %p335 = scmp.lt.s32.totalorder %s23, 1
        %s336 = scalar_select %p335, %s23, 1
        %p337 = scmp.lt.s32.totalorder %s24, 0
        %s338 = scalar_select %p337, %s24, 0
        %s339 = sadd.s32 %s338, %s336
        %s340 = smul.addr %s339, 8
        %s341 = scalar_lea.vmem %s0, %s340
      $region48: #{decoder_forward.10} parent=43 // pred_fallthru
        _
      // Predicated region
      $region49: #{decoder_forward.10} parent=43 // pred_check
        %p342 = pneg %p76
      $region50: #{decoder_forward.10} parent=43 // pred_check_branch
        %344 = sbr.rel (%p342) target = $region52
      $region51: #{decoder_forward.10} parent=43 // pred_region
        %p345 = scmp.lt.s32.totalorder %s23, 1
        %s346 = scalar_select %p345, %s23, 1
        %s347 = smul.addr %s346, 2
        %s348 = smul.addr %s347, 4
        %s349 = scalar_lea.vmem %s1, %s348
      $region52: #{decoder_forward.10} parent=43 // pred_fallthru
        _
      // Predicated region
      $region53: #{decoder_forward.10} parent=43 // pred_check
        %p350 = pneg %p102
      $region54: #{decoder_forward.10} parent=43 // pred_check_branch
        %352 = sbr.rel (%p350) target = $region56
      $region55: #{decoder_forward.10} parent=43 // pred_region
        %p353 = scmp.lt.s32.totalorder %s23, 1
        %s354 = scalar_select %p353, %s23, 1
        %s355 = smul.addr %s354, 2
        %s356 = smul.addr %s355, 4
        %s357 = scalar_lea.vmem %s2, %s356
      $region56: #{decoder_forward.10} parent=43 // pred_fallthru
        _
    $region44: #{decoder_forward.10} parent=5 // pred_fallthru
      _
    %p358 = scmp.le.s32.totalorder 1, %s16
    %p359 = scmp.lt.s32.totalorder %s16, 3
    %p360 = pnand %p358, %p359
    %p361 = pneg %p360
    // Predicated region
    $region57: #{decoder_forward.10} parent=5 // pred_check
      _
    $region58: #{decoder_forward.10} parent=5 // pred_check_branch
      %363 = sbr.rel (%p360) target = $region60
    $region59: #{decoder_forward.10} parent=5 // pred_region
      %s364 = ssub.s32 %s16, 1
      %p365 = scmp.lt.s32.totalorder %s25, 1
      %s366 = scalar_select %p365, %s25, 1
      %p367 = scmp.lt.s32.totalorder %s26, 0
      %s368 = scalar_select %p367, %s26, 0
      %s369 = sadd.s32 %s368, %s366
      %s370 = smul.addr %s369, 8
      %s371 = scalar_lea.vmem %s0, %s370
      %p372 = pneg %p56
      %p373 = pneg %p53
      %p374 = scmp.lt.s32.totalorder %s25, 1
      %s375 = scalar_select %p374, %s25, 1
      %s376 = smul.addr %s375, 2
      %s377 = smul.addr %s376, 4
      %s378 = scalar_lea.vmem %s1, %s377
      %p379 = pneg %p82
      %p380 = pneg %p79
      %p381 = scmp.lt.s32.totalorder %s25, 1
      %s382 = scalar_select %p381, %s25, 1
      %s383 = smul.addr %s382, 2
      %s384 = smul.addr %s383, 4
      %s385 = scalar_lea.vmem %s2, %s384
      %p386 = pneg %p108
      %p387 = pneg %p105
      %p388 = scmp.lt.s32.totalorder %s26, 0
      %s389 = scalar_select %p388, %s26, 0
      %s390 = smul.addr %s389, 8
      %s391 = scalar_lea.vmem %s3, %s390
      %p392 = pneg %p134
      %p393 = pneg %p131
      %p394 = pneg %p155
      %p395 = pneg %p152
      %p396 = pneg %p176
      %p397 = pneg %p173
      %p398 = pneg %p197
      %p399 = pneg %p194
      %p400 = pneg %p218
      %p401 = pneg %p215
      %p402 = pneg %p239
      %p403 = pneg %p236
      %p404 = pneg %p260
      %p405 = pneg %p257
      %p406 = pneg %p288
      %p407 = pneg %p285
      %p408 = scmp.lt.s32.totalorder %s25, 1
      %s409 = scalar_select %p408, %s25, 1
      %p410 = scmp.lt.s32.totalorder %s26, 0
      %s411 = scalar_select %p410, %s26, 0
      %s412 = sadd.s32 %s411, %s409
      %s413 = smul.addr %s412, 8
      %s414 = scalar_lea.vmem %s10, %s413
      %p415 = scmp.lt.s32.totalorder %s25, 1
      %s416 = scalar_select %p415, %s25, 1
      %p417 = scmp.lt.s32.totalorder %s26, 0
      %s418 = scalar_select %p417, %s26, 0
      %s419 = sadd.s32 %s418, %s416
      %s420 = smul.addr %s419, 8
      %s421 = scalar_lea.vmem %s0, %s420
      %p422 = scmp.lt.s32.totalorder %s25, 1
      %s423 = scalar_select %p422, %s25, 1
      %s424 = smul.addr %s423, 2
      %s425 = smul.addr %s424, 4
      %s426 = scalar_lea.vmem %s1, %s425
      %p427 = scmp.lt.s32.totalorder %s25, 1
      %s428 = scalar_select %p427, %s25, 1
      %s429 = smul.addr %s428, 2
      %s430 = smul.addr %s429, 4
      %s431 = scalar_lea.vmem %s2, %s430
      %p432 = scmp.lt.s32.totalorder %s26, 0
      %s433 = scalar_select %p432, %s26, 0
      %s434 = smul.addr %s433, 8
      %s435 = scalar_lea.vmem %s3, %s434
      %p436 = scmp.lt.s32.totalorder %s25, 1
      %s437 = scalar_select %p436, %s25, 1
      %p438 = scmp.lt.s32.totalorder %s26, 0
      %s439 = scalar_select %p438, %s26, 0
      %s440 = sadd.s32 %s439, %s437
      %s441 = smul.addr %s440, 8
      %s442 = scalar_lea.vmem %s10, %s441
      %v444 = vld [vmem:[%s421] sm:$0xff]
      %v445 = vld [vmem:[%s4] sm:$0x1]
      %v446 = vld [vmem:[%s5] sm:$0x1]
      %447 = vadd.xlane.f32.xlu0 %v444
      %v448 = vpop.xlane.xlu0 %447
      %v449 = vrcp.pop 128.0
      %v450 = vmul.f32 %v448, %v449
      %v451 = vsub.f32 %v444, %v450
      %v452 = vmul.f32 %v451, %v451
      %453 = vadd.xlane.f32.xlu0 %v452
      %v454 = vpop.xlane.xlu0 %453
      %v455 = vmul.f32 %v454, 0.007874016
      %v457 = vlaneseq
      %v458 = vshrl.u32 %v457, 7
      %v459 = vsub.s32 0, %v458
      %v460 = vrot.slane %v445, %v459
      %v462 = vmul.f32 %v460, %v451
      %v463 = vrsqrt.pop %v455
      %v464 = vmul.f32 %v455, %v463
      %vm465 = vcmp.eq.f32.partialorder %v455, inf
      %v466 = vsel %vm465, %v455, %v464
      %vm467 = vcmp.eq.f32.partialorder %v455, 0.0
      %v468 = vand.u32 %v455, 2147483648
      %v469 = vsel %vm467, %v468, %v466
      %v470 = vadd.f32 %v469, 1e-06
      %v471 = vrcp.pop %v470
      %v472 = vmul.f32 %v462, %v471
      %v474 = vlaneseq
      %v475 = vshrl.u32 %v474, 7
      %v476 = vsub.s32 0, %v475
      %v477 = vrot.slane %v446, %v476
      %v479 = vadd.f32 %v472, %v477
      %v480 = vpack.c.bf16 %v479, %v479
      %v481 = vld [vmem:[%s6] sm:$0xf]
      %v482 = vld [vmem:[%s6 + $0x4] sm:$0xf]
      %v483 = vld [vmem:[%s6 + $0x8] sm:$0xf]
      %v484 = vld [vmem:[%s6 + $0xc] sm:$0xf]
      %v485 = vld [vmem:[%s6 + $0x10] sm:$0xf]
      %v486 = vld [vmem:[%s6 + $0x14] sm:$0xf]
      %v487 = vld [vmem:[%s6 + $0x18] sm:$0xf]
      %v488 = vld [vmem:[%s6 + $0x1c] sm:$0xf]
      %v489 = vld [vmem:[%s6 + $0x20] sm:$0xf]
      %v490 = vld [vmem:[%s6 + $0x24] sm:$0xf]
      %v491 = vld [vmem:[%s6 + $0x28] sm:$0xf]
      %v492 = vld [vmem:[%s6 + $0x2c] sm:$0xf]
      %v493 = vld [vmem:[%s6 + $0x30] sm:$0xf]
      %v494 = vld [vmem:[%s6 + $0x34] sm:$0xf]
      %v495 = vld [vmem:[%s6 + $0x38] sm:$0xf]
      %v496 = vld [vmem:[%s6 + $0x3c] sm:$0xf]
      %v497 = vld [vmem:[%s7] sm:$0x1]
      %v499 = vlaneseq
      %v500 = vshrl.u32 %v499, 7
      %v501 = vsub.s32 0, %v500
      %v502 = vrot.slane %v497, %v501
      %v520 = vunpack.c.l.b16 %v481
      %v521 = vunpack.c.l.b16 %v482
      %v522 = vunpack.c.l.b16 %v483
      %v523 = vunpack.c.l.b16 %v484
      %v524 = vunpack.c.l.b16 %v485
      %v525 = vunpack.c.l.b16 %v486
      %v526 = vunpack.c.l.b16 %v487
      %v527 = vunpack.c.l.b16 %v488
      %v528 = vunpack.c.l.b16 %v489
      %v529 = vunpack.c.l.b16 %v490
      %v530 = vunpack.c.l.b16 %v491
      %v531 = vunpack.c.l.b16 %v492
      %v532 = vunpack.c.l.b16 %v493
      %v533 = vunpack.c.l.b16 %v494
      %v534 = vunpack.c.l.b16 %v495
      %v535 = vunpack.c.l.b16 %v496
      %v536 = vpack.c.b16 %v521, %v520
      %v537 = vpack.c.b16 %v523, %v522
      %v538 = vpack.c.b16 %v525, %v524
      %v539 = vpack.c.b16 %v527, %v526
      %v540 = vpack.c.b16 %v529, %v528
      %v541 = vpack.c.b16 %v531, %v530
      %v542 = vpack.c.b16 %v533, %v532
      %v543 = vpack.c.b16 %v535, %v534
      %552 = vmatprep.subr.bf16.mxu0 0
      %553 = vmatpush1.bf16.msra.mxu0 %v543
      %554 = vmatprep.subr.bf16.mxu0 0
      %555 = vmatpush1.bf16.msra.mxu0 %v542
      %556 = vmatprep.subr.bf16.mxu0 0
      %557 = vmatpush1.bf16.msra.mxu0 %v541
      %558 = vmatprep.subr.bf16.mxu0 0
      %559 = vmatpush1.bf16.msra.mxu0 %v540
      %560 = vmatprep.subr.bf16.mxu0 0
      %561 = vmatpush1.bf16.msra.mxu0 %v539
      %562 = vmatprep.subr.bf16.mxu0 0
      %563 = vmatpush1.bf16.msra.mxu0 %v538
      %564 = vmatprep.subr.bf16.mxu0 0
      %565 = vmatpush1.bf16.msra.mxu0 %v537
      %566 = vmatprep.subr.bf16.mxu0 0
      %567 = vmatpush1.bf16.msra.mxu0 %v536
      %568 = vmatprep.subr.bf16.mxu0 0
      %569 = vmatpush2.bf16.msra.mxu0 0
      %570 = vmatprep.subr.bf16.mxu0 0
      %571 = vmatpush2.bf16.msra.mxu0 0
      %572 = vmatprep.subr.bf16.mxu0 0
      %573 = vmatpush2.bf16.msra.mxu0 0
      %574 = vmatprep.subr.bf16.mxu0 0
      %575 = vmatpush2.bf16.msra.mxu0 0
      %576 = vmatprep.subr.bf16.mxu0 0
      %577 = vmatpush2.bf16.msra.mxu0 0
      %578 = vmatprep.subr.bf16.mxu0 0
      %579 = vmatpush2.bf16.msra.mxu0 0
      %580 = vmatprep.subr.bf16.mxu0 0
      %581 = vmatpush2.bf16.msra.mxu0 0
      %582 = vmatprep.subr.bf16.mxu0 0
      %583 = vmatpush2.bf16.msra.mxu0 0
      %584 = vmatprep.mubr.bf16.mxu0 0
      %585 = vmatmul.mubr.bf16.gmra.mxu0 %v480
      %v586 = vpop.f32.mrf.mxu0
      %v587 = vadd.f32 %v502, %v586
      %v588 = vpop.f32.mrf.mxu0
      %v589 = vpop.f32.mrf.mxu0
      %v590 = vpop.f32.mrf.mxu0
      %591 = vdwg.mxu0
      %v592 = vpack.c.bf16 %v587, %v587
      %v593 = vld [vmem:[%s426] sm:$0xf]
      %v594 = vld [vmem:[%s426 + $0x4] sm:$0xf]
      %v595 = vld [vmem:[%s431] sm:$0xf]
      %v596 = vld [vmem:[%s431 + $0x4] sm:$0xf]
      %v597 = vld [vmem:[%s435] sm:$0xff]
      %v600 = vunpack.c.l.b16 %v593
      %v601 = vunpack.c.l.b16 %v594
      %v602 = vpack.c.b16 %v601, %v600
      %vm603 = vcmask 261120
      %v605 = vsel %vm603, %v592, 0
      %v608 = vsel %vm603, %v602, 0
      %610 = vmatprep.subr.bf16.mxu0 0
      %611 = vmatpush1.bf16.xpose.msra.mxu0 0
      %612 = vmatprep.subr.bf16.mxu0 0
      %613 = vmatpush1.bf16.xpose.msra.mxu0 0
      %614 = vmatprep.subr.bf16.mxu0 0
      %615 = vmatpush1.bf16.xpose.msra.mxu0 0
      %616 = vmatprep.subr.bf16.mxu0 0
      %617 = vmatpush1.bf16.xpose.msra.mxu0 0
      %618 = vmatprep.subr.bf16.mxu0 0
      %619 = vmatpush1.bf16.xpose.msra.mxu0 0
      %620 = vmatprep.subr.bf16.mxu0 0
      %621 = vmatpush1.bf16.xpose.msra.mxu0 0
      %622 = vmatprep.subr.bf16.mxu0 0
      %623 = vmatpush1.bf16.xpose.msra.mxu0 0
      %624 = vmatprep.subr.bf16.mxu0 0
      %625 = vmatpush1.bf16.xpose.msra.mxu0 %v608
      %626 = vmatprep.subr.bf16.mxu0 0
      %627 = vmatpush2.bf16.xpose.msra.mxu0 0
      %628 = vmatprep.subr.bf16.mxu0 0
      %629 = vmatpush2.bf16.xpose.msra.mxu0 0
      %630 = vmatprep.subr.bf16.mxu0 0
      %631 = vmatpush2.bf16.xpose.msra.mxu0 0
      %632 = vmatprep.subr.bf16.mxu0 0
      %633 = vmatpush2.bf16.xpose.msra.mxu0 0
      %634 = vmatprep.subr.bf16.mxu0 0
      %635 = vmatpush2.bf16.xpose.msra.mxu0 0
      %636 = vmatprep.subr.bf16.mxu0 0
      %637 = vmatpush2.bf16.xpose.msra.mxu0 0
      %638 = vmatprep.subr.bf16.mxu0 0
      %639 = vmatpush2.bf16.xpose.msra.mxu0 0
      %640 = vmatprep.subr.bf16.mxu0 0
      %641 = vmatpush2.bf16.xpose.msra.mxu0 0
      %642 = vmatprep.mubr.bf16.mxu0 0
      %643 = vmatmul.mubr.bf16.gmra.mxu0 %v605
      %v644 = vpop.f32.mrf.mxu0
      %v645 = vadd.f32 %v597, %v644
      %v646 = vpop.f32.mrf.mxu0
      %v647 = vpop.f32.mrf.mxu0
      %v648 = vpop.f32.mrf.mxu0
      %649 = vdwg.mxu0
      %vm650 = vcmask 130048
      %v651 = vsel %vm650, %v645, -inf
      %652 = vmax.xlane.f32.xlu0 %v651
      %v653 = vpop.xlane.xlu0 %652
      %v654 = vsub.f32 %v645, %v653
      %v655 = vmul.f32 %v654, 1.442695
      %v656 = vpow.pop %v655
      %v657 = vsel %vm650, %v656, 0.0
      %658 = vadd.xlane.f32.xlu0 %v657
      %v659 = vpop.xlane.xlu0 %658
      %v660 = vrcp.pop %v659
      %v661 = vmul.f32 %v656, %v660
      %v662 = vpack.c.bf16 %v661, %v661
      %v665 = vunpack.c.l.b16 %v595
      %v666 = vunpack.c.l.b16 %v596
      %v667 = vpack.c.b16 %v666, %v665
      %v670 = vsel %vm650, %v662, 0
      %672 = vmatprep.subr.bf16.mxu0 0
      %673 = vmatpush1.bf16.msra.mxu0 0
      %674 = vmatprep.subr.bf16.mxu0 0
      %675 = vmatpush1.bf16.msra.mxu0 0
      %676 = vmatprep.subr.bf16.mxu0 0
      %677 = vmatpush1.bf16.msra.mxu0 0
      %678 = vmatprep.subr.bf16.mxu0 0
      %679 = vmatpush1.bf16.msra.mxu0 0
      %680 = vmatprep.subr.bf16.mxu0 0
      %681 = vmatpush1.bf16.msra.mxu0 0
      %682 = vmatprep.subr.bf16.mxu0 0
      %683 = vmatpush1.bf16.msra.mxu0 0
      %684 = vmatprep.subr.bf16.mxu0 0
      %685 = vmatpush1.bf16.msra.mxu0 0
      %686 = vmatprep.subr.bf16.mxu0 0
      %687 = vmatpush1.bf16.msra.mxu0 %v667
      %688 = vmatprep.subr.bf16.mxu0 0
      %689 = vmatpush2.bf16.msra.mxu0 0
      %690 = vmatprep.subr.bf16.mxu0 0
      %691 = vmatpush2.bf16.msra.mxu0 0
      %692 = vmatprep.subr.bf16.mxu0 0
      %693 = vmatpush2.bf16.msra.mxu0 0
      %694 = vmatprep.subr.bf16.mxu0 0
      %695 = vmatpush2.bf16.msra.mxu0 0
      %696 = vmatprep.subr.bf16.mxu0 0
      %697 = vmatpush2.bf16.msra.mxu0 0
      %698 = vmatprep.subr.bf16.mxu0 0
      %699 = vmatpush2.bf16.msra.mxu0 0
      %700 = vmatprep.subr.bf16.mxu0 0
      %701 = vmatpush2.bf16.msra.mxu0 0
      %702 = vmatprep.subr.bf16.mxu0 0
      %703 = vmatpush2.bf16.msra.mxu0 0
      %704 = vmatprep.mubr.bf16.mxu0 0
      %705 = vmatmul.mubr.bf16.gmra.mxu0 %v670
      %v706 = vpop.f32.mrf.mxu0
      %v707 = vadd.f32 0.0, %v706
      %v708 = vpop.f32.mrf.mxu0
      %v709 = vpop.f32.mrf.mxu0
      %v710 = vpop.f32.mrf.mxu0
      %711 = vdwg.mxu0
      %v712 = vpack.c.bf16 %v707, %v707
      %714 = vrot.lane.b32.xlu0 %v592, 96
      %v715 = vpop.permute.xlu0 %714
      %716 = vrot.lane.b32.xlu0 %v602, 96
      %v717 = vpop.permute.xlu0 %716
      %v719 = vsel %vm603, %v715, 0
      %v722 = vsel %vm603, %v717, 0
      %724 = vmatprep.subr.bf16.mxu0 0
      %725 = vmatpush1.bf16.xpose.msra.mxu0 0
      %726 = vmatprep.subr.bf16.mxu0 0
      %727 = vmatpush1.bf16.xpose.msra.mxu0 0
      %728 = vmatprep.subr.bf16.mxu0 0
      %729 = vmatpush1.bf16.xpose.msra.mxu0 0
      %730 = vmatprep.subr.bf16.mxu0 0
      %731 = vmatpush1.bf16.xpose.msra.mxu0 0
      %732 = vmatprep.subr.bf16.mxu0 0
      %733 = vmatpush1.bf16.xpose.msra.mxu0 0
      %734 = vmatprep.subr.bf16.mxu0 0
      %735 = vmatpush1.bf16.xpose.msra.mxu0 0
      %736 = vmatprep.subr.bf16.mxu0 0
      %737 = vmatpush1.bf16.xpose.msra.mxu0 0
      %738 = vmatprep.subr.bf16.mxu0 0
      %739 = vmatpush1.bf16.xpose.msra.mxu0 %v722
      %740 = vmatprep.subr.bf16.mxu0 0
      %741 = vmatpush2.bf16.xpose.msra.mxu0 0
      %742 = vmatprep.subr.bf16.mxu0 0
      %743 = vmatpush2.bf16.xpose.msra.mxu0 0
      %744 = vmatprep.subr.bf16.mxu0 0
      %745 = vmatpush2.bf16.xpose.msra.mxu0 0
      %746 = vmatprep.subr.bf16.mxu0 0
      %747 = vmatpush2.bf16.xpose.msra.mxu0 0
      %748 = vmatprep.subr.bf16.mxu0 0
      %749 = vmatpush2.bf16.xpose.msra.mxu0 0
      %750 = vmatprep.subr.bf16.mxu0 0
      %751 = vmatpush2.bf16.xpose.msra.mxu0 0
      %752 = vmatprep.subr.bf16.mxu0 0
      %753 = vmatpush2.bf16.xpose.msra.mxu0 0
      %754 = vmatprep.subr.bf16.mxu0 0
      %755 = vmatpush2.bf16.xpose.msra.mxu0 0
      %756 = vmatprep.mubr.bf16.mxu0 0
      %757 = vmatmul.mubr.bf16.gmra.mxu0 %v719
      %v758 = vpop.f32.mrf.mxu0
      %v759 = vadd.f32 %v597, %v758
      %v760 = vpop.f32.mrf.mxu0
      %v761 = vpop.f32.mrf.mxu0
      %v762 = vpop.f32.mrf.mxu0
      %763 = vdwg.mxu0
      %v764 = vsel %vm650, %v759, -inf
      %765 = vmax.xlane.f32.xlu0 %v764
      %v766 = vpop.xlane.xlu0 %765
      %v767 = vsub.f32 %v759, %v766
      %v768 = vmul.f32 %v767, 1.442695
      %v769 = vpow.pop %v768
      %v770 = vsel %vm650, %v769, 0.0
      %771 = vadd.xlane.f32.xlu0 %v770
      %v772 = vpop.xlane.xlu0 %771
      %v773 = vrcp.pop %v772
      %v774 = vmul.f32 %v769, %v773
      %v775 = vpack.c.bf16 %v774, %v774
      %776 = vrot.lane.b32.xlu0 %v667, 96
      %v777 = vpop.permute.xlu0 %776
      %v780 = vsel %vm650, %v775, 0
      %782 = vmatprep.subr.bf16.mxu0 0
      %783 = vmatpush1.bf16.msra.mxu0 0
      %784 = vmatprep.subr.bf16.mxu0 0
      %785 = vmatpush1.bf16.msra.mxu0 0
      %786 = vmatprep.subr.bf16.mxu0 0
      %787 = vmatpush1.bf16.msra.mxu0 0
      %788 = vmatprep.subr.bf16.mxu0 0
      %789 = vmatpush1.bf16.msra.mxu0 0
      %790 = vmatprep.subr.bf16.mxu0 0
      %791 = vmatpush1.bf16.msra.mxu0 0
      %792 = vmatprep.subr.bf16.mxu0 0
      %793 = vmatpush1.bf16.msra.mxu0 0
      %794 = vmatprep.subr.bf16.mxu0 0
      %795 = vmatpush1.bf16.msra.mxu0 0
      %796 = vmatprep.subr.bf16.mxu0 0
      %797 = vmatpush1.bf16.msra.mxu0 %v777
      %798 = vmatprep.subr.bf16.mxu0 0
      %799 = vmatpush2.bf16.msra.mxu0 0
      %800 = vmatprep.subr.bf16.mxu0 0
      %801 = vmatpush2.bf16.msra.mxu0 0
      %802 = vmatprep.subr.bf16.mxu0 0
      %803 = vmatpush2.bf16.msra.mxu0 0
      %804 = vmatprep.subr.bf16.mxu0 0
      %805 = vmatpush2.bf16.msra.mxu0 0
      %806 = vmatprep.subr.bf16.mxu0 0
      %807 = vmatpush2.bf16.msra.mxu0 0
      %808 = vmatprep.subr.bf16.mxu0 0
      %809 = vmatpush2.bf16.msra.mxu0 0
      %810 = vmatprep.subr.bf16.mxu0 0
      %811 = vmatpush2.bf16.msra.mxu0 0
      %812 = vmatprep.subr.bf16.mxu0 0
      %813 = vmatpush2.bf16.msra.mxu0 0
      %814 = vmatprep.mubr.bf16.mxu0 0
      %815 = vmatmul.mubr.bf16.gmra.mxu0 %v780
      %v816 = vpop.f32.mrf.mxu0
      %v817 = vadd.f32 0.0, %v816
      %v818 = vpop.f32.mrf.mxu0
      %v819 = vpop.f32.mrf.mxu0
      %v820 = vpop.f32.mrf.mxu0
      %821 = vdwg.mxu0
      %v822 = vpack.c.bf16 %v817, %v817
      %823 = vrot.lane.b32.xlu0 %v592, 64
      %v824 = vpop.permute.xlu0 %823
      %825 = vrot.lane.b32.xlu0 %v602, 64
      %v826 = vpop.permute.xlu0 %825
      %v828 = vsel %vm603, %v824, 0
      %v831 = vsel %vm603, %v826, 0
      %833 = vmatprep.subr.bf16.mxu0 0
      %834 = vmatpush1.bf16.xpose.msra.mxu0 0
      %835 = vmatprep.subr.bf16.mxu0 0
      %836 = vmatpush1.bf16.xpose.msra.mxu0 0
      %837 = vmatprep.subr.bf16.mxu0 0
      %838 = vmatpush1.bf16.xpose.msra.mxu0 0
      %839 = vmatprep.subr.bf16.mxu0 0
      %840 = vmatpush1.bf16.xpose.msra.mxu0 0
      %841 = vmatprep.subr.bf16.mxu0 0
      %842 = vmatpush1.bf16.xpose.msra.mxu0 0
      %843 = vmatprep.subr.bf16.mxu0 0
      %844 = vmatpush1.bf16.xpose.msra.mxu0 0
      %845 = vmatprep.subr.bf16.mxu0 0
      %846 = vmatpush1.bf16.xpose.msra.mxu0 0
      %847 = vmatprep.subr.bf16.mxu0 0
      %848 = vmatpush1.bf16.xpose.msra.mxu0 %v831
      %849 = vmatprep.subr.bf16.mxu0 0
      %850 = vmatpush2.bf16.xpose.msra.mxu0 0
      %851 = vmatprep.subr.bf16.mxu0 0
      %852 = vmatpush2.bf16.xpose.msra.mxu0 0
      %853 = vmatprep.subr.bf16.mxu0 0
      %854 = vmatpush2.bf16.xpose.msra.mxu0 0
      %855 = vmatprep.subr.bf16.mxu0 0
      %856 = vmatpush2.bf16.xpose.msra.mxu0 0
      %857 = vmatprep.subr.bf16.mxu0 0
      %858 = vmatpush2.bf16.xpose.msra.mxu0 0
      %859 = vmatprep.subr.bf16.mxu0 0
      %860 = vmatpush2.bf16.xpose.msra.mxu0 0
      %861 = vmatprep.subr.bf16.mxu0 0
      %862 = vmatpush2.bf16.xpose.msra.mxu0 0
      %863 = vmatprep.subr.bf16.mxu0 0
      %864 = vmatpush2.bf16.xpose.msra.mxu0 0
      %865 = vmatprep.mubr.bf16.mxu0 0
      %866 = vmatmul.mubr.bf16.gmra.mxu0 %v828
      %v867 = vpop.f32.mrf.mxu0
      %v868 = vadd.f32 %v597, %v867
      %v869 = vpop.f32.mrf.mxu0
      %v870 = vpop.f32.mrf.mxu0
      %v871 = vpop.f32.mrf.mxu0
      %872 = vdwg.mxu0
      %v873 = vsel %vm650, %v868, -inf
      %874 = vmax.xlane.f32.xlu0 %v873
      %v875 = vpop.xlane.xlu0 %874
      %v876 = vsub.f32 %v868, %v875
      %v877 = vmul.f32 %v876, 1.442695
      %v878 = vpow.pop %v877
      %v879 = vsel %vm650, %v878, 0.0
      %880 = vadd.xlane.f32.xlu0 %v879
      %v881 = vpop.xlane.xlu0 %880
      %v882 = vrcp.pop %v881
      %v883 = vmul.f32 %v878, %v882
      %v884 = vpack.c.bf16 %v883, %v883
      %885 = vrot.lane.b32.xlu0 %v667, 64
      %v886 = vpop.permute.xlu0 %885
      %v889 = vsel %vm650, %v884, 0
      %891 = vmatprep.subr.bf16.mxu0 0
      %892 = vmatpush1.bf16.msra.mxu0 0
      %893 = vmatprep.subr.bf16.mxu0 0
      %894 = vmatpush1.bf16.msra.mxu0 0
      %895 = vmatprep.subr.bf16.mxu0 0
      %896 = vmatpush1.bf16.msra.mxu0 0
      %897 = vmatprep.subr.bf16.mxu0 0
      %898 = vmatpush1.bf16.msra.mxu0 0
      %899 = vmatprep.subr.bf16.mxu0 0
      %900 = vmatpush1.bf16.msra.mxu0 0
      %901 = vmatprep.subr.bf16.mxu0 0
      %902 = vmatpush1.bf16.msra.mxu0 0
      %903 = vmatprep.subr.bf16.mxu0 0
      %904 = vmatpush1.bf16.msra.mxu0 0
      %905 = vmatprep.subr.bf16.mxu0 0
      %906 = vmatpush1.bf16.msra.mxu0 %v886
      %907 = vmatprep.subr.bf16.mxu0 0
      %908 = vmatpush2.bf16.msra.mxu0 0
      %909 = vmatprep.subr.bf16.mxu0 0
      %910 = vmatpush2.bf16.msra.mxu0 0
      %911 = vmatprep.subr.bf16.mxu0 0
      %912 = vmatpush2.bf16.msra.mxu0 0
      %913 = vmatprep.subr.bf16.mxu0 0
      %914 = vmatpush2.bf16.msra.mxu0 0
      %915 = vmatprep.subr.bf16.mxu0 0
      %916 = vmatpush2.bf16.msra.mxu0 0
      %917 = vmatprep.subr.bf16.mxu0 0
      %918 = vmatpush2.bf16.msra.mxu0 0
      %919 = vmatprep.subr.bf16.mxu0 0
      %920 = vmatpush2.bf16.msra.mxu0 0
      %921 = vmatprep.subr.bf16.mxu0 0
      %922 = vmatpush2.bf16.msra.mxu0 0
      %923 = vmatprep.mubr.bf16.mxu0 0
      %924 = vmatmul.mubr.bf16.gmra.mxu0 %v889
      %v925 = vpop.f32.mrf.mxu0
      %v926 = vadd.f32 0.0, %v925
      %v927 = vpop.f32.mrf.mxu0
      %v928 = vpop.f32.mrf.mxu0
      %v929 = vpop.f32.mrf.mxu0
      %930 = vdwg.mxu0
      %v931 = vpack.c.bf16 %v926, %v926
      %932 = vrot.lane.b32.xlu0 %v592, 32
      %v933 = vpop.permute.xlu0 %932
      %934 = vrot.lane.b32.xlu0 %v602, 32
      %v935 = vpop.permute.xlu0 %934
      %v937 = vsel %vm603, %v933, 0
      %v940 = vsel %vm603, %v935, 0
      %942 = vmatprep.subr.bf16.mxu0 0
      %943 = vmatpush1.bf16.xpose.msra.mxu0 0
      %944 = vmatprep.subr.bf16.mxu0 0
      %945 = vmatpush1.bf16.xpose.msra.mxu0 0
      %946 = vmatprep.subr.bf16.mxu0 0
      %947 = vmatpush1.bf16.xpose.msra.mxu0 0
      %948 = vmatprep.subr.bf16.mxu0 0
      %949 = vmatpush1.bf16.xpose.msra.mxu0 0
      %950 = vmatprep.subr.bf16.mxu0 0
      %951 = vmatpush1.bf16.xpose.msra.mxu0 0
      %952 = vmatprep.subr.bf16.mxu0 0
      %953 = vmatpush1.bf16.xpose.msra.mxu0 0
      %954 = vmatprep.subr.bf16.mxu0 0
      %955 = vmatpush1.bf16.xpose.msra.mxu0 0
      %956 = vmatprep.subr.bf16.mxu0 0
      %957 = vmatpush1.bf16.xpose.msra.mxu0 %v940
      %958 = vmatprep.subr.bf16.mxu0 0
      %959 = vmatpush2.bf16.xpose.msra.mxu0 0
      %960 = vmatprep.subr.bf16.mxu0 0
      %961 = vmatpush2.bf16.xpose.msra.mxu0 0
      %962 = vmatprep.subr.bf16.mxu0 0
      %963 = vmatpush2.bf16.xpose.msra.mxu0 0
      %964 = vmatprep.subr.bf16.mxu0 0
      %965 = vmatpush2.bf16.xpose.msra.mxu0 0
      %966 = vmatprep.subr.bf16.mxu0 0
      %967 = vmatpush2.bf16.xpose.msra.mxu0 0
      %968 = vmatprep.subr.bf16.mxu0 0
      %969 = vmatpush2.bf16.xpose.msra.mxu0 0
      %970 = vmatprep.subr.bf16.mxu0 0
      %971 = vmatpush2.bf16.xpose.msra.mxu0 0
      %972 = vmatprep.subr.bf16.mxu0 0
      %973 = vmatpush2.bf16.xpose.msra.mxu0 0
      %974 = vmatprep.mubr.bf16.mxu0 0
      %975 = vmatmul.mubr.bf16.gmra.mxu0 %v937
      %v976 = vpop.f32.mrf.mxu0
      %v977 = vadd.f32 %v597, %v976
      %v978 = vpop.f32.mrf.mxu0
      %v979 = vpop.f32.mrf.mxu0
      %v980 = vpop.f32.mrf.mxu0
      %981 = vdwg.mxu0
      %v982 = vsel %vm650, %v977, -inf
      %983 = vmax.xlane.f32.xlu0 %v982
      %v984 = vpop.xlane.xlu0 %983
      %v985 = vsub.f32 %v977, %v984
      %v986 = vmul.f32 %v985, 1.442695
      %v987 = vpow.pop %v986
      %v988 = vsel %vm650, %v987, 0.0
      %989 = vadd.xlane.f32.xlu0 %v988
      %v990 = vpop.xlane.xlu0 %989
      %v991 = vrcp.pop %v990
      %v992 = vmul.f32 %v987, %v991
      %v993 = vpack.c.bf16 %v992, %v992
      %994 = vrot.lane.b32.xlu0 %v667, 32
      %v995 = vpop.permute.xlu0 %994
      %v998 = vsel %vm650, %v993, 0
      %1000 = vmatprep.subr.bf16.mxu0 0
      %1001 = vmatpush1.bf16.msra.mxu0 0
      %1002 = vmatprep.subr.bf16.mxu0 0
      %1003 = vmatpush1.bf16.msra.mxu0 0
      %1004 = vmatprep.subr.bf16.mxu0 0
      %1005 = vmatpush1.bf16.msra.mxu0 0
      %1006 = vmatprep.subr.bf16.mxu0 0
      %1007 = vmatpush1.bf16.msra.mxu0 0
      %1008 = vmatprep.subr.bf16.mxu0 0
      %1009 = vmatpush1.bf16.msra.mxu0 0
      %1010 = vmatprep.subr.bf16.mxu0 0
      %1011 = vmatpush1.bf16.msra.mxu0 0
      %1012 = vmatprep.subr.bf16.mxu0 0
      %1013 = vmatpush1.bf16.msra.mxu0 0
      %1014 = vmatprep.subr.bf16.mxu0 0
      %1015 = vmatpush1.bf16.msra.mxu0 %v995
      %1016 = vmatprep.subr.bf16.mxu0 0
      %1017 = vmatpush2.bf16.msra.mxu0 0
      %1018 = vmatprep.subr.bf16.mxu0 0
      %1019 = vmatpush2.bf16.msra.mxu0 0
      %1020 = vmatprep.subr.bf16.mxu0 0
      %1021 = vmatpush2.bf16.msra.mxu0 0
      %1022 = vmatprep.subr.bf16.mxu0 0
      %1023 = vmatpush2.bf16.msra.mxu0 0
      %1024 = vmatprep.subr.bf16.mxu0 0
      %1025 = vmatpush2.bf16.msra.mxu0 0
      %1026 = vmatprep.subr.bf16.mxu0 0
      %1027 = vmatpush2.bf16.msra.mxu0 0
      %1028 = vmatprep.subr.bf16.mxu0 0
      %1029 = vmatpush2.bf16.msra.mxu0 0
      %1030 = vmatprep.subr.bf16.mxu0 0
      %1031 = vmatpush2.bf16.msra.mxu0 0
      %1032 = vmatprep.mubr.bf16.mxu0 0
      %1033 = vmatmul.mubr.bf16.gmra.mxu0 %v998
      %v1034 = vpop.f32.mrf.mxu0
      %v1035 = vadd.f32 0.0, %v1034
      %v1036 = vpop.f32.mrf.mxu0
      %v1037 = vpop.f32.mrf.mxu0
      %v1038 = vpop.f32.mrf.mxu0
      %1039 = vdwg.mxu0
      %v1040 = vpack.c.bf16 %v1035, %v1035
      %1042 = vrot.lane.b32.xlu0 %v822, 32
      %v1043 = vpop.permute.xlu0 %1042
      %1045 = vrot.lane.b32.xlu0 %v931, 64
      %v1046 = vpop.permute.xlu0 %1045
      %1048 = vrot.lane.b32.xlu0 %v1040, 96
      %v1049 = vpop.permute.xlu0 %1048
      %v1052 = vsel %vm603, %v712, %v1043
      %vm1053 = vcmask 523264
      %v1055 = vsel %vm1053, %v1052, %v1046
      %vm1056 = vcmask 785408
      %v1058 = vsel %vm1056, %v1055, %v1049
      %v1060 = vld [vmem:[%s8] sm:$0xf]
      %v1061 = vld [vmem:[%s8 + $0x4] sm:$0xf]
      %v1062 = vld [vmem:[%s8 + $0x8] sm:$0xf]
      %v1063 = vld [vmem:[%s8 + $0xc] sm:$0xf]
      %v1064 = vld [vmem:[%s8 + $0x10] sm:$0xf]
      %v1065 = vld [vmem:[%s8 + $0x14] sm:$0xf]
      %v1066 = vld [vmem:[%s8 + $0x18] sm:$0xf]
      %v1067 = vld [vmem:[%s8 + $0x1c] sm:$0xf]
      %v1068 = vld [vmem:[%s8 + $0x20] sm:$0xf]
      %v1069 = vld [vmem:[%s8 + $0x24] sm:$0xf]
      %v1070 = vld [vmem:[%s8 + $0x28] sm:$0xf]
      %v1071 = vld [vmem:[%s8 + $0x2c] sm:$0xf]
      %v1072 = vld [vmem:[%s8 + $0x30] sm:$0xf]
      %v1073 = vld [vmem:[%s8 + $0x34] sm:$0xf]
      %v1074 = vld [vmem:[%s8 + $0x38] sm:$0xf]
      %v1075 = vld [vmem:[%s8 + $0x3c] sm:$0xf]
      %v1076 = vld [vmem:[%s9] sm:$0x1]
      %v1078 = vlaneseq
      %v1079 = vshrl.u32 %v1078, 7
      %v1080 = vsub.s32 0, %v1079
      %v1081 = vrot.slane %v1076, %v1080
      %v1099 = vunpack.c.l.b16 %v1060
      %v1100 = vunpack.c.l.b16 %v1061
      %v1101 = vunpack.c.l.b16 %v1062
      %v1102 = vunpack.c.l.b16 %v1063
      %v1103 = vunpack.c.l.b16 %v1064
      %v1104 = vunpack.c.l.b16 %v1065
      %v1105 = vunpack.c.l.b16 %v1066
      %v1106 = vunpack.c.l.b16 %v1067
      %v1107 = vunpack.c.l.b16 %v1068
      %v1108 = vunpack.c.l.b16 %v1069
      %v1109 = vunpack.c.l.b16 %v1070
      %v1110 = vunpack.c.l.b16 %v1071
      %v1111 = vunpack.c.l.b16 %v1072
      %v1112 = vunpack.c.l.b16 %v1073
      %v1113 = vunpack.c.l.b16 %v1074
      %v1114 = vunpack.c.l.b16 %v1075
      %v1115 = vpack.c.b16 %v1100, %v1099
      %v1116 = vpack.c.b16 %v1102, %v1101
      %v1117 = vpack.c.b16 %v1104, %v1103
      %v1118 = vpack.c.b16 %v1106, %v1105
      %v1119 = vpack.c.b16 %v1108, %v1107
      %v1120 = vpack.c.b16 %v1110, %v1109
      %v1121 = vpack.c.b16 %v1112, %v1111
      %v1122 = vpack.c.b16 %v1114, %v1113
      %1131 = vmatprep.subr.bf16.mxu0 0
      %1132 = vmatpush1.bf16.msra.mxu0 %v1122
      %1133 = vmatprep.subr.bf16.mxu0 0
      %1134 = vmatpush1.bf16.msra.mxu0 %v1121
      %1135 = vmatprep.subr.bf16.mxu0 0
      %1136 = vmatpush1.bf16.msra.mxu0 %v1120
      %1137 = vmatprep.subr.bf16.mxu0 0
      %1138 = vmatpush1.bf16.msra.mxu0 %v1119
      %1139 = vmatprep.subr.bf16.mxu0 0
      %1140 = vmatpush1.bf16.msra.mxu0 %v1118
      %1141 = vmatprep.subr.bf16.mxu0 0
      %1142 = vmatpush1.bf16.msra.mxu0 %v1117
      %1143 = vmatprep.subr.bf16.mxu0 0
      %1144 = vmatpush1.bf16.msra.mxu0 %v1116
      %1145 = vmatprep.subr.bf16.mxu0 0
      %1146 = vmatpush1.bf16.msra.mxu0 %v1115
      %1147 = vmatprep.subr.bf16.mxu0 0
      %1148 = vmatpush2.bf16.msra.mxu0 0
      %1149 = vmatprep.subr.bf16.mxu0 0
      %1150 = vmatpush2.bf16.msra.mxu0 0
      %1151 = vmatprep.subr.bf16.mxu0 0
      %1152 = vmatpush2.bf16.msra.mxu0 0
      %1153 = vmatprep.subr.bf16.mxu0 0
      %1154 = vmatpush2.bf16.msra.mxu0 0
      %1155 = vmatprep.subr.bf16.mxu0 0
      %1156 = vmatpush2.bf16.msra.mxu0 0
      %1157 = vmatprep.subr.bf16.mxu0 0
      %1158 = vmatpush2.bf16.msra.mxu0 0
      %1159 = vmatprep.subr.bf16.mxu0 0
      %1160 = vmatpush2.bf16.msra.mxu0 0
      %1161 = vmatprep.subr.bf16.mxu0 0
      %1162 = vmatpush2.bf16.msra.mxu0 0
      %1163 = vmatprep.mubr.bf16.mxu0 0
      %1164 = vmatmul.mubr.bf16.gmra.mxu0 %v1058
      %v1165 = vpop.f32.mrf.mxu0
      %v1166 = vadd.f32 %v1081, %v1165
      %v1167 = vpop.f32.mrf.mxu0
      %v1168 = vpop.f32.mrf.mxu0
      %v1169 = vpop.f32.mrf.mxu0
      %1170 = vdwg.mxu0
      %v1171 = vadd.f32 %v444, %v1166
      %1172 = vst [vmem:[%s442] sm:$0xff] %v1171
      %p1173 = scmp.lt.s32.totalorder %s25, 1
      %s1174 = scalar_select %p1173, %s25, 1
      %p1175 = scmp.lt.s32.totalorder %s26, 0
      %s1176 = scalar_select %p1175, %s26, 0
      %s1177 = sadd.s32 %s1176, %s1174
      %s1178 = smul.addr %s1177, 8
      %s1179 = scalar_lea.vmem %s10, %s1178
      // Predicated region
      $region61: #{decoder_forward.10} parent=59 // pred_check
        %p1180 = pneg %p285
      $region62: #{decoder_forward.10} parent=59 // pred_check_branch
        %1182 = sbr.rel (%p1180) target = $region64
      $region63: #{decoder_forward.10} parent=59 // pred_region
        _
      $region64: #{decoder_forward.10} parent=59 // pred_fallthru
        _
    $region60: #{decoder_forward.10} parent=5 // pred_fallthru
      _
    %p1183 = scmp.le.s32.totalorder 2, %s16
    // Predicated region
    $region65: #{decoder_forward.10} parent=5 // pred_check
      %p1184 = pneg %p1183
    $region66: #{decoder_forward.10} parent=5 // pred_check_branch
      %1186 = sbr.rel (%p1184) target = $region68
    $region67: #{decoder_forward.10} parent=5 // pred_region
      %s1187 = ssub.s32 %s16, 2
      // Predicated region
      $region69: #{decoder_forward.10} parent=67 // pred_check
        %p1188 = pneg %p291
      $region70: #{decoder_forward.10} parent=67 // pred_check_branch
        %1190 = sbr.rel (%p1188) target = $region72
      $region71: #{decoder_forward.10} parent=67 // pred_region
        %p1191 = scmp.lt.s32.totalorder %s27, 1
        %s1192 = scalar_select %p1191, %s27, 1
        %p1193 = scmp.lt.s32.totalorder %s28, 0
        %s1194 = scalar_select %p1193, %s28, 0
        %s1195 = sadd.s32 %s1194, %s1192
        %s1196 = smul.addr %s1195, 8
        %s1197 = scalar_lea.vmem %s10, %s1196
      $region72: #{decoder_forward.10} parent=67 // pred_fallthru
        _
    $region68: #{decoder_forward.10} parent=5 // pred_fallthru
      _
  $region6: #{decoder_forward.10} parent=0 // loop_footer
    %s20 = sadd.s32 1, %s16
  $region7: #{decoder_forward.10} parent=0 // loop_footer_branch
    %15 = sbr.rel target = $region3
  $region8: #{decoder_forward.10} parent=0 // loop_exit
    _

// kernel: decoder_forward.8
$region0: #{decoder_forward.8}
  #allocation0 [shape = 'u32[]', space=smem, size = 0x4, offset = 0x4, fixed_abs, tag = 'smem constant byte address 0x4 - core index']
  #allocation1 [shape = 'u32[144,128]{1,0:T(1,128)}', space=vmem, size = 0x12000, scoped, tag = 'internal scratch']
  %s0 = inlined_call_operand.hbm [shape: f32[2,8,128], index: 0, kind: input, shape index: {}]
  %s1 = inlined_call_operand.vmem [shape: f32[1,8,8], index: 1, kind: input, shape index: {}]
  %s2 = inlined_call_operand.hbm [shape: f32[1,128], index: 2, kind: input, shape index: {}]
  %s3 = inlined_call_operand.hbm [shape: f32[1,128], index: 3, kind: input, shape index: {}]
  %s4 = inlined_call_operand.vmem [shape: bf16[128,384], index: 4, kind: input, shape index: {}]
  %s5 = inlined_call_operand.hbm [shape: f32[1,384], index: 5, kind: input, shape index: {}]
  %s6 = inlined_call_operand.hbm [shape: bf16[128,128], index: 6, kind: input, shape index: {}]
  %s7 = inlined_call_operand.hbm [shape: f32[1,128], index: 7, kind: input, shape index: {}]
  %s8 = inlined_call_operand.vmem [shape: f32[2,8,128], index: 8, kind: output, shape index: {}]
  %s9 = sld [smem:[#allocation0]]
  $region89: #{decoder_forward.8} parent=0
    _
  %s11 = ssub.s32 1, %s9
  %s12 = scalar_select 0, %s11, %s9
  $region1: #{decoder_forward.8} parent=0
    #allocation2 [shape = 'u8[8192]{0}', space=vmem, size = 0x2000, scoped, tag = 'input window, operand 0']
    #allocation3 [shape = 's32[2]{0}', space=sflag, size = 0x8, scoped, tag = 'scoped memory for decoder_forward.8']
    #allocation4 [shape = 'u8[512]{0}', space=vmem, size = 0x400, scoped, tag = 'input window, operand 2, single buffered']
    #allocation5 [shape = 's32[1]{0}', space=sflag, size = 0x4, scoped, tag = 'scoped memory for decoder_forward.8']
    #allocation6 [shape = 'u8[512]{0}', space=vmem, size = 0x400, scoped, tag = 'input window, operand 3, single buffered']
    #allocation7 [shape = 'u8[1536]{0}', space=vmem, size = 0x800, scoped, tag = 'input window, operand 5, single buffered']
    #allocation8 [shape = 's32[1]{0}', space=sflag, size = 0x4, scoped, tag = 'scoped memory for decoder_forward.8']
    #allocation9 [shape = 'u8[32768]{0}', space=vmem, size = 0x8000, scoped, tag = 'input window, operand 6, single buffered']
    #allocation10 [shape = 'u8[512]{0}', space=vmem, size = 0x400, scoped, tag = 'input window, operand 7, single buffered']
    #allocation11 [shape = 's32[1]{0}', space=sflag, size = 0x4, scoped, tag = 'scoped memory for decoder_forward.8']
    %13 = vsyncpa [#allocation3], 0
    %s14 = scalar_lea.sflag [#allocation3], 1
    %15 = vsyncpa %s14, 0
    %16 = vsyncpa [#allocation5], 0
    %17 = vsyncpa [#allocation8], 0
    %18 = vsyncpa [#allocation11], 0
    loop: start=0, step=1, limit=4
    $region2: #{decoder_forward.8} parent=1 // loop_pre_header
      _
    $region3: #{decoder_forward.8} parent=1 // loop_header
      %s20 = sphi 0, %s24
      %p21 = scmp.ge.s32.totalorder %s20, 4
      %s30 = sphi 0, %s32
      %s33 = sphi 0, %s30
      %s34 = sphi 0, %s33
      %s50 = sphi 0, %s34
      %s54 = sphi 0, %s54
      %s56 = sphi 0, %s54
      %s57 = sphi 0, %s56
      %s71 = sphi 0, %s57
      %s75 = sphi 0, %s75
      %s77 = sphi 0, %s75
      %s78 = sphi 0, %s77
      %s92 = sphi 0, %s78
      %s96 = sphi 0, %s96
      %s98 = sphi 0, %s96
      %s99 = sphi 0, %s98
      %s113 = sphi 0, %s99
      %s117 = sphi 0, %s117
      %s119 = sphi 0, %s117
      %s120 = sphi 0, %s119
      %s134 = sphi 0, %s120
      %s138 = sphi 0, %s138
      %s140 = sphi 0, %s138
      %s141 = sphi 0, %s140
      %s155 = sphi 0, %s141
      %s159 = sphi 0, %s159
      %s161 = sphi 0, %s159
      %s162 = sphi 0, %s161
      %s176 = sphi 0, %s162
      %s180 = sphi 0, %s180
      %s182 = sphi 0, %s180
      %s183 = sphi 0, %s182
      %s197 = sphi 0, %s183
      %s203 = sphi 0, %s205
      %s206 = sphi 0, %s203
      %s207 = sphi 0, %s206
      %s223 = sphi 0, %s207
    $region4: #{decoder_forward.8} parent=1 // loop_header_branch
      %23 = sbr.rel (%p21) target = $region8
    $region5: #{decoder_forward.8} parent=1 // loop_body
      %s25 = ssub.s32 %s20, 1
      %s26 = ssub.s32 %s20, 2
      %s27 = sadd.s32 %s20, 1
      %s28 = ssub.s32 %s20, %s27
      %p29 = scmp.eq.s32.totalorder %s28, 0
      %s31 = sadd.s32 %s30, 1
      %s32 = scalar_select %p29, %s30, %s31
      %p35 = pneg %p29
      %p36 = scmp.eq.s32.totalorder %s20, 1
      %p37 = por %p35, %p36
      %p38 = scmp.ne.s32.totalorder %s30, %s33
      %p39 = scmp.eq.s32.totalorder %s20, 0
      %p40 = por %p38, %p39
      %p41 = scmp.ne.s32.totalorder %s30, %s33
      %p42 = scmp.eq.s32.totalorder %s25, 1
      %p43 = por %p41, %p42
      %p44 = scmp.ne.s32.totalorder %s33, %s34
      %p45 = scmp.eq.s32.totalorder %s25, 0
      %p46 = por %p44, %p45
      %p47 = scmp.ne.s32.totalorder %s33, %s34
      %p48 = scmp.eq.s32.totalorder %s26, 1
      %p49 = por %p47, %p48
      %p51 = scmp.ne.s32.totalorder %s34, %s50
      %p52 = scmp.eq.s32.totalorder %s26, 0
      %p53 = por %p51, %p52
      %s55 = sadd.s32 %s54, 1
      %p58 = scmp.eq.s32.totalorder %s20, 1
      %p59 = scmp.ne.s32.totalorder %s54, %s56
      %p60 = scmp.eq.s32.totalorder %s20, 0
      %p61 = por %p59, %p60
      %p62 = scmp.ne.s32.totalorder %s54, %s56
      %p63 = scmp.eq.s32.totalorder %s25, 1
      %p64 = por %p62, %p63
      %p65 = scmp.ne.s32.totalorder %s56, %s57
      %p66 = scmp.eq.s32.totalorder %s25, 0
      %p67 = por %p65, %p66
      %p68 = scmp.ne.s32.totalorder %s56, %s57
      %p69 = scmp.eq.s32.totalorder %s26, 1
      %p70 = por %p68, %p69
      %p72 = scmp.ne.s32.totalorder %s57, %s71
      %p73 = scmp.eq.s32.totalorder %s26, 0
      %p74 = por %p72, %p73
      %s76 = sadd.s32 %s75, 1
      %p79 = scmp.eq.s32.totalorder %s20, 1
      %p80 = scmp.ne.s32.totalorder %s75, %s77
      %p81 = scmp.eq.s32.totalorder %s20, 0
      %p82 = por %p80, %p81
      %p83 = scmp.ne.s32.totalorder %s75, %s77
      %p84 = scmp.eq.s32.totalorder %s25, 1
      %p85 = por %p83, %p84
      %p86 = scmp.ne.s32.totalorder %s77, %s78
      %p87 = scmp.eq.s32.totalorder %s25, 0
      %p88 = por %p86, %p87
      %p89 = scmp.ne.s32.totalorder %s77, %s78
      %p90 = scmp.eq.s32.totalorder %s26, 1
      %p91 = por %p89, %p90
      %p93 = scmp.ne.s32.totalorder %s78, %s92
      %p94 = scmp.eq.s32.totalorder %s26, 0
      %p95 = por %p93, %p94
      %s97 = sadd.s32 %s96, 1
      %p100 = scmp.eq.s32.totalorder %s20, 1
      %p101 = scmp.ne.s32.totalorder %s96, %s98
      %p102 = scmp.eq.s32.totalorder %s20, 0
      %p103 = por %p101, %p102
      %p104 = scmp.ne.s32.totalorder %s96, %s98
      %p105 = scmp.eq.s32.totalorder %s25, 1
      %p106 = por %p104, %p105
      %p107 = scmp.ne.s32.totalorder %s98, %s99
      %p108 = scmp.eq.s32.totalorder %s25, 0
      %p109 = por %p107, %p108
      %p110 = scmp.ne.s32.totalorder %s98, %s99
      %p111 = scmp.eq.s32.totalorder %s26, 1
      %p112 = por %p110, %p111
      %p114 = scmp.ne.s32.totalorder %s99, %s113
      %p115 = scmp.eq.s32.totalorder %s26, 0
      %p116 = por %p114, %p115
      %s118 = sadd.s32 %s117, 1
      %p121 = scmp.eq.s32.totalorder %s20, 1
      %p122 = scmp.ne.s32.totalorder %s117, %s119
      %p123 = scmp.eq.s32.totalorder %s20, 0
      %p124 = por %p122, %p123
      %p125 = scmp.ne.s32.totalorder %s117, %s119
      %p126 = scmp.eq.s32.totalorder %s25, 1
      %p127 = por %p125, %p126
      %p128 = scmp.ne.s32.totalorder %s119, %s120
      %p129 = scmp.eq.s32.totalorder %s25, 0
      %p130 = por %p128, %p129
      %p131 = scmp.ne.s32.totalorder %s119, %s120
      %p132 = scmp.eq.s32.totalorder %s26, 1
      %p133 = por %p131, %p132
      %p135 = scmp.ne.s32.totalorder %s120, %s134
      %p136 = scmp.eq.s32.totalorder %s26, 0
      %p137 = por %p135, %p136
      %s139 = sadd.s32 %s138, 1
      %p142 = scmp.eq.s32.totalorder %s20, 1
      %p143 = scmp.ne.s32.totalorder %s138, %s140
      %p144 = scmp.eq.s32.totalorder %s20, 0
      %p145 = por %p143, %p144
      %p146 = scmp.ne.s32.totalorder %s138, %s140
      %p147 = scmp.eq.s32.totalorder %s25, 1
      %p148 = por %p146, %p147
      %p149 = scmp.ne.s32.totalorder %s140, %s141
      %p150 = scmp.eq.s32.totalorder %s25, 0
      %p151 = por %p149, %p150
      %p152 = scmp.ne.s32.totalorder %s140, %s141
      %p153 = scmp.eq.s32.totalorder %s26, 1
      %p154 = por %p152, %p153
      %p156 = scmp.ne.s32.totalorder %s141, %s155
      %p157 = scmp.eq.s32.totalorder %s26, 0
      %p158 = por %p156, %p157
      %s160 = sadd.s32 %s159, 1
      %p163 = scmp.eq.s32.totalorder %s20, 1
      %p164 = scmp.ne.s32.totalorder %s159, %s161
      %p165 = scmp.eq.s32.totalorder %s20, 0
      %p166 = por %p164, %p165
      %p167 = scmp.ne.s32.totalorder %s159, %s161
      %p168 = scmp.eq.s32.totalorder %s25, 1
      %p169 = por %p167, %p168
      %p170 = scmp.ne.s32.totalorder %s161, %s162
      %p171 = scmp.eq.s32.totalorder %s25, 0
      %p172 = por %p170, %p171
      %p173 = scmp.ne.s32.totalorder %s161, %s162
      %p174 = scmp.eq.s32.totalorder %s26, 1
      %p175 = por %p173, %p174
      %p177 = scmp.ne.s32.totalorder %s162, %s176
      %p178 = scmp.eq.s32.totalorder %s26, 0
      %p179 = por %p177, %p178
      %s181 = sadd.s32 %s180, 1
      %p184 = scmp.eq.s32.totalorder %s20, 1
      %p185 = scmp.ne.s32.totalorder %s180, %s182
      %p186 = scmp.eq.s32.totalorder %s20, 0
      %p187 = por %p185, %p186
      %p188 = scmp.ne.s32.totalorder %s180, %s182
      %p189 = scmp.eq.s32.totalorder %s25, 1
      %p190 = por %p188, %p189
      %p191 = scmp.ne.s32.totalorder %s182, %s183
      %p192 = scmp.eq.s32.totalorder %s25, 0
      %p193 = por %p191, %p192
      %p194 = scmp.ne.s32.totalorder %s182, %s183
      %p195 = scmp.eq.s32.totalorder %s26, 1
      %p196 = por %p194, %p195
      %p198 = scmp.ne.s32.totalorder %s183, %s197
      %p199 = scmp.eq.s32.totalorder %s26, 0
      %p200 = por %p198, %p199
      %s201 = ssub.s32 %s20, %s27
      %p202 = scmp.eq.s32.totalorder %s201, 0
      %s204 = sadd.s32 %s203, 1
      %s205 = scalar_select %p202, %s203, %s204
      %p208 = pneg %p202
      %p209 = scmp.eq.s32.totalorder %s20, 1
      %p210 = por %p208, %p209
      %p211 = scmp.ne.s32.totalorder %s203, %s206
      %p212 = scmp.eq.s32.totalorder %s20, 0
      %p213 = por %p211, %p212
      %p214 = scmp.ne.s32.totalorder %s203, %s206
      %p215 = scmp.eq.s32.totalorder %s25, 1
      %p216 = por %p214, %p215
      %p217 = scmp.ne.s32.totalorder %s206, %s207
      %p218 = scmp.eq.s32.totalorder %s25, 0
      %p219 = por %p217, %p218
      %p220 = scmp.ne.s32.totalorder %s206, %s207
      %p221 = scmp.eq.s32.totalorder %s26, 1
      %p222 = por %p220, %p221
      %p224 = scmp.ne.s32.totalorder %s207, %s223
      %p225 = scmp.eq.s32.totalorder %s26, 0
      %p226 = por %p224, %p225
      %p227 = scmp.le.s32.totalorder 1, %s20
      %p228 = scmp.lt.s32.totalorder %s20, 3
      %p229 = pnand %p227, %p228
      %p230 = pneg %p229
      // Predicated region
      $region9: #{decoder_forward.8} parent=5 // pred_check
        _
      $region10: #{decoder_forward.8} parent=5 // pred_check_branch
        %232 = sbr.rel (%p229) target = $region12
      $region11: #{decoder_forward.8} parent=5 // pred_region
        %s233 = ssub.s32 %s20, 1
        // Predicated region
        $region13: #{decoder_forward.8} parent=11 // pred_check
          %p234 = pneg %p67
        $region14: #{decoder_forward.8} parent=11 // pred_check_branch
          %236 = sbr.rel (%p234) target = $region16
        $region15: #{decoder_forward.8} parent=11 // pred_region
          _
        $region16: #{decoder_forward.8} parent=11 // pred_fallthru
          _
        // Predicated region
        $region17: #{decoder_forward.8} parent=11 // pred_check
          %p237 = pneg %p88
        $region18: #{decoder_forward.8} parent=11 // pred_check_branch
          %239 = sbr.rel (%p237) target = $region20
        $region19: #{decoder_forward.8} parent=11 // pred_region
          %s241 = ssub.s32 16, 16
          %242 = vsyncadd [#allocation5], %s241
          %s244 = sshll.u32 [#allocation4], 4
          %s245 = int_to_ptr.vmem [resolvable:$true] %s244
          %247 = dma.hbm_to_vmem [thread:$0]  %s2, 16, %s245, [#allocation5]
        $region20: #{decoder_forward.8} parent=11 // pred_fallthru
          _
        // Predicated region
        $region21: #{decoder_forward.8} parent=11 // pred_check
          %p248 = pneg %p109
        $region22: #{decoder_forward.8} parent=11 // pred_check_branch
          %250 = sbr.rel (%p248) target = $region24
        $region23: #{decoder_forward.8} parent=11 // pred_region
          %s252 = ssub.s32 16, 16
          %253 = vsyncadd [#allocation5], %s252
          %s255 = sshll.u32 [#allocation6], 4
          %s256 = int_to_ptr.vmem [resolvable:$true] %s255
          %258 = dma.hbm_to_vmem [thread:$0]  %s3, 16, %s256, [#allocation5]
        $region24: #{decoder_forward.8} parent=11 // pred_fallthru
          _
        // Predicated region
        $region25: #{decoder_forward.8} parent=11 // pred_check
          %p259 = pneg %p130
        $region26: #{decoder_forward.8} parent=11 // pred_check_branch
          %261 = sbr.rel (%p259) target = $region28
        $region27: #{decoder_forward.8} parent=11 // pred_region
          _
        $region28: #{decoder_forward.8} parent=11 // pred_fallthru
          _
        // Predicated region
        $region29: #{decoder_forward.8} parent=11 // pred_check
          %p262 = pneg %p151
        $region30: #{decoder_forward.8} parent=11 // pred_check_branch
          %264 = sbr.rel (%p262) target = $region32
        $region31: #{decoder_forward.8} parent=11 // pred_region
          %s266 = ssub.s32 48, 48
          %267 = vsyncadd [#allocation8], %s266
          %s269 = sshll.u32 [#allocation7], 4
          %s270 = int_to_ptr.vmem [resolvable:$true] %s269
          %272 = dma.hbm_to_vmem [thread:$0]  %s5, 48, %s270, [#allocation8]
        $region32: #{decoder_forward.8} parent=11 // pred_fallthru
          _
        // Predicated region
        $region33: #{decoder_forward.8} parent=11 // pred_check
          %p273 = pneg %p172
        $region34: #{decoder_forward.8} parent=11 // pred_check_branch
          %275 = sbr.rel (%p273) target = $region36
        $region35: #{decoder_forward.8} parent=11 // pred_region
          %s277 = ssub.s32 1024, 1024
          %278 = vsyncadd [#allocation8], %s277
          %s279 = sshll.u32 [#allocation9], 4
          %s280 = int_to_ptr.vmem [resolvable:$true] %s279
          %285 = dma.hbm_to_vmem [thread:$0]  %s6, 1024, %s280, [#allocation8], 64, 64, 4
        $region36: #{decoder_forward.8} parent=11 // pred_fallthru
          _
        // Predicated region
        $region37: #{decoder_forward.8} parent=11 // pred_check
          %p286 = pneg %p193
        $region38: #{decoder_forward.8} parent=11 // pred_check_branch
          %288 = sbr.rel (%p286) target = $region40
        $region39: #{decoder_forward.8} parent=11 // pred_region
          %s290 = ssub.s32 16, 16
          %291 = vsyncadd [#allocation11], %s290
          %s293 = sshll.u32 [#allocation10], 4
          %s294 = int_to_ptr.vmem [resolvable:$true] %s293
          %296 = dma.hbm_to_vmem [thread:$0]  %s7, 16, %s294, [#allocation11]
        $region40: #{decoder_forward.8} parent=11 // pred_fallthru
          _
      $region12: #{decoder_forward.8} parent=5 // pred_fallthru
        _
      %p297 = scmp.lt.s32.totalorder %s20, 2
      // Predicated region
      $region41: #{decoder_forward.8} parent=5 // pred_check
        %p298 = pneg %p297
      $region42: #{decoder_forward.8} parent=5 // pred_check_branch
        %300 = sbr.rel (%p298) target = $region44
      $region43: #{decoder_forward.8} parent=5 // pred_region
        // Predicated region
        $region45: #{decoder_forward.8} parent=43 // pred_check
          %p301 = pneg %p40
        $region46: #{decoder_forward.8} parent=43 // pred_check_branch
          %303 = sbr.rel (%p301) target = $region48
        $region47: #{decoder_forward.8} parent=43 // pred_region
          %s304 = sand.u32 %s30, 1
          %s305 = scalar_lea.sflag [#allocation3], %s304
          %s306 = sand.u32 %s30, 1
          %s307 = smul.addr %s306, 8
          %s308 = scalar_lea.vmem [#allocation2], %s307
          %s310 = ssub.s32 128, 128
          %311 = vsyncadd %s305, %s310
          %s312 = smul.addr %s20, 128
          %s313 = scalar_lea.hbm %s0, %s312
          %s315 = sshll.u32 %s308, 4
          %s316 = int_to_ptr.vmem [resolvable:$true] %s315
          %318 = dma.hbm_to_vmem [thread:$0]  %s313, 128, %s316, %s305
        $region48: #{decoder_forward.8} parent=43 // pred_fallthru
          _
      $region44: #{decoder_forward.8} parent=5 // pred_fallthru
        _
      %p319 = scmp.le.s32.totalorder 1, %s20
      %p320 = scmp.lt.s32.totalorder %s20, 3
      %p321 = pnand %p319, %p320
      %p322 = pneg %p321
      // Predicated region
      $region49: #{decoder_forward.8} parent=5 // pred_check
        _
      $region50: #{decoder_forward.8} parent=5 // pred_check_branch
        %324 = sbr.rel (%p321) target = $region52
      $region51: #{decoder_forward.8} parent=5 // pred_region
        %s325 = ssub.s32 %s20, 1
        %s326 = sand.u32 %s33, 1
        %s327 = scalar_lea.sflag [#allocation3], %s326
        %s328 = sand.u32 %s33, 1
        %s329 = smul.addr %s328, 8
        %s330 = scalar_lea.vmem [#allocation2], %s329
        // Predicated region
        $region53: #{decoder_forward.8} parent=51 // pred_check
          %p331 = pneg %p46
        $region54: #{decoder_forward.8} parent=51 // pred_check_branch
          %333 = sbr.rel (%p331) target = $region56
        $region55: #{decoder_forward.8} parent=51 // pred_region
          %334 = dma.done %s327, 128
        $region56: #{decoder_forward.8} parent=51 // pred_fallthru
          _
        // Predicated region
        $region57: #{decoder_forward.8} parent=51 // pred_check
          %p335 = pneg %p88
        $region58: #{decoder_forward.8} parent=51 // pred_check_branch
          %337 = sbr.rel (%p335) target = $region60
        $region59: #{decoder_forward.8} parent=51 // pred_region
          %338 = dma.done [#allocation5], 16
        $region60: #{decoder_forward.8} parent=51 // pred_fallthru
          _
        // Predicated region
        $region61: #{decoder_forward.8} parent=51 // pred_check
          %p339 = pneg %p109
        $region62: #{decoder_forward.8} parent=51 // pred_check_branch
          %341 = sbr.rel (%p339) target = $region64
        $region63: #{decoder_forward.8} parent=51 // pred_region
          %342 = dma.done [#allocation5], 16
        $region64: #{decoder_forward.8} parent=51 // pred_fallthru
          _
        // Predicated region
        $region65: #{decoder_forward.8} parent=51 // pred_check
          %p343 = pneg %p151
        $region66: #{decoder_forward.8} parent=51 // pred_check_branch
          %345 = sbr.rel (%p343) target = $region68
        $region67: #{decoder_forward.8} parent=51 // pred_region
          %346 = dma.done [#allocation8], 48
        $region68: #{decoder_forward.8} parent=51 // pred_fallthru
          _
        // Predicated region
        $region69: #{decoder_forward.8} parent=51 // pred_check
          %p347 = pneg %p172
        $region70: #{decoder_forward.8} parent=51 // pred_check_branch
          %349 = sbr.rel (%p347) target = $region72
        $region71: #{decoder_forward.8} parent=51 // pred_region
          %350 = dma.done [#allocation8], 1024
        $region72: #{decoder_forward.8} parent=51 // pred_fallthru
          _
        // Predicated region
        $region73: #{decoder_forward.8} parent=51 // pred_check
          %p351 = pneg %p193
        $region74: #{decoder_forward.8} parent=51 // pred_check_branch
          %353 = sbr.rel (%p351) target = $region76
        $region75: #{decoder_forward.8} parent=51 // pred_region
          %354 = dma.done [#allocation11], 16
        $region76: #{decoder_forward.8} parent=51 // pred_fallthru
          _
        %s355 = sand.u32 %s33, 1
        %s356 = scalar_lea.sflag [#allocation3], %s355
        %s357 = sand.u32 %s33, 1
        %s358 = smul.addr %s357, 8
        %s359 = scalar_lea.vmem [#allocation2], %s358
        %p360 = pneg %p46
        %p361 = pneg %p43
        %p362 = pneg %p67
        %p363 = pneg %p64
        %p364 = pneg %p88
        %p365 = pneg %p85
        %p366 = pneg %p109
        %p367 = pneg %p106
        %p368 = pneg %p130
        %p369 = pneg %p127
        %p370 = pneg %p151
        %p371 = pneg %p148
        %p372 = pneg %p172
        %p373 = pneg %p169
        %p374 = pneg %p193
        %p375 = pneg %p190
        %p376 = pneg %p219
        %p377 = pneg %p216
        %p378 = scmp.lt.s32.totalorder %s25, 1
        %s379 = scalar_select %p378, %s25, 1
        %s380 = smul.addr %s379, 8
        %s381 = scalar_lea.vmem %s8, %s380
        %p382 = scmp.lt.s32.totalorder %s25, 1
        %s383 = scalar_select %p382, %s25, 1
        %s384 = smul.addr %s383, 8
        %s385 = scalar_lea.vmem %s8, %s384
        %v387 = vld [vmem:[%s330] sm:$0xff]
        %v388 = vld [vmem:[#allocation4] sm:$0x1]
        %v389 = vld [vmem:[#allocation6] sm:$0x1]
        %390 = vadd.xlane.f32.xlu0 %v387
        %v391 = vpop.xlane.xlu0 %390
        %v392 = vrcp.pop 128.0
        %v393 = vmul.f32 %v391, %v392
        %v394 = vsub.f32 %v387, %v393
        %v395 = vmul.f32 %v394, %v394
        %396 = vadd.xlane.f32.xlu0 %v395
        %v397 = vpop.xlane.xlu0 %396
        %v398 = vmul.f32 %v397, 0.007874016
        %v400 = vlaneseq
        %v401 = vshrl.u32 %v400, 7
        %v402 = vsub.s32 0, %v401
        %v403 = vrot.slane %v388, %v402
        %v405 = vmul.f32 %v403, %v394
        %v406 = vrsqrt.pop %v398
        %v407 = vmul.f32 %v398, %v406
        %vm408 = vcmp.eq.f32.partialorder %v398, inf
        %v409 = vsel %vm408, %v398, %v407
        %vm410 = vcmp.eq.f32.partialorder %v398, 0.0
        %v411 = vand.u32 %v398, 2147483648
        %v412 = vsel %vm410, %v411, %v409
        %v413 = vadd.f32 %v412, 1e-06
        %v414 = vrcp.pop %v413
        %v415 = vmul.f32 %v405, %v414
        %v417 = vlaneseq
        %v418 = vshrl.u32 %v417, 7
        %v419 = vsub.s32 0, %v418
        %v420 = vrot.slane %v389, %v419
        %v422 = vadd.f32 %v415, %v420
        %v423 = vpack.c.bf16 %v422, %v422
        %v424 = vld [vmem:[%s4] sm:$0xff]
        %v425 = vld [vmem:[%s4 + $0x8] sm:$0xf]
        %v426 = vld [vmem:[%s4 + $0xc] sm:$0xff]
        %v427 = vld [vmem:[%s4 + $0x14] sm:$0xf]
        %v428 = vld [vmem:[%s4 + $0x18] sm:$0xff]
        %v429 = vld [vmem:[%s4 + $0x20] sm:$0xf]
        %v430 = vld [vmem:[%s4 + $0x24] sm:$0xff]
        %v431 = vld [vmem:[%s4 + $0x2c] sm:$0xf]
        %v432 = vld [vmem:[%s4 + $0x30] sm:$0xff]
        %v433 = vld [vmem:[%s4 + $0x38] sm:$0xf]
        %v434 = vld [vmem:[%s4 + $0x3c] sm:$0xff]
        %v435 = vld [vmem:[%s4 + $0x44] sm:$0xf]
        %v436 = vld [vmem:[%s4 + $0x48] sm:$0xff]
        %v437 = vld [vmem:[%s4 + $0x50] sm:$0xf]
        %v438 = vld [vmem:[%s4 + $0x54] sm:$0xff]
        %v439 = vld [vmem:[%s4 + $0x5c] sm:$0xf]
        %v440 = vld [vmem:[%s4 + $0x60] sm:$0xff]
        %v441 = vld [vmem:[%s4 + $0x68] sm:$0xf]
        %v442 = vld [vmem:[%s4 + $0x6c] sm:$0xff]
        %v443 = vld [vmem:[%s4 + $0x74] sm:$0xf]
        %v444 = vld [vmem:[%s4 + $0x78] sm:$0xff]
        %v445 = vld [vmem:[%s4 + $0x80] sm:$0xf]
        %v446 = vld [vmem:[%s4 + $0x84] sm:$0xff]
        %v447 = vld [vmem:[%s4 + $0x8c] sm:$0xf]
        %v448 = vld [vmem:[%s4 + $0x90] sm:$0xff]
        %v449 = vld [vmem:[%s4 + $0x98] sm:$0xf]
        %v450 = vld [vmem:[%s4 + $0x9c] sm:$0xff]
        %v451 = vld [vmem:[%s4 + $0xa4] sm:$0xf]
        %v452 = vld [vmem:[%s4 + $0xa8] sm:$0xff]
        %v453 = vld [vmem:[%s4 + $0xb0] sm:$0xf]
        %v454 = vld [vmem:[%s4 + $0xb4] sm:$0xff]
        %v455 = vld [vmem:[%s4 + $0xbc] sm:$0xf]
        %v456 = vld [vmem:[#allocation7] sm:$0x7]
        %v458 = vlaneseq
        %v459 = vshrl.u32 %v458, 7
        %v460 = vsub.s32 0, %v459
        %v461 = vrot.slane %v456, %v460
        %v462 = vlaneseq
        %v463 = vshrl.u32 %v462, 7
        %v464 = vsub.s32 1, %v463
        %v465 = vrot.slane %v456, %v464
        %v466 = vlaneseq
        %v467 = vshrl.u32 %v466, 7
        %v468 = vsub.s32 2, %v467
        %v469 = vrot.slane %v456, %v468
        %v505 = vunpack.c.l.b16 %v424
        %v506 = vunpack.c.h.b16 %v424
        %v507 = vunpack.c.l.b16 %v425
        %v508 = vunpack.c.l.b16 %v426
        %v509 = vunpack.c.h.b16 %v426
        %v510 = vunpack.c.l.b16 %v427
        %v511 = vunpack.c.l.b16 %v428
        %v512 = vunpack.c.h.b16 %v428
        %v513 = vunpack.c.l.b16 %v429
        %v514 = vunpack.c.l.b16 %v430
        %v515 = vunpack.c.h.b16 %v430
        %v516 = vunpack.c.l.b16 %v431
        %v517 = vunpack.c.l.b16 %v432
        %v518 = vunpack.c.h.b16 %v432
        %v519 = vunpack.c.l.b16 %v433
        %v520 = vunpack.c.l.b16 %v434
        %v521 = vunpack.c.h.b16 %v434
        %v522 = vunpack.c.l.b16 %v435
        %v523 = vunpack.c.l.b16 %v436
        %v524 = vunpack.c.h.b16 %v436
        %v525 = vunpack.c.l.b16 %v437
        %v526 = vunpack.c.l.b16 %v438
        %v527 = vunpack.c.h.b16 %v438
        %v528 = vunpack.c.l.b16 %v439
        %v529 = vunpack.c.l.b16 %v440
        %v530 = vunpack.c.h.b16 %v440
        %v531 = vunpack.c.l.b16 %v441
        %v532 = vunpack.c.l.b16 %v442
        %v533 = vunpack.c.h.b16 %v442
        %v534 = vunpack.c.l.b16 %v443
        %v535 = vunpack.c.l.b16 %v444
        %v536 = vunpack.c.h.b16 %v444
        %v537 = vunpack.c.l.b16 %v445
        %v538 = vunpack.c.l.b16 %v446
        %v539 = vunpack.c.h.b16 %v446
        %v540 = vunpack.c.l.b16 %v447
        %v541 = vunpack.c.l.b16 %v448
        %v542 = vunpack.c.h.b16 %v448
        %v543 = vunpack.c.l.b16 %v449
        %v544 = vunpack.c.l.b16 %v450
        %v545 = vunpack.c.h.b16 %v450
        %v546 = vunpack.c.l.b16 %v451
        %v547 = vunpack.c.l.b16 %v452
        %v548 = vunpack.c.h.b16 %v452
        %v549 = vunpack.c.l.b16 %v453
        %v550 = vunpack.c.l.b16 %v454
        %v551 = vunpack.c.h.b16 %v454
        %v552 = vunpack.c.l.b16 %v455
        %v553 = vpack.c.b16 %v508, %v505
        %v554 = vpack.c.b16 %v509, %v506
        %v555 = vpack.c.b16 %v510, %v507
        %v556 = vpack.c.b16 %v514, %v511
        %v557 = vpack.c.b16 %v515, %v512
        %v558 = vpack.c.b16 %v516, %v513
        %v559 = vpack.c.b16 %v520, %v517
        %v560 = vpack.c.b16 %v521, %v518
        %v561 = vpack.c.b16 %v522, %v519
        %v562 = vpack.c.b16 %v526, %v523
        %v563 = vpack.c.b16 %v527, %v524
        %v564 = vpack.c.b16 %v528, %v525
        %v565 = vpack.c.b16 %v532, %v529
        %v566 = vpack.c.b16 %v533, %v530
        %v567 = vpack.c.b16 %v534, %v531
        %v568 = vpack.c.b16 %v538, %v535
        %v569 = vpack.c.b16 %v539, %v536
        %v570 = vpack.c.b16 %v540, %v537
        %v571 = vpack.c.b16 %v544, %v541
        %v572 = vpack.c.b16 %v545, %v542
        %v573 = vpack.c.b16 %v546, %v543
        %v574 = vpack.c.b16 %v550, %v547
        %v575 = vpack.c.b16 %v551, %v548
        %v576 = vpack.c.b16 %v552, %v549
        %601 = vmatprep.subr.bf16.mxu0 %v575
        %602 = vmatpush1.bf16.msra.mxu0 %v574
        %603 = vmatprep.subr.bf16.mxu0 %v572
        %604 = vmatpush1.bf16.msra.mxu0 %v571
        %605 = vmatprep.subr.bf16.mxu0 %v569
        %606 = vmatpush1.bf16.msra.mxu0 %v568
        %607 = vmatprep.subr.bf16.mxu0 %v566
        %608 = vmatpush1.bf16.msra.mxu0 %v565
        %609 = vmatprep.subr.bf16.mxu0 %v563
        %610 = vmatpush1.bf16.msra.mxu0 %v562
        %611 = vmatprep.subr.bf16.mxu0 %v560
        %612 = vmatpush1.bf16.msra.mxu0 %v559
        %613 = vmatprep.subr.bf16.mxu0 %v557
        %614 = vmatpush1.bf16.msra.mxu0 %v556
        %615 = vmatprep.subr.bf16.mxu0 %v554
        %616 = vmatpush1.bf16.msra.mxu0 %v553
        %617 = vmatprep.subr.bf16.mxu0 0
        %618 = vmatpush2.bf16.msra.mxu0 0
        %619 = vmatprep.subr.bf16.mxu0 0
        %620 = vmatpush2.bf16.msra.mxu0 0
        %621 = vmatprep.subr.bf16.mxu0 0
        %622 = vmatpush2.bf16.msra.mxu0 0
        %623 = vmatprep.subr.bf16.mxu0 0
        %624 = vmatpush2.bf16.msra.mxu0 0
        %625 = vmatprep.subr.bf16.mxu0 0
        %626 = vmatpush2.bf16.msra.mxu0 0
        %627 = vmatprep.subr.bf16.mxu0 0
        %628 = vmatpush2.bf16.msra.mxu0 0
        %629 = vmatprep.subr.bf16.mxu0 0
        %630 = vmatpush2.bf16.msra.mxu0 0
        %631 = vmatprep.subr.bf16.mxu0 0
        %632 = vmatpush2.bf16.msra.mxu0 0
        %633 = vmatprep.mubr.bf16.mxu0 0
        %634 = vmatmul.mubr.bf16.gmra.mxu0 %v423
        %v635 = vpop.f32.mrf.mxu0
        %v636 = vadd.f32 %v461, %v635
        %v637 = vpop.f32.mrf.mxu0
        %v638 = vadd.f32 %v465, %v637
        %v639 = vpop.f32.mrf.mxu0
        %v640 = vpop.f32.mrf.mxu0
        %641 = vdwg.mxu0
        %642 = vmatprep.subr.bf16.mxu0 0
        %643 = vmatpush1.bf16.msra.mxu0 %v576
        %644 = vmatprep.subr.bf16.mxu0 0
        %645 = vmatpush1.bf16.msra.mxu0 %v573
        %646 = vmatprep.subr.bf16.mxu0 0
        %647 = vmatpush1.bf16.msra.mxu0 %v570
        %648 = vmatprep.subr.bf16.mxu0 0
        %649 = vmatpush1.bf16.msra.mxu0 %v567
        %650 = vmatprep.subr.bf16.mxu0 0
        %651 = vmatpush1.bf16.msra.mxu0 %v564
        %652 = vmatprep.subr.bf16.mxu0 0
        %653 = vmatpush1.bf16.msra.mxu0 %v561
        %654 = vmatprep.subr.bf16.mxu0 0
        %655 = vmatpush1.bf16.msra.mxu0 %v558
        %656 = vmatprep.subr.bf16.mxu0 0
        %657 = vmatpush1.bf16.msra.mxu0 %v555
        %658 = vmatprep.subr.bf16.mxu0 0
        %659 = vmatpush2.bf16.msra.mxu0 0
        %660 = vmatprep.subr.bf16.mxu0 0
        %661 = vmatpush2.bf16.msra.mxu0 0
        %662 = vmatprep.subr.bf16.mxu0 0
        %663 = vmatpush2.bf16.msra.mxu0 0
        %664 = vmatprep.subr.bf16.mxu0 0
        %665 = vmatpush2.bf16.msra.mxu0 0
        %666 = vmatprep.subr.bf16.mxu0 0
        %667 = vmatpush2.bf16.msra.mxu0 0
        %668 = vmatprep.subr.bf16.mxu0 0
        %669 = vmatpush2.bf16.msra.mxu0 0
        %670 = vmatprep.subr.bf16.mxu0 0
        %671 = vmatpush2.bf16.msra.mxu0 0
        %672 = vmatprep.subr.bf16.mxu0 0
        %673 = vmatpush2.bf16.msra.mxu0 0
        %674 = vmatprep.mubr.bf16.mxu0 0
        %675 = vmatmul.mubr.bf16.gmra.mxu0 %v423
        %v676 = vpop.f32.mrf.mxu0
        %v677 = vadd.f32 %v469, %v676
        %v678 = vpop.f32.mrf.mxu0
        %v679 = vpop.f32.mrf.mxu0
        %v680 = vpop.f32.mrf.mxu0
        %681 = vdwg.mxu0
        %v682 = vpack.c.bf16 %v636, %v636
        %v683 = vpack.c.bf16 %v638, %v638
        %v684 = vpack.c.bf16 %v677, %v677
        %v685 = vld [vmem:[%s1] sm:$0xff]
        %vm686 = vcmask 261120
        %v688 = vsel %vm686, %v682, 0
        %v691 = vsel %vm686, %v683, 0
        %693 = vmatprep.subr.bf16.mxu0 0
        %694 = vmatpush1.bf16.xpose.msra.mxu0 0
        %695 = vmatprep.subr.bf16.mxu0 0
        %696 = vmatpush1.bf16.xpose.msra.mxu0 0
        %697 = vmatprep.subr.bf16.mxu0 0
        %698 = vmatpush1.bf16.xpose.msra.mxu0 0
        %699 = vmatprep.subr.bf16.mxu0 0
        %700 = vmatpush1.bf16.xpose.msra.mxu0 0
        %701 = vmatprep.subr.bf16.mxu0 0
        %702 = vmatpush1.bf16.xpose.msra.mxu0 0
        %703 = vmatprep.subr.bf16.mxu0 0
        %704 = vmatpush1.bf16.xpose.msra.mxu0 0
        %705 = vmatprep.subr.bf16.mxu0 0
        %706 = vmatpush1.bf16.xpose.msra.mxu0 0
        %707 = vmatprep.subr.bf16.mxu0 0
        %708 = vmatpush1.bf16.xpose.msra.mxu0 %v691
        %709 = vmatprep.subr.bf16.mxu0 0
        %710 = vmatpush2.bf16.xpose.msra.mxu0 0
        %711 = vmatprep.subr.bf16.mxu0 0
        %712 = vmatpush2.bf16.xpose.msra.mxu0 0
        %713 = vmatprep.subr.bf16.mxu0 0
        %714 = vmatpush2.bf16.xpose.msra.mxu0 0
        %715 = vmatprep.subr.bf16.mxu0 0
        %716 = vmatpush2.bf16.xpose.msra.mxu0 0
        %717 = vmatprep.subr.bf16.mxu0 0
        %718 = vmatpush2.bf16.xpose.msra.mxu0 0
        %719 = vmatprep.subr.bf16.mxu0 0
        %720 = vmatpush2.bf16.xpose.msra.mxu0 0
        %721 = vmatprep.subr.bf16.mxu0 0
        %722 = vmatpush2.bf16.xpose.msra.mxu0 0
        %723 = vmatprep.subr.bf16.mxu0 0
        %724 = vmatpush2.bf16.xpose.msra.mxu0 0
        %725 = vmatprep.mubr.bf16.mxu0 0
        %726 = vmatmul.mubr.bf16.gmra.mxu0 %v688
        %v727 = vpop.f32.mrf.mxu0
        %v728 = vadd.f32 %v685, %v727
        %v729 = vpop.f32.mrf.mxu0
        %v730 = vpop.f32.mrf.mxu0
        %v731 = vpop.f32.mrf.mxu0
        %732 = vdwg.mxu0
        %vm733 = vcmask 64512
        %v734 = vsel %vm733, %v728, -inf
        %735 = vmax.xlane.f32.xlu0 %v734
        %v736 = vpop.xlane.xlu0 %735
        %v737 = vsub.f32 %v728, %v736
        %v738 = vmul.f32 %v737, 1.442695
        %v739 = vpow.pop %v738
        %v740 = vsel %vm733, %v739, 0.0
        %741 = vadd.xlane.f32.xlu0 %v740
        %v742 = vpop.xlane.xlu0 %741
        %v743 = vrcp.pop %v742
        %v744 = vmul.f32 %v739, %v743
        %v745 = vpack.c.bf16 %v744, %v744
        %v747 = vsel %vm733, %v745, 0
        %vm749 = vcmask 1043456
        %v751 = vsel %vm749, %v684, 0
        %753 = vmatprep.subr.bf16.mxu0 0
        %754 = vmatpush1.bf16.msra.mxu0 0
        %755 = vmatprep.subr.bf16.mxu0 0
        %756 = vmatpush1.bf16.msra.mxu0 0
        %757 = vmatprep.subr.bf16.mxu0 0
        %758 = vmatpush1.bf16.msra.mxu0 0
        %759 = vmatprep.subr.bf16.mxu0 0
        %760 = vmatpush1.bf16.msra.mxu0 0
        %761 = vmatprep.subr.bf16.mxu0 0
        %762 = vmatpush1.bf16.msra.mxu0 0
        %763 = vmatprep.subr.bf16.mxu0 0
        %764 = vmatpush1.bf16.msra.mxu0 0
        %765 = vmatprep.subr.bf16.mxu0 0
        %766 = vmatpush1.bf16.msra.mxu0 0
        %767 = vmatprep.subr.bf16.mxu0 0
        %768 = vmatpush1.bf16.msra.mxu0 %v751
        %769 = vmatprep.subr.bf16.mxu0 0
        %770 = vmatpush2.bf16.msra.mxu0 0
        %771 = vmatprep.subr.bf16.mxu0 0
        %772 = vmatpush2.bf16.msra.mxu0 0
        %773 = vmatprep.subr.bf16.mxu0 0
        %774 = vmatpush2.bf16.msra.mxu0 0
        %775 = vmatprep.subr.bf16.mxu0 0
        %776 = vmatpush2.bf16.msra.mxu0 0
        %777 = vmatprep.subr.bf16.mxu0 0
        %778 = vmatpush2.bf16.msra.mxu0 0
        %779 = vmatprep.subr.bf16.mxu0 0
        %780 = vmatpush2.bf16.msra.mxu0 0
        %781 = vmatprep.subr.bf16.mxu0 0
        %782 = vmatpush2.bf16.msra.mxu0 0
        %783 = vmatprep.subr.bf16.mxu0 0
        %784 = vmatpush2.bf16.msra.mxu0 0
        %785 = vmatprep.mubr.bf16.mxu0 0
        %786 = vmatmul.mubr.bf16.gmra.mxu0 %v747
        %v787 = vpop.f32.mrf.mxu0
        %v788 = vadd.f32 0.0, %v787
        %v789 = vpop.f32.mrf.mxu0
        %v790 = vpop.f32.mrf.mxu0
        %v791 = vpop.f32.mrf.mxu0
        %792 = vdwg.mxu0
        %v793 = vpack.c.bf16 %v788, %v788
        %795 = vrot.lane.b32.xlu0 %v682, 96
        %v796 = vpop.permute.xlu0 %795
        %798 = vrot.lane.b32.xlu0 %v683, 96
        %v799 = vpop.permute.xlu0 %798
        %v801 = vsel %vm686, %v796, 0
        %v804 = vsel %vm686, %v799, 0
        %806 = vmatprep.subr.bf16.mxu0 0
        %807 = vmatpush1.bf16.xpose.msra.mxu0 0
        %808 = vmatprep.subr.bf16.mxu0 0
        %809 = vmatpush1.bf16.xpose.msra.mxu0 0
        %810 = vmatprep.subr.bf16.mxu0 0
        %811 = vmatpush1.bf16.xpose.msra.mxu0 0
        %812 = vmatprep.subr.bf16.mxu0 0
        %813 = vmatpush1.bf16.xpose.msra.mxu0 0
        %814 = vmatprep.subr.bf16.mxu0 0
        %815 = vmatpush1.bf16.xpose.msra.mxu0 0
        %816 = vmatprep.subr.bf16.mxu0 0
        %817 = vmatpush1.bf16.xpose.msra.mxu0 0
        %818 = vmatprep.subr.bf16.mxu0 0
        %819 = vmatpush1.bf16.xpose.msra.mxu0 0
        %820 = vmatprep.subr.bf16.mxu0 0
        %821 = vmatpush1.bf16.xpose.msra.mxu0 %v804
        %822 = vmatprep.subr.bf16.mxu0 0
        %823 = vmatpush2.bf16.xpose.msra.mxu0 0
        %824 = vmatprep.subr.bf16.mxu0 0
        %825 = vmatpush2.bf16.xpose.msra.mxu0 0
        %826 = vmatprep.subr.bf16.mxu0 0
        %827 = vmatpush2.bf16.xpose.msra.mxu0 0
        %828 = vmatprep.subr.bf16.mxu0 0
        %829 = vmatpush2.bf16.xpose.msra.mxu0 0
        %830 = vmatprep.subr.bf16.mxu0 0
        %831 = vmatpush2.bf16.xpose.msra.mxu0 0
        %832 = vmatprep.subr.bf16.mxu0 0
        %833 = vmatpush2.bf16.xpose.msra.mxu0 0
        %834 = vmatprep.subr.bf16.mxu0 0
        %835 = vmatpush2.bf16.xpose.msra.mxu0 0
        %836 = vmatprep.subr.bf16.mxu0 0
        %837 = vmatpush2.bf16.xpose.msra.mxu0 0
        %838 = vmatprep.mubr.bf16.mxu0 0
        %839 = vmatmul.mubr.bf16.gmra.mxu0 %v801
        %v840 = vpop.f32.mrf.mxu0
        %v841 = vadd.f32 %v685, %v840
        %v842 = vpop.f32.mrf.mxu0
        %v843 = vpop.f32.mrf.mxu0
        %v844 = vpop.f32.mrf.mxu0
        %845 = vdwg.mxu0
        %v846 = vsel %vm733, %v841, -inf
        %847 = vmax.xlane.f32.xlu0 %v846
        %v848 = vpop.xlane.xlu0 %847
        %v849 = vsub.f32 %v841, %v848
        %v850 = vmul.f32 %v849, 1.442695
        %v851 = vpow.pop %v850
        %v852 = vsel %vm733, %v851, 0.0
        %853 = vadd.xlane.f32.xlu0 %v852
        %v854 = vpop.xlane.xlu0 %853
        %v855 = vrcp.pop %v854
        %v856 = vmul.f32 %v851, %v855
        %v857 = vpack.c.bf16 %v856, %v856
        %859 = vrot.lane.b32.xlu0 %v684, 96
        %v860 = vpop.permute.xlu0 %859
        %v862 = vsel %vm733, %v857, 0
        %v865 = vsel %vm749, %v860, 0
        %867 = vmatprep.subr.bf16.mxu0 0
        %868 = vmatpush1.bf16.msra.mxu0 0
        %869 = vmatprep.subr.bf16.mxu0 0
        %870 = vmatpush1.bf16.msra.mxu0 0
        %871 = vmatprep.subr.bf16.mxu0 0
        %872 = vmatpush1.bf16.msra.mxu0 0
        %873 = vmatprep.subr.bf16.mxu0 0
        %874 = vmatpush1.bf16.msra.mxu0 0
        %875 = vmatprep.subr.bf16.mxu0 0
        %876 = vmatpush1.bf16.msra.mxu0 0
        %877 = vmatprep.subr.bf16.mxu0 0
        %878 = vmatpush1.bf16.msra.mxu0 0
        %879 = vmatprep.subr.bf16.mxu0 0
        %880 = vmatpush1.bf16.msra.mxu0 0
        %881 = vmatprep.subr.bf16.mxu0 0
        %882 = vmatpush1.bf16.msra.mxu0 %v865
        %883 = vmatprep.subr.bf16.mxu0 0
        %884 = vmatpush2.bf16.msra.mxu0 0
        %885 = vmatprep.subr.bf16.mxu0 0
        %886 = vmatpush2.bf16.msra.mxu0 0
        %887 = vmatprep.subr.bf16.mxu0 0
        %888 = vmatpush2.bf16.msra.mxu0 0
        %889 = vmatprep.subr.bf16.mxu0 0
        %890 = vmatpush2.bf16.msra.mxu0 0
        %891 = vmatprep.subr.bf16.mxu0 0
        %892 = vmatpush2.bf16.msra.mxu0 0
        %893 = vmatprep.subr.bf16.mxu0 0
        %894 = vmatpush2.bf16.msra.mxu0 0
        %895 = vmatprep.subr.bf16.mxu0 0
        %896 = vmatpush2.bf16.msra.mxu0 0
        %897 = vmatprep.subr.bf16.mxu0 0
        %898 = vmatpush2.bf16.msra.mxu0 0
        %899 = vmatprep.mubr.bf16.mxu0 0
        %900 = vmatmul.mubr.bf16.gmra.mxu0 %v862
        %v901 = vpop.f32.mrf.mxu0
        %v902 = vadd.f32 0.0, %v901
        %v903 = vpop.f32.mrf.mxu0
        %v904 = vpop.f32.mrf.mxu0
        %v905 = vpop.f32.mrf.mxu0
        %906 = vdwg.mxu0
        %v907 = vpack.c.bf16 %v902, %v902
        %908 = vrot.lane.b32.xlu0 %v682, 64
        %v909 = vpop.permute.xlu0 %908
        %910 = vrot.lane.b32.xlu0 %v683, 64
        %v911 = vpop.permute.xlu0 %910
        %v913 = vsel %vm686, %v909, 0
        %v916 = vsel %vm686, %v911, 0
        %918 = vmatprep.subr.bf16.mxu0 0
        %919 = vmatpush1.bf16.xpose.msra.mxu0 0
        %920 = vmatprep.subr.bf16.mxu0 0
        %921 = vmatpush1.bf16.xpose.msra.mxu0 0
        %922 = vmatprep.subr.bf16.mxu0 0
        %923 = vmatpush1.bf16.xpose.msra.mxu0 0
        %924 = vmatprep.subr.bf16.mxu0 0
        %925 = vmatpush1.bf16.xpose.msra.mxu0 0
        %926 = vmatprep.subr.bf16.mxu0 0
        %927 = vmatpush1.bf16.xpose.msra.mxu0 0
        %928 = vmatprep.subr.bf16.mxu0 0
        %929 = vmatpush1.bf16.xpose.msra.mxu0 0
        %930 = vmatprep.subr.bf16.mxu0 0
        %931 = vmatpush1.bf16.xpose.msra.mxu0 0
        %932 = vmatprep.subr.bf16.mxu0 0
        %933 = vmatpush1.bf16.xpose.msra.mxu0 %v916
        %934 = vmatprep.subr.bf16.mxu0 0
        %935 = vmatpush2.bf16.xpose.msra.mxu0 0
        %936 = vmatprep.subr.bf16.mxu0 0
        %937 = vmatpush2.bf16.xpose.msra.mxu0 0
        %938 = vmatprep.subr.bf16.mxu0 0
        %939 = vmatpush2.bf16.xpose.msra.mxu0 0
        %940 = vmatprep.subr.bf16.mxu0 0
        %941 = vmatpush2.bf16.xpose.msra.mxu0 0
        %942 = vmatprep.subr.bf16.mxu0 0
        %943 = vmatpush2.bf16.xpose.msra.mxu0 0
        %944 = vmatprep.subr.bf16.mxu0 0
        %945 = vmatpush2.bf16.xpose.msra.mxu0 0
        %946 = vmatprep.subr.bf16.mxu0 0
        %947 = vmatpush2.bf16.xpose.msra.mxu0 0
        %948 = vmatprep.subr.bf16.mxu0 0
        %949 = vmatpush2.bf16.xpose.msra.mxu0 0
        %950 = vmatprep.mubr.bf16.mxu0 0
        %951 = vmatmul.mubr.bf16.gmra.mxu0 %v913
        %v952 = vpop.f32.mrf.mxu0
        %v953 = vadd.f32 %v685, %v952
        %v954 = vpop.f32.mrf.mxu0
        %v955 = vpop.f32.mrf.mxu0
        %v956 = vpop.f32.mrf.mxu0
        %957 = vdwg.mxu0
        %v958 = vsel %vm733, %v953, -inf
        %959 = vmax.xlane.f32.xlu0 %v958
        %v960 = vpop.xlane.xlu0 %959
        %v961 = vsub.f32 %v953, %v960
        %v962 = vmul.f32 %v961, 1.442695
        %v963 = vpow.pop %v962
        %v964 = vsel %vm733, %v963, 0.0
        %965 = vadd.xlane.f32.xlu0 %v964
        %v966 = vpop.xlane.xlu0 %965
        %v967 = vrcp.pop %v966
        %v968 = vmul.f32 %v963, %v967
        %v969 = vpack.c.bf16 %v968, %v968
        %970 = vrot.lane.b32.xlu0 %v684, 64
        %v971 = vpop.permute.xlu0 %970
        %v973 = vsel %vm733, %v969, 0
        %v976 = vsel %vm749, %v971, 0
        %978 = vmatprep.subr.bf16.mxu0 0
        %979 = vmatpush1.bf16.msra.mxu0 0
        %980 = vmatprep.subr.bf16.mxu0 0
        %981 = vmatpush1.bf16.msra.mxu0 0
        %982 = vmatprep.subr.bf16.mxu0 0
        %983 = vmatpush1.bf16.msra.mxu0 0
        %984 = vmatprep.subr.bf16.mxu0 0
        %985 = vmatpush1.bf16.msra.mxu0 0
        %986 = vmatprep.subr.bf16.mxu0 0
        %987 = vmatpush1.bf16.msra.mxu0 0
        %988 = vmatprep.subr.bf16.mxu0 0
        %989 = vmatpush1.bf16.msra.mxu0 0
        %990 = vmatprep.subr.bf16.mxu0 0
        %991 = vmatpush1.bf16.msra.mxu0 0
        %992 = vmatprep.subr.bf16.mxu0 0
        %993 = vmatpush1.bf16.msra.mxu0 %v976
        %994 = vmatprep.subr.bf16.mxu0 0
        %995 = vmatpush2.bf16.msra.mxu0 0
        %996 = vmatprep.subr.bf16.mxu0 0
        %997 = vmatpush2.bf16.msra.mxu0 0
        %998 = vmatprep.subr.bf16.mxu0 0
        %999 = vmatpush2.bf16.msra.mxu0 0
        %1000 = vmatprep.subr.bf16.mxu0 0
        %1001 = vmatpush2.bf16.msra.mxu0 0
        %1002 = vmatprep.subr.bf16.mxu0 0
        %1003 = vmatpush2.bf16.msra.mxu0 0
        %1004 = vmatprep.subr.bf16.mxu0 0
        %1005 = vmatpush2.bf16.msra.mxu0 0
        %1006 = vmatprep.subr.bf16.mxu0 0
        %1007 = vmatpush2.bf16.msra.mxu0 0
        %1008 = vmatprep.subr.bf16.mxu0 0
        %1009 = vmatpush2.bf16.msra.mxu0 0
        %1010 = vmatprep.mubr.bf16.mxu0 0
        %1011 = vmatmul.mubr.bf16.gmra.mxu0 %v973
        %v1012 = vpop.f32.mrf.mxu0
        %v1013 = vadd.f32 0.0, %v1012
        %v1014 = vpop.f32.mrf.mxu0
        %v1015 = vpop.f32.mrf.mxu0
        %v1016 = vpop.f32.mrf.mxu0
        %1017 = vdwg.mxu0
        %v1018 = vpack.c.bf16 %v1013, %v1013
        %1019 = vrot.lane.b32.xlu0 %v682, 32
        %v1020 = vpop.permute.xlu0 %1019
        %1021 = vrot.lane.b32.xlu0 %v683, 32
        %v1022 = vpop.permute.xlu0 %1021
        %v1024 = vsel %vm686, %v1020, 0
        %v1027 = vsel %vm686, %v1022, 0
        %1029 = vmatprep.subr.bf16.mxu0 0
        %1030 = vmatpush1.bf16.xpose.msra.mxu0 0
        %1031 = vmatprep.subr.bf16.mxu0 0
        %1032 = vmatpush1.bf16.xpose.msra.mxu0 0
        %1033 = vmatprep.subr.bf16.mxu0 0
        %1034 = vmatpush1.bf16.xpose.msra.mxu0 0
        %1035 = vmatprep.subr.bf16.mxu0 0
        %1036 = vmatpush1.bf16.xpose.msra.mxu0 0
        %1037 = vmatprep.subr.bf16.mxu0 0
        %1038 = vmatpush1.bf16.xpose.msra.mxu0 0
        %1039 = vmatprep.subr.bf16.mxu0 0
        %1040 = vmatpush1.bf16.xpose.msra.mxu0 0
        %1041 = vmatprep.subr.bf16.mxu0 0
        %1042 = vmatpush1.bf16.xpose.msra.mxu0 0
        %1043 = vmatprep.subr.bf16.mxu0 0
        %1044 = vmatpush1.bf16.xpose.msra.mxu0 %v1027
        %1045 = vmatprep.subr.bf16.mxu0 0
        %1046 = vmatpush2.bf16.xpose.msra.mxu0 0
        %1047 = vmatprep.subr.bf16.mxu0 0
        %1048 = vmatpush2.bf16.xpose.msra.mxu0 0
        %1049 = vmatprep.subr.bf16.mxu0 0
        %1050 = vmatpush2.bf16.xpose.msra.mxu0 0
        %1051 = vmatprep.subr.bf16.mxu0 0
        %1052 = vmatpush2.bf16.xpose.msra.mxu0 0
        %1053 = vmatprep.subr.bf16.mxu0 0
        %1054 = vmatpush2.bf16.xpose.msra.mxu0 0
        %1055 = vmatprep.subr.bf16.mxu0 0
        %1056 = vmatpush2.bf16.xpose.msra.mxu0 0
        %1057 = vmatprep.subr.bf16.mxu0 0
        %1058 = vmatpush2.bf16.xpose.msra.mxu0 0
        %1059 = vmatprep.subr.bf16.mxu0 0
        %1060 = vmatpush2.bf16.xpose.msra.mxu0 0
        %1061 = vmatprep.mubr.bf16.mxu0 0
        %1062 = vmatmul.mubr.bf16.gmra.mxu0 %v1024
        %v1063 = vpop.f32.mrf.mxu0
        %v1064 = vadd.f32 %v685, %v1063
        %v1065 = vpop.f32.mrf.mxu0
        %v1066 = vpop.f32.mrf.mxu0
        %v1067 = vpop.f32.mrf.mxu0
        %1068 = vdwg.mxu0
        %v1069 = vsel %vm733, %v1064, -inf
        %1070 = vmax.xlane.f32.xlu0 %v1069
        %v1071 = vpop.xlane.xlu0 %1070
        %v1072 = vsub.f32 %v1064, %v1071
        %v1073 = vmul.f32 %v1072, 1.442695
        %v1074 = vpow.pop %v1073
        %v1075 = vsel %vm733, %v1074, 0.0
        %1076 = vadd.xlane.f32.xlu0 %v1075
        %v1077 = vpop.xlane.xlu0 %1076
        %v1078 = vrcp.pop %v1077
        %v1079 = vmul.f32 %v1074, %v1078
        %v1080 = vpack.c.bf16 %v1079, %v1079
        %1081 = vrot.lane.b32.xlu0 %v684, 32
        %v1082 = vpop.permute.xlu0 %1081
        %v1084 = vsel %vm733, %v1080, 0
        %v1087 = vsel %vm749, %v1082, 0
        %1089 = vmatprep.subr.bf16.mxu0 0
        %1090 = vmatpush1.bf16.msra.mxu0 0
        %1091 = vmatprep.subr.bf16.mxu0 0
        %1092 = vmatpush1.bf16.msra.mxu0 0
        %1093 = vmatprep.subr.bf16.mxu0 0
        %1094 = vmatpush1.bf16.msra.mxu0 0
        %1095 = vmatprep.subr.bf16.mxu0 0
        %1096 = vmatpush1.bf16.msra.mxu0 0
        %1097 = vmatprep.subr.bf16.mxu0 0
        %1098 = vmatpush1.bf16.msra.mxu0 0
        %1099 = vmatprep.subr.bf16.mxu0 0
        %1100 = vmatpush1.bf16.msra.mxu0 0
        %1101 = vmatprep.subr.bf16.mxu0 0
        %1102 = vmatpush1.bf16.msra.mxu0 0
        %1103 = vmatprep.subr.bf16.mxu0 0
        %1104 = vmatpush1.bf16.msra.mxu0 %v1087
        %1105 = vmatprep.subr.bf16.mxu0 0
        %1106 = vmatpush2.bf16.msra.mxu0 0
        %1107 = vmatprep.subr.bf16.mxu0 0
        %1108 = vmatpush2.bf16.msra.mxu0 0
        %1109 = vmatprep.subr.bf16.mxu0 0
        %1110 = vmatpush2.bf16.msra.mxu0 0
        %1111 = vmatprep.subr.bf16.mxu0 0
        %1112 = vmatpush2.bf16.msra.mxu0 0
        %1113 = vmatprep.subr.bf16.mxu0 0
        %1114 = vmatpush2.bf16.msra.mxu0 0
        %1115 = vmatprep.subr.bf16.mxu0 0
        %1116 = vmatpush2.bf16.msra.mxu0 0
        %1117 = vmatprep.subr.bf16.mxu0 0
        %1118 = vmatpush2.bf16.msra.mxu0 0
        %1119 = vmatprep.subr.bf16.mxu0 0
        %1120 = vmatpush2.bf16.msra.mxu0 0
        %1121 = vmatprep.mubr.bf16.mxu0 0
        %1122 = vmatmul.mubr.bf16.gmra.mxu0 %v1084
        %v1123 = vpop.f32.mrf.mxu0
        %v1124 = vadd.f32 0.0, %v1123
        %v1125 = vpop.f32.mrf.mxu0
        %v1126 = vpop.f32.mrf.mxu0
        %v1127 = vpop.f32.mrf.mxu0
        %1128 = vdwg.mxu0
        %v1129 = vpack.c.bf16 %v1124, %v1124
        %1131 = vrot.lane.b32.xlu0 %v907, 32
        %v1132 = vpop.permute.xlu0 %1131
        %1134 = vrot.lane.b32.xlu0 %v1018, 64
        %v1135 = vpop.permute.xlu0 %1134
        %1137 = vrot.lane.b32.xlu0 %v1129, 96
        %v1138 = vpop.permute.xlu0 %1137
        %v1141 = vsel %vm686, %v793, %v1132
        %vm1142 = vcmask 523264
        %v1144 = vsel %vm1142, %v1141, %v1135
        %vm1145 = vcmask 785408
        %v1147 = vsel %vm1145, %v1144, %v1138
        %v1149 = vld [vmem:[#allocation9] sm:$0xf]
        %v1150 = vld [vmem:[#allocation9 + $0x4] sm:$0xf]
        %v1151 = vld [vmem:[#allocation9 + $0x8] sm:$0xf]
        %v1152 = vld [vmem:[#allocation9 + $0xc] sm:$0xf]
        %v1153 = vld [vmem:[#allocation9 + $0x10] sm:$0xf]
        %v1154 = vld [vmem:[#allocation9 + $0x14] sm:$0xf]
        %v1155 = vld [vmem:[#allocation9 + $0x18] sm:$0xf]
        %v1156 = vld [vmem:[#allocation9 + $0x1c] sm:$0xf]
        %v1157 = vld [vmem:[#allocation9 + $0x20] sm:$0xf]
        %v1158 = vld [vmem:[#allocation9 + $0x24] sm:$0xf]
        %v1159 = vld [vmem:[#allocation9 + $0x28] sm:$0xf]
        %v1160 = vld [vmem:[#allocation9 + $0x2c] sm:$0xf]
        %v1161 = vld [vmem:[#allocation9 + $0x30] sm:$0xf]
        %v1162 = vld [vmem:[#allocation9 + $0x34] sm:$0xf]
        %v1163 = vld [vmem:[#allocation9 + $0x38] sm:$0xf]
        %v1164 = vld [vmem:[#allocation9 + $0x3c] sm:$0xf]
        %v1165 = vld [vmem:[#allocation10] sm:$0x1]
        %v1167 = vlaneseq
        %v1168 = vshrl.u32 %v1167, 7
        %v1169 = vsub.s32 0, %v1168
        %v1170 = vrot.slane %v1165, %v1169
        %v1188 = vunpack.c.l.b16 %v1149
        %v1189 = vunpack.c.l.b16 %v1150
        %v1190 = vunpack.c.l.b16 %v1151
        %v1191 = vunpack.c.l.b16 %v1152
        %v1192 = vunpack.c.l.b16 %v1153
        %v1193 = vunpack.c.l.b16 %v1154
        %v1194 = vunpack.c.l.b16 %v1155
        %v1195 = vunpack.c.l.b16 %v1156
        %v1196 = vunpack.c.l.b16 %v1157
        %v1197 = vunpack.c.l.b16 %v1158
        %v1198 = vunpack.c.l.b16 %v1159
        %v1199 = vunpack.c.l.b16 %v1160
        %v1200 = vunpack.c.l.b16 %v1161
        %v1201 = vunpack.c.l.b16 %v1162
        %v1202 = vunpack.c.l.b16 %v1163
        %v1203 = vunpack.c.l.b16 %v1164
        %v1204 = vpack.c.b16 %v1189, %v1188
        %v1205 = vpack.c.b16 %v1191, %v1190
        %v1206 = vpack.c.b16 %v1193, %v1192
        %v1207 = vpack.c.b16 %v1195, %v1194
        %v1208 = vpack.c.b16 %v1197, %v1196
        %v1209 = vpack.c.b16 %v1199, %v1198
        %v1210 = vpack.c.b16 %v1201, %v1200
        %v1211 = vpack.c.b16 %v1203, %v1202
        %1220 = vmatprep.subr.bf16.mxu0 0
        %1221 = vmatpush1.bf16.msra.mxu0 %v1211
        %1222 = vmatprep.subr.bf16.mxu0 0
        %1223 = vmatpush1.bf16.msra.mxu0 %v1210
        %1224 = vmatprep.subr.bf16.mxu0 0
        %1225 = vmatpush1.bf16.msra.mxu0 %v1209
        %1226 = vmatprep.subr.bf16.mxu0 0
        %1227 = vmatpush1.bf16.msra.mxu0 %v1208
        %1228 = vmatprep.subr.bf16.mxu0 0
        %1229 = vmatpush1.bf16.msra.mxu0 %v1207
        %1230 = vmatprep.subr.bf16.mxu0 0
        %1231 = vmatpush1.bf16.msra.mxu0 %v1206
        %1232 = vmatprep.subr.bf16.mxu0 0
        %1233 = vmatpush1.bf16.msra.mxu0 %v1205
        %1234 = vmatprep.subr.bf16.mxu0 0
        %1235 = vmatpush1.bf16.msra.mxu0 %v1204
        %1236 = vmatprep.subr.bf16.mxu0 0
        %1237 = vmatpush2.bf16.msra.mxu0 0
        %1238 = vmatprep.subr.bf16.mxu0 0
        %1239 = vmatpush2.bf16.msra.mxu0 0
        %1240 = vmatprep.subr.bf16.mxu0 0
        %1241 = vmatpush2.bf16.msra.mxu0 0
        %1242 = vmatprep.subr.bf16.mxu0 0
        %1243 = vmatpush2.bf16.msra.mxu0 0
        %1244 = vmatprep.subr.bf16.mxu0 0
        %1245 = vmatpush2.bf16.msra.mxu0 0
        %1246 = vmatprep.subr.bf16.mxu0 0
        %1247 = vmatpush2.bf16.msra.mxu0 0
        %1248 = vmatprep.subr.bf16.mxu0 0
        %1249 = vmatpush2.bf16.msra.mxu0 0
        %1250 = vmatprep.subr.bf16.mxu0 0
        %1251 = vmatpush2.bf16.msra.mxu0 0
        %1252 = vmatprep.mubr.bf16.mxu0 0
        %1253 = vmatmul.mubr.bf16.gmra.mxu0 %v1147
        %v1254 = vpop.f32.mrf.mxu0
        %v1255 = vadd.f32 %v1170, %v1254
        %v1256 = vpop.f32.mrf.mxu0
        %v1257 = vpop.f32.mrf.mxu0
        %v1258 = vpop.f32.mrf.mxu0
        %1259 = vdwg.mxu0
        %v1260 = vadd.f32 %v387, %v1255
        %1261 = vst [vmem:[%s385] sm:$0xff] %v1260
        %p1262 = scmp.lt.s32.totalorder %s25, 1
        %s1263 = scalar_select %p1262, %s25, 1
        %s1264 = smul.addr %s1263, 8
        %s1265 = scalar_lea.vmem %s8, %s1264
        // Predicated region
        $region77: #{decoder_forward.8} parent=51 // pred_check
          %p1266 = pneg %p216
        $region78: #{decoder_forward.8} parent=51 // pred_check_branch
          %1268 = sbr.rel (%p1266) target = $region80
        $region79: #{decoder_forward.8} parent=51 // pred_region
          _
        $region80: #{decoder_forward.8} parent=51 // pred_fallthru
          _
      $region52: #{decoder_forward.8} parent=5 // pred_fallthru
        _
      %p1269 = scmp.le.s32.totalorder 2, %s20
      // Predicated region
      $region81: #{decoder_forward.8} parent=5 // pred_check
        %p1270 = pneg %p1269
      $region82: #{decoder_forward.8} parent=5 // pred_check_branch
        %1272 = sbr.rel (%p1270) target = $region84
      $region83: #{decoder_forward.8} parent=5 // pred_region
        %s1273 = ssub.s32 %s20, 2
        // Predicated region
        $region85: #{decoder_forward.8} parent=83 // pred_check
          %p1274 = pneg %p222
        $region86: #{decoder_forward.8} parent=83 // pred_check_branch
          %1276 = sbr.rel (%p1274) target = $region88
        $region87: #{decoder_forward.8} parent=83 // pred_region
          %p1277 = scmp.lt.s32.totalorder %s26, 1
          %s1278 = scalar_select %p1277, %s26, 1
          %s1279 = smul.addr %s1278, 8
          %s1280 = scalar_lea.vmem %s8, %s1279
        $region88: #{decoder_forward.8} parent=83 // pred_fallthru
          _
      $region84: #{decoder_forward.8} parent=5 // pred_fallthru
        _
    $region6: #{decoder_forward.8} parent=1 // loop_footer
      %s24 = sadd.s32 1, %s20
    $region7: #{decoder_forward.8} parent=1 // loop_footer_branch
      %19 = sbr.rel target = $region3
    $region8: #{decoder_forward.8} parent=1 // loop_exit
      _
    %1281 = vsyncpa [#allocation3], 1
    %s1282 = scalar_lea.sflag [#allocation3], 1
    %1283 = vsyncpa %s1282, 1
    %1284 = vsyncpa [#allocation5], 1
    %1285 = vsyncpa [#allocation8], 1
    %1286 = vsyncpa [#allocation11], 1

// kernel: decoder_forward.15
$region0: #{decoder_forward.15}
  #allocation0 [shape = 'u32[]', space=smem, size = 0x4, offset = 0x4, fixed_abs, tag = 'smem constant byte address 0x4 - core index']
  #allocation1 [shape = 'u32[144,128]{1,0:T(1,128)}', space=vmem, size = 0x12000, scoped, tag = 'internal scratch']
  %s0 = inlined_call_operand.vmem [shape: f32[2,8,128], index: 0, kind: input, shape index: {}]
  %s1 = inlined_call_operand.vmem [shape: f32[1,128], index: 1, kind: input, shape index: {}]
  %s2 = inlined_call_operand.vmem [shape: f32[1,128], index: 2, kind: input, shape index: {}]
  %s3 = inlined_call_operand.vmem [shape: bf16[128,256], index: 3, kind: input, shape index: {}]
  %s4 = inlined_call_operand.vmem [shape: f32[1,256], index: 4, kind: input, shape index: {}]
  %s5 = inlined_call_operand.vmem [shape: bf16[256,128], index: 5, kind: input, shape index: {}]
  %s6 = inlined_call_operand.vmem [shape: f32[1,128], index: 6, kind: input, shape index: {}]
  %s7 = inlined_call_operand.vmem [shape: f32[1,128], index: 7, kind: input, shape index: {}]
  %s8 = inlined_call_operand.vmem [shape: f32[1,128], index: 8, kind: input, shape index: {}]
  %s9 = inlined_call_operand.hbm [shape: f32[2,8,128], index: 9, kind: output, shape index: {}]
  %s10 = sld [smem:[#allocation0]]
  $region69: #{decoder_forward.15} parent=0
    _
  %s12 = ssub.s32 1, %s10
  %s13 = scalar_select 0, %s12, %s10
  $region1: #{decoder_forward.15} parent=0
    #allocation2 [shape = 'u8[8192]{0}', space=vmem, size = 0x2000, scoped, tag = 'output window, operand 0']
    #allocation3 [shape = 's32[2]{0}', space=sflag, size = 0x8, scoped, tag = 'scoped memory for decoder_forward.15']
    %14 = vsyncpa [#allocation3], 0
    %s15 = scalar_lea.sflag [#allocation3], 1
    %16 = vsyncpa %s15, 0
    loop: start=0, step=1, limit=4
    $region2: #{decoder_forward.15} parent=1 // loop_pre_header
      _
    $region3: #{decoder_forward.15} parent=1 // loop_header
      %s18 = sphi 0, %s22
      %p19 = scmp.ge.s32.totalorder %s18, 4
      %s25 = sphi 0, %s37
      %s26 = sphi 0, %s33
      %s27 = sphi 0, %s25
      %s28 = sphi 0, %s26
      %s29 = sphi 0, %s27
      %s30 = sphi 0, %s28
      %s42 = sphi 0, %s44
      %s45 = sphi 0, %s42
      %s46 = sphi 0, %s45
      %s62 = sphi 0, %s46
      %s66 = sphi 0, %s66
      %s68 = sphi 0, %s66
      %s69 = sphi 0, %s68
      %s83 = sphi 0, %s69
      %s87 = sphi 0, %s87
      %s89 = sphi 0, %s87
      %s90 = sphi 0, %s89
      %s104 = sphi 0, %s90
      %s108 = sphi 0, %s108
      %s110 = sphi 0, %s108
      %s111 = sphi 0, %s110
      %s125 = sphi 0, %s111
      %s129 = sphi 0, %s129
      %s131 = sphi 0, %s129
      %s132 = sphi 0, %s131
      %s146 = sphi 0, %s132
      %s150 = sphi 0, %s150
      %s152 = sphi 0, %s150
      %s153 = sphi 0, %s152
      %s167 = sphi 0, %s153
      %s171 = sphi 0, %s171
      %s173 = sphi 0, %s171
      %s174 = sphi 0, %s173
      %s188 = sphi 0, %s174
      %s192 = sphi 0, %s192
      %s194 = sphi 0, %s192
      %s195 = sphi 0, %s194
      %s209 = sphi 0, %s195
      %s213 = sphi 0, %s213
      %s215 = sphi 0, %s213
      %s216 = sphi 0, %s215
      %s230 = sphi 0, %s216
      %s238 = sphi 0, %s240
      %s241 = sphi 0, %s238
      %s242 = sphi 0, %s241
      %s258 = sphi 0, %s242
    $region4: #{decoder_forward.15} parent=1 // loop_header_branch
      %21 = sbr.rel (%p19) target = $region8
    $region5: #{decoder_forward.15} parent=1 // loop_body
      %s23 = ssub.s32 %s18, 1
      %s24 = ssub.s32 %s18, 2
      %s31 = sadd.s32 1, %s26
      %p32 = scmp.ge.s32.totalorder %s31, 1
      %s33 = scalar_select %p32, 0, %s31
      %s34 = sadd.s32 1, %s25
      %s35 = scalar_select %p32, %s34, %s25
      %p36 = scmp.ge.s32.totalorder %s35, 2
      %s37 = scalar_select %p36, 0, %s35
      %s38 = ssub.s32 %s25, %s37
      %s39 = ssub.s32 %s26, %s33
      %s40 = sor.u32 %s38, %s39
      %p41 = scmp.eq.s32.totalorder %s40, 0
      %s43 = sadd.s32 %s42, 1
      %s44 = scalar_select %p41, %s42, %s43
      %p47 = pneg %p41
      %p48 = scmp.eq.s32.totalorder %s18, 1
      %p49 = por %p47, %p48
      %p50 = scmp.ne.s32.totalorder %s42, %s45
      %p51 = scmp.eq.s32.totalorder %s18, 0
      %p52 = por %p50, %p51
      %p53 = scmp.ne.s32.totalorder %s42, %s45
      %p54 = scmp.eq.s32.totalorder %s23, 1
      %p55 = por %p53, %p54
      %p56 = scmp.ne.s32.totalorder %s45, %s46
      %p57 = scmp.eq.s32.totalorder %s23, 0
      %p58 = por %p56, %p57
      %p59 = scmp.ne.s32.totalorder %s45, %s46
      %p60 = scmp.eq.s32.totalorder %s24, 1
      %p61 = por %p59, %p60
      %p63 = scmp.ne.s32.totalorder %s46, %s62
      %p64 = scmp.eq.s32.totalorder %s24, 0
      %p65 = por %p63, %p64
      %s67 = sadd.s32 %s66, 1
      %p70 = scmp.eq.s32.totalorder %s18, 1
      %p71 = scmp.ne.s32.totalorder %s66, %s68
      %p72 = scmp.eq.s32.totalorder %s18, 0
      %p73 = por %p71, %p72
      %p74 = scmp.ne.s32.totalorder %s66, %s68
      %p75 = scmp.eq.s32.totalorder %s23, 1
      %p76 = por %p74, %p75
      %p77 = scmp.ne.s32.totalorder %s68, %s69
      %p78 = scmp.eq.s32.totalorder %s23, 0
      %p79 = por %p77, %p78
      %p80 = scmp.ne.s32.totalorder %s68, %s69
      %p81 = scmp.eq.s32.totalorder %s24, 1
      %p82 = por %p80, %p81
      %p84 = scmp.ne.s32.totalorder %s69, %s83
      %p85 = scmp.eq.s32.totalorder %s24, 0
      %p86 = por %p84, %p85
      %s88 = sadd.s32 %s87, 1
      %p91 = scmp.eq.s32.totalorder %s18, 1
      %p92 = scmp.ne.s32.totalorder %s87, %s89
      %p93 = scmp.eq.s32.totalorder %s18, 0
      %p94 = por %p92, %p93
      %p95 = scmp.ne.s32.totalorder %s87, %s89
      %p96 = scmp.eq.s32.totalorder %s23, 1
      %p97 = por %p95, %p96
      %p98 = scmp.ne.s32.totalorder %s89, %s90
      %p99 = scmp.eq.s32.totalorder %s23, 0
      %p100 = por %p98, %p99
      %p101 = scmp.ne.s32.totalorder %s89, %s90
      %p102 = scmp.eq.s32.totalorder %s24, 1
      %p103 = por %p101, %p102
      %p105 = scmp.ne.s32.totalorder %s90, %s104
      %p106 = scmp.eq.s32.totalorder %s24, 0
      %p107 = por %p105, %p106
      %s109 = sadd.s32 %s108, 1
      %p112 = scmp.eq.s32.totalorder %s18, 1
      %p113 = scmp.ne.s32.totalorder %s108, %s110
      %p114 = scmp.eq.s32.totalorder %s18, 0
      %p115 = por %p113, %p114
      %p116 = scmp.ne.s32.totalorder %s108, %s110
      %p117 = scmp.eq.s32.totalorder %s23, 1
      %p118 = por %p116, %p117
      %p119 = scmp.ne.s32.totalorder %s110, %s111
      %p120 = scmp.eq.s32.totalorder %s23, 0
      %p121 = por %p119, %p120
      %p122 = scmp.ne.s32.totalorder %s110, %s111
      %p123 = scmp.eq.s32.totalorder %s24, 1
      %p124 = por %p122, %p123
      %p126 = scmp.ne.s32.totalorder %s111, %s125
      %p127 = scmp.eq.s32.totalorder %s24, 0
      %p128 = por %p126, %p127
      %s130 = sadd.s32 %s129, 1
      %p133 = scmp.eq.s32.totalorder %s18, 1
      %p134 = scmp.ne.s32.totalorder %s129, %s131
      %p135 = scmp.eq.s32.totalorder %s18, 0
      %p136 = por %p134, %p135
      %p137 = scmp.ne.s32.totalorder %s129, %s131
      %p138 = scmp.eq.s32.totalorder %s23, 1
      %p139 = por %p137, %p138
      %p140 = scmp.ne.s32.totalorder %s131, %s132
      %p141 = scmp.eq.s32.totalorder %s23, 0
      %p142 = por %p140, %p141
      %p143 = scmp.ne.s32.totalorder %s131, %s132
      %p144 = scmp.eq.s32.totalorder %s24, 1
      %p145 = por %p143, %p144
      %p147 = scmp.ne.s32.totalorder %s132, %s146
      %p148 = scmp.eq.s32.totalorder %s24, 0
      %p149 = por %p147, %p148
      %s151 = sadd.s32 %s150, 1
      %p154 = scmp.eq.s32.totalorder %s18, 1
      %p155 = scmp.ne.s32.totalorder %s150, %s152
      %p156 = scmp.eq.s32.totalorder %s18, 0
      %p157 = por %p155, %p156
      %p158 = scmp.ne.s32.totalorder %s150, %s152
      %p159 = scmp.eq.s32.totalorder %s23, 1
      %p160 = por %p158, %p159
      %p161 = scmp.ne.s32.totalorder %s152, %s153
      %p162 = scmp.eq.s32.totalorder %s23, 0
      %p163 = por %p161, %p162
      %p164 = scmp.ne.s32.totalorder %s152, %s153
      %p165 = scmp.eq.s32.totalorder %s24, 1
      %p166 = por %p164, %p165
      %p168 = scmp.ne.s32.totalorder %s153, %s167
      %p169 = scmp.eq.s32.totalorder %s24, 0
      %p170 = por %p168, %p169
      %s172 = sadd.s32 %s171, 1
      %p175 = scmp.eq.s32.totalorder %s18, 1
      %p176 = scmp.ne.s32.totalorder %s171, %s173
      %p177 = scmp.eq.s32.totalorder %s18, 0
      %p178 = por %p176, %p177
      %p179 = scmp.ne.s32.totalorder %s171, %s173
      %p180 = scmp.eq.s32.totalorder %s23, 1
      %p181 = por %p179, %p180
      %p182 = scmp.ne.s32.totalorder %s173, %s174
      %p183 = scmp.eq.s32.totalorder %s23, 0
      %p184 = por %p182, %p183
      %p185 = scmp.ne.s32.totalorder %s173, %s174
      %p186 = scmp.eq.s32.totalorder %s24, 1
      %p187 = por %p185, %p186
      %p189 = scmp.ne.s32.totalorder %s174, %s188
      %p190 = scmp.eq.s32.totalorder %s24, 0
      %p191 = por %p189, %p190
      %s193 = sadd.s32 %s192, 1
      %p196 = scmp.eq.s32.totalorder %s18, 1
      %p197 = scmp.ne.s32.totalorder %s192, %s194
      %p198 = scmp.eq.s32.totalorder %s18, 0
      %p199 = por %p197, %p198
      %p200 = scmp.ne.s32.totalorder %s192, %s194
      %p201 = scmp.eq.s32.totalorder %s23, 1
      %p202 = por %p200, %p201
      %p203 = scmp.ne.s32.totalorder %s194, %s195
      %p204 = scmp.eq.s32.totalorder %s23, 0
      %p205 = por %p203, %p204
      %p206 = scmp.ne.s32.totalorder %s194, %s195
      %p207 = scmp.eq.s32.totalorder %s24, 1
      %p208 = por %p206, %p207
      %p210 = scmp.ne.s32.totalorder %s195, %s209
      %p211 = scmp.eq.s32.totalorder %s24, 0
      %p212 = por %p210, %p211
      %s214 = sadd.s32 %s213, 1
      %p217 = scmp.eq.s32.totalorder %s18, 1
      %p218 = scmp.ne.s32.totalorder %s213, %s215
      %p219 = scmp.eq.s32.totalorder %s18, 0
      %p220 = por %p218, %p219
      %p221 = scmp.ne.s32.totalorder %s213, %s215
      %p222 = scmp.eq.s32.totalorder %s23, 1
      %p223 = por %p221, %p222
      %p224 = scmp.ne.s32.totalorder %s215, %s216
      %p225 = scmp.eq.s32.totalorder %s23, 0
      %p226 = por %p224, %p225
      %p227 = scmp.ne.s32.totalorder %s215, %s216
      %p228 = scmp.eq.s32.totalorder %s24, 1
      %p229 = por %p227, %p228
      %p231 = scmp.ne.s32.totalorder %s216, %s230
      %p232 = scmp.eq.s32.totalorder %s24, 0
      %p233 = por %p231, %p232
      %s234 = ssub.s32 %s25, %s37
      %s235 = ssub.s32 %s26, %s33
      %s236 = sor.u32 %s234, %s235
      %p237 = scmp.eq.s32.totalorder %s236, 0
      %s239 = sadd.s32 %s238, 1
      %s240 = scalar_select %p237, %s238, %s239
      %p243 = pneg %p237
      %p244 = scmp.eq.s32.totalorder %s18, 1
      %p245 = por %p243, %p244
      %p246 = scmp.ne.s32.totalorder %s238, %s241
      %p247 = scmp.eq.s32.totalorder %s18, 0
      %p248 = por %p246, %p247
      %p249 = scmp.ne.s32.totalorder %s238, %s241
      %p250 = scmp.eq.s32.totalorder %s23, 1
      %p251 = por %p249, %p250
      %p252 = scmp.ne.s32.totalorder %s241, %s242
      %p253 = scmp.eq.s32.totalorder %s23, 0
      %p254 = por %p252, %p253
      %p255 = scmp.ne.s32.totalorder %s241, %s242
      %p256 = scmp.eq.s32.totalorder %s24, 1
      %p257 = por %p255, %p256
      %p259 = scmp.ne.s32.totalorder %s242, %s258
      %p260 = scmp.eq.s32.totalorder %s24, 0
      %p261 = por %p259, %p260
      %p262 = scmp.le.s32.totalorder 1, %s18
      %p263 = scmp.lt.s32.totalorder %s18, 3
      %p264 = pnand %p262, %p263
      %p265 = pneg %p264
      // Predicated region
      $region9: #{decoder_forward.15} parent=5 // pred_check
        _
      $region10: #{decoder_forward.15} parent=5 // pred_check_branch
        %267 = sbr.rel (%p264) target = $region12
      $region11: #{decoder_forward.15} parent=5 // pred_region
        %s268 = ssub.s32 %s18, 1
        // Predicated region
        $region13: #{decoder_forward.15} parent=11 // pred_check
          %p269 = pneg %p79
        $region14: #{decoder_forward.15} parent=11 // pred_check_branch
          %271 = sbr.rel (%p269) target = $region16
        $region15: #{decoder_forward.15} parent=11 // pred_region
          _
        $region16: #{decoder_forward.15} parent=11 // pred_fallthru
          _
        // Predicated region
        $region17: #{decoder_forward.15} parent=11 // pred_check
          %p272 = pneg %p100
        $region18: #{decoder_forward.15} parent=11 // pred_check_branch
          %274 = sbr.rel (%p272) target = $region20
        $region19: #{decoder_forward.15} parent=11 // pred_region
          _
        $region20: #{decoder_forward.15} parent=11 // pred_fallthru
          _
        // Predicated region
        $region21: #{decoder_forward.15} parent=11 // pred_check
          %p275 = pneg %p121
        $region22: #{decoder_forward.15} parent=11 // pred_check_branch
          %277 = sbr.rel (%p275) target = $region24
        $region23: #{decoder_forward.15} parent=11 // pred_region
          _
        $region24: #{decoder_forward.15} parent=11 // pred_fallthru
          _
        // Predicated region
        $region25: #{decoder_forward.15} parent=11 // pred_check
          %p278 = pneg %p142
        $region26: #{decoder_forward.15} parent=11 // pred_check_branch
          %280 = sbr.rel (%p278) target = $region28
        $region27: #{decoder_forward.15} parent=11 // pred_region
          _
        $region28: #{decoder_forward.15} parent=11 // pred_fallthru
          _
        // Predicated region
        $region29: #{decoder_forward.15} parent=11 // pred_check
          %p281 = pneg %p163
        $region30: #{decoder_forward.15} parent=11 // pred_check_branch
          %283 = sbr.rel (%p281) target = $region32
        $region31: #{decoder_forward.15} parent=11 // pred_region
          _
        $region32: #{decoder_forward.15} parent=11 // pred_fallthru
          _
        // Predicated region
        $region33: #{decoder_forward.15} parent=11 // pred_check
          %p284 = pneg %p184
        $region34: #{decoder_forward.15} parent=11 // pred_check_branch
          %286 = sbr.rel (%p284) target = $region36
        $region35: #{decoder_forward.15} parent=11 // pred_region
          _
        $region36: #{decoder_forward.15} parent=11 // pred_fallthru
          _
        // Predicated region
        $region37: #{decoder_forward.15} parent=11 // pred_check
          %p287 = pneg %p205
        $region38: #{decoder_forward.15} parent=11 // pred_check_branch
          %289 = sbr.rel (%p287) target = $region40
        $region39: #{decoder_forward.15} parent=11 // pred_region
          _
        $region40: #{decoder_forward.15} parent=11 // pred_fallthru
          _
        // Predicated region
        $region41: #{decoder_forward.15} parent=11 // pred_check
          %p290 = pneg %p226
        $region42: #{decoder_forward.15} parent=11 // pred_check_branch
          %292 = sbr.rel (%p290) target = $region44
        $region43: #{decoder_forward.15} parent=11 // pred_region
          _
        $region44: #{decoder_forward.15} parent=11 // pred_fallthru
          _
      $region12: #{decoder_forward.15} parent=5 // pred_fallthru
        _
      %p293 = scmp.lt.s32.totalorder %s18, 2
      // Predicated region
      $region45: #{decoder_forward.15} parent=5 // pred_check
        %p294 = pneg %p293
      $region46: #{decoder_forward.15} parent=5 // pred_check_branch
        %296 = sbr.rel (%p294) target = $region48
      $region47: #{decoder_forward.15} parent=5 // pred_region
        // Predicated region
        $region49: #{decoder_forward.15} parent=47 // pred_check
          %p297 = pneg %p52
        $region50: #{decoder_forward.15} parent=47 // pred_check_branch
          %299 = sbr.rel (%p297) target = $region52
        $region51: #{decoder_forward.15} parent=47 // pred_region
          %p300 = scmp.lt.s32.totalorder %s25, 1
          %s301 = scalar_select %p300, %s25, 1
          %p302 = scmp.lt.s32.totalorder %s26, 0
          %s303 = scalar_select %p302, %s26, 0
          %s304 = sadd.s32 %s303, %s301
          %s305 = smul.addr %s304, 8
          %s306 = scalar_lea.vmem %s0, %s305
        $region52: #{decoder_forward.15} parent=47 // pred_fallthru
          _
      $region48: #{decoder_forward.15} parent=5 // pred_fallthru
        _
      %p307 = scmp.le.s32.totalorder 1, %s18
      %p308 = scmp.lt.s32.totalorder %s18, 3
      %p309 = pnand %p307, %p308
      %p310 = pneg %p309
      // Predicated region
      $region53: #{decoder_forward.15} parent=5 // pred_check
        _
      $region54: #{decoder_forward.15} parent=5 // pred_check_branch
        %312 = sbr.rel (%p309) target = $region56
      $region55: #{decoder_forward.15} parent=5 // pred_region
        %s313 = ssub.s32 %s18, 1
        %p314 = scmp.lt.s32.totalorder %s27, 1
        %s315 = scalar_select %p314, %s27, 1
        %p316 = scmp.lt.s32.totalorder %s28, 0
        %s317 = scalar_select %p316, %s28, 0
        %s318 = sadd.s32 %s317, %s315
        %s319 = smul.addr %s318, 8
        %s320 = scalar_lea.vmem %s0, %s319
        %p321 = pneg %p58
        %p322 = pneg %p55
        %p323 = pneg %p79
        %p324 = pneg %p76
        %p325 = pneg %p100
        %p326 = pneg %p97
        %p327 = pneg %p121
        %p328 = pneg %p118
        %p329 = pneg %p142
        %p330 = pneg %p139
        %p331 = pneg %p163
        %p332 = pneg %p160
        %p333 = pneg %p184
        %p334 = pneg %p181
        %p335 = pneg %p205
        %p336 = pneg %p202
        %p337 = pneg %p226
        %p338 = pneg %p223
        %p339 = pneg %p254
        %p340 = pneg %p251
        %s341 = sand.u32 %s241, 1
        %s342 = scalar_lea.sflag [#allocation3], %s341
        %s343 = sand.u32 %s241, 1
        %s344 = smul.addr %s343, 8
        %s345 = scalar_lea.vmem [#allocation2], %s344
        %p346 = scmp.lt.s32.totalorder %s27, 1
        %s347 = scalar_select %p346, %s27, 1
        %p348 = scmp.lt.s32.totalorder %s28, 0
        %s349 = scalar_select %p348, %s28, 0
        %s350 = sadd.s32 %s349, %s347
        %s351 = smul.addr %s350, 8
        %s352 = scalar_lea.vmem %s0, %s351
        %v354 = vld [vmem:[%s352] sm:$0xff]
        %v355 = vld [vmem:[%s1] sm:$0x1]
        %v356 = vld [vmem:[%s2] sm:$0x1]
        %357 = vadd.xlane.f32.xlu0 %v354
        %v358 = vpop.xlane.xlu0 %357
        %v359 = vrcp.pop 128.0
        %v360 = vmul.f32 %v358, %v359
        %v361 = vsub.f32 %v354, %v360
        %v362 = vmul.f32 %v361, %v361
        %363 = vadd.xlane.f32.xlu0 %v362
        %v364 = vpop.xlane.xlu0 %363
        %v365 = vmul.f32 %v364, 0.007874016
        %v367 = vlaneseq
        %v368 = vshrl.u32 %v367, 7
        %v369 = vsub.s32 0, %v368
        %v370 = vrot.slane %v355, %v369
        %v372 = vmul.f32 %v370, %v361
        %v373 = vrsqrt.pop %v365
        %v374 = vmul.f32 %v365, %v373
        %vm375 = vcmp.eq.f32.partialorder %v365, inf
        %v376 = vsel %vm375, %v365, %v374
        %vm377 = vcmp.eq.f32.partialorder %v365, 0.0
        %v378 = vand.u32 %v365, 2147483648
        %v379 = vsel %vm377, %v378, %v376
        %v380 = vadd.f32 %v379, 1e-06
        %v381 = vrcp.pop %v380
        %v382 = vmul.f32 %v372, %v381
        %v384 = vlaneseq
        %v385 = vshrl.u32 %v384, 7
        %v386 = vsub.s32 0, %v385
        %v387 = vrot.slane %v356, %v386
        %v389 = vadd.f32 %v382, %v387
        %v390 = vpack.c.bf16 %v389, %v389
        %v391 = vld [vmem:[%s3] sm:$0xff]
        %v392 = vld [vmem:[%s3 + $0x8] sm:$0xff]
        %v393 = vld [vmem:[%s3 + $0x10] sm:$0xff]
        %v394 = vld [vmem:[%s3 + $0x18] sm:$0xff]
        %v395 = vld [vmem:[%s3 + $0x20] sm:$0xff]
        %v396 = vld [vmem:[%s3 + $0x28] sm:$0xff]
        %v397 = vld [vmem:[%s3 + $0x30] sm:$0xff]
        %v398 = vld [vmem:[%s3 + $0x38] sm:$0xff]
        %v399 = vld [vmem:[%s3 + $0x40] sm:$0xff]
        %v400 = vld [vmem:[%s3 + $0x48] sm:$0xff]
        %v401 = vld [vmem:[%s3 + $0x50] sm:$0xff]
        %v402 = vld [vmem:[%s3 + $0x58] sm:$0xff]
        %v403 = vld [vmem:[%s3 + $0x60] sm:$0xff]
        %v404 = vld [vmem:[%s3 + $0x68] sm:$0xff]
        %v405 = vld [vmem:[%s3 + $0x70] sm:$0xff]
        %v406 = vld [vmem:[%s3 + $0x78] sm:$0xff]
        %v407 = vld [vmem:[%s4] sm:$0x3]
        %v409 = vlaneseq
        %v410 = vshrl.u32 %v409, 7
        %v411 = vsub.s32 0, %v410
        %v412 = vrot.slane %v407, %v411
        %v413 = vlaneseq
        %v414 = vshrl.u32 %v413, 7
        %v415 = vsub.s32 1, %v414
        %v416 = vrot.slane %v407, %v415
        %v435 = vunpack.c.l.b16 %v391
        %v436 = vunpack.c.h.b16 %v391
        %v437 = vunpack.c.l.b16 %v392
        %v438 = vunpack.c.h.b16 %v392
        %v439 = vunpack.c.l.b16 %v393
        %v440 = vunpack.c.h.b16 %v393
        %v441 = vunpack.c.l.b16 %v394
        %v442 = vunpack.c.h.b16 %v394
        %v443 = vunpack.c.l.b16 %v395
        %v444 = vunpack.c.h.b16 %v395
        %v445 = vunpack.c.l.b16 %v396
        %v446 = vunpack.c.h.b16 %v396
        %v447 = vunpack.c.l.b16 %v397
        %v448 = vunpack.c.h.b16 %v397
        %v449 = vunpack.c.l.b16 %v398
        %v450 = vunpack.c.h.b16 %v398
        %v451 = vunpack.c.l.b16 %v399
        %v452 = vunpack.c.h.b16 %v399
        %v453 = vunpack.c.l.b16 %v400
        %v454 = vunpack.c.h.b16 %v400
        %v455 = vunpack.c.l.b16 %v401
        %v456 = vunpack.c.h.b16 %v401
        %v457 = vunpack.c.l.b16 %v402
        %v458 = vunpack.c.h.b16 %v402
        %v459 = vunpack.c.l.b16 %v403
        %v460 = vunpack.c.h.b16 %v403
        %v461 = vunpack.c.l.b16 %v404
        %v462 = vunpack.c.h.b16 %v404
        %v463 = vunpack.c.l.b16 %v405
        %v464 = vunpack.c.h.b16 %v405
        %v465 = vunpack.c.l.b16 %v406
        %v466 = vunpack.c.h.b16 %v406
        %v467 = vpack.c.b16 %v437, %v435
        %v468 = vpack.c.b16 %v438, %v436
        %v469 = vpack.c.b16 %v441, %v439
        %v470 = vpack.c.b16 %v442, %v440
        %v471 = vpack.c.b16 %v445, %v443
        %v472 = vpack.c.b16 %v446, %v444
        %v473 = vpack.c.b16 %v449, %v447
        %v474 = vpack.c.b16 %v450, %v448
        %v475 = vpack.c.b16 %v453, %v451
        %v476 = vpack.c.b16 %v454, %v452
        %v477 = vpack.c.b16 %v457, %v455
        %v478 = vpack.c.b16 %v458, %v456
        %v479 = vpack.c.b16 %v461, %v459
        %v480 = vpack.c.b16 %v462, %v460
        %v481 = vpack.c.b16 %v465, %v463
        %v482 = vpack.c.b16 %v466, %v464
        %499 = vmatprep.subr.bf16.mxu0 %v482
        %500 = vmatpush1.bf16.msra.mxu0 %v481
        %501 = vmatprep.subr.bf16.mxu0 %v480
        %502 = vmatpush1.bf16.msra.mxu0 %v479
        %503 = vmatprep.subr.bf16.mxu0 %v478
        %504 = vmatpush1.bf16.msra.mxu0 %v477
        %505 = vmatprep.subr.bf16.mxu0 %v476
        %506 = vmatpush1.bf16.msra.mxu0 %v475
        %507 = vmatprep.subr.bf16.mxu0 %v474
        %508 = vmatpush1.bf16.msra.mxu0 %v473
        %509 = vmatprep.subr.bf16.mxu0 %v472
        %510 = vmatpush1.bf16.msra.mxu0 %v471
        %511 = vmatprep.subr.bf16.mxu0 %v470
        %512 = vmatpush1.bf16.msra.mxu0 %v469
        %513 = vmatprep.subr.bf16.mxu0 %v468
        %514 = vmatpush1.bf16.msra.mxu0 %v467
        %515 = vmatprep.subr.bf16.mxu0 0
        %516 = vmatpush2.bf16.msra.mxu0 0
        %517 = vmatprep.subr.bf16.mxu0 0
        %518 = vmatpush2.bf16.msra.mxu0 0
        %519 = vmatprep.subr.bf16.mxu0 0
        %520 = vmatpush2.bf16.msra.mxu0 0
        %521 = vmatprep.subr.bf16.mxu0 0
        %522 = vmatpush2.bf16.msra.mxu0 0
        %523 = vmatprep.subr.bf16.mxu0 0
        %524 = vmatpush2.bf16.msra.mxu0 0
        %525 = vmatprep.subr.bf16.mxu0 0
        %526 = vmatpush2.bf16.msra.mxu0 0
        %527 = vmatprep.subr.bf16.mxu0 0
        %528 = vmatpush2.bf16.msra.mxu0 0
        %529 = vmatprep.subr.bf16.mxu0 0
        %530 = vmatpush2.bf16.msra.mxu0 0
        %531 = vmatprep.mubr.bf16.mxu0 0
        %532 = vmatmul.mubr.bf16.gmra.mxu0 %v390
        %v533 = vpop.f32.mrf.mxu0
        %v534 = vadd.f32 %v412, %v533
        %v535 = vpop.f32.mrf.mxu0
        %v536 = vadd.f32 %v416, %v535
        %v537 = vpop.f32.mrf.mxu0
        %v538 = vpop.f32.mrf.mxu0
        %539 = vdwg.mxu0
        %v540 = vmax.f32 %v534, 0.0
        %v541 = vmax.f32 %v536, 0.0
        %v542 = vpack.c.bf16 %v540, %v540
        %v543 = vpack.c.bf16 %v541, %v541
        %v544 = vld [vmem:[%s5] sm:$0xf]
        %v545 = vld [vmem:[%s5 + $0x4] sm:$0xf]
        %v546 = vld [vmem:[%s5 + $0x8] sm:$0xf]
        %v547 = vld [vmem:[%s5 + $0xc] sm:$0xf]
        %v548 = vld [vmem:[%s5 + $0x10] sm:$0xf]
        %v549 = vld [vmem:[%s5 + $0x14] sm:$0xf]
        %v550 = vld [vmem:[%s5 + $0x18] sm:$0xf]
        %v551 = vld [vmem:[%s5 + $0x1c] sm:$0xf]
        %v552 = vld [vmem:[%s5 + $0x20] sm:$0xf]
        %v553 = vld [vmem:[%s5 + $0x24] sm:$0xf]
        %v554 = vld [vmem:[%s5 + $0x28] sm:$0xf]
        %v555 = vld [vmem:[%s5 + $0x2c] sm:$0xf]
        %v556 = vld [vmem:[%s5 + $0x30] sm:$0xf]
        %v557 = vld [vmem:[%s5 + $0x34] sm:$0xf]
        %v558 = vld [vmem:[%s5 + $0x38] sm:$0xf]
        %v559 = vld [vmem:[%s5 + $0x3c] sm:$0xf]
        %v560 = vld [vmem:[%s5 + $0x40] sm:$0xf]
        %v561 = vld [vmem:[%s5 + $0x44] sm:$0xf]
        %v562 = vld [vmem:[%s5 + $0x48] sm:$0xf]
        %v563 = vld [vmem:[%s5 + $0x4c] sm:$0xf]
        %v564 = vld [vmem:[%s5 + $0x50] sm:$0xf]
        %v565 = vld [vmem:[%s5 + $0x54] sm:$0xf]
        %v566 = vld [vmem:[%s5 + $0x58] sm:$0xf]
        %v567 = vld [vmem:[%s5 + $0x5c] sm:$0xf]
        %v568 = vld [vmem:[%s5 + $0x60] sm:$0xf]
        %v569 = vld [vmem:[%s5 + $0x64] sm:$0xf]
        %v570 = vld [vmem:[%s5 + $0x68] sm:$0xf]
        %v571 = vld [vmem:[%s5 + $0x6c] sm:$0xf]
        %v572 = vld [vmem:[%s5 + $0x70] sm:$0xf]
        %v573 = vld [vmem:[%s5 + $0x74] sm:$0xf]
        %v574 = vld [vmem:[%s5 + $0x78] sm:$0xf]
        %v575 = vld [vmem:[%s5 + $0x7c] sm:$0xf]
        %v576 = vld [vmem:[%s6] sm:$0x1]
        %v578 = vlaneseq
        %v579 = vshrl.u32 %v578, 7
        %v580 = vsub.s32 0, %v579
        %v581 = vrot.slane %v576, %v580
        %v615 = vunpack.c.l.b16 %v544
        %v616 = vunpack.c.l.b16 %v545
        %v617 = vunpack.c.l.b16 %v546
        %v618 = vunpack.c.l.b16 %v547
        %v619 = vunpack.c.l.b16 %v548
        %v620 = vunpack.c.l.b16 %v549
        %v621 = vunpack.c.l.b16 %v550
        %v622 = vunpack.c.l.b16 %v551
        %v623 = vunpack.c.l.b16 %v552
        %v624 = vunpack.c.l.b16 %v553
        %v625 = vunpack.c.l.b16 %v554
        %v626 = vunpack.c.l.b16 %v555
        %v627 = vunpack.c.l.b16 %v556
        %v628 = vunpack.c.l.b16 %v557
        %v629 = vunpack.c.l.b16 %v558
        %v630 = vunpack.c.l.b16 %v559
        %v631 = vunpack.c.l.b16 %v560
        %v632 = vunpack.c.l.b16 %v561
        %v633 = vunpack.c.l.b16 %v562
        %v634 = vunpack.c.l.b16 %v563
        %v635 = vunpack.c.l.b16 %v564
        %v636 = vunpack.c.l.b16 %v565
        %v637 = vunpack.c.l.b16 %v566
        %v638 = vunpack.c.l.b16 %v567
        %v639 = vunpack.c.l.b16 %v568
        %v640 = vunpack.c.l.b16 %v569
        %v641 = vunpack.c.l.b16 %v570
        %v642 = vunpack.c.l.b16 %v571
        %v643 = vunpack.c.l.b16 %v572
        %v644 = vunpack.c.l.b16 %v573
        %v645 = vunpack.c.l.b16 %v574
        %v646 = vunpack.c.l.b16 %v575
        %v647 = vpack.c.b16 %v616, %v615
        %v648 = vpack.c.b16 %v618, %v617
        %v649 = vpack.c.b16 %v620, %v619
        %v650 = vpack.c.b16 %v622, %v621
        %v651 = vpack.c.b16 %v624, %v623
        %v652 = vpack.c.b16 %v626, %v625
        %v653 = vpack.c.b16 %v628, %v627
        %v654 = vpack.c.b16 %v630, %v629
        %v655 = vpack.c.b16 %v632, %v631
        %v656 = vpack.c.b16 %v634, %v633
        %v657 = vpack.c.b16 %v636, %v635
        %v658 = vpack.c.b16 %v638, %v637
        %v659 = vpack.c.b16 %v640, %v639
        %v660 = vpack.c.b16 %v642, %v641
        %v661 = vpack.c.b16 %v644, %v643
        %v662 = vpack.c.b16 %v646, %v645
        %679 = vmatprep.subr.bf16.mxu0 0
        %680 = vmatpush1.bf16.msra.mxu0 %v654
        %681 = vmatprep.subr.bf16.mxu0 0
        %682 = vmatpush1.bf16.msra.mxu0 %v653
        %683 = vmatprep.subr.bf16.mxu0 0
        %684 = vmatpush1.bf16.msra.mxu0 %v652
        %685 = vmatprep.subr.bf16.mxu0 0
        %686 = vmatpush1.bf16.msra.mxu0 %v651
        %687 = vmatprep.subr.bf16.mxu0 0
        %688 = vmatpush1.bf16.msra.mxu0 %v650
        %689 = vmatprep.subr.bf16.mxu0 0
        %690 = vmatpush1.bf16.msra.mxu0 %v649
        %691 = vmatprep.subr.bf16.mxu0 0
        %692 = vmatpush1.bf16.msra.mxu0 %v648
        %693 = vmatprep.subr.bf16.mxu0 0
        %694 = vmatpush1.bf16.msra.mxu0 %v647
        %695 = vmatprep.subr.bf16.mxu0 0
        %696 = vmatpush2.bf16.msra.mxu0 %v662
        %697 = vmatprep.subr.bf16.mxu0 0
        %698 = vmatpush2.bf16.msra.mxu0 %v661
        %699 = vmatprep.subr.bf16.mxu0 0
        %700 = vmatpush2.bf16.msra.mxu0 %v660
        %701 = vmatprep.subr.bf16.mxu0 0
        %702 = vmatpush2.bf16.msra.mxu0 %v659
        %703 = vmatprep.subr.bf16.mxu0 0
        %704 = vmatpush2.bf16.msra.mxu0 %v658
        %705 = vmatprep.subr.bf16.mxu0 0
        %706 = vmatpush2.bf16.msra.mxu0 %v657
        %707 = vmatprep.subr.bf16.mxu0 0
        %708 = vmatpush2.bf16.msra.mxu0 %v656
        %709 = vmatprep.subr.bf16.mxu0 0
        %710 = vmatpush2.bf16.msra.mxu0 %v655
        %711 = vmatprep.mubr.bf16.mxu0 %v543
        %712 = vmatmul.mubr.bf16.gmra.mxu0 %v542
        %v713 = vpop.f32.mrf.mxu0
        %v714 = vadd.f32 %v581, %v713
        %v715 = vpop.f32.mrf.mxu0
        %v716 = vpop.f32.mrf.mxu0
        %v717 = vpop.f32.mrf.mxu0
        %718 = vdwg.mxu0
        %v719 = vadd.f32 %v354, %v714
        %v720 = vld [vmem:[%s7] sm:$0x1]
        %v721 = vld [vmem:[%s8] sm:$0x1]
        %722 = vadd.xlane.f32.xlu0 %v719
        %v723 = vpop.xlane.xlu0 %722
        %v724 = vmul.f32 %v723, %v359
        %v725 = vsub.f32 %v719, %v724
        %v726 = vmul.f32 %v725, %v725
        %727 = vadd.xlane.f32.xlu0 %v726
        %v728 = vpop.xlane.xlu0 %727
        %v729 = vmul.f32 %v728, 0.007874016
        %v731 = vlaneseq
        %v732 = vshrl.u32 %v731, 7
        %v733 = vsub.s32 0, %v732
        %v734 = vrot.slane %v720, %v733
        %v736 = vmul.f32 %v734, %v725
        %v737 = vrsqrt.pop %v729
        %v738 = vmul.f32 %v729, %v737
        %vm739 = vcmp.eq.f32.partialorder %v729, inf
        %v740 = vsel %vm739, %v729, %v738
        %vm741 = vcmp.eq.f32.partialorder %v729, 0.0
        %v742 = vand.u32 %v729, 2147483648
        %v743 = vsel %vm741, %v742, %v740
        %v744 = vadd.f32 %v743, 1e-06
        %v745 = vrcp.pop %v744
        %v746 = vmul.f32 %v736, %v745
        %v748 = vlaneseq
        %v749 = vshrl.u32 %v748, 7
        %v750 = vsub.s32 0, %v749
        %v751 = vrot.slane %v721, %v750
        %v753 = vadd.f32 %v746, %v751
        %754 = vst [vmem:[%s345] sm:$0xff] %v753
        %s755 = sand.u32 %s241, 1
        %s756 = scalar_lea.sflag [#allocation3], %s755
        %s757 = sand.u32 %s241, 1
        %s758 = smul.addr %s757, 8
        %s759 = scalar_lea.vmem [#allocation2], %s758
        // Predicated region
        $region57: #{decoder_forward.15} parent=55 // pred_check
          %p760 = pneg %p251
        $region58: #{decoder_forward.15} parent=55 // pred_check_branch
          %762 = sbr.rel (%p760) target = $region60
        $region59: #{decoder_forward.15} parent=55 // pred_region
          %s764 = ssub.s32 128, 128
          %765 = vsyncadd %s756, %s764
          %s766 = sadd.s32 %s28, %s27
          %s767 = smul.addr %s766, 128
          %s768 = scalar_lea.hbm %s9, %s767
          %s770 = sshll.u32 %s759, 4
          %s771 = int_to_ptr.vmem [resolvable:$true] %s770
          %773 = dma.vmem_to_hbm [thread:$0]  %s771, 128, %s768, %s756
        $region60: #{decoder_forward.15} parent=55 // pred_fallthru
          _
      $region56: #{decoder_forward.15} parent=5 // pred_fallthru
        _
      %p774 = scmp.le.s32.totalorder 2, %s18
      // Predicated region
      $region61: #{decoder_forward.15} parent=5 // pred_check
        %p775 = pneg %p774
      $region62: #{decoder_forward.15} parent=5 // pred_check_branch
        %777 = sbr.rel (%p775) target = $region64
      $region63: #{decoder_forward.15} parent=5 // pred_region
        %s778 = ssub.s32 %s18, 2
        // Predicated region
        $region65: #{decoder_forward.15} parent=63 // pred_check
          %p779 = pneg %p257
        $region66: #{decoder_forward.15} parent=63 // pred_check_branch
          %781 = sbr.rel (%p779) target = $region68
        $region67: #{decoder_forward.15} parent=63 // pred_region
          %s782 = sand.u32 %s242, 1
          %s783 = scalar_lea.sflag [#allocation3], %s782
          %s784 = sand.u32 %s242, 1
          %s785 = smul.addr %s784, 8
          %s786 = scalar_lea.vmem [#allocation2], %s785
          %787 = dma.done %s783, 128
        $region68: #{decoder_forward.15} parent=63 // pred_fallthru
          _
      $region64: #{decoder_forward.15} parent=5 // pred_fallthru
        _
    $region6: #{decoder_forward.15} parent=1 // loop_footer
      %s22 = sadd.s32 1, %s18
    $region7: #{decoder_forward.15} parent=1 // loop_footer_branch
      %17 = sbr.rel target = $region3
    $region8: #{decoder_forward.15} parent=1 // loop_exit
      _
    %788 = vsyncpa [#allocation3], 1
    %s789 = scalar_lea.sflag [#allocation3], 1
    %790 = vsyncpa %s789, 1

// kernel: decoder_forward.12
$region0: #{decoder_forward.12}
  #allocation0 [shape = 'u32[]', space=smem, size = 0x4, offset = 0x4, fixed_abs, tag = 'smem constant byte address 0x4 - core index']
  #allocation1 [shape = 'u32[144,128]{1,0:T(1,128)}', space=vmem, size = 0x12000, scoped, tag = 'internal scratch']
  %s0 = inlined_call_operand.vmem [shape: f32[2,8,128], index: 0, kind: input, shape index: {}]
  %s1 = inlined_call_operand.vmem [shape: f32[1,8,8], index: 1, kind: input, shape index: {}]
  %s2 = inlined_call_operand.vmem [shape: f32[1,128], index: 2, kind: input, shape index: {}]
  %s3 = inlined_call_operand.vmem [shape: f32[1,128], index: 3, kind: input, shape index: {}]
  %s4 = inlined_call_operand.vmem [shape: bf16[128,384], index: 4, kind: input, shape index: {}]
  %s5 = inlined_call_operand.vmem [shape: f32[1,384], index: 5, kind: input, shape index: {}]
  %s6 = inlined_call_operand.vmem [shape: bf16[128,128], index: 6, kind: input, shape index: {}]
  %s7 = inlined_call_operand.vmem [shape: f32[1,128], index: 7, kind: input, shape index: {}]
  %s8 = inlined_call_operand.vmem [shape: f32[2,8,128], index: 8, kind: output, shape index: {}]
  %s9 = sld [smem:[#allocation0]]
  $region65: #{decoder_forward.12} parent=0
    _
  %s11 = ssub.s32 1, %s9
  %s12 = scalar_select 0, %s11, %s9
  loop: start=0, step=1, limit=4
  $region2: #{decoder_forward.12} parent=0 // loop_pre_header
    _
  $region3: #{decoder_forward.12} parent=0 // loop_header
    %s14 = sphi 0, %s18
    %p15 = scmp.ge.s32.totalorder %s14, 4
    %s24 = sphi 0, %s26
    %s27 = sphi 0, %s24
    %s28 = sphi 0, %s27
    %s44 = sphi 0, %s28
    %s48 = sphi 0, %s48
    %s50 = sphi 0, %s48
    %s51 = sphi 0, %s50
    %s65 = sphi 0, %s51
    %s69 = sphi 0, %s69
    %s71 = sphi 0, %s69
    %s72 = sphi 0, %s71
    %s86 = sphi 0, %s72
    %s90 = sphi 0, %s90
    %s92 = sphi 0, %s90
    %s93 = sphi 0, %s92
    %s107 = sphi 0, %s93
    %s111 = sphi 0, %s111
    %s113 = sphi 0, %s111
    %s114 = sphi 0, %s113
    %s128 = sphi 0, %s114
    %s132 = sphi 0, %s132
    %s134 = sphi 0, %s132
    %s135 = sphi 0, %s134
    %s149 = sphi 0, %s135
    %s153 = sphi 0, %s153
    %s155 = sphi 0, %s153
    %s156 = sphi 0, %s155
    %s170 = sphi 0, %s156
    %s174 = sphi 0, %s174
    %s176 = sphi 0, %s174
    %s177 = sphi 0, %s176
    %s191 = sphi 0, %s177
    %s197 = sphi 0, %s199
    %s200 = sphi 0, %s197
    %s201 = sphi 0, %s200
    %s217 = sphi 0, %s201
  $region4: #{decoder_forward.12} parent=0 // loop_header_branch
    %17 = sbr.rel (%p15) target = $region8
  $region5: #{decoder_forward.12} parent=0 // loop_body
    %s19 = ssub.s32 %s14, 1
    %s20 = ssub.s32 %s14, 2
    %s21 = sadd.s32 %s14, 1
    %s22 = ssub.s32 %s14, %s21
    %p23 = scmp.eq.s32.totalorder %s22, 0
    %s25 = sadd.s32 %s24, 1
    %s26 = scalar_select %p23, %s24, %s25
    %p29 = pneg %p23
    %p30 = scmp.eq.s32.totalorder %s14, 1
    %p31 = por %p29, %p30
    %p32 = scmp.ne.s32.totalorder %s24, %s27
    %p33 = scmp.eq.s32.totalorder %s14, 0
    %p34 = por %p32, %p33
    %p35 = scmp.ne.s32.totalorder %s24, %s27
    %p36 = scmp.eq.s32.totalorder %s19, 1
    %p37 = por %p35, %p36
    %p38 = scmp.ne.s32.totalorder %s27, %s28
    %p39 = scmp.eq.s32.totalorder %s19, 0
    %p40 = por %p38, %p39
    %p41 = scmp.ne.s32.totalorder %s27, %s28
    %p42 = scmp.eq.s32.totalorder %s20, 1
    %p43 = por %p41, %p42
    %p45 = scmp.ne.s32.totalorder %s28, %s44
    %p46 = scmp.eq.s32.totalorder %s20, 0
    %p47 = por %p45, %p46
    %s49 = sadd.s32 %s48, 1
    %p52 = scmp.eq.s32.totalorder %s14, 1
    %p53 = scmp.ne.s32.totalorder %s48, %s50
    %p54 = scmp.eq.s32.totalorder %s14, 0
    %p55 = por %p53, %p54
    %p56 = scmp.ne.s32.totalorder %s48, %s50
    %p57 = scmp.eq.s32.totalorder %s19, 1
    %p58 = por %p56, %p57
    %p59 = scmp.ne.s32.totalorder %s50, %s51
    %p60 = scmp.eq.s32.totalorder %s19, 0
    %p61 = por %p59, %p60
    %p62 = scmp.ne.s32.totalorder %s50, %s51
    %p63 = scmp.eq.s32.totalorder %s20, 1
    %p64 = por %p62, %p63
    %p66 = scmp.ne.s32.totalorder %s51, %s65
    %p67 = scmp.eq.s32.totalorder %s20, 0
    %p68 = por %p66, %p67
    %s70 = sadd.s32 %s69, 1
    %p73 = scmp.eq.s32.totalorder %s14, 1
    %p74 = scmp.ne.s32.totalorder %s69, %s71
    %p75 = scmp.eq.s32.totalorder %s14, 0
    %p76 = por %p74, %p75
    %p77 = scmp.ne.s32.totalorder %s69, %s71
    %p78 = scmp.eq.s32.totalorder %s19, 1
    %p79 = por %p77, %p78
    %p80 = scmp.ne.s32.totalorder %s71, %s72
    %p81 = scmp.eq.s32.totalorder %s19, 0
    %p82 = por %p80, %p81
    %p83 = scmp.ne.s32.totalorder %s71, %s72
    %p84 = scmp.eq.s32.totalorder %s20, 1
    %p85 = por %p83, %p84
    %p87 = scmp.ne.s32.totalorder %s72, %s86
    %p88 = scmp.eq.s32.totalorder %s20, 0
    %p89 = por %p87, %p88
    %s91 = sadd.s32 %s90, 1
    %p94 = scmp.eq.s32.totalorder %s14, 1
    %p95 = scmp.ne.s32.totalorder %s90, %s92
    %p96 = scmp.eq.s32.totalorder %s14, 0
    %p97 = por %p95, %p96
    %p98 = scmp.ne.s32.totalorder %s90, %s92
    %p99 = scmp.eq.s32.totalorder %s19, 1
    %p100 = por %p98, %p99
    %p101 = scmp.ne.s32.totalorder %s92, %s93
    %p102 = scmp.eq.s32.totalorder %s19, 0
    %p103 = por %p101, %p102
    %p104 = scmp.ne.s32.totalorder %s92, %s93
    %p105 = scmp.eq.s32.totalorder %s20, 1
    %p106 = por %p104, %p105
    %p108 = scmp.ne.s32.totalorder %s93, %s107
    %p109 = scmp.eq.s32.totalorder %s20, 0
    %p110 = por %p108, %p109
    %s112 = sadd.s32 %s111, 1
    %p115 = scmp.eq.s32.totalorder %s14, 1
    %p116 = scmp.ne.s32.totalorder %s111, %s113
    %p117 = scmp.eq.s32.totalorder %s14, 0
    %p118 = por %p116, %p117
    %p119 = scmp.ne.s32.totalorder %s111, %s113
    %p120 = scmp.eq.s32.totalorder %s19, 1
    %p121 = por %p119, %p120
    %p122 = scmp.ne.s32.totalorder %s113, %s114
    %p123 = scmp.eq.s32.totalorder %s19, 0
    %p124 = por %p122, %p123
    %p125 = scmp.ne.s32.totalorder %s113, %s114
    %p126 = scmp.eq.s32.totalorder %s20, 1
    %p127 = por %p125, %p126
    %p129 = scmp.ne.s32.totalorder %s114, %s128
    %p130 = scmp.eq.s32.totalorder %s20, 0
    %p131 = por %p129, %p130
    %s133 = sadd.s32 %s132, 1
    %p136 = scmp.eq.s32.totalorder %s14, 1
    %p137 = scmp.ne.s32.totalorder %s132, %s134
    %p138 = scmp.eq.s32.totalorder %s14, 0
    %p139 = por %p137, %p138
    %p140 = scmp.ne.s32.totalorder %s132, %s134
    %p141 = scmp.eq.s32.totalorder %s19, 1
    %p142 = por %p140, %p141
    %p143 = scmp.ne.s32.totalorder %s134, %s135
    %p144 = scmp.eq.s32.totalorder %s19, 0
    %p145 = por %p143, %p144
    %p146 = scmp.ne.s32.totalorder %s134, %s135
    %p147 = scmp.eq.s32.totalorder %s20, 1
    %p148 = por %p146, %p147
    %p150 = scmp.ne.s32.totalorder %s135, %s149
    %p151 = scmp.eq.s32.totalorder %s20, 0
    %p152 = por %p150, %p151
    %s154 = sadd.s32 %s153, 1
    %p157 = scmp.eq.s32.totalorder %s14, 1
    %p158 = scmp.ne.s32.totalorder %s153, %s155
    %p159 = scmp.eq.s32.totalorder %s14, 0
    %p160 = por %p158, %p159
    %p161 = scmp.ne.s32.totalorder %s153, %s155
    %p162 = scmp.eq.s32.totalorder %s19, 1
    %p163 = por %p161, %p162
    %p164 = scmp.ne.s32.totalorder %s155, %s156
    %p165 = scmp.eq.s32.totalorder %s19, 0
    %p166 = por %p164, %p165
    %p167 = scmp.ne.s32.totalorder %s155, %s156
    %p168 = scmp.eq.s32.totalorder %s20, 1
    %p169 = por %p167, %p168
    %p171 = scmp.ne.s32.totalorder %s156, %s170
    %p172 = scmp.eq.s32.totalorder %s20, 0
    %p173 = por %p171, %p172
    %s175 = sadd.s32 %s174, 1
    %p178 = scmp.eq.s32.totalorder %s14, 1
    %p179 = scmp.ne.s32.totalorder %s174, %s176
    %p180 = scmp.eq.s32.totalorder %s14, 0
    %p181 = por %p179, %p180
    %p182 = scmp.ne.s32.totalorder %s174, %s176
    %p183 = scmp.eq.s32.totalorder %s19, 1
    %p184 = por %p182, %p183
    %p185 = scmp.ne.s32.totalorder %s176, %s177
    %p186 = scmp.eq.s32.totalorder %s19, 0
    %p187 = por %p185, %p186
    %p188 = scmp.ne.s32.totalorder %s176, %s177
    %p189 = scmp.eq.s32.totalorder %s20, 1
    %p190 = por %p188, %p189
    %p192 = scmp.ne.s32.totalorder %s177, %s191
    %p193 = scmp.eq.s32.totalorder %s20, 0
    %p194 = por %p192, %p193
    %s195 = ssub.s32 %s14, %s21
    %p196 = scmp.eq.s32.totalorder %s195, 0
    %s198 = sadd.s32 %s197, 1
    %s199 = scalar_select %p196, %s197, %s198
    %p202 = pneg %p196
    %p203 = scmp.eq.s32.totalorder %s14, 1
    %p204 = por %p202, %p203
    %p205 = scmp.ne.s32.totalorder %s197, %s200
    %p206 = scmp.eq.s32.totalorder %s14, 0
    %p207 = por %p205, %p206
    %p208 = scmp.ne.s32.totalorder %s197, %s200
    %p209 = scmp.eq.s32.totalorder %s19, 1
    %p210 = por %p208, %p209
    %p211 = scmp.ne.s32.totalorder %s200, %s201
    %p212 = scmp.eq.s32.totalorder %s19, 0
    %p213 = por %p211, %p212
    %p214 = scmp.ne.s32.totalorder %s200, %s201
    %p215 = scmp.eq.s32.totalorder %s20, 1
    %p216 = por %p214, %p215
    %p218 = scmp.ne.s32.totalorder %s201, %s217
    %p219 = scmp.eq.s32.totalorder %s20, 0
    %p220 = por %p218, %p219
    %p221 = scmp.le.s32.totalorder 1, %s14
    %p222 = scmp.lt.s32.totalorder %s14, 3
    %p223 = pnand %p221, %p222
    %p224 = pneg %p223
    // Predicated region
    $region9: #{decoder_forward.12} parent=5 // pred_check
      _
    $region10: #{decoder_forward.12} parent=5 // pred_check_branch
      %226 = sbr.rel (%p223) target = $region12
    $region11: #{decoder_forward.12} parent=5 // pred_region
      %s227 = ssub.s32 %s14, 1
      // Predicated region
      $region13: #{decoder_forward.12} parent=11 // pred_check
        %p228 = pneg %p61
      $region14: #{decoder_forward.12} parent=11 // pred_check_branch
        %230 = sbr.rel (%p228) target = $region16
      $region15: #{decoder_forward.12} parent=11 // pred_region
        _
      $region16: #{decoder_forward.12} parent=11 // pred_fallthru
        _
      // Predicated region
      $region17: #{decoder_forward.12} parent=11 // pred_check
        %p231 = pneg %p82
      $region18: #{decoder_forward.12} parent=11 // pred_check_branch
        %233 = sbr.rel (%p231) target = $region20
      $region19: #{decoder_forward.12} parent=11 // pred_region
        _
      $region20: #{decoder_forward.12} parent=11 // pred_fallthru
        _
      // Predicated region
      $region21: #{decoder_forward.12} parent=11 // pred_check
        %p234 = pneg %p103
      $region22: #{decoder_forward.12} parent=11 // pred_check_branch
        %236 = sbr.rel (%p234) target = $region24
      $region23: #{decoder_forward.12} parent=11 // pred_region
        _
      $region24: #{decoder_forward.12} parent=11 // pred_fallthru
        _
      // Predicated region
      $region25: #{decoder_forward.12} parent=11 // pred_check
        %p237 = pneg %p124
      $region26: #{decoder_forward.12} parent=11 // pred_check_branch
        %239 = sbr.rel (%p237) target = $region28
      $region27: #{decoder_forward.12} parent=11 // pred_region
        _
      $region28: #{decoder_forward.12} parent=11 // pred_fallthru
        _
      // Predicated region
      $region29: #{decoder_forward.12} parent=11 // pred_check
        %p240 = pneg %p145
      $region30: #{decoder_forward.12} parent=11 // pred_check_branch
        %242 = sbr.rel (%p240) target = $region32
      $region31: #{decoder_forward.12} parent=11 // pred_region
        _
      $region32: #{decoder_forward.12} parent=11 // pred_fallthru
        _
      // Predicated region
      $region33: #{decoder_forward.12} parent=11 // pred_check
        %p243 = pneg %p166
      $region34: #{decoder_forward.12} parent=11 // pred_check_branch
        %245 = sbr.rel (%p243) target = $region36
      $region35: #{decoder_forward.12} parent=11 // pred_region
        _
      $region36: #{decoder_forward.12} parent=11 // pred_fallthru
        _
      // Predicated region
      $region37: #{decoder_forward.12} parent=11 // pred_check
        %p246 = pneg %p187
      $region38: #{decoder_forward.12} parent=11 // pred_check_branch
        %248 = sbr.rel (%p246) target = $region40
      $region39: #{decoder_forward.12} parent=11 // pred_region
        _
      $region40: #{decoder_forward.12} parent=11 // pred_fallthru
        _
    $region12: #{decoder_forward.12} parent=5 // pred_fallthru
      _
    %p249 = scmp.lt.s32.totalorder %s14, 2
    // Predicated region
    $region41: #{decoder_forward.12} parent=5 // pred_check
      %p250 = pneg %p249
    $region42: #{decoder_forward.12} parent=5 // pred_check_branch
      %252 = sbr.rel (%p250) target = $region44
    $region43: #{decoder_forward.12} parent=5 // pred_region
      // Predicated region
      $region45: #{decoder_forward.12} parent=43 // pred_check
        %p253 = pneg %p34
      $region46: #{decoder_forward.12} parent=43 // pred_check_branch
        %255 = sbr.rel (%p253) target = $region48
      $region47: #{decoder_forward.12} parent=43 // pred_region
        %p256 = scmp.lt.s32.totalorder %s14, 1
        %s257 = scalar_select %p256, %s14, 1
        %s258 = smul.addr %s257, 8
        %s259 = scalar_lea.vmem %s0, %s258
      $region48: #{decoder_forward.12} parent=43 // pred_fallthru
        _
    $region44: #{decoder_forward.12} parent=5 // pred_fallthru
      _
    %p260 = scmp.le.s32.totalorder 1, %s14
    %p261 = scmp.lt.s32.totalorder %s14, 3
    %p262 = pnand %p260, %p261
    %p263 = pneg %p262
    // Predicated region
    $region49: #{decoder_forward.12} parent=5 // pred_check
      _
    $region50: #{decoder_forward.12} parent=5 // pred_check_branch
      %265 = sbr.rel (%p262) target = $region52
    $region51: #{decoder_forward.12} parent=5 // pred_region
      %s266 = ssub.s32 %s14, 1
      %p267 = scmp.lt.s32.totalorder %s19, 1
      %s268 = scalar_select %p267, %s19, 1
      %s269 = smul.addr %s268, 8
      %s270 = scalar_lea.vmem %s0, %s269
      %p271 = pneg %p40
      %p272 = pneg %p37
      %p273 = pneg %p61
      %p274 = pneg %p58
      %p275 = pneg %p82
      %p276 = pneg %p79
      %p277 = pneg %p103
      %p278 = pneg %p100
      %p279 = pneg %p124
      %p280 = pneg %p121
      %p281 = pneg %p145
      %p282 = pneg %p142
      %p283 = pneg %p166
      %p284 = pneg %p163
      %p285 = pneg %p187
      %p286 = pneg %p184
      %p287 = pneg %p213
      %p288 = pneg %p210
      %p289 = scmp.lt.s32.totalorder %s19, 1
      %s290 = scalar_select %p289, %s19, 1
      %s291 = smul.addr %s290, 8
      %s292 = scalar_lea.vmem %s8, %s291
      %p293 = scmp.lt.s32.totalorder %s19, 1
      %s294 = scalar_select %p293, %s19, 1
      %s295 = smul.addr %s294, 8
      %s296 = scalar_lea.vmem %s0, %s295
      %p297 = scmp.lt.s32.totalorder %s19, 1
      %s298 = scalar_select %p297, %s19, 1
      %s299 = smul.addr %s298, 8
      %s300 = scalar_lea.vmem %s8, %s299
      %v302 = vld [vmem:[%s296] sm:$0xff]
      %v303 = vld [vmem:[%s2] sm:$0x1]
      %v304 = vld [vmem:[%s3] sm:$0x1]
      %305 = vadd.xlane.f32.xlu0 %v302
      %v306 = vpop.xlane.xlu0 %305
      %v307 = vrcp.pop 128.0
      %v308 = vmul.f32 %v306, %v307
      %v309 = vsub.f32 %v302, %v308
      %v310 = vmul.f32 %v309, %v309
      %311 = vadd.xlane.f32.xlu0 %v310
      %v312 = vpop.xlane.xlu0 %311
      %v313 = vmul.f32 %v312, 0.007874016
      %v315 = vlaneseq
      %v316 = vshrl.u32 %v315, 7
      %v317 = vsub.s32 0, %v316
      %v318 = vrot.slane %v303, %v317
      %v320 = vmul.f32 %v318, %v309
      %v321 = vrsqrt.pop %v313
      %v322 = vmul.f32 %v313, %v321
      %vm323 = vcmp.eq.f32.partialorder %v313, inf
      %v324 = vsel %vm323, %v313, %v322
      %vm325 = vcmp.eq.f32.partialorder %v313, 0.0
      %v326 = vand.u32 %v313, 2147483648
      %v327 = vsel %vm325, %v326, %v324
      %v328 = vadd.f32 %v327, 1e-06
      %v329 = vrcp.pop %v328
      %v330 = vmul.f32 %v320, %v329
      %v332 = vlaneseq
      %v333 = vshrl.u32 %v332, 7
      %v334 = vsub.s32 0, %v333
      %v335 = vrot.slane %v304, %v334
      %v337 = vadd.f32 %v330, %v335
      %v338 = vpack.c.bf16 %v337, %v337
      %v339 = vld [vmem:[%s4] sm:$0xff]
      %v340 = vld [vmem:[%s4 + $0x8] sm:$0xf]
      %v341 = vld [vmem:[%s4 + $0xc] sm:$0xff]
      %v342 = vld [vmem:[%s4 + $0x14] sm:$0xf]
      %v343 = vld [vmem:[%s4 + $0x18] sm:$0xff]
      %v344 = vld [vmem:[%s4 + $0x20] sm:$0xf]
      %v345 = vld [vmem:[%s4 + $0x24] sm:$0xff]
      %v346 = vld [vmem:[%s4 + $0x2c] sm:$0xf]
      %v347 = vld [vmem:[%s4 + $0x30] sm:$0xff]
      %v348 = vld [vmem:[%s4 + $0x38] sm:$0xf]
      %v349 = vld [vmem:[%s4 + $0x3c] sm:$0xff]
      %v350 = vld [vmem:[%s4 + $0x44] sm:$0xf]
      %v351 = vld [vmem:[%s4 + $0x48] sm:$0xff]
      %v352 = vld [vmem:[%s4 + $0x50] sm:$0xf]
      %v353 = vld [vmem:[%s4 + $0x54] sm:$0xff]
      %v354 = vld [vmem:[%s4 + $0x5c] sm:$0xf]
      %v355 = vld [vmem:[%s4 + $0x60] sm:$0xff]
      %v356 = vld [vmem:[%s4 + $0x68] sm:$0xf]
      %v357 = vld [vmem:[%s4 + $0x6c] sm:$0xff]
      %v358 = vld [vmem:[%s4 + $0x74] sm:$0xf]
      %v359 = vld [vmem:[%s4 + $0x78] sm:$0xff]
      %v360 = vld [vmem:[%s4 + $0x80] sm:$0xf]
      %v361 = vld [vmem:[%s4 + $0x84] sm:$0xff]
      %v362 = vld [vmem:[%s4 + $0x8c] sm:$0xf]
      %v363 = vld [vmem:[%s4 + $0x90] sm:$0xff]
      %v364 = vld [vmem:[%s4 + $0x98] sm:$0xf]
      %v365 = vld [vmem:[%s4 + $0x9c] sm:$0xff]
      %v366 = vld [vmem:[%s4 + $0xa4] sm:$0xf]
      %v367 = vld [vmem:[%s4 + $0xa8] sm:$0xff]
      %v368 = vld [vmem:[%s4 + $0xb0] sm:$0xf]
      %v369 = vld [vmem:[%s4 + $0xb4] sm:$0xff]
      %v370 = vld [vmem:[%s4 + $0xbc] sm:$0xf]
      %v371 = vld [vmem:[%s5] sm:$0x7]
      %v373 = vlaneseq
      %v374 = vshrl.u32 %v373, 7
      %v375 = vsub.s32 0, %v374
      %v376 = vrot.slane %v371, %v375
      %v377 = vlaneseq
      %v378 = vshrl.u32 %v377, 7
      %v379 = vsub.s32 1, %v378
      %v380 = vrot.slane %v371, %v379
      %v381 = vlaneseq
      %v382 = vshrl.u32 %v381, 7
      %v383 = vsub.s32 2, %v382
      %v384 = vrot.slane %v371, %v383
      %v420 = vunpack.c.l.b16 %v339
      %v421 = vunpack.c.h.b16 %v339
      %v422 = vunpack.c.l.b16 %v340
      %v423 = vunpack.c.l.b16 %v341
      %v424 = vunpack.c.h.b16 %v341
      %v425 = vunpack.c.l.b16 %v342
      %v426 = vunpack.c.l.b16 %v343
      %v427 = vunpack.c.h.b16 %v343
      %v428 = vunpack.c.l.b16 %v344
      %v429 = vunpack.c.l.b16 %v345
      %v430 = vunpack.c.h.b16 %v345
      %v431 = vunpack.c.l.b16 %v346
      %v432 = vunpack.c.l.b16 %v347
      %v433 = vunpack.c.h.b16 %v347
      %v434 = vunpack.c.l.b16 %v348
      %v435 = vunpack.c.l.b16 %v349
      %v436 = vunpack.c.h.b16 %v349
      %v437 = vunpack.c.l.b16 %v350
      %v438 = vunpack.c.l.b16 %v351
      %v439 = vunpack.c.h.b16 %v351
      %v440 = vunpack.c.l.b16 %v352
      %v441 = vunpack.c.l.b16 %v353
      %v442 = vunpack.c.h.b16 %v353
      %v443 = vunpack.c.l.b16 %v354
      %v444 = vunpack.c.l.b16 %v355
      %v445 = vunpack.c.h.b16 %v355
      %v446 = vunpack.c.l.b16 %v356
      %v447 = vunpack.c.l.b16 %v357
      %v448 = vunpack.c.h.b16 %v357
      %v449 = vunpack.c.l.b16 %v358
      %v450 = vunpack.c.l.b16 %v359
      %v451 = vunpack.c.h.b16 %v359
      %v452 = vunpack.c.l.b16 %v360
      %v453 = vunpack.c.l.b16 %v361
      %v454 = vunpack.c.h.b16 %v361
      %v455 = vunpack.c.l.b16 %v362
      %v456 = vunpack.c.l.b16 %v363
      %v457 = vunpack.c.h.b16 %v363
      %v458 = vunpack.c.l.b16 %v364
      %v459 = vunpack.c.l.b16 %v365
      %v460 = vunpack.c.h.b16 %v365
      %v461 = vunpack.c.l.b16 %v366
      %v462 = vunpack.c.l.b16 %v367
      %v463 = vunpack.c.h.b16 %v367
      %v464 = vunpack.c.l.b16 %v368
      %v465 = vunpack.c.l.b16 %v369
      %v466 = vunpack.c.h.b16 %v369
      %v467 = vunpack.c.l.b16 %v370
      %v468 = vpack.c.b16 %v423, %v420
      %v469 = vpack.c.b16 %v424, %v421
      %v470 = vpack.c.b16 %v425, %v422
      %v471 = vpack.c.b16 %v429, %v426
      %v472 = vpack.c.b16 %v430, %v427
      %v473 = vpack.c.b16 %v431, %v428
      %v474 = vpack.c.b16 %v435, %v432
      %v475 = vpack.c.b16 %v436, %v433
      %v476 = vpack.c.b16 %v437, %v434
      %v477 = vpack.c.b16 %v441, %v438
      %v478 = vpack.c.b16 %v442, %v439
      %v479 = vpack.c.b16 %v443, %v440
      %v480 = vpack.c.b16 %v447, %v444
      %v481 = vpack.c.b16 %v448, %v445
      %v482 = vpack.c.b16 %v449, %v446
      %v483 = vpack.c.b16 %v453, %v450
      %v484 = vpack.c.b16 %v454, %v451
      %v485 = vpack.c.b16 %v455, %v452
      %v486 = vpack.c.b16 %v459, %v456
      %v487 = vpack.c.b16 %v460, %v457
      %v488 = vpack.c.b16 %v461, %v458
      %v489 = vpack.c.b16 %v465, %v462
      %v490 = vpack.c.b16 %v466, %v463
      %v491 = vpack.c.b16 %v467, %v464
      %516 = vmatprep.subr.bf16.mxu0 %v490
      %517 = vmatpush1.bf16.msra.mxu0 %v489
      %518 = vmatprep.subr.bf16.mxu0 %v487
      %519 = vmatpush1.bf16.msra.mxu0 %v486
      %520 = vmatprep.subr.bf16.mxu0 %v484
      %521 = vmatpush1.bf16.msra.mxu0 %v483
      %522 = vmatprep.subr.bf16.mxu0 %v481
      %523 = vmatpush1.bf16.msra.mxu0 %v480
      %524 = vmatprep.subr.bf16.mxu0 %v478
      %525 = vmatpush1.bf16.msra.mxu0 %v477
      %526 = vmatprep.subr.bf16.mxu0 %v475
      %527 = vmatpush1.bf16.msra.mxu0 %v474
      %528 = vmatprep.subr.bf16.mxu0 %v472
      %529 = vmatpush1.bf16.msra.mxu0 %v471
      %530 = vmatprep.subr.bf16.mxu0 %v469
      %531 = vmatpush1.bf16.msra.mxu0 %v468
      %532 = vmatprep.subr.bf16.mxu0 0
      %533 = vmatpush2.bf16.msra.mxu0 0
      %534 = vmatprep.subr.bf16.mxu0 0
      %535 = vmatpush2.bf16.msra.mxu0 0
      %536 = vmatprep.subr.bf16.mxu0 0
      %537 = vmatpush2.bf16.msra.mxu0 0
      %538 = vmatprep.subr.bf16.mxu0 0
      %539 = vmatpush2.bf16.msra.mxu0 0
      %540 = vmatprep.subr.bf16.mxu0 0
      %541 = vmatpush2.bf16.msra.mxu0 0
      %542 = vmatprep.subr.bf16.mxu0 0
      %543 = vmatpush2.bf16.msra.mxu0 0
      %544 = vmatprep.subr.bf16.mxu0 0
      %545 = vmatpush2.bf16.msra.mxu0 0
      %546 = vmatprep.subr.bf16.mxu0 0
      %547 = vmatpush2.bf16.msra.mxu0 0
      %548 = vmatprep.mubr.bf16.mxu0 0
      %549 = vmatmul.mubr.bf16.gmra.mxu0 %v338
      %v550 = vpop.f32.mrf.mxu0
      %v551 = vadd.f32 %v376, %v550
      %v552 = vpop.f32.mrf.mxu0
      %v553 = vadd.f32 %v380, %v552
      %v554 = vpop.f32.mrf.mxu0
      %v555 = vpop.f32.mrf.mxu0
      %556 = vdwg.mxu0
      %557 = vmatprep.subr.bf16.mxu0 0
      %558 = vmatpush1.bf16.msra.mxu0 %v491
      %559 = vmatprep.subr.bf16.mxu0 0
      %560 = vmatpush1.bf16.msra.mxu0 %v488
      %561 = vmatprep.subr.bf16.mxu0 0
      %562 = vmatpush1.bf16.msra.mxu0 %v485
      %563 = vmatprep.subr.bf16.mxu0 0
      %564 = vmatpush1.bf16.msra.mxu0 %v482
      %565 = vmatprep.subr.bf16.mxu0 0
      %566 = vmatpush1.bf16.msra.mxu0 %v479
      %567 = vmatprep.subr.bf16.mxu0 0
      %568 = vmatpush1.bf16.msra.mxu0 %v476
      %569 = vmatprep.subr.bf16.mxu0 0
      %570 = vmatpush1.bf16.msra.mxu0 %v473
      %571 = vmatprep.subr.bf16.mxu0 0
      %572 = vmatpush1.bf16.msra.mxu0 %v470
      %573 = vmatprep.subr.bf16.mxu0 0
      %574 = vmatpush2.bf16.msra.mxu0 0
      %575 = vmatprep.subr.bf16.mxu0 0
      %576 = vmatpush2.bf16.msra.mxu0 0
      %577 = vmatprep.subr.bf16.mxu0 0
      %578 = vmatpush2.bf16.msra.mxu0 0
      %579 = vmatprep.subr.bf16.mxu0 0
      %580 = vmatpush2.bf16.msra.mxu0 0
      %581 = vmatprep.subr.bf16.mxu0 0
      %582 = vmatpush2.bf16.msra.mxu0 0
      %583 = vmatprep.subr.bf16.mxu0 0
      %584 = vmatpush2.bf16.msra.mxu0 0
      %585 = vmatprep.subr.bf16.mxu0 0
      %586 = vmatpush2.bf16.msra.mxu0 0
      %587 = vmatprep.subr.bf16.mxu0 0
      %588 = vmatpush2.bf16.msra.mxu0 0
      %589 = vmatprep.mubr.bf16.mxu0 0
      %590 = vmatmul.mubr.bf16.gmra.mxu0 %v338
      %v591 = vpop.f32.mrf.mxu0
      %v592 = vadd.f32 %v384, %v591
      %v593 = vpop.f32.mrf.mxu0
      %v594 = vpop.f32.mrf.mxu0
      %v595 = vpop.f32.mrf.mxu0
      %596 = vdwg.mxu0
      %v597 = vpack.c.bf16 %v551, %v551
      %v598 = vpack.c.bf16 %v553, %v553
      %v599 = vpack.c.bf16 %v592, %v592
      %v600 = vld [vmem:[%s1] sm:$0xff]
      %vm601 = vcmask 261120
      %v603 = vsel %vm601, %v597, 0
      %v606 = vsel %vm601, %v598, 0
      %608 = vmatprep.subr.bf16.mxu0 0
      %609 = vmatpush1.bf16.xpose.msra.mxu0 0
      %610 = vmatprep.subr.bf16.mxu0 0
      %611 = vmatpush1.bf16.xpose.msra.mxu0 0
      %612 = vmatprep.subr.bf16.mxu0 0
      %613 = vmatpush1.bf16.xpose.msra.mxu0 0
      %614 = vmatprep.subr.bf16.mxu0 0
      %615 = vmatpush1.bf16.xpose.msra.mxu0 0
      %616 = vmatprep.subr.bf16.mxu0 0
      %617 = vmatpush1.bf16.xpose.msra.mxu0 0
      %618 = vmatprep.subr.bf16.mxu0 0
      %619 = vmatpush1.bf16.xpose.msra.mxu0 0
      %620 = vmatprep.subr.bf16.mxu0 0
      %621 = vmatpush1.bf16.xpose.msra.mxu0 0
      %622 = vmatprep.subr.bf16.mxu0 0
      %623 = vmatpush1.bf16.xpose.msra.mxu0 %v606
      %624 = vmatprep.subr.bf16.mxu0 0
      %625 = vmatpush2.bf16.xpose.msra.mxu0 0
      %626 = vmatprep.subr.bf16.mxu0 0
      %627 = vmatpush2.bf16.xpose.msra.mxu0 0
      %628 = vmatprep.subr.bf16.mxu0 0
      %629 = vmatpush2.bf16.xpose.msra.mxu0 0
      %630 = vmatprep.subr.bf16.mxu0 0
      %631 = vmatpush2.bf16.xpose.msra.mxu0 0
      %632 = vmatprep.subr.bf16.mxu0 0
      %633 = vmatpush2.bf16.xpose.msra.mxu0 0
      %634 = vmatprep.subr.bf16.mxu0 0
      %635 = vmatpush2.bf16.xpose.msra.mxu0 0
      %636 = vmatprep.subr.bf16.mxu0 0
      %637 = vmatpush2.bf16.xpose.msra.mxu0 0
      %638 = vmatprep.subr.bf16.mxu0 0
      %639 = vmatpush2.bf16.xpose.msra.mxu0 0
      %640 = vmatprep.mubr.bf16.mxu0 0
      %641 = vmatmul.mubr.bf16.gmra.mxu0 %v603
      %v642 = vpop.f32.mrf.mxu0
      %v643 = vadd.f32 %v600, %v642
      %v644 = vpop.f32.mrf.mxu0
      %v645 = vpop.f32.mrf.mxu0
      %v646 = vpop.f32.mrf.mxu0
      %647 = vdwg.mxu0
      %vm648 = vcmask 64512
      %v649 = vsel %vm648, %v643, -inf
      %650 = vmax.xlane.f32.xlu0 %v649
      %v651 = vpop.xlane.xlu0 %650
      %v652 = vsub.f32 %v643, %v651
      %v653 = vmul.f32 %v652, 1.442695
      %v654 = vpow.pop %v653
      %v655 = vsel %vm648, %v654, 0.0
      %656 = vadd.xlane.f32.xlu0 %v655
      %v657 = vpop.xlane.xlu0 %656
      %v658 = vrcp.pop %v657
      %v659 = vmul.f32 %v654, %v658
      %v660 = vpack.c.bf16 %v659, %v659
      %v662 = vsel %vm648, %v660, 0
      %vm664 = vcmask 1043456
      %v666 = vsel %vm664, %v599, 0
      %668 = vmatprep.subr.bf16.mxu0 0
      %669 = vmatpush1.bf16.msra.mxu0 0
      %670 = vmatprep.subr.bf16.mxu0 0
      %671 = vmatpush1.bf16.msra.mxu0 0
      %672 = vmatprep.subr.bf16.mxu0 0
      %673 = vmatpush1.bf16.msra.mxu0 0
      %674 = vmatprep.subr.bf16.mxu0 0
      %675 = vmatpush1.bf16.msra.mxu0 0
      %676 = vmatprep.subr.bf16.mxu0 0
      %677 = vmatpush1.bf16.msra.mxu0 0
      %678 = vmatprep.subr.bf16.mxu0 0
      %679 = vmatpush1.bf16.msra.mxu0 0
      %680 = vmatprep.subr.bf16.mxu0 0
      %681 = vmatpush1.bf16.msra.mxu0 0
      %682 = vmatprep.subr.bf16.mxu0 0
      %683 = vmatpush1.bf16.msra.mxu0 %v666
      %684 = vmatprep.subr.bf16.mxu0 0
      %685 = vmatpush2.bf16.msra.mxu0 0
      %686 = vmatprep.subr.bf16.mxu0 0
      %687 = vmatpush2.bf16.msra.mxu0 0
      %688 = vmatprep.subr.bf16.mxu0 0
      %689 = vmatpush2.bf16.msra.mxu0 0
      %690 = vmatprep.subr.bf16.mxu0 0
      %691 = vmatpush2.bf16.msra.mxu0 0
      %692 = vmatprep.subr.bf16.mxu0 0
      %693 = vmatpush2.bf16.msra.mxu0 0
      %694 = vmatprep.subr.bf16.mxu0 0
      %695 = vmatpush2.bf16.msra.mxu0 0
      %696 = vmatprep.subr.bf16.mxu0 0
      %697 = vmatpush2.bf16.msra.mxu0 0
      %698 = vmatprep.subr.bf16.mxu0 0
      %699 = vmatpush2.bf16.msra.mxu0 0
      %700 = vmatprep.mubr.bf16.mxu0 0
      %701 = vmatmul.mubr.bf16.gmra.mxu0 %v662
      %v702 = vpop.f32.mrf.mxu0
      %v703 = vadd.f32 0.0, %v702
      %v704 = vpop.f32.mrf.mxu0
      %v705 = vpop.f32.mrf.mxu0
      %v706 = vpop.f32.mrf.mxu0
      %707 = vdwg.mxu0
      %v708 = vpack.c.bf16 %v703, %v703
      %710 = vrot.lane.b32.xlu0 %v597, 96
      %v711 = vpop.permute.xlu0 %710
      %713 = vrot.lane.b32.xlu0 %v598, 96
      %v714 = vpop.permute.xlu0 %713
      %v716 = vsel %vm601, %v711, 0
      %v719 = vsel %vm601, %v714, 0
      %721 = vmatprep.subr.bf16.mxu0 0
      %722 = vmatpush1.bf16.xpose.msra.mxu0 0
      %723 = vmatprep.subr.bf16.mxu0 0
      %724 = vmatpush1.bf16.xpose.msra.mxu0 0
      %725 = vmatprep.subr.bf16.mxu0 0
      %726 = vmatpush1.bf16.xpose.msra.mxu0 0
      %727 = vmatprep.subr.bf16.mxu0 0
      %728 = vmatpush1.bf16.xpose.msra.mxu0 0
      %729 = vmatprep.subr.bf16.mxu0 0
      %730 = vmatpush1.bf16.xpose.msra.mxu0 0
      %731 = vmatprep.subr.bf16.mxu0 0
      %732 = vmatpush1.bf16.xpose.msra.mxu0 0
      %733 = vmatprep.subr.bf16.mxu0 0
      %734 = vmatpush1.bf16.xpose.msra.mxu0 0
      %735 = vmatprep.subr.bf16.mxu0 0
      %736 = vmatpush1.bf16.xpose.msra.mxu0 %v719
      %737 = vmatprep.subr.bf16.mxu0 0
      %738 = vmatpush2.bf16.xpose.msra.mxu0 0
      %739 = vmatprep.subr.bf16.mxu0 0
      %740 = vmatpush2.bf16.xpose.msra.mxu0 0
      %741 = vmatprep.subr.bf16.mxu0 0
      %742 = vmatpush2.bf16.xpose.msra.mxu0 0
      %743 = vmatprep.subr.bf16.mxu0 0
      %744 = vmatpush2.bf16.xpose.msra.mxu0 0
      %745 = vmatprep.subr.bf16.mxu0 0
      %746 = vmatpush2.bf16.xpose.msra.mxu0 0
      %747 = vmatprep.subr.bf16.mxu0 0
      %748 = vmatpush2.bf16.xpose.msra.mxu0 0
      %749 = vmatprep.subr.bf16.mxu0 0
      %750 = vmatpush2.bf16.xpose.msra.mxu0 0
      %751 = vmatprep.subr.bf16.mxu0 0
      %752 = vmatpush2.bf16.xpose.msra.mxu0 0
      %753 = vmatprep.mubr.bf16.mxu0 0
      %754 = vmatmul.mubr.bf16.gmra.mxu0 %v716
      %v755 = vpop.f32.mrf.mxu0
      %v756 = vadd.f32 %v600, %v755
      %v757 = vpop.f32.mrf.mxu0
      %v758 = vpop.f32.mrf.mxu0
      %v759 = vpop.f32.mrf.mxu0
      %760 = vdwg.mxu0
      %v761 = vsel %vm648, %v756, -inf
      %762 = vmax.xlane.f32.xlu0 %v761
      %v763 = vpop.xlane.xlu0 %762
      %v764 = vsub.f32 %v756, %v763
      %v765 = vmul.f32 %v764, 1.442695
      %v766 = vpow.pop %v765
      %v767 = vsel %vm648, %v766, 0.0
      %768 = vadd.xlane.f32.xlu0 %v767
      %v769 = vpop.xlane.xlu0 %768
      %v770 = vrcp.pop %v769
      %v771 = vmul.f32 %v766, %v770
      %v772 = vpack.c.bf16 %v771, %v771
      %774 = vrot.lane.b32.xlu0 %v599, 96
      %v775 = vpop.permute.xlu0 %774
      %v777 = vsel %vm648, %v772, 0
      %v780 = vsel %vm664, %v775, 0
      %782 = vmatprep.subr.bf16.mxu0 0
      %783 = vmatpush1.bf16.msra.mxu0 0
      %784 = vmatprep.subr.bf16.mxu0 0
      %785 = vmatpush1.bf16.msra.mxu0 0
      %786 = vmatprep.subr.bf16.mxu0 0
      %787 = vmatpush1.bf16.msra.mxu0 0
      %788 = vmatprep.subr.bf16.mxu0 0
      %789 = vmatpush1.bf16.msra.mxu0 0
      %790 = vmatprep.subr.bf16.mxu0 0
      %791 = vmatpush1.bf16.msra.mxu0 0
      %792 = vmatprep.subr.bf16.mxu0 0
      %793 = vmatpush1.bf16.msra.mxu0 0
      %794 = vmatprep.subr.bf16.mxu0 0
      %795 = vmatpush1.bf16.msra.mxu0 0
      %796 = vmatprep.subr.bf16.mxu0 0
      %797 = vmatpush1.bf16.msra.mxu0 %v780
      %798 = vmatprep.subr.bf16.mxu0 0
      %799 = vmatpush2.bf16.msra.mxu0 0
      %800 = vmatprep.subr.bf16.mxu0 0
      %801 = vmatpush2.bf16.msra.mxu0 0
      %802 = vmatprep.subr.bf16.mxu0 0
      %803 = vmatpush2.bf16.msra.mxu0 0
      %804 = vmatprep.subr.bf16.mxu0 0
      %805 = vmatpush2.bf16.msra.mxu0 0
      %806 = vmatprep.subr.bf16.mxu0 0
      %807 = vmatpush2.bf16.msra.mxu0 0
      %808 = vmatprep.subr.bf16.mxu0 0
      %809 = vmatpush2.bf16.msra.mxu0 0
      %810 = vmatprep.subr.bf16.mxu0 0
      %811 = vmatpush2.bf16.msra.mxu0 0
      %812 = vmatprep.subr.bf16.mxu0 0
      %813 = vmatpush2.bf16.msra.mxu0 0
      %814 = vmatprep.mubr.bf16.mxu0 0
      %815 = vmatmul.mubr.bf16.gmra.mxu0 %v777
      %v816 = vpop.f32.mrf.mxu0
      %v817 = vadd.f32 0.0, %v816
      %v818 = vpop.f32.mrf.mxu0
      %v819 = vpop.f32.mrf.mxu0
      %v820 = vpop.f32.mrf.mxu0
      %821 = vdwg.mxu0
      %v822 = vpack.c.bf16 %v817, %v817
      %823 = vrot.lane.b32.xlu0 %v597, 64
      %v824 = vpop.permute.xlu0 %823
      %825 = vrot.lane.b32.xlu0 %v598, 64
      %v826 = vpop.permute.xlu0 %825
      %v828 = vsel %vm601, %v824, 0
      %v831 = vsel %vm601, %v826, 0
      %833 = vmatprep.subr.bf16.mxu0 0
      %834 = vmatpush1.bf16.xpose.msra.mxu0 0
      %835 = vmatprep.subr.bf16.mxu0 0
      %836 = vmatpush1.bf16.xpose.msra.mxu0 0
      %837 = vmatprep.subr.bf16.mxu0 0
      %838 = vmatpush1.bf16.xpose.msra.mxu0 0
      %839 = vmatprep.subr.bf16.mxu0 0
      %840 = vmatpush1.bf16.xpose.msra.mxu0 0
      %841 = vmatprep.subr.bf16.mxu0 0
      %842 = vmatpush1.bf16.xpose.msra.mxu0 0
      %843 = vmatprep.subr.bf16.mxu0 0
      %844 = vmatpush1.bf16.xpose.msra.mxu0 0
      %845 = vmatprep.subr.bf16.mxu0 0
      %846 = vmatpush1.bf16.xpose.msra.mxu0 0
      %847 = vmatprep.subr.bf16.mxu0 0
      %848 = vmatpush1.bf16.xpose.msra.mxu0 %v831
      %849 = vmatprep.subr.bf16.mxu0 0
      %850 = vmatpush2.bf16.xpose.msra.mxu0 0
      %851 = vmatprep.subr.bf16.mxu0 0
      %852 = vmatpush2.bf16.xpose.msra.mxu0 0
      %853 = vmatprep.subr.bf16.mxu0 0
      %854 = vmatpush2.bf16.xpose.msra.mxu0 0
      %855 = vmatprep.subr.bf16.mxu0 0
      %856 = vmatpush2.bf16.xpose.msra.mxu0 0
      %857 = vmatprep.subr.bf16.mxu0 0
      %858 = vmatpush2.bf16.xpose.msra.mxu0 0
      %859 = vmatprep.subr.bf16.mxu0 0
      %860 = vmatpush2.bf16.xpose.msra.mxu0 0
      %861 = vmatprep.subr.bf16.mxu0 0
      %862 = vmatpush2.bf16.xpose.msra.mxu0 0
      %863 = vmatprep.subr.bf16.mxu0 0
      %864 = vmatpush2.bf16.xpose.msra.mxu0 0
      %865 = vmatprep.mubr.bf16.mxu0 0
      %866 = vmatmul.mubr.bf16.gmra.mxu0 %v828
      %v867 = vpop.f32.mrf.mxu0
      %v868 = vadd.f32 %v600, %v867
      %v869 = vpop.f32.mrf.mxu0
      %v870 = vpop.f32.mrf.mxu0
      %v871 = vpop.f32.mrf.mxu0
      %872 = vdwg.mxu0
      %v873 = vsel %vm648, %v868, -inf
      %874 = vmax.xlane.f32.xlu0 %v873
      %v875 = vpop.xlane.xlu0 %874
      %v876 = vsub.f32 %v868, %v875
      %v877 = vmul.f32 %v876, 1.442695
      %v878 = vpow.pop %v877
      %v879 = vsel %vm648, %v878, 0.0
      %880 = vadd.xlane.f32.xlu0 %v879
      %v881 = vpop.xlane.xlu0 %880
      %v882 = vrcp.pop %v881
      %v883 = vmul.f32 %v878, %v882
      %v884 = vpack.c.bf16 %v883, %v883
      %885 = vrot.lane.b32.xlu0 %v599, 64
      %v886 = vpop.permute.xlu0 %885
      %v888 = vsel %vm648, %v884, 0
      %v891 = vsel %vm664, %v886, 0
      %893 = vmatprep.subr.bf16.mxu0 0
      %894 = vmatpush1.bf16.msra.mxu0 0
      %895 = vmatprep.subr.bf16.mxu0 0
      %896 = vmatpush1.bf16.msra.mxu0 0
      %897 = vmatprep.subr.bf16.mxu0 0
      %898 = vmatpush1.bf16.msra.mxu0 0
      %899 = vmatprep.subr.bf16.mxu0 0
      %900 = vmatpush1.bf16.msra.mxu0 0
      %901 = vmatprep.subr.bf16.mxu0 0
      %902 = vmatpush1.bf16.msra.mxu0 0
      %903 = vmatprep.subr.bf16.mxu0 0
      %904 = vmatpush1.bf16.msra.mxu0 0
      %905 = vmatprep.subr.bf16.mxu0 0
      %906 = vmatpush1.bf16.msra.mxu0 0
      %907 = vmatprep.subr.bf16.mxu0 0
      %908 = vmatpush1.bf16.msra.mxu0 %v891
      %909 = vmatprep.subr.bf16.mxu0 0
      %910 = vmatpush2.bf16.msra.mxu0 0
      %911 = vmatprep.subr.bf16.mxu0 0
      %912 = vmatpush2.bf16.msra.mxu0 0
      %913 = vmatprep.subr.bf16.mxu0 0
      %914 = vmatpush2.bf16.msra.mxu0 0
      %915 = vmatprep.subr.bf16.mxu0 0
      %916 = vmatpush2.bf16.msra.mxu0 0
      %917 = vmatprep.subr.bf16.mxu0 0
      %918 = vmatpush2.bf16.msra.mxu0 0
      %919 = vmatprep.subr.bf16.mxu0 0
      %920 = vmatpush2.bf16.msra.mxu0 0
      %921 = vmatprep.subr.bf16.mxu0 0
      %922 = vmatpush2.bf16.msra.mxu0 0
      %923 = vmatprep.subr.bf16.mxu0 0
      %924 = vmatpush2.bf16.msra.mxu0 0
      %925 = vmatprep.mubr.bf16.mxu0 0
      %926 = vmatmul.mubr.bf16.gmra.mxu0 %v888
      %v927 = vpop.f32.mrf.mxu0
      %v928 = vadd.f32 0.0, %v927
      %v929 = vpop.f32.mrf.mxu0
      %v930 = vpop.f32.mrf.mxu0
      %v931 = vpop.f32.mrf.mxu0
      %932 = vdwg.mxu0
      %v933 = vpack.c.bf16 %v928, %v928
      %934 = vrot.lane.b32.xlu0 %v597, 32
      %v935 = vpop.permute.xlu0 %934
      %936 = vrot.lane.b32.xlu0 %v598, 32
      %v937 = vpop.permute.xlu0 %936
      %v939 = vsel %vm601, %v935, 0
      %v942 = vsel %vm601, %v937, 0
      %944 = vmatprep.subr.bf16.mxu0 0
      %945 = vmatpush1.bf16.xpose.msra.mxu0 0
      %946 = vmatprep.subr.bf16.mxu0 0
      %947 = vmatpush1.bf16.xpose.msra.mxu0 0
      %948 = vmatprep.subr.bf16.mxu0 0
      %949 = vmatpush1.bf16.xpose.msra.mxu0 0
      %950 = vmatprep.subr.bf16.mxu0 0
      %951 = vmatpush1.bf16.xpose.msra.mxu0 0
      %952 = vmatprep.subr.bf16.mxu0 0
      %953 = vmatpush1.bf16.xpose.msra.mxu0 0
      %954 = vmatprep.subr.bf16.mxu0 0
      %955 = vmatpush1.bf16.xpose.msra.mxu0 0
      %956 = vmatprep.subr.bf16.mxu0 0
      %957 = vmatpush1.bf16.xpose.msra.mxu0 0
      %958 = vmatprep.subr.bf16.mxu0 0
      %959 = vmatpush1.bf16.xpose.msra.mxu0 %v942
      %960 = vmatprep.subr.bf16.mxu0 0
      %961 = vmatpush2.bf16.xpose.msra.mxu0 0
      %962 = vmatprep.subr.bf16.mxu0 0
      %963 = vmatpush2.bf16.xpose.msra.mxu0 0
      %964 = vmatprep.subr.bf16.mxu0 0
      %965 = vmatpush2.bf16.xpose.msra.mxu0 0
      %966 = vmatprep.subr.bf16.mxu0 0
      %967 = vmatpush2.bf16.xpose.msra.mxu0 0
      %968 = vmatprep.subr.bf16.mxu0 0
      %969 = vmatpush2.bf16.xpose.msra.mxu0 0
      %970 = vmatprep.subr.bf16.mxu0 0
      %971 = vmatpush2.bf16.xpose.msra.mxu0 0
      %972 = vmatprep.subr.bf16.mxu0 0
      %973 = vmatpush2.bf16.xpose.msra.mxu0 0
      %974 = vmatprep.subr.bf16.mxu0 0
      %975 = vmatpush2.bf16.xpose.msra.mxu0 0
      %976 = vmatprep.mubr.bf16.mxu0 0
      %977 = vmatmul.mubr.bf16.gmra.mxu0 %v939
      %v978 = vpop.f32.mrf.mxu0
      %v979 = vadd.f32 %v600, %v978
      %v980 = vpop.f32.mrf.mxu0
      %v981 = vpop.f32.mrf.mxu0
      %v982 = vpop.f32.mrf.mxu0
      %983 = vdwg.mxu0
      %v984 = vsel %vm648, %v979, -inf
      %985 = vmax.xlane.f32.xlu0 %v984
      %v986 = vpop.xlane.xlu0 %985
      %v987 = vsub.f32 %v979, %v986
      %v988 = vmul.f32 %v987, 1.442695
      %v989 = vpow.pop %v988
      %v990 = vsel %vm648, %v989, 0.0
      %991 = vadd.xlane.f32.xlu0 %v990
      %v992 = vpop.xlane.xlu0 %991
      %v993 = vrcp.pop %v992
      %v994 = vmul.f32 %v989, %v993
      %v995 = vpack.c.bf16 %v994, %v994
      %996 = vrot.lane.b32.xlu0 %v599, 32
      %v997 = vpop.permute.xlu0 %996
      %v999 = vsel %vm648, %v995, 0
      %v1002 = vsel %vm664, %v997, 0
      %1004 = vmatprep.subr.bf16.mxu0 0
      %1005 = vmatpush1.bf16.msra.mxu0 0
      %1006 = vmatprep.subr.bf16.mxu0 0
      %1007 = vmatpush1.bf16.msra.mxu0 0
      %1008 = vmatprep.subr.bf16.mxu0 0
      %1009 = vmatpush1.bf16.msra.mxu0 0
      %1010 = vmatprep.subr.bf16.mxu0 0
      %1011 = vmatpush1.bf16.msra.mxu0 0
      %1012 = vmatprep.subr.bf16.mxu0 0
      %1013 = vmatpush1.bf16.msra.mxu0 0
      %1014 = vmatprep.subr.bf16.mxu0 0
      %1015 = vmatpush1.bf16.msra.mxu0 0
      %1016 = vmatprep.subr.bf16.mxu0 0
      %1017 = vmatpush1.bf16.msra.mxu0 0
      %1018 = vmatprep.subr.bf16.mxu0 0
      %1019 = vmatpush1.bf16.msra.mxu0 %v1002
      %1020 = vmatprep.subr.bf16.mxu0 0
      %1021 = vmatpush2.bf16.msra.mxu0 0
      %1022 = vmatprep.subr.bf16.mxu0 0
      %1023 = vmatpush2.bf16.msra.mxu0 0
      %1024 = vmatprep.subr.bf16.mxu0 0
      %1025 = vmatpush2.bf16.msra.mxu0 0
      %1026 = vmatprep.subr.bf16.mxu0 0
      %1027 = vmatpush2.bf16.msra.mxu0 0
      %1028 = vmatprep.subr.bf16.mxu0 0
      %1029 = vmatpush2.bf16.msra.mxu0 0
      %1030 = vmatprep.subr.bf16.mxu0 0
      %1031 = vmatpush2.bf16.msra.mxu0 0
      %1032 = vmatprep.subr.bf16.mxu0 0
      %1033 = vmatpush2.bf16.msra.mxu0 0
      %1034 = vmatprep.subr.bf16.mxu0 0
      %1035 = vmatpush2.bf16.msra.mxu0 0
      %1036 = vmatprep.mubr.bf16.mxu0 0
      %1037 = vmatmul.mubr.bf16.gmra.mxu0 %v999
      %v1038 = vpop.f32.mrf.mxu0
      %v1039 = vadd.f32 0.0, %v1038
      %v1040 = vpop.f32.mrf.mxu0
      %v1041 = vpop.f32.mrf.mxu0
      %v1042 = vpop.f32.mrf.mxu0
      %1043 = vdwg.mxu0
      %v1044 = vpack.c.bf16 %v1039, %v1039
      %1046 = vrot.lane.b32.xlu0 %v822, 32
      %v1047 = vpop.permute.xlu0 %1046
      %1049 = vrot.lane.b32.xlu0 %v933, 64
      %v1050 = vpop.permute.xlu0 %1049
      %1052 = vrot.lane.b32.xlu0 %v1044, 96
      %v1053 = vpop.permute.xlu0 %1052
      %v1056 = vsel %vm601, %v708, %v1047
      %vm1057 = vcmask 523264
      %v1059 = vsel %vm1057, %v1056, %v1050
      %vm1060 = vcmask 785408
      %v1062 = vsel %vm1060, %v1059, %v1053
      %v1064 = vld [vmem:[%s6] sm:$0xf]
      %v1065 = vld [vmem:[%s6 + $0x4] sm:$0xf]
      %v1066 = vld [vmem:[%s6 + $0x8] sm:$0xf]
      %v1067 = vld [vmem:[%s6 + $0xc] sm:$0xf]
      %v1068 = vld [vmem:[%s6 + $0x10] sm:$0xf]
      %v1069 = vld [vmem:[%s6 + $0x14] sm:$0xf]
      %v1070 = vld [vmem:[%s6 + $0x18] sm:$0xf]
      %v1071 = vld [vmem:[%s6 + $0x1c] sm:$0xf]
      %v1072 = vld [vmem:[%s6 + $0x20] sm:$0xf]
      %v1073 = vld [vmem:[%s6 + $0x24] sm:$0xf]
      %v1074 = vld [vmem:[%s6 + $0x28] sm:$0xf]
      %v1075 = vld [vmem:[%s6 + $0x2c] sm:$0xf]
      %v1076 = vld [vmem:[%s6 + $0x30] sm:$0xf]
      %v1077 = vld [vmem:[%s6 + $0x34] sm:$0xf]
      %v1078 = vld [vmem:[%s6 + $0x38] sm:$0xf]
      %v1079 = vld [vmem:[%s6 + $0x3c] sm:$0xf]
      %v1080 = vld [vmem:[%s7] sm:$0x1]
      %v1082 = vlaneseq
      %v1083 = vshrl.u32 %v1082, 7
      %v1084 = vsub.s32 0, %v1083
      %v1085 = vrot.slane %v1080, %v1084
      %v1103 = vunpack.c.l.b16 %v1064
      %v1104 = vunpack.c.l.b16 %v1065
      %v1105 = vunpack.c.l.b16 %v1066
      %v1106 = vunpack.c.l.b16 %v1067
      %v1107 = vunpack.c.l.b16 %v1068
      %v1108 = vunpack.c.l.b16 %v1069
      %v1109 = vunpack.c.l.b16 %v1070
      %v1110 = vunpack.c.l.b16 %v1071
      %v1111 = vunpack.c.l.b16 %v1072
      %v1112 = vunpack.c.l.b16 %v1073
      %v1113 = vunpack.c.l.b16 %v1074
      %v1114 = vunpack.c.l.b16 %v1075
      %v1115 = vunpack.c.l.b16 %v1076
      %v1116 = vunpack.c.l.b16 %v1077
      %v1117 = vunpack.c.l.b16 %v1078
      %v1118 = vunpack.c.l.b16 %v1079
      %v1119 = vpack.c.b16 %v1104, %v1103
      %v1120 = vpack.c.b16 %v1106, %v1105
      %v1121 = vpack.c.b16 %v1108, %v1107
      %v1122 = vpack.c.b16 %v1110, %v1109
      %v1123 = vpack.c.b16 %v1112, %v1111
      %v1124 = vpack.c.b16 %v1114, %v1113
      %v1125 = vpack.c.b16 %v1116, %v1115
      %v1126 = vpack.c.b16 %v1118, %v1117
      %1135 = vmatprep.subr.bf16.mxu0 0
      %1136 = vmatpush1.bf16.msra.mxu0 %v1126
      %1137 = vmatprep.subr.bf16.mxu0 0
      %1138 = vmatpush1.bf16.msra.mxu0 %v1125
      %1139 = vmatprep.subr.bf16.mxu0 0
      %1140 = vmatpush1.bf16.msra.mxu0 %v1124
      %1141 = vmatprep.subr.bf16.mxu0 0
      %1142 = vmatpush1.bf16.msra.mxu0 %v1123
      %1143 = vmatprep.subr.bf16.mxu0 0
      %1144 = vmatpush1.bf16.msra.mxu0 %v1122
      %1145 = vmatprep.subr.bf16.mxu0 0
      %1146 = vmatpush1.bf16.msra.mxu0 %v1121
      %1147 = vmatprep.subr.bf16.mxu0 0
      %1148 = vmatpush1.bf16.msra.mxu0 %v1120
      %1149 = vmatprep.subr.bf16.mxu0 0
      %1150 = vmatpush1.bf16.msra.mxu0 %v1119
      %1151 = vmatprep.subr.bf16.mxu0 0
      %1152 = vmatpush2.bf16.msra.mxu0 0
      %1153 = vmatprep.subr.bf16.mxu0 0
      %1154 = vmatpush2.bf16.msra.mxu0 0
      %1155 = vmatprep.subr.bf16.mxu0 0
      %1156 = vmatpush2.bf16.msra.mxu0 0
      %1157 = vmatprep.subr.bf16.mxu0 0
      %1158 = vmatpush2.bf16.msra.mxu0 0
      %1159 = vmatprep.subr.bf16.mxu0 0
      %1160 = vmatpush2.bf16.msra.mxu0 0
      %1161 = vmatprep.subr.bf16.mxu0 0
      %1162 = vmatpush2.bf16.msra.mxu0 0
      %1163 = vmatprep.subr.bf16.mxu0 0
      %1164 = vmatpush2.bf16.msra.mxu0 0
      %1165 = vmatprep.subr.bf16.mxu0 0
      %1166 = vmatpush2.bf16.msra.mxu0 0
      %1167 = vmatprep.mubr.bf16.mxu0 0
      %1168 = vmatmul.mubr.bf16.gmra.mxu0 %v1062
      %v1169 = vpop.f32.mrf.mxu0
      %v1170 = vadd.f32 %v1085, %v1169
      %v1171 = vpop.f32.mrf.mxu0
      %v1172 = vpop.f32.mrf.mxu0
      %v1173 = vpop.f32.mrf.mxu0
      %1174 = vdwg.mxu0
      %v1175 = vadd.f32 %v302, %v1170
      %1176 = vst [vmem:[%s300] sm:$0xff] %v1175
      %p1177 = scmp.lt.s32.totalorder %s19, 1
      %s1178 = scalar_select %p1177, %s19, 1
      %s1179 = smul.addr %s1178, 8
      %s1180 = scalar_lea.vmem %s8, %s1179
      // Predicated region
      $region53: #{decoder_forward.12} parent=51 // pred_check
        %p1181 = pneg %p210
      $region54: #{decoder_forward.12} parent=51 // pred_check_branch
        %1183 = sbr.rel (%p1181) target = $region56
      $region55: #{decoder_forward.12} parent=51 // pred_region
        _
      $region56: #{decoder_forward.12} parent=51 // pred_fallthru
        _
    $region52: #{decoder_forward.12} parent=5 // pred_fallthru
      _
    %p1184 = scmp.le.s32.totalorder 2, %s14
    // Predicated region
    $region57: #{decoder_forward.12} parent=5 // pred_check
      %p1185 = pneg %p1184
    $region58: #{decoder_forward.12} parent=5 // pred_check_branch
      %1187 = sbr.rel (%p1185) target = $region60
    $region59: #{decoder_forward.12} parent=5 // pred_region
      %s1188 = ssub.s32 %s14, 2
      // Predicated region
      $region61: #{decoder_forward.12} parent=59 // pred_check
        %p1189 = pneg %p216
      $region62: #{decoder_forward.12} parent=59 // pred_check_branch
        %1191 = sbr.rel (%p1189) target = $region64
      $region63: #{decoder_forward.12} parent=59 // pred_region
        %p1192 = scmp.lt.s32.totalorder %s20, 1
        %s1193 = scalar_select %p1192, %s20, 1
        %s1194 = smul.addr %s1193, 8
        %s1195 = scalar_lea.vmem %s8, %s1194
      $region64: #{decoder_forward.12} parent=59 // pred_fallthru
        _
    $region60: #{decoder_forward.12} parent=5 // pred_fallthru
      _
  $region6: #{decoder_forward.12} parent=0 // loop_footer
    %s18 = sadd.s32 1, %s14
  $region7: #{decoder_forward.12} parent=0 // loop_footer_branch
    %13 = sbr.rel target = $region3
  $region8: #{decoder_forward.12} parent=0 // loop_exit
    _

</llo_original>
